<compile_context>
chip_gen: v5e
topology: v5e:2x2
jax: 0.10.0
libtpu: 0.0.40
codegen_flags: <defaults>
</compile_context>

<pallas_src>
import functools

import jax
import jax.numpy as jnp
from jax import lax
from jax.experimental import pallas as pl
from jax.experimental.pallas import tpu as pltpu


_ROW_TILE = 256  # rows per grid step for the row-tiled (b*hw, *) kernels


# ---------------------------------------------------------------------------
# Fused LayerNorm (WithBias) + 1x1 conv (channel matmul + bias), row-tiled.
# ---------------------------------------------------------------------------
def _ln_matmul_kernel(x_ref, lnw_ref, lnb_ref, w_ref, b_ref, o_ref):
    x = x_ref[...].astype(jnp.float32)                       # (TM, cin)
    mu = jnp.mean(x, axis=-1, keepdims=True)
    var = jnp.mean((x - mu) ** 2, axis=-1, keepdims=True)    # unbiased=False
    y = (x - mu) * lax.rsqrt(var + 1e-5) * lnw_ref[...] + lnb_ref[...]
    y = jnp.dot(y.astype(w_ref.dtype), w_ref[...],
                preferred_element_type=jnp.float32)          # (TM, cout) f32
    o_ref[...] = (y + b_ref[...]).astype(o_ref.dtype)


def ln_pointwise(x2d, ln_w, ln_b, w, bias):
    n, cin = x2d.shape
    cout = w.shape[1]
    tm = min(_ROW_TILE, n)
    return pl.pallas_call(
        _ln_matmul_kernel,
        out_shape=jax.ShapeDtypeStruct((n, cout), x2d.dtype),
        grid=(pl.cdiv(n, tm),),
        in_specs=[pl.BlockSpec((tm, cin), lambda i: (i, 0)),
                  pl.BlockSpec((1, cin), lambda i: (0, 0)),
                  pl.BlockSpec((1, cin), lambda i: (0, 0)),
                  pl.BlockSpec((cin, cout), lambda i: (0, 0)),
                  pl.BlockSpec((1, cout), lambda i: (0, 0))],
        out_specs=pl.BlockSpec((tm, cout), lambda i: (i, 0)),
        compiler_params=pltpu.CompilerParams(dimension_semantics=("parallel",)),
    )(x2d, ln_w.reshape(1, cin), ln_b.reshape(1, cin),
      w.astype(jnp.bfloat16), bias.reshape(1, cout))


# ---------------------------------------------------------------------------
# Depthwise 3x3 conv, stride 1, padding 1, groups == channels.
# Single padded input; the 9 shifted taps are static slices inside the kernel.
# ---------------------------------------------------------------------------
def _dwconv3x3_kernel(xp_ref, w_ref, b_ref, o_ref):
    _, H, W, C = o_ref.shape
    acc = jnp.zeros((H, W, C), jnp.float32)
    for i in range(3):
        for j in range(3):
            acc = acc + xp_ref[0, i:i + H, j:j + W, :] * w_ref[i, j]   # w_ref[i,j]: (1,C)
    o_ref[0] = (acc + b_ref[...]).astype(o_ref.dtype)


def dwconv3x3(x_nhwc, w_dw, b_dw):
    b, h, w, c = x_nhwc.shape
    # TODO(synk): borders could be handled fully in-kernel (masked taps) to avoid
    # this one XLA pad copy; for large resolutions also tile the H axis.
    xp = jnp.pad(x_nhwc, ((0, 0), (1, 1), (1, 1), (0, 0)))
    return pl.pallas_call(
        _dwconv3x3_kernel,
        out_shape=jax.ShapeDtypeStruct((b, h, w, c), x_nhwc.dtype),
        grid=(b,),
        in_specs=[pl.BlockSpec((1, h + 2, w + 2, c), lambda i: (i, 0, 0, 0)),
                  pl.BlockSpec((3, 3, 1, c), lambda i: (0, 0, 0, 0)),
                  pl.BlockSpec((1, c), lambda i: (0, 0))],
        out_specs=pl.BlockSpec((1, h, w, c), lambda i: (i, 0, 0, 0)),
        compiler_params=pltpu.CompilerParams(dimension_semantics=("parallel",)),
    )(xp, w_dw, b_dw.reshape(1, c))


# ---------------------------------------------------------------------------
# Fused attention (all heads per batch element, channels-last layout)
# + project_out 1x1 conv + bias + residual add.
#   q,k,v kept as (hw, c_head): L2-normalize over hw (rows), attn = qn^T @ kn,
#   softmax over last axis, out = v @ attn^T, projected per-head slice of W.
# ---------------------------------------------------------------------------
def _attn_proj_kernel(qkv_ref, res_ref, pw_ref, pb_ref, temp_ref, o_ref, *,
                      num_heads):
    c = res_ref.shape[-1]
    ch = c // num_heads
    hw = qkv_ref.shape[1]
    qkv = qkv_ref[0].astype(jnp.float32)                     # (hw, 3c)
    q, k, v = qkv[:, :c], qkv[:, c:2 * c], qkv[:, 2 * c:]

    acc = jnp.zeros((hw, c), jnp.float32)
    for h in range(num_heads):
        sl = slice(h * ch, (h + 1) * ch)
        qh, kh, vh = q[:, sl], k[:, sl], v[:, sl]            # each (hw, ch)
        # F.normalize(dim=-1 over hw) with eps=1e-12 clamp on the norm.
        qn = qh * lax.rsqrt(jnp.maximum(jnp.sum(qh * qh, axis=0, keepdims=True), 1e-24))
        kn = kh * lax.rsqrt(jnp.maximum(jnp.sum(kh * kh, axis=0, keepdims=True), 1e-24))
        attn = lax.dot_general(qn.astype(jnp.bfloat16), kn.astype(jnp.bfloat16),
                               (((0,), (0,)), ((), ())),
                               preferred_element_type=jnp.float32)     # (ch_q, ch_k)
        attn = attn * temp_ref[h]
        attn = attn - jnp.max(attn, axis=-1, keepdims=True)
        attn = jnp.exp(attn)
        attn = attn * pl.reciprocal(jnp.sum(attn, axis=-1, keepdims=True), approx=True)
        oh = lax.dot_general(vh.astype(jnp.bfloat16), attn.astype(jnp.bfloat16),
                             (((1,), (1,)), ((), ())),
                             preferred_element_type=jnp.float32)       # (hw, ch_q)
        # project_out contribution of this head's channel slice.
        acc = acc + jnp.dot(oh.astype(jnp.bfloat16), pw_ref[sl, :],
                            preferred_element_type=jnp.float32)
    o_ref[0] = (acc + pb_ref[...] + res_ref[0]).astype(o_ref.dtype)


def attention_project(qkv3d, x_res3d, proj_w, proj_b, temperature, num_heads):
    b, hw, c3 = qkv3d.shape
    c = c3 // 3
    kernel = functools.partial(_attn_proj_kernel, num_heads=num_heads)
    return pl.pallas_call(
        kernel,
        out_shape=jax.ShapeDtypeStruct((b, hw, c), x_res3d.dtype),
        grid=(b,),
        in_specs=[pl.BlockSpec((1, hw, c3), lambda i: (i, 0, 0)),
                  pl.BlockSpec((1, hw, c), lambda i: (i, 0, 0)),
                  pl.BlockSpec((c, c), lambda i: (0, 0)),
                  pl.BlockSpec((1, c), lambda i: (0, 0)),
                  pl.BlockSpec(memory_space=pltpu.MemorySpace.SMEM)],
        out_specs=pl.BlockSpec((1, hw, c), lambda i: (i, 0, 0)),
        compiler_params=pltpu.CompilerParams(dimension_semantics=("parallel",)),
    )(qkv3d, x_res3d, proj_w.astype(jnp.bfloat16), proj_b.reshape(1, c),
      temperature)


# ---------------------------------------------------------------------------
# Fused gated GELU (exact erf GELU) + ffn project_out 1x1 conv + residual.
# u holds [x1 | x2] along channels; sliced inside the kernel.
# ---------------------------------------------------------------------------
def _gelu_proj_kernel(u_ref, res_ref, w_ref, b_ref, o_ref):
    u = u_ref[...].astype(jnp.float32)                       # (TM, 2*hid)
    hid = u.shape[-1] // 2
    x1, x2 = u[:, :hid], u[:, hid:]
    g = 0.5 * x1 * (1.0 + lax.erf(x1 * 0.7071067811865475)) * x2
    y = jnp.dot(g.astype(w_ref.dtype), w_ref[...],
                preferred_element_type=jnp.float32)          # (TM, c)
    o_ref[...] = (y + b_ref[...] + res_ref[...]).astype(o_ref.dtype)


def gelu_project(u2d, res2d, w, bias):
    n, h2 = u2d.shape
    hid, c = w.shape
    tm = min(_ROW_TILE, n)
    return pl.pallas_call(
        _gelu_proj_kernel,
        out_shape=jax.ShapeDtypeStruct((n, c), res2d.dtype),
        grid=(pl.cdiv(n, tm),),
        in_specs=[pl.BlockSpec((tm, h2), lambda i: (i, 0)),
                  pl.BlockSpec((tm, c), lambda i: (i, 0)),
                  pl.BlockSpec((hid, c), lambda i: (0, 0)),
                  pl.BlockSpec((1, c), lambda i: (0, 0))],
        out_specs=pl.BlockSpec((tm, c), lambda i: (i, 0)),
        compiler_params=pltpu.CompilerParams(dimension_semantics=("parallel",)),
    )(u2d, res2d, w.astype(jnp.bfloat16), bias.reshape(1, c))


# ---------------------------------------------------------------------------
# Full TransformerBlock forward (glue: only the NCHW<->NHWC transposes and
# free reshapes; no intermediate HBM transposes/slices between kernels).
# ---------------------------------------------------------------------------
def transformer_block(x_nchw, params, num_heads):
    b, c, h, w = x_nchw.shape
    hw = h * w
    x = jnp.transpose(x_nchw, (0, 2, 3, 1)).reshape(b, hw, c)          # (b, hw, c)

    # ----- x = x + attn(norm1(x)) -----
    qkv = ln_pointwise(x.reshape(b * hw, c), params["ln1_w"], params["ln1_b"],
                       params["qkv_w"], params["qkv_b"])               # (b*hw, 3c)
    qkv = dwconv3x3(qkv.reshape(b, h, w, 3 * c),
                    params["qkv_dw_w"], params["qkv_dw_b"])            # (b, h, w, 3c)
    x = attention_project(qkv.reshape(b, hw, 3 * c), x,
                          params["proj_w"], params["proj_b"],
                          params["temperature"], num_heads)            # (b, hw, c)

    # ----- x = x + ffn(norm2(x)) -----
    hid = params["ffn_out_w"].shape[0]
    u = ln_pointwise(x.reshape(b * hw, c), params["ln2_w"], params["ln2_b"],
                     params["ffn_in_w"], params["ffn_in_b"])           # (b*hw, 2*hid)
    u = dwconv3x3(u.reshape(b, h, w, 2 * hid),
                  params["ffn_dw_w"], params["ffn_dw_b"])              # (b, h, w, 2*hid)
    x = gelu_project(u.reshape(b * hw, 2 * hid), x.reshape(b * hw, c),
                     params["ffn_out_w"], params["ffn_out_b"])         # (b*hw, c)

    return jnp.transpose(x.reshape(b, h, w, c), (0, 3, 1, 2))          # NCHW


# ---------------------------------------------------------------------------
def make_params(key, dim, num_heads, ffn_expansion_factor):
    hid = int(dim * ffn_expansion_factor)
    ks = jax.random.split(key, 7)
    f32 = jnp.float32
    return dict(
        ln1_w=jnp.ones((dim,), f32), ln1_b=jnp.zeros((dim,), f32),
        qkv_w=0.1 * jax.random.normal(ks[0], (dim, 3 * dim), f32),
        qkv_b=0.01 * jax.random.normal(ks[1], (3 * dim,), f32),
        qkv_dw_w=0.1 * jax.random.normal(ks[2], (3, 3, 1, 3 * dim), f32),
        qkv_dw_b=jnp.zeros((3 * dim,), f32),
        temperature=jnp.ones((num_heads,), f32),
        proj_w=0.1 * jax.random.normal(ks[3], (dim, dim), f32),
        proj_b=jnp.zeros((dim,), f32),
        ln2_w=jnp.ones((dim,), f32), ln2_b=jnp.zeros((dim,), f32),
        ffn_in_w=0.1 * jax.random.normal(ks[4], (dim, 2 * hid), f32),
        ffn_in_b=jnp.zeros((2 * hid,), f32),
        ffn_dw_w=0.1 * jax.random.normal(ks[5], (3, 3, 1, 2 * hid), f32),
        ffn_dw_b=jnp.zeros((2 * hid,), f32),
        ffn_out_w=0.1 * jax.random.normal(ks[6], (hid, dim), f32),
        ffn_out_b=jnp.zeros((dim,), f32),
    )


if __name__ == "__main__":
    dim, num_heads, ffn_expansion_factor = 8, 2, 2.0
    batch, height, width = 2, 16, 16

    root = jax.random.PRNGKey(0)
    kp, kx = jax.random.split(root)
    params = make_params(kp, dim, num_heads, ffn_expansion_factor)
    x = jax.random.normal(kx, (batch, dim, height, width), jnp.float32)  # NCHW

    fwd = jax.jit(lambda inp: transformer_block(inp, params, num_heads))
    out = fwd(x)
    jax.block_until_ready(out)
    assert out.shape == (batch, dim, height, width)
    assert bool(jnp.all(jnp.isfinite(out)))
    print("KERNEL_OK")
</pallas_src>

<mosaic_0001>
module attributes {stable_mosaic.version = 11 : i64} {
  func.func @_ln_matmul_kernel(%arg0: i32, %arg1: memref<256x8xf32, #tpu.memory_space<vmem>>, %arg2: memref<1x8xf32, #tpu.memory_space<vmem>>, %arg3: memref<1x8xf32, #tpu.memory_space<vmem>>, %arg4: memref<8x24xbf16, #tpu.memory_space<vmem>>, %arg5: memref<1x24xf32, #tpu.memory_space<vmem>>, %arg6: memref<256x24xf32, #tpu.memory_space<vmem>>) attributes {dimension_semantics = [#tpu.dimension_semantics<parallel>], iteration_bounds = array<i64: 2>, scalar_prefetch = 0 : i64, scratch_operands = 0 : i64, tpu.core_type = #tpu.core_type<tc>, window_params = [{transform_indices = @transform_0, window_bounds = array<i64: 256, 8>}, {pipeline_mode = #tpu.pipeline_mode<synchronous>, transform_indices = @transform_1, window_bounds = array<i64: 1, 8>}, {pipeline_mode = #tpu.pipeline_mode<synchronous>, transform_indices = @transform_2, window_bounds = array<i64: 1, 8>}, {pipeline_mode = #tpu.pipeline_mode<synchronous>, transform_indices = @transform_3, window_bounds = array<i64: 8, 24>}, {pipeline_mode = #tpu.pipeline_mode<synchronous>, transform_indices = @transform_4, window_bounds = array<i64: 1, 24>}, {transform_indices = @transform_5, window_bounds = array<i64: 256, 24>}]} {
    %c0 = arith.constant 0 : index
    %c0_0 = arith.constant 0 : index
    %0 = vector.load %arg1[%c0, %c0_0] : memref<256x8xf32, #tpu.memory_space<vmem>>, vector<256x8xf32>
    %cst = arith.constant dense<0.000000e+00> : vector<256xf32>
    %1 = vector.multi_reduction <add>, %0, %cst [1] : vector<256x8xf32> to vector<256xf32>
    %2 = vector.shape_cast %1 : vector<256xf32> to vector<256x1xf32>
    %cst_1 = arith.constant 8.000000e+00 : f32
    %3 = vector.broadcast %cst_1 : f32 to vector<256x1xf32>
    %4 = arith.divf %2, %3 : vector<256x1xf32>
    %5 = vector.broadcast %4 : vector<256x1xf32> to vector<256x8xf32>
    %6 = arith.subf %0, %5 : vector<256x8xf32>
    %7 = arith.mulf %6, %6 : vector<256x8xf32>
    %cst_2 = arith.constant dense<0.000000e+00> : vector<256xf32>
    %8 = vector.multi_reduction <add>, %7, %cst_2 [1] : vector<256x8xf32> to vector<256xf32>
    %9 = vector.shape_cast %8 : vector<256xf32> to vector<256x1xf32>
    %cst_3 = arith.constant 8.000000e+00 : f32
    %10 = vector.broadcast %cst_3 : f32 to vector<256x1xf32>
    %11 = arith.divf %9, %10 : vector<256x1xf32>
    %12 = vector.broadcast %4 : vector<256x1xf32> to vector<256x8xf32>
    %13 = arith.subf %0, %12 : vector<256x8xf32>
    %cst_4 = arith.constant 9.99999974E-6 : f32
    %14 = vector.broadcast %cst_4 : f32 to vector<256x1xf32>
    %15 = arith.addf %11, %14 : vector<256x1xf32>
    %16 = math.rsqrt %15 : vector<256x1xf32>
    %17 = vector.broadcast %16 : vector<256x1xf32> to vector<256x8xf32>
    %18 = arith.mulf %13, %17 : vector<256x8xf32>
    %c0_5 = arith.constant 0 : index
    %c0_6 = arith.constant 0 : index
    %19 = vector.load %arg2[%c0_5, %c0_6] : memref<1x8xf32, #tpu.memory_space<vmem>>, vector<1x8xf32>
    %20 = vector.broadcast %19 : vector<1x8xf32> to vector<256x8xf32>
    %21 = arith.mulf %18, %20 : vector<256x8xf32>
    %c0_7 = arith.constant 0 : index
    %c0_8 = arith.constant 0 : index
    %22 = vector.load %arg3[%c0_7, %c0_8] : memref<1x8xf32, #tpu.memory_space<vmem>>, vector<1x8xf32>
    %23 = vector.broadcast %22 : vector<1x8xf32> to vector<256x8xf32>
    %24 = arith.addf %21, %23 : vector<256x8xf32>
    %25 = arith.truncf %24 : vector<256x8xf32> to vector<256x8xbf16>
    %c0_9 = arith.constant 0 : index
    %c0_10 = arith.constant 0 : index
    %26 = vector.load %arg4[%c0_9, %c0_10] : memref<8x24xbf16, #tpu.memory_space<vmem>>, vector<8x24xbf16>
    %cst_11 = arith.constant dense<0.000000e+00> : vector<256x24xf32>
    %27 = tpu.matmul %25, %26, %cst_11 {dimension_numbers = #tpu.dot_dimension_numbers<[1], [0], [0], [1], [0, 0, 1, 1], [], []>} : vector<256x8xbf16>, vector<8x24xbf16>, vector<256x24xf32> -> vector<256x24xf32>
    %c0_12 = arith.constant 0 : index
    %c0_13 = arith.constant 0 : index
    %28 = vector.load %arg5[%c0_12, %c0_13] : memref<1x24xf32, #tpu.memory_space<vmem>>, vector<1x24xf32>
    %29 = vector.broadcast %28 : vector<1x24xf32> to vector<256x24xf32>
    %30 = arith.addf %27, %29 : vector<256x24xf32>
    %c0_14 = arith.constant 0 : index
    %c0_15 = arith.constant 0 : index
    %31 = vector.load %arg6[%c0_14, %c0_15] : memref<256x24xf32, #tpu.memory_space<vmem>>, vector<256x24xf32>
    tpu.vector_store %arg6[%c0_14, %c0_15], %30 {strides = array<i32>} : memref<256x24xf32, #tpu.memory_space<vmem>>, vector<256x24xf32>,
    return
  }
  func.func @transform_0(%arg0: i32) -> (i32, i32) {
    %c0_i32 = arith.constant 0 : i32
    %c0_i32_0 = arith.constant 0 : i32
    return %arg0, %c0_i32 : i32, i32
  }
  func.func @transform_1(%arg0: i32) -> (i32, i32) {
    %c0_i32 = arith.constant 0 : i32
    %c0_i32_0 = arith.constant 0 : i32
    %c0_i32_1 = arith.constant 0 : i32
    return %c0_i32, %c0_i32_0 : i32, i32
  }
  func.func @transform_2(%arg0: i32) -> (i32, i32) {
    %c0_i32 = arith.constant 0 : i32
    %c0_i32_0 = arith.constant 0 : i32
    %c0_i32_1 = arith.constant 0 : i32
    return %c0_i32, %c0_i32_0 : i32, i32
  }
  func.func @transform_3(%arg0: i32) -> (i32, i32) {
    %c0_i32 = arith.constant 0 : i32
    %c0_i32_0 = arith.constant 0 : i32
    %c0_i32_1 = arith.constant 0 : i32
    return %c0_i32, %c0_i32_0 : i32, i32
  }
  func.func @transform_4(%arg0: i32) -> (i32, i32) {
    %c0_i32 = arith.constant 0 : i32
    %c0_i32_0 = arith.constant 0 : i32
    %c0_i32_1 = arith.constant 0 : i32
    return %c0_i32, %c0_i32_0 : i32, i32
  }
  func.func @transform_5(%arg0: i32) -> (i32, i32) {
    %c0_i32 = arith.constant 0 : i32
    %c0_i32_0 = arith.constant 0 : i32
    return %arg0, %c0_i32 : i32, i32
  }
}

module attributes {stable_mosaic.version = 11 : i64} {
  func.func @_dwconv3x3_kernel(%arg0: i32, %arg1: memref<1x18x18x24xf32, #tpu.memory_space<vmem>>, %arg2: memref<3x3x1x24xf32, #tpu.memory_space<vmem>>, %arg3: memref<1x24xf32, #tpu.memory_space<vmem>>, %arg4: memref<1x16x16x24xf32, #tpu.memory_space<vmem>>) attributes {dimension_semantics = [#tpu.dimension_semantics<parallel>], iteration_bounds = array<i64: 2>, scalar_prefetch = 0 : i64, scratch_operands = 0 : i64, tpu.core_type = #tpu.core_type<tc>, window_params = [{transform_indices = @transform_0, window_bounds = array<i64: 1, 18, 18, 24>}, {pipeline_mode = #tpu.pipeline_mode<synchronous>, transform_indices = @transform_1, window_bounds = array<i64: 3, 3, 1, 24>}, {pipeline_mode = #tpu.pipeline_mode<synchronous>, transform_indices = @transform_2, window_bounds = array<i64: 1, 24>}, {transform_indices = @transform_3, window_bounds = array<i64: 1, 16, 16, 24>}]} {
    %cst = arith.constant 0.000000e+00 : f32
    %0 = vector.broadcast %cst : f32 to vector<16x16x24xf32>
    %c0 = arith.constant 0 : index
    %c0_0 = arith.constant 0 : index
    %c0_1 = arith.constant 0 : index
    %c0_2 = arith.constant 0 : index
    %1 = vector.load %arg1[%c0, %c0_0, %c0_1, %c0_2] : memref<1x18x18x24xf32, #tpu.memory_space<vmem>>, vector<1x16x16x24xf32>
    %2 = vector.shape_cast %1 : vector<1x16x16x24xf32> to vector<16x16x24xf32>
    %c0_3 = arith.constant 0 : index
    %c0_4 = arith.constant 0 : index
    %c0_5 = arith.constant 0 : index
    %c0_6 = arith.constant 0 : index
    %3 = vector.load %arg2[%c0_3, %c0_4, %c0_5, %c0_6] : memref<3x3x1x24xf32, #tpu.memory_space<vmem>>, vector<1x1x1x24xf32>
    %4 = vector.shape_cast %3 : vector<1x1x1x24xf32> to vector<1x24xf32>
    %5 = vector.shape_cast %4 : vector<1x24xf32> to vector<1x1x24xf32>
    %6 = vector.broadcast %5 : vector<1x1x24xf32> to vector<16x16x24xf32>
    %7 = arith.mulf %2, %6 : vector<16x16x24xf32>
    %8 = arith.addf %0, %7 : vector<16x16x24xf32>
    %c0_7 = arith.constant 0 : index
    %c0_8 = arith.constant 0 : index
    %c1 = arith.constant 1 : index
    %c0_9 = arith.constant 0 : index
    %9 = vector.load %arg1[%c0_7, %c0_8, %c1, %c0_9] : memref<1x18x18x24xf32, #tpu.memory_space<vmem>>, vector<1x16x16x24xf32>
    %10 = vector.shape_cast %9 : vector<1x16x16x24xf32> to vector<16x16x24xf32>
    %c0_10 = arith.constant 0 : index
    %c1_11 = arith.constant 1 : index
    %c0_12 = arith.constant 0 : index
    %c0_13 = arith.constant 0 : index
    %11 = vector.load %arg2[%c0_10, %c1_11, %c0_12, %c0_13] : memref<3x3x1x24xf32, #tpu.memory_space<vmem>>, vector<1x1x1x24xf32>
    %12 = vector.shape_cast %11 : vector<1x1x1x24xf32> to vector<1x24xf32>
    %13 = vector.shape_cast %12 : vector<1x24xf32> to vector<1x1x24xf32>
    %14 = vector.broadcast %13 : vector<1x1x24xf32> to vector<16x16x24xf32>
    %15 = arith.mulf %10, %14 : vector<16x16x24xf32>
    %16 = arith.addf %8, %15 : vector<16x16x24xf32>
    %c0_14 = arith.constant 0 : index
    %c0_15 = arith.constant 0 : index
    %c2 = arith.constant 2 : index
    %c0_16 = arith.constant 0 : index
    %17 = vector.load %arg1[%c0_14, %c0_15, %c2, %c0_16] : memref<1x18x18x24xf32, #tpu.memory_space<vmem>>, vector<1x16x16x24xf32>
    %18 = vector.shape_cast %17 : vector<1x16x16x24xf32> to vector<16x16x24xf32>
    %c0_17 = arith.constant 0 : index
    %c2_18 = arith.constant 2 : index
    %c0_19 = arith.constant 0 : index
    %c0_20 = arith.constant 0 : index
    %19 = vector.load %arg2[%c0_17, %c2_18, %c0_19, %c0_20] : memref<3x3x1x24xf32, #tpu.memory_space<vmem>>, vector<1x1x1x24xf32>
    %20 = vector.shape_cast %19 : vector<1x1x1x24xf32> to vector<1x24xf32>
    %21 = vector.shape_cast %20 : vector<1x24xf32> to vector<1x1x24xf32>
    %22 = vector.broadcast %21 : vector<1x1x24xf32> to vector<16x16x24xf32>
    %23 = arith.mulf %18, %22 : vector<16x16x24xf32>
    %24 = arith.addf %16, %23 : vector<16x16x24xf32>
    %c0_21 = arith.constant 0 : index
    %c1_22 = arith.constant 1 : index
    %c0_23 = arith.constant 0 : index
    %c0_24 = arith.constant 0 : index
    %25 = vector.load %arg1[%c0_21, %c1_22, %c0_23, %c0_24] : memref<1x18x18x24xf32, #tpu.memory_space<vmem>>, vector<1x16x16x24xf32>
    %26 = vector.shape_cast %25 : vector<1x16x16x24xf32> to vector<16x16x24xf32>
    %c1_25 = arith.constant 1 : index
    %c0_26 = arith.constant 0 : index
    %c0_27 = arith.constant 0 : index
    %c0_28 = arith.constant 0 : index
    %27 = vector.load %arg2[%c1_25, %c0_26, %c0_27, %c0_28] : memref<3x3x1x24xf32, #tpu.memory_space<vmem>>, vector<1x1x1x24xf32>
    %28 = vector.shape_cast %27 : vector<1x1x1x24xf32> to vector<1x24xf32>
    %29 = vector.shape_cast %28 : vector<1x24xf32> to vector<1x1x24xf32>
    %30 = vector.broadcast %29 : vector<1x1x24xf32> to vector<16x16x24xf32>
    %31 = arith.mulf %26, %30 : vector<16x16x24xf32>
    %32 = arith.addf %24, %31 : vector<16x16x24xf32>
    %c0_29 = arith.constant 0 : index
    %c1_30 = arith.constant 1 : index
    %c1_31 = arith.constant 1 : index
    %c0_32 = arith.constant 0 : index
    %33 = vector.load %arg1[%c0_29, %c1_30, %c1_31, %c0_32] : memref<1x18x18x24xf32, #tpu.memory_space<vmem>>, vector<1x16x16x24xf32>
    %34 = vector.shape_cast %33 : vector<1x16x16x24xf32> to vector<16x16x24xf32>
    %c1_33 = arith.constant 1 : index
    %c1_34 = arith.constant 1 : index
    %c0_35 = arith.constant 0 : index
    %c0_36 = arith.constant 0 : index
    %35 = vector.load %arg2[%c1_33, %c1_34, %c0_35, %c0_36] : memref<3x3x1x24xf32, #tpu.memory_space<vmem>>, vector<1x1x1x24xf32>
    %36 = vector.shape_cast %35 : vector<1x1x1x24xf32> to vector<1x24xf32>
    %37 = vector.shape_cast %36 : vector<1x24xf32> to vector<1x1x24xf32>
    %38 = vector.broadcast %37 : vector<1x1x24xf32> to vector<16x16x24xf32>
    %39 = arith.mulf %34, %38 : vector<16x16x24xf32>
    %40 = arith.addf %32, %39 : vector<16x16x24xf32>
    %c0_37 = arith.constant 0 : index
    %c1_38 = arith.constant 1 : index
    %c2_39 = arith.constant 2 : index
    %c0_40 = arith.constant 0 : index
    %41 = vector.load %arg1[%c0_37, %c1_38, %c2_39, %c0_40] : memref<1x18x18x24xf32, #tpu.memory_space<vmem>>, vector<1x16x16x24xf32>
    %42 = vector.shape_cast %41 : vector<1x16x16x24xf32> to vector<16x16x24xf32>
    %c1_41 = arith.constant 1 : index
    %c2_42 = arith.constant 2 : index
    %c0_43 = arith.constant 0 : index
    %c0_44 = arith.constant 0 : index
    %43 = vector.load %arg2[%c1_41, %c2_42, %c0_43, %c0_44] : memref<3x3x1x24xf32, #tpu.memory_space<vmem>>, vector<1x1x1x24xf32>
    %44 = vector.shape_cast %43 : vector<1x1x1x24xf32> to vector<1x24xf32>
    %45 = vector.shape_cast %44 : vector<1x24xf32> to vector<1x1x24xf32>
    %46 = vector.broadcast %45 : vector<1x1x24xf32> to vector<16x16x24xf32>
    %47 = arith.mulf %42, %46 : vector<16x16x24xf32>
    %48 = arith.addf %40, %47 : vector<16x16x24xf32>
    %c0_45 = arith.constant 0 : index
    %c2_46 = arith.constant 2 : index
    %c0_47 = arith.constant 0 : index
    %c0_48 = arith.constant 0 : index
    %49 = vector.load %arg1[%c0_45, %c2_46, %c0_47, %c0_48] : memref<1x18x18x24xf32, #tpu.memory_space<vmem>>, vector<1x16x16x24xf32>
    %50 = vector.shape_cast %49 : vector<1x16x16x24xf32> to vector<16x16x24xf32>
    %c2_49 = arith.constant 2 : index
    %c0_50 = arith.constant 0 : index
    %c0_51 = arith.constant 0 : index
    %c0_52 = arith.constant 0 : index
    %51 = vector.load %arg2[%c2_49, %c0_50, %c0_51, %c0_52] : memref<3x3x1x24xf32, #tpu.memory_space<vmem>>, vector<1x1x1x24xf32>
    %52 = vector.shape_cast %51 : vector<1x1x1x24xf32> to vector<1x24xf32>
    %53 = vector.shape_cast %52 : vector<1x24xf32> to vector<1x1x24xf32>
    %54 = vector.broadcast %53 : vector<1x1x24xf32> to vector<16x16x24xf32>
    %55 = arith.mulf %50, %54 : vector<16x16x24xf32>
    %56 = arith.addf %48, %55 : vector<16x16x24xf32>
    %c0_53 = arith.constant 0 : index
    %c2_54 = arith.constant 2 : index
    %c1_55 = arith.constant 1 : index
    %c0_56 = arith.constant 0 : index
    %57 = vector.load %arg1[%c0_53, %c2_54, %c1_55, %c0_56] : memref<1x18x18x24xf32, #tpu.memory_space<vmem>>, vector<1x16x16x24xf32>
    %58 = vector.shape_cast %57 : vector<1x16x16x24xf32> to vector<16x16x24xf32>
    %c2_57 = arith.constant 2 : index
    %c1_58 = arith.constant 1 : index
    %c0_59 = arith.constant 0 : index
    %c0_60 = arith.constant 0 : index
    %59 = vector.load %arg2[%c2_57, %c1_58, %c0_59, %c0_60] : memref<3x3x1x24xf32, #tpu.memory_space<vmem>>, vector<1x1x1x24xf32>
    %60 = vector.shape_cast %59 : vector<1x1x1x24xf32> to vector<1x24xf32>
    %61 = vector.shape_cast %60 : vector<1x24xf32> to vector<1x1x24xf32>
    %62 = vector.broadcast %61 : vector<1x1x24xf32> to vector<16x16x24xf32>
    %63 = arith.mulf %58, %62 : vector<16x16x24xf32>
    %64 = arith.addf %56, %63 : vector<16x16x24xf32>
    %c0_61 = arith.constant 0 : index
    %c2_62 = arith.constant 2 : index
    %c2_63 = arith.constant 2 : index
    %c0_64 = arith.constant 0 : index
    %65 = vector.load %arg1[%c0_61, %c2_62, %c2_63, %c0_64] : memref<1x18x18x24xf32, #tpu.memory_space<vmem>>, vector<1x16x16x24xf32>
    %66 = vector.shape_cast %65 : vector<1x16x16x24xf32> to vector<16x16x24xf32>
    %c2_65 = arith.constant 2 : index
    %c2_66 = arith.constant 2 : index
    %c0_67 = arith.constant 0 : index
    %c0_68 = arith.constant 0 : index
    %67 = vector.load %arg2[%c2_65, %c2_66, %c0_67, %c0_68] : memref<3x3x1x24xf32, #tpu.memory_space<vmem>>, vector<1x1x1x24xf32>
    %68 = vector.shape_cast %67 : vector<1x1x1x24xf32> to vector<1x24xf32>
    %69 = vector.shape_cast %68 : vector<1x24xf32> to vector<1x1x24xf32>
    %70 = vector.broadcast %69 : vector<1x1x24xf32> to vector<16x16x24xf32>
    %71 = arith.mulf %66, %70 : vector<16x16x24xf32>
    %72 = arith.addf %64, %71 : vector<16x16x24xf32>
    %c0_69 = arith.constant 0 : index
    %c0_70 = arith.constant 0 : index
    %73 = vector.load %arg3[%c0_69, %c0_70] : memref<1x24xf32, #tpu.memory_space<vmem>>, vector<1x24xf32>
    %74 = vector.shape_cast %73 : vector<1x24xf32> to vector<1x1x24xf32>
    %75 = vector.broadcast %74 : vector<1x1x24xf32> to vector<16x16x24xf32>
    %76 = arith.addf %72, %75 : vector<16x16x24xf32>
    %c0_71 = arith.constant 0 : index
    %c0_72 = arith.constant 0 : index
    %c0_73 = arith.constant 0 : index
    %c0_74 = arith.constant 0 : index
    %77 = vector.load %arg4[%c0_71, %c0_72, %c0_73, %c0_74] : memref<1x16x16x24xf32, #tpu.memory_space<vmem>>, vector<1x16x16x24xf32>
    %78 = vector.shape_cast %77 : vector<1x16x16x24xf32> to vector<16x16x24xf32>
    %79 = vector.shape_cast %76 : vector<16x16x24xf32> to vector<1x16x16x24xf32>
    tpu.vector_store %arg4[%c0_71, %c0_72, %c0_73, %c0_74], %79 {strides = array<i32>} : memref<1x16x16x24xf32, #tpu.memory_space<vmem>>, vector<1x16x16x24xf32>,
    return
  }
  func.func @transform_0(%arg0: i32) -> (i32, i32, i32, i32) {
    %c0_i32 = arith.constant 0 : i32
    %c0_i32_0 = arith.constant 0 : i32
    %c0_i32_1 = arith.constant 0 : i32
    %c0_i32_2 = arith.constant 0 : i32
    return %arg0, %c0_i32, %c0_i32_0, %c0_i32_1 : i32, i32, i32, i32
  }
  func.func @transform_1(%arg0: i32) -> (i32, i32, i32, i32) {
    %c0_i32 = arith.constant 0 : i32
    %c0_i32_0 = arith.constant 0 : i32
    %c0_i32_1 = arith.constant 0 : i32
    %c0_i32_2 = arith.constant 0 : i32
    %c0_i32_3 = arith.constant 0 : i32
    return %c0_i32, %c0_i32_0, %c0_i32_1, %c0_i32_2 : i32, i32, i32, i32
  }
  func.func @transform_2(%arg0: i32) -> (i32, i32) {
    %c0_i32 = arith.constant 0 : i32
    %c0_i32_0 = arith.constant 0 : i32
    %c0_i32_1 = arith.constant 0 : i32
    return %c0_i32, %c0_i32_0 : i32, i32
  }
  func.func @transform_3(%arg0: i32) -> (i32, i32, i32, i32) {
    %c0_i32 = arith.constant 0 : i32
    %c0_i32_0 = arith.constant 0 : i32
    %c0_i32_1 = arith.constant 0 : i32
    %c0_i32_2 = arith.constant 0 : i32
    return %arg0, %c0_i32, %c0_i32_0, %c0_i32_1 : i32, i32, i32, i32
  }
}

module attributes {stable_mosaic.version = 11 : i64} {
  func.func @_attn_proj_kernel(%arg0: i32, %arg1: memref<1x256x24xf32, #tpu.memory_space<vmem>>, %arg2: memref<1x256x8xf32, #tpu.memory_space<vmem>>, %arg3: memref<8x8xbf16, #tpu.memory_space<vmem>>, %arg4: memref<1x8xf32, #tpu.memory_space<vmem>>, %arg5: memref<2xf32, #tpu.memory_space<smem>>, %arg6: memref<1x256x8xf32, #tpu.memory_space<vmem>>) attributes {dimension_semantics = [#tpu.dimension_semantics<parallel>], iteration_bounds = array<i64: 2>, scalar_prefetch = 0 : i64, scratch_operands = 0 : i64, tpu.core_type = #tpu.core_type<tc>, window_params = [{transform_indices = @transform_0, window_bounds = array<i64: 1, 256, 24>}, {transform_indices = @transform_1, window_bounds = array<i64: 1, 256, 8>}, {pipeline_mode = #tpu.pipeline_mode<synchronous>, transform_indices = @transform_2, window_bounds = array<i64: 8, 8>}, {pipeline_mode = #tpu.pipeline_mode<synchronous>, transform_indices = @transform_3, window_bounds = array<i64: 1, 8>}, {transform_indices = @transform_4, window_bounds = array<i64: 2>}, {transform_indices = @transform_5, window_bounds = array<i64: 1, 256, 8>}]} {
    %c0 = arith.constant 0 : index
    %c0_0 = arith.constant 0 : index
    %c0_1 = arith.constant 0 : index
    %0 = vector.load %arg1[%c0, %c0_0, %c0_1] : memref<1x256x24xf32, #tpu.memory_space<vmem>>, vector<1x256x24xf32>
    %1 = vector.shape_cast %0 : vector<1x256x24xf32> to vector<256x24xf32>
    %2 = vector.extract_strided_slice %1 {offsets = [0, 0], sizes = [256, 8], strides = [1, 1]} : vector<256x24xf32> to vector<256x8xf32>
    %3 = vector.extract_strided_slice %1 {offsets = [0, 8], sizes = [256, 8], strides = [1, 1]} : vector<256x24xf32> to vector<256x8xf32>
    %4 = vector.extract_strided_slice %1 {offsets = [0, 16], sizes = [256, 8], strides = [1, 1]} : vector<256x24xf32> to vector<256x8xf32>
    %cst = arith.constant 0.000000e+00 : f32
    %5 = vector.broadcast %cst : f32 to vector<256x8xf32>
    %6 = vector.extract_strided_slice %2 {offsets = [0, 0], sizes = [256, 4], strides = [1, 1]} : vector<256x8xf32> to vector<256x4xf32>
    %7 = vector.extract_strided_slice %3 {offsets = [0, 0], sizes = [256, 4], strides = [1, 1]} : vector<256x8xf32> to vector<256x4xf32>
    %8 = vector.extract_strided_slice %4 {offsets = [0, 0], sizes = [256, 4], strides = [1, 1]} : vector<256x8xf32> to vector<256x4xf32>
    %9 = arith.mulf %6, %6 : vector<256x4xf32>
    %cst_2 = arith.constant dense<0.000000e+00> : vector<4xf32>
    %10 = vector.multi_reduction <add>, %9, %cst_2 [0] : vector<256x4xf32> to vector<4xf32>
    %11 = vector.shape_cast %10 : vector<4xf32> to vector<1x4xf32>
    %cst_3 = arith.constant 1.000000e-24 : f32
    %12 = vector.broadcast %cst_3 : f32 to vector<1x4xf32>
    %13 = arith.maximumf %11, %12 : vector<1x4xf32>
    %14 = math.rsqrt %13 : vector<1x4xf32>
    %15 = vector.broadcast %14 : vector<1x4xf32> to vector<256x4xf32>
    %16 = arith.mulf %6, %15 : vector<256x4xf32>
    %17 = arith.mulf %7, %7 : vector<256x4xf32>
    %cst_4 = arith.constant dense<0.000000e+00> : vector<4xf32>
    %18 = vector.multi_reduction <add>, %17, %cst_4 [0] : vector<256x4xf32> to vector<4xf32>
    %19 = vector.shape_cast %18 : vector<4xf32> to vector<1x4xf32>
    %cst_5 = arith.constant 1.000000e-24 : f32
    %20 = vector.broadcast %cst_5 : f32 to vector<1x4xf32>
    %21 = arith.maximumf %19, %20 : vector<1x4xf32>
    %22 = math.rsqrt %21 : vector<1x4xf32>
    %23 = vector.broadcast %22 : vector<1x4xf32> to vector<256x4xf32>
    %24 = arith.mulf %7, %23 : vector<256x4xf32>
    %25 = arith.truncf %16 : vector<256x4xf32> to vector<256x4xbf16>
    %26 = arith.truncf %24 : vector<256x4xf32> to vector<256x4xbf16>
    %cst_6 = arith.constant dense<0.000000e+00> : vector<4x4xf32>
    %27 = tpu.matmul %25, %26, %cst_6 {dimension_numbers = #tpu.dot_dimension_numbers<[0], [0], [1], [1], [0, 1, 1, 1], [], []>} : vector<256x4xbf16>, vector<256x4xbf16>, vector<4x4xf32> -> vector<4x4xf32>
    %c0_7 = arith.constant 0 : index
    %28 = memref.load %arg5[%c0_7] : memref<2xf32, #tpu.memory_space<smem>>
    %29 = vector.broadcast %28 : f32 to vector<4x4xf32>
    %30 = arith.mulf %27, %29 : vector<4x4xf32>
    %cst_8 = arith.constant dense<0xFF800000> : vector<4xf32>
    %31 = vector.multi_reduction <maximumf>, %30, %cst_8 [1] : vector<4x4xf32> to vector<4xf32>
    %32 = vector.shape_cast %31 : vector<4xf32> to vector<4x1xf32>
    %33 = vector.broadcast %32 : vector<4x1xf32> to vector<4x4xf32>
    %34 = arith.subf %30, %33 : vector<4x4xf32>
    %35 = math.exp %34 : vector<4x4xf32>
    %cst_9 = arith.constant dense<0.000000e+00> : vector<4xf32>
    %36 = vector.multi_reduction <add>, %35, %cst_9 [1] : vector<4x4xf32> to vector<4xf32>
    %37 = vector.shape_cast %36 : vector<4xf32> to vector<4x1xf32>
    %38 = tpu.reciprocal %37 {approx = true} : vector<4x1xf32> -> vector<4x1xf32>
    %39 = vector.broadcast %38 : vector<4x1xf32> to vector<4x4xf32>
    %40 = arith.mulf %35, %39 : vector<4x4xf32>
    %41 = arith.truncf %8 : vector<256x4xf32> to vector<256x4xbf16>
    %42 = arith.truncf %40 : vector<4x4xf32> to vector<4x4xbf16>
    %cst_10 = arith.constant dense<0.000000e+00> : vector<256x4xf32>
    %43 = tpu.matmul %41, %42, %cst_10 {dimension_numbers = #tpu.dot_dimension_numbers<[1], [1], [0], [0], [0, 0, 1, 0], [], []>} : vector<256x4xbf16>, vector<4x4xbf16>, vector<256x4xf32> -> vector<256x4xf32>
    %44 = arith.truncf %43 : vector<256x4xf32> to vector<256x4xbf16>
    %c0_11 = arith.constant 0 : index
    %c0_12 = arith.constant 0 : index
    %45 = vector.load %arg3[%c0_11, %c0_12] : memref<8x8xbf16, #tpu.memory_space<vmem>>, vector<4x8xbf16>
    %cst_13 = arith.constant dense<0.000000e+00> : vector<256x8xf32>
    %46 = tpu.matmul %44, %45, %cst_13 {dimension_numbers = #tpu.dot_dimension_numbers<[1], [0], [0], [1], [0, 0, 1, 1], [], []>} : vector<256x4xbf16>, vector<4x8xbf16>, vector<256x8xf32> -> vector<256x8xf32>
    %47 = arith.addf %5, %46 : vector<256x8xf32>
    %48 = vector.extract_strided_slice %2 {offsets = [0, 4], sizes = [256, 4], strides = [1, 1]} : vector<256x8xf32> to vector<256x4xf32>
    %49 = vector.extract_strided_slice %3 {offsets = [0, 4], sizes = [256, 4], strides = [1, 1]} : vector<256x8xf32> to vector<256x4xf32>
    %50 = vector.extract_strided_slice %4 {offsets = [0, 4], sizes = [256, 4], strides = [1, 1]} : vector<256x8xf32> to vector<256x4xf32>
    %51 = arith.mulf %48, %48 : vector<256x4xf32>
    %cst_14 = arith.constant dense<0.000000e+00> : vector<4xf32>
    %52 = vector.multi_reduction <add>, %51, %cst_14 [0] : vector<256x4xf32> to vector<4xf32>
    %53 = vector.shape_cast %52 : vector<4xf32> to vector<1x4xf32>
    %cst_15 = arith.constant 1.000000e-24 : f32
    %54 = vector.broadcast %cst_15 : f32 to vector<1x4xf32>
    %55 = arith.maximumf %53, %54 : vector<1x4xf32>
    %56 = math.rsqrt %55 : vector<1x4xf32>
    %57 = vector.broadcast %56 : vector<1x4xf32> to vector<256x4xf32>
    %58 = arith.mulf %48, %57 : vector<256x4xf32>
    %59 = arith.mulf %49, %49 : vector<256x4xf32>
    %cst_16 = arith.constant dense<0.000000e+00> : vector<4xf32>
    %60 = vector.multi_reduction <add>, %59, %cst_16 [0] : vector<256x4xf32> to vector<4xf32>
    %61 = vector.shape_cast %60 : vector<4xf32> to vector<1x4xf32>
    %cst_17 = arith.constant 1.000000e-24 : f32
    %62 = vector.broadcast %cst_17 : f32 to vector<1x4xf32>
    %63 = arith.maximumf %61, %62 : vector<1x4xf32>
    %64 = math.rsqrt %63 : vector<1x4xf32>
    %65 = vector.broadcast %64 : vector<1x4xf32> to vector<256x4xf32>
    %66 = arith.mulf %49, %65 : vector<256x4xf32>
    %67 = arith.truncf %58 : vector<256x4xf32> to vector<256x4xbf16>
    %68 = arith.truncf %66 : vector<256x4xf32> to vector<256x4xbf16>
    %cst_18 = arith.constant dense<0.000000e+00> : vector<4x4xf32>
    %69 = tpu.matmul %67, %68, %cst_18 {dimension_numbers = #tpu.dot_dimension_numbers<[0], [0], [1], [1], [0, 1, 1, 1], [], []>} : vector<256x4xbf16>, vector<256x4xbf16>, vector<4x4xf32> -> vector<4x4xf32>
    %c1 = arith.constant 1 : index
    %70 = memref.load %arg5[%c1] : memref<2xf32, #tpu.memory_space<smem>>
    %71 = vector.broadcast %70 : f32 to vector<4x4xf32>
    %72 = arith.mulf %69, %71 : vector<4x4xf32>
    %cst_19 = arith.constant dense<0xFF800000> : vector<4xf32>
    %73 = vector.multi_reduction <maximumf>, %72, %cst_19 [1] : vector<4x4xf32> to vector<4xf32>
    %74 = vector.shape_cast %73 : vector<4xf32> to vector<4x1xf32>
    %75 = vector.broadcast %74 : vector<4x1xf32> to vector<4x4xf32>
    %76 = arith.subf %72, %75 : vector<4x4xf32>
    %77 = math.exp %76 : vector<4x4xf32>
    %cst_20 = arith.constant dense<0.000000e+00> : vector<4xf32>
    %78 = vector.multi_reduction <add>, %77, %cst_20 [1] : vector<4x4xf32> to vector<4xf32>
    %79 = vector.shape_cast %78 : vector<4xf32> to vector<4x1xf32>
    %80 = tpu.reciprocal %79 {approx = true} : vector<4x1xf32> -> vector<4x1xf32>
    %81 = vector.broadcast %80 : vector<4x1xf32> to vector<4x4xf32>
    %82 = arith.mulf %77, %81 : vector<4x4xf32>
    %83 = arith.truncf %50 : vector<256x4xf32> to vector<256x4xbf16>
    %84 = arith.truncf %82 : vector<4x4xf32> to vector<4x4xbf16>
    %cst_21 = arith.constant dense<0.000000e+00> : vector<256x4xf32>
    %85 = tpu.matmul %83, %84, %cst_21 {dimension_numbers = #tpu.dot_dimension_numbers<[1], [1], [0], [0], [0, 0, 1, 0], [], []>} : vector<256x4xbf16>, vector<4x4xbf16>, vector<256x4xf32> -> vector<256x4xf32>
    %86 = arith.truncf %85 : vector<256x4xf32> to vector<256x4xbf16>
    %c4 = arith.constant 4 : index
    %c0_22 = arith.constant 0 : index
    %87 = vector.load %arg3[%c4, %c0_22] : memref<8x8xbf16, #tpu.memory_space<vmem>>, vector<4x8xbf16>
    %cst_23 = arith.constant dense<0.000000e+00> : vector<256x8xf32>
    %88 = tpu.matmul %86, %87, %cst_23 {dimension_numbers = #tpu.dot_dimension_numbers<[1], [0], [0], [1], [0, 0, 1, 1], [], []>} : vector<256x4xbf16>, vector<4x8xbf16>, vector<256x8xf32> -> vector<256x8xf32>
    %89 = arith.addf %47, %88 : vector<256x8xf32>
    %c0_24 = arith.constant 0 : index
    %c0_25 = arith.constant 0 : index
    %90 = vector.load %arg4[%c0_24, %c0_25] : memref<1x8xf32, #tpu.memory_space<vmem>>, vector<1x8xf32>
    %91 = vector.broadcast %90 : vector<1x8xf32> to vector<256x8xf32>
    %92 = arith.addf %89, %91 : vector<256x8xf32>
    %c0_26 = arith.constant 0 : index
    %c0_27 = arith.constant 0 : index
    %c0_28 = arith.constant 0 : index
    %93 = vector.load %arg2[%c0_26, %c0_27, %c0_28] : memref<1x256x8xf32, #tpu.memory_space<vmem>>, vector<1x256x8xf32>
    %94 = vector.shape_cast %93 : vector<1x256x8xf32> to vector<256x8xf32>
    %95 = arith.addf %92, %94 : vector<256x8xf32>
    %c0_29 = arith.constant 0 : index
    %c0_30 = arith.constant 0 : index
    %c0_31 = arith.constant 0 : index
    %96 = vector.load %arg6[%c0_29, %c0_30, %c0_31] : memref<1x256x8xf32, #tpu.memory_space<vmem>>, vector<1x256x8xf32>
    %97 = vector.shape_cast %96 : vector<1x256x8xf32> to vector<256x8xf32>
    %98 = vector.shape_cast %95 : vector<256x8xf32> to vector<1x256x8xf32>
    tpu.vector_store %arg6[%c0_29, %c0_30, %c0_31], %98 {strides = array<i32>} : memref<1x256x8xf32, #tpu.memory_space<vmem>>, vector<1x256x8xf32>,
    return
  }
  func.func @transform_0(%arg0: i32) -> (i32, i32, i32) {
    %c0_i32 = arith.constant 0 : i32
    %c0_i32_0 = arith.constant 0 : i32
    %c0_i32_1 = arith.constant 0 : i32
    return %arg0, %c0_i32, %c0_i32_0 : i32, i32, i32
  }
  func.func @transform_1(%arg0: i32) -> (i32, i32, i32) {
    %c0_i32 = arith.constant 0 : i32
    %c0_i32_0 = arith.constant 0 : i32
    %c0_i32_1 = arith.constant 0 : i32
    return %arg0, %c0_i32, %c0_i32_0 : i32, i32, i32
  }
  func.func @transform_2(%arg0: i32) -> (i32, i32) {
    %c0_i32 = arith.constant 0 : i32
    %c0_i32_0 = arith.constant 0 : i32
    %c0_i32_1 = arith.constant 0 : i32
    return %c0_i32, %c0_i32_0 : i32, i32
  }
  func.func @transform_3(%arg0: i32) -> (i32, i32) {
    %c0_i32 = arith.constant 0 : i32
    %c0_i32_0 = arith.constant 0 : i32
    %c0_i32_1 = arith.constant 0 : i32
    return %c0_i32, %c0_i32_0 : i32, i32
  }
  func.func @transform_4(%arg0: i32) -> i32 {
    %c0_i32 = arith.constant 0 : i32
    %c0_i32_0 = arith.constant 0 : i32
    return %c0_i32 : i32
  }
  func.func @transform_5(%arg0: i32) -> (i32, i32, i32) {
    %c0_i32 = arith.constant 0 : i32
    %c0_i32_0 = arith.constant 0 : i32
    %c0_i32_1 = arith.constant 0 : i32
    return %arg0, %c0_i32, %c0_i32_0 : i32, i32, i32
  }
}

module attributes {stable_mosaic.version = 11 : i64} {
  func.func @_ln_matmul_kernel(%arg0: i32, %arg1: memref<256x8xf32, #tpu.memory_space<vmem>>, %arg2: memref<1x8xf32, #tpu.memory_space<vmem>>, %arg3: memref<1x8xf32, #tpu.memory_space<vmem>>, %arg4: memref<8x32xbf16, #tpu.memory_space<vmem>>, %arg5: memref<1x32xf32, #tpu.memory_space<vmem>>, %arg6: memref<256x32xf32, #tpu.memory_space<vmem>>) attributes {dimension_semantics = [#tpu.dimension_semantics<parallel>], iteration_bounds = array<i64: 2>, scalar_prefetch = 0 : i64, scratch_operands = 0 : i64, tpu.core_type = #tpu.core_type<tc>, window_params = [{transform_indices = @transform_0, window_bounds = array<i64: 256, 8>}, {pipeline_mode = #tpu.pipeline_mode<synchronous>, transform_indices = @transform_1, window_bounds = array<i64: 1, 8>}, {pipeline_mode = #tpu.pipeline_mode<synchronous>, transform_indices = @transform_2, window_bounds = array<i64: 1, 8>}, {pipeline_mode = #tpu.pipeline_mode<synchronous>, transform_indices = @transform_3, window_bounds = array<i64: 8, 32>}, {pipeline_mode = #tpu.pipeline_mode<synchronous>, transform_indices = @transform_4, window_bounds = array<i64: 1, 32>}, {transform_indices = @transform_5, window_bounds = array<i64: 256, 32>}]} {
    %c0 = arith.constant 0 : index
    %c0_0 = arith.constant 0 : index
    %0 = vector.load %arg1[%c0, %c0_0] : memref<256x8xf32, #tpu.memory_space<vmem>>, vector<256x8xf32>
    %cst = arith.constant dense<0.000000e+00> : vector<256xf32>
    %1 = vector.multi_reduction <add>, %0, %cst [1] : vector<256x8xf32> to vector<256xf32>
    %2 = vector.shape_cast %1 : vector<256xf32> to vector<256x1xf32>
    %cst_1 = arith.constant 8.000000e+00 : f32
    %3 = vector.broadcast %cst_1 : f32 to vector<256x1xf32>
    %4 = arith.divf %2, %3 : vector<256x1xf32>
    %5 = vector.broadcast %4 : vector<256x1xf32> to vector<256x8xf32>
    %6 = arith.subf %0, %5 : vector<256x8xf32>
    %7 = arith.mulf %6, %6 : vector<256x8xf32>
    %cst_2 = arith.constant dense<0.000000e+00> : vector<256xf32>
    %8 = vector.multi_reduction <add>, %7, %cst_2 [1] : vector<256x8xf32> to vector<256xf32>
    %9 = vector.shape_cast %8 : vector<256xf32> to vector<256x1xf32>
    %cst_3 = arith.constant 8.000000e+00 : f32
    %10 = vector.broadcast %cst_3 : f32 to vector<256x1xf32>
    %11 = arith.divf %9, %10 : vector<256x1xf32>
    %12 = vector.broadcast %4 : vector<256x1xf32> to vector<256x8xf32>
    %13 = arith.subf %0, %12 : vector<256x8xf32>
    %cst_4 = arith.constant 9.99999974E-6 : f32
    %14 = vector.broadcast %cst_4 : f32 to vector<256x1xf32>
    %15 = arith.addf %11, %14 : vector<256x1xf32>
    %16 = math.rsqrt %15 : vector<256x1xf32>
    %17 = vector.broadcast %16 : vector<256x1xf32> to vector<256x8xf32>
    %18 = arith.mulf %13, %17 : vector<256x8xf32>
    %c0_5 = arith.constant 0 : index
    %c0_6 = arith.constant 0 : index
    %19 = vector.load %arg2[%c0_5, %c0_6] : memref<1x8xf32, #tpu.memory_space<vmem>>, vector<1x8xf32>
    %20 = vector.broadcast %19 : vector<1x8xf32> to vector<256x8xf32>
    %21 = arith.mulf %18, %20 : vector<256x8xf32>
    %c0_7 = arith.constant 0 : index
    %c0_8 = arith.constant 0 : index
    %22 = vector.load %arg3[%c0_7, %c0_8] : memref<1x8xf32, #tpu.memory_space<vmem>>, vector<1x8xf32>
    %23 = vector.broadcast %22 : vector<1x8xf32> to vector<256x8xf32>
    %24 = arith.addf %21, %23 : vector<256x8xf32>
    %25 = arith.truncf %24 : vector<256x8xf32> to vector<256x8xbf16>
    %c0_9 = arith.constant 0 : index
    %c0_10 = arith.constant 0 : index
    %26 = vector.load %arg4[%c0_9, %c0_10] : memref<8x32xbf16, #tpu.memory_space<vmem>>, vector<8x32xbf16>
    %cst_11 = arith.constant dense<0.000000e+00> : vector<256x32xf32>
    %27 = tpu.matmul %25, %26, %cst_11 {dimension_numbers = #tpu.dot_dimension_numbers<[1], [0], [0], [1], [0, 0, 1, 1], [], []>} : vector<256x8xbf16>, vector<8x32xbf16>, vector<256x32xf32> -> vector<256x32xf32>
    %c0_12 = arith.constant 0 : index
    %c0_13 = arith.constant 0 : index
    %28 = vector.load %arg5[%c0_12, %c0_13] : memref<1x32xf32, #tpu.memory_space<vmem>>, vector<1x32xf32>
    %29 = vector.broadcast %28 : vector<1x32xf32> to vector<256x32xf32>
    %30 = arith.addf %27, %29 : vector<256x32xf32>
    %c0_14 = arith.constant 0 : index
    %c0_15 = arith.constant 0 : index
    %31 = vector.load %arg6[%c0_14, %c0_15] : memref<256x32xf32, #tpu.memory_space<vmem>>, vector<256x32xf32>
    tpu.vector_store %arg6[%c0_14, %c0_15], %30 {strides = array<i32>} : memref<256x32xf32, #tpu.memory_space<vmem>>, vector<256x32xf32>,
    return
  }
  func.func @transform_0(%arg0: i32) -> (i32, i32) {
    %c0_i32 = arith.constant 0 : i32
    %c0_i32_0 = arith.constant 0 : i32
    return %arg0, %c0_i32 : i32, i32
  }
  func.func @transform_1(%arg0: i32) -> (i32, i32) {
    %c0_i32 = arith.constant 0 : i32
    %c0_i32_0 = arith.constant 0 : i32
    %c0_i32_1 = arith.constant 0 : i32
    return %c0_i32, %c0_i32_0 : i32, i32
  }
  func.func @transform_2(%arg0: i32) -> (i32, i32) {
    %c0_i32 = arith.constant 0 : i32
    %c0_i32_0 = arith.constant 0 : i32
    %c0_i32_1 = arith.constant 0 : i32
    return %c0_i32, %c0_i32_0 : i32, i32
  }
  func.func @transform_3(%arg0: i32) -> (i32, i32) {
    %c0_i32 = arith.constant 0 : i32
    %c0_i32_0 = arith.constant 0 : i32
    %c0_i32_1 = arith.constant 0 : i32
    return %c0_i32, %c0_i32_0 : i32, i32
  }
  func.func @transform_4(%arg0: i32) -> (i32, i32) {
    %c0_i32 = arith.constant 0 : i32
    %c0_i32_0 = arith.constant 0 : i32
    %c0_i32_1 = arith.constant 0 : i32
    return %c0_i32, %c0_i32_0 : i32, i32
  }
  func.func @transform_5(%arg0: i32) -> (i32, i32) {
    %c0_i32 = arith.constant 0 : i32
    %c0_i32_0 = arith.constant 0 : i32
    return %arg0, %c0_i32 : i32, i32
  }
}

module attributes {stable_mosaic.version = 11 : i64} {
  func.func @_dwconv3x3_kernel(%arg0: i32, %arg1: memref<1x18x18x32xf32, #tpu.memory_space<vmem>>, %arg2: memref<3x3x1x32xf32, #tpu.memory_space<vmem>>, %arg3: memref<1x32xf32, #tpu.memory_space<vmem>>, %arg4: memref<1x16x16x32xf32, #tpu.memory_space<vmem>>) attributes {dimension_semantics = [#tpu.dimension_semantics<parallel>], iteration_bounds = array<i64: 2>, scalar_prefetch = 0 : i64, scratch_operands = 0 : i64, tpu.core_type = #tpu.core_type<tc>, window_params = [{transform_indices = @transform_0, window_bounds = array<i64: 1, 18, 18, 32>}, {pipeline_mode = #tpu.pipeline_mode<synchronous>, transform_indices = @transform_1, window_bounds = array<i64: 3, 3, 1, 32>}, {pipeline_mode = #tpu.pipeline_mode<synchronous>, transform_indices = @transform_2, window_bounds = array<i64: 1, 32>}, {transform_indices = @transform_3, window_bounds = array<i64: 1, 16, 16, 32>}]} {
    %cst = arith.constant 0.000000e+00 : f32
    %0 = vector.broadcast %cst : f32 to vector<16x16x32xf32>
    %c0 = arith.constant 0 : index
    %c0_0 = arith.constant 0 : index
    %c0_1 = arith.constant 0 : index
    %c0_2 = arith.constant 0 : index
    %1 = vector.load %arg1[%c0, %c0_0, %c0_1, %c0_2] : memref<1x18x18x32xf32, #tpu.memory_space<vmem>>, vector<1x16x16x32xf32>
    %2 = vector.shape_cast %1 : vector<1x16x16x32xf32> to vector<16x16x32xf32>
    %c0_3 = arith.constant 0 : index
    %c0_4 = arith.constant 0 : index
    %c0_5 = arith.constant 0 : index
    %c0_6 = arith.constant 0 : index
    %3 = vector.load %arg2[%c0_3, %c0_4, %c0_5, %c0_6] : memref<3x3x1x32xf32, #tpu.memory_space<vmem>>, vector<1x1x1x32xf32>
    %4 = vector.shape_cast %3 : vector<1x1x1x32xf32> to vector<1x32xf32>
    %5 = vector.shape_cast %4 : vector<1x32xf32> to vector<1x1x32xf32>
    %6 = vector.broadcast %5 : vector<1x1x32xf32> to vector<16x16x32xf32>
    %7 = arith.mulf %2, %6 : vector<16x16x32xf32>
    %8 = arith.addf %0, %7 : vector<16x16x32xf32>
    %c0_7 = arith.constant 0 : index
    %c0_8 = arith.constant 0 : index
    %c1 = arith.constant 1 : index
    %c0_9 = arith.constant 0 : index
    %9 = vector.load %arg1[%c0_7, %c0_8, %c1, %c0_9] : memref<1x18x18x32xf32, #tpu.memory_space<vmem>>, vector<1x16x16x32xf32>
    %10 = vector.shape_cast %9 : vector<1x16x16x32xf32> to vector<16x16x32xf32>
    %c0_10 = arith.constant 0 : index
    %c1_11 = arith.constant 1 : index
    %c0_12 = arith.constant 0 : index
    %c0_13 = arith.constant 0 : index
    %11 = vector.load %arg2[%c0_10, %c1_11, %c0_12, %c0_13] : memref<3x3x1x32xf32, #tpu.memory_space<vmem>>, vector<1x1x1x32xf32>
    %12 = vector.shape_cast %11 : vector<1x1x1x32xf32> to vector<1x32xf32>
    %13 = vector.shape_cast %12 : vector<1x32xf32> to vector<1x1x32xf32>
    %14 = vector.broadcast %13 : vector<1x1x32xf32> to vector<16x16x32xf32>
    %15 = arith.mulf %10, %14 : vector<16x16x32xf32>
    %16 = arith.addf %8, %15 : vector<16x16x32xf32>
    %c0_14 = arith.constant 0 : index
    %c0_15 = arith.constant 0 : index
    %c2 = arith.constant 2 : index
    %c0_16 = arith.constant 0 : index
    %17 = vector.load %arg1[%c0_14, %c0_15, %c2, %c0_16] : memref<1x18x18x32xf32, #tpu.memory_space<vmem>>, vector<1x16x16x32xf32>
    %18 = vector.shape_cast %17 : vector<1x16x16x32xf32> to vector<16x16x32xf32>
    %c0_17 = arith.constant 0 : index
    %c2_18 = arith.constant 2 : index
    %c0_19 = arith.constant 0 : index
    %c0_20 = arith.constant 0 : index
    %19 = vector.load %arg2[%c0_17, %c2_18, %c0_19, %c0_20] : memref<3x3x1x32xf32, #tpu.memory_space<vmem>>, vector<1x1x1x32xf32>
    %20 = vector.shape_cast %19 : vector<1x1x1x32xf32> to vector<1x32xf32>
    %21 = vector.shape_cast %20 : vector<1x32xf32> to vector<1x1x32xf32>
    %22 = vector.broadcast %21 : vector<1x1x32xf32> to vector<16x16x32xf32>
    %23 = arith.mulf %18, %22 : vector<16x16x32xf32>
    %24 = arith.addf %16, %23 : vector<16x16x32xf32>
    %c0_21 = arith.constant 0 : index
    %c1_22 = arith.constant 1 : index
    %c0_23 = arith.constant 0 : index
    %c0_24 = arith.constant 0 : index
    %25 = vector.load %arg1[%c0_21, %c1_22, %c0_23, %c0_24] : memref<1x18x18x32xf32, #tpu.memory_space<vmem>>, vector<1x16x16x32xf32>
    %26 = vector.shape_cast %25 : vector<1x16x16x32xf32> to vector<16x16x32xf32>
    %c1_25 = arith.constant 1 : index
    %c0_26 = arith.constant 0 : index
    %c0_27 = arith.constant 0 : index
    %c0_28 = arith.constant 0 : index
    %27 = vector.load %arg2[%c1_25, %c0_26, %c0_27, %c0_28] : memref<3x3x1x32xf32, #tpu.memory_space<vmem>>, vector<1x1x1x32xf32>
    %28 = vector.shape_cast %27 : vector<1x1x1x32xf32> to vector<1x32xf32>
    %29 = vector.shape_cast %28 : vector<1x32xf32> to vector<1x1x32xf32>
    %30 = vector.broadcast %29 : vector<1x1x32xf32> to vector<16x16x32xf32>
    %31 = arith.mulf %26, %30 : vector<16x16x32xf32>
    %32 = arith.addf %24, %31 : vector<16x16x32xf32>
    %c0_29 = arith.constant 0 : index
    %c1_30 = arith.constant 1 : index
    %c1_31 = arith.constant 1 : index
    %c0_32 = arith.constant 0 : index
    %33 = vector.load %arg1[%c0_29, %c1_30, %c1_31, %c0_32] : memref<1x18x18x32xf32, #tpu.memory_space<vmem>>, vector<1x16x16x32xf32>
    %34 = vector.shape_cast %33 : vector<1x16x16x32xf32> to vector<16x16x32xf32>
    %c1_33 = arith.constant 1 : index
    %c1_34 = arith.constant 1 : index
    %c0_35 = arith.constant 0 : index
    %c0_36 = arith.constant 0 : index
    %35 = vector.load %arg2[%c1_33, %c1_34, %c0_35, %c0_36] : memref<3x3x1x32xf32, #tpu.memory_space<vmem>>, vector<1x1x1x32xf32>
    %36 = vector.shape_cast %35 : vector<1x1x1x32xf32> to vector<1x32xf32>
    %37 = vector.shape_cast %36 : vector<1x32xf32> to vector<1x1x32xf32>
    %38 = vector.broadcast %37 : vector<1x1x32xf32> to vector<16x16x32xf32>
    %39 = arith.mulf %34, %38 : vector<16x16x32xf32>
    %40 = arith.addf %32, %39 : vector<16x16x32xf32>
    %c0_37 = arith.constant 0 : index
    %c1_38 = arith.constant 1 : index
    %c2_39 = arith.constant 2 : index
    %c0_40 = arith.constant 0 : index
    %41 = vector.load %arg1[%c0_37, %c1_38, %c2_39, %c0_40] : memref<1x18x18x32xf32, #tpu.memory_space<vmem>>, vector<1x16x16x32xf32>
    %42 = vector.shape_cast %41 : vector<1x16x16x32xf32> to vector<16x16x32xf32>
    %c1_41 = arith.constant 1 : index
    %c2_42 = arith.constant 2 : index
    %c0_43 = arith.constant 0 : index
    %c0_44 = arith.constant 0 : index
    %43 = vector.load %arg2[%c1_41, %c2_42, %c0_43, %c0_44] : memref<3x3x1x32xf32, #tpu.memory_space<vmem>>, vector<1x1x1x32xf32>
    %44 = vector.shape_cast %43 : vector<1x1x1x32xf32> to vector<1x32xf32>
    %45 = vector.shape_cast %44 : vector<1x32xf32> to vector<1x1x32xf32>
    %46 = vector.broadcast %45 : vector<1x1x32xf32> to vector<16x16x32xf32>
    %47 = arith.mulf %42, %46 : vector<16x16x32xf32>
    %48 = arith.addf %40, %47 : vector<16x16x32xf32>
    %c0_45 = arith.constant 0 : index
    %c2_46 = arith.constant 2 : index
    %c0_47 = arith.constant 0 : index
    %c0_48 = arith.constant 0 : index
    %49 = vector.load %arg1[%c0_45, %c2_46, %c0_47, %c0_48] : memref<1x18x18x32xf32, #tpu.memory_space<vmem>>, vector<1x16x16x32xf32>
    %50 = vector.shape_cast %49 : vector<1x16x16x32xf32> to vector<16x16x32xf32>
    %c2_49 = arith.constant 2 : index
    %c0_50 = arith.constant 0 : index
    %c0_51 = arith.constant 0 : index
    %c0_52 = arith.constant 0 : index
    %51 = vector.load %arg2[%c2_49, %c0_50, %c0_51, %c0_52] : memref<3x3x1x32xf32, #tpu.memory_space<vmem>>, vector<1x1x1x32xf32>
    %52 = vector.shape_cast %51 : vector<1x1x1x32xf32> to vector<1x32xf32>
    %53 = vector.shape_cast %52 : vector<1x32xf32> to vector<1x1x32xf32>
    %54 = vector.broadcast %53 : vector<1x1x32xf32> to vector<16x16x32xf32>
    %55 = arith.mulf %50, %54 : vector<16x16x32xf32>
    %56 = arith.addf %48, %55 : vector<16x16x32xf32>
    %c0_53 = arith.constant 0 : index
    %c2_54 = arith.constant 2 : index
    %c1_55 = arith.constant 1 : index
    %c0_56 = arith.constant 0 : index
    %57 = vector.load %arg1[%c0_53, %c2_54, %c1_55, %c0_56] : memref<1x18x18x32xf32, #tpu.memory_space<vmem>>, vector<1x16x16x32xf32>
    %58 = vector.shape_cast %57 : vector<1x16x16x32xf32> to vector<16x16x32xf32>
    %c2_57 = arith.constant 2 : index
    %c1_58 = arith.constant 1 : index
    %c0_59 = arith.constant 0 : index
    %c0_60 = arith.constant 0 : index
    %59 = vector.load %arg2[%c2_57, %c1_58, %c0_59, %c0_60] : memref<3x3x1x32xf32, #tpu.memory_space<vmem>>, vector<1x1x1x32xf32>
    %60 = vector.shape_cast %59 : vector<1x1x1x32xf32> to vector<1x32xf32>
    %61 = vector.shape_cast %60 : vector<1x32xf32> to vector<1x1x32xf32>
    %62 = vector.broadcast %61 : vector<1x1x32xf32> to vector<16x16x32xf32>
    %63 = arith.mulf %58, %62 : vector<16x16x32xf32>
    %64 = arith.addf %56, %63 : vector<16x16x32xf32>
    %c0_61 = arith.constant 0 : index
    %c2_62 = arith.constant 2 : index
    %c2_63 = arith.constant 2 : index
    %c0_64 = arith.constant 0 : index
    %65 = vector.load %arg1[%c0_61, %c2_62, %c2_63, %c0_64] : memref<1x18x18x32xf32, #tpu.memory_space<vmem>>, vector<1x16x16x32xf32>
    %66 = vector.shape_cast %65 : vector<1x16x16x32xf32> to vector<16x16x32xf32>
    %c2_65 = arith.constant 2 : index
    %c2_66 = arith.constant 2 : index
    %c0_67 = arith.constant 0 : index
    %c0_68 = arith.constant 0 : index
    %67 = vector.load %arg2[%c2_65, %c2_66, %c0_67, %c0_68] : memref<3x3x1x32xf32, #tpu.memory_space<vmem>>, vector<1x1x1x32xf32>
    %68 = vector.shape_cast %67 : vector<1x1x1x32xf32> to vector<1x32xf32>
    %69 = vector.shape_cast %68 : vector<1x32xf32> to vector<1x1x32xf32>
    %70 = vector.broadcast %69 : vector<1x1x32xf32> to vector<16x16x32xf32>
    %71 = arith.mulf %66, %70 : vector<16x16x32xf32>
    %72 = arith.addf %64, %71 : vector<16x16x32xf32>
    %c0_69 = arith.constant 0 : index
    %c0_70 = arith.constant 0 : index
    %73 = vector.load %arg3[%c0_69, %c0_70] : memref<1x32xf32, #tpu.memory_space<vmem>>, vector<1x32xf32>
    %74 = vector.shape_cast %73 : vector<1x32xf32> to vector<1x1x32xf32>
    %75 = vector.broadcast %74 : vector<1x1x32xf32> to vector<16x16x32xf32>
    %76 = arith.addf %72, %75 : vector<16x16x32xf32>
    %c0_71 = arith.constant 0 : index
    %c0_72 = arith.constant 0 : index
    %c0_73 = arith.constant 0 : index
    %c0_74 = arith.constant 0 : index
    %77 = vector.load %arg4[%c0_71, %c0_72, %c0_73, %c0_74] : memref<1x16x16x32xf32, #tpu.memory_space<vmem>>, vector<1x16x16x32xf32>
    %78 = vector.shape_cast %77 : vector<1x16x16x32xf32> to vector<16x16x32xf32>
    %79 = vector.shape_cast %76 : vector<16x16x32xf32> to vector<1x16x16x32xf32>
    tpu.vector_store %arg4[%c0_71, %c0_72, %c0_73, %c0_74], %79 {strides = array<i32>} : memref<1x16x16x32xf32, #tpu.memory_space<vmem>>, vector<1x16x16x32xf32>,
    return
  }
  func.func @transform_0(%arg0: i32) -> (i32, i32, i32, i32) {
    %c0_i32 = arith.constant 0 : i32
    %c0_i32_0 = arith.constant 0 : i32
    %c0_i32_1 = arith.constant 0 : i32
    %c0_i32_2 = arith.constant 0 : i32
    return %arg0, %c0_i32, %c0_i32_0, %c0_i32_1 : i32, i32, i32, i32
  }
  func.func @transform_1(%arg0: i32) -> (i32, i32, i32, i32) {
    %c0_i32 = arith.constant 0 : i32
    %c0_i32_0 = arith.constant 0 : i32
    %c0_i32_1 = arith.constant 0 : i32
    %c0_i32_2 = arith.constant 0 : i32
    %c0_i32_3 = arith.constant 0 : i32
    return %c0_i32, %c0_i32_0, %c0_i32_1, %c0_i32_2 : i32, i32, i32, i32
  }
  func.func @transform_2(%arg0: i32) -> (i32, i32) {
    %c0_i32 = arith.constant 0 : i32
    %c0_i32_0 = arith.constant 0 : i32
    %c0_i32_1 = arith.constant 0 : i32
    return %c0_i32, %c0_i32_0 : i32, i32
  }
  func.func @transform_3(%arg0: i32) -> (i32, i32, i32, i32) {
    %c0_i32 = arith.constant 0 : i32
    %c0_i32_0 = arith.constant 0 : i32
    %c0_i32_1 = arith.constant 0 : i32
    %c0_i32_2 = arith.constant 0 : i32
    return %arg0, %c0_i32, %c0_i32_0, %c0_i32_1 : i32, i32, i32, i32
  }
}

module attributes {stable_mosaic.version = 11 : i64} {
  func.func @_gelu_proj_kernel(%arg0: i32, %arg1: memref<256x32xf32, #tpu.memory_space<vmem>>, %arg2: memref<256x8xf32, #tpu.memory_space<vmem>>, %arg3: memref<16x8xbf16, #tpu.memory_space<vmem>>, %arg4: memref<1x8xf32, #tpu.memory_space<vmem>>, %arg5: memref<256x8xf32, #tpu.memory_space<vmem>>) attributes {dimension_semantics = [#tpu.dimension_semantics<parallel>], iteration_bounds = array<i64: 2>, scalar_prefetch = 0 : i64, scratch_operands = 0 : i64, tpu.core_type = #tpu.core_type<tc>, window_params = [{transform_indices = @transform_0, window_bounds = array<i64: 256, 32>}, {transform_indices = @transform_1, window_bounds = array<i64: 256, 8>}, {pipeline_mode = #tpu.pipeline_mode<synchronous>, transform_indices = @transform_2, window_bounds = array<i64: 16, 8>}, {pipeline_mode = #tpu.pipeline_mode<synchronous>, transform_indices = @transform_3, window_bounds = array<i64: 1, 8>}, {transform_indices = @transform_4, window_bounds = array<i64: 256, 8>}]} {
    %c0 = arith.constant 0 : index
    %c0_0 = arith.constant 0 : index
    %0 = vector.load %arg1[%c0, %c0_0] : memref<256x32xf32, #tpu.memory_space<vmem>>, vector<256x32xf32>
    %1 = vector.extract_strided_slice %0 {offsets = [0, 0], sizes = [256, 16], strides = [1, 1]} : vector<256x32xf32> to vector<256x16xf32>
    %2 = vector.extract_strided_slice %0 {offsets = [0, 16], sizes = [256, 16], strides = [1, 1]} : vector<256x32xf32> to vector<256x16xf32>
    %cst = arith.constant 5.000000e-01 : f32
    %3 = vector.broadcast %cst : f32 to vector<256x16xf32>
    %4 = arith.mulf %3, %1 : vector<256x16xf32>
    %cst_1 = arith.constant 0.707106769 : f32
    %5 = vector.broadcast %cst_1 : f32 to vector<256x16xf32>
    %6 = arith.mulf %1, %5 : vector<256x16xf32>
    %7 = math.erf %6 : vector<256x16xf32>
    %cst_2 = arith.constant 1.000000e+00 : f32
    %8 = vector.broadcast %cst_2 : f32 to vector<256x16xf32>
    %9 = arith.addf %8, %7 : vector<256x16xf32>
    %10 = arith.mulf %4, %9 : vector<256x16xf32>
    %11 = arith.mulf %10, %2 : vector<256x16xf32>
    %12 = arith.truncf %11 : vector<256x16xf32> to vector<256x16xbf16>
    %c0_3 = arith.constant 0 : index
    %c0_4 = arith.constant 0 : index
    %13 = vector.load %arg3[%c0_3, %c0_4] : memref<16x8xbf16, #tpu.memory_space<vmem>>, vector<16x8xbf16>
    %cst_5 = arith.constant dense<0.000000e+00> : vector<256x8xf32>
    %14 = tpu.matmul %12, %13, %cst_5 {dimension_numbers = #tpu.dot_dimension_numbers<[1], [0], [0], [1], [0, 0, 1, 1], [], []>} : vector<256x16xbf16>, vector<16x8xbf16>, vector<256x8xf32> -> vector<256x8xf32>
    %c0_6 = arith.constant 0 : index
    %c0_7 = arith.constant 0 : index
    %15 = vector.load %arg4[%c0_6, %c0_7] : memref<1x8xf32, #tpu.memory_space<vmem>>, vector<1x8xf32>
    %16 = vector.broadcast %15 : vector<1x8xf32> to vector<256x8xf32>
    %17 = arith.addf %14, %16 : vector<256x8xf32>
    %c0_8 = arith.constant 0 : index
    %c0_9 = arith.constant 0 : index
    %18 = vector.load %arg2[%c0_8, %c0_9] : memref<256x8xf32, #tpu.memory_space<vmem>>, vector<256x8xf32>
    %19 = arith.addf %17, %18 : vector<256x8xf32>
    %c0_10 = arith.constant 0 : index
    %c0_11 = arith.constant 0 : index
    %20 = vector.load %arg5[%c0_10, %c0_11] : memref<256x8xf32, #tpu.memory_space<vmem>>, vector<256x8xf32>
    tpu.vector_store %arg5[%c0_10, %c0_11], %19 {strides = array<i32>} : memref<256x8xf32, #tpu.memory_space<vmem>>, vector<256x8xf32>,
    return
  }
  func.func @transform_0(%arg0: i32) -> (i32, i32) {
    %c0_i32 = arith.constant 0 : i32
    %c0_i32_0 = arith.constant 0 : i32
    return %arg0, %c0_i32 : i32, i32
  }
  func.func @transform_1(%arg0: i32) -> (i32, i32) {
    %c0_i32 = arith.constant 0 : i32
    %c0_i32_0 = arith.constant 0 : i32
    return %arg0, %c0_i32 : i32, i32
  }
  func.func @transform_2(%arg0: i32) -> (i32, i32) {
    %c0_i32 = arith.constant 0 : i32
    %c0_i32_0 = arith.constant 0 : i32
    %c0_i32_1 = arith.constant 0 : i32
    return %c0_i32, %c0_i32_0 : i32, i32
  }
  func.func @transform_3(%arg0: i32) -> (i32, i32) {
    %c0_i32 = arith.constant 0 : i32
    %c0_i32_0 = arith.constant 0 : i32
    %c0_i32_1 = arith.constant 0 : i32
    return %c0_i32, %c0_i32_0 : i32, i32
  }
  func.func @transform_4(%arg0: i32) -> (i32, i32) {
    %c0_i32 = arith.constant 0 : i32
    %c0_i32_0 = arith.constant 0 : i32
    return %arg0, %c0_i32 : i32, i32
  }
}

</mosaic_0001>

<llo_original>
// kernel: _lambda_.6
$region0: #{_lambda_.6}
  #allocation0 [shape = 'u32[]', space=smem, size = 0x4, offset = 0x4, fixed_abs, tag = 'smem constant byte address 0x4 - core index']
  #allocation1 [shape = 'u32[72,128]{1,0:T(1,128)}', space=vmem, size = 0x9000, scoped, tag = 'internal scratch']
  %s0 = inlined_call_operand.vmem [shape: f32[512,8], index: 0, kind: input, shape index: {}]
  %s1 = inlined_call_operand.vmem [shape: f32[1,8], index: 1, kind: input, shape index: {}]
  %s2 = inlined_call_operand.vmem [shape: f32[1,8], index: 2, kind: input, shape index: {}]
  %s3 = inlined_call_operand.vmem [shape: bf16[8,24], index: 3, kind: input, shape index: {}]
  %s4 = inlined_call_operand.vmem [shape: f32[1,24], index: 4, kind: input, shape index: {}]
  %s5 = inlined_call_operand.vmem [shape: f32[512,24], index: 5, kind: output, shape index: {}]
  %s6 = sld [smem:[#allocation0]]
  $region53: #{_lambda_.6} parent=0
    _
  %s8 = ssub.s32 1, %s6
  %s9 = scalar_select 0, %s8, %s6
  loop: start=0, step=1, limit=4
  $region2: #{_lambda_.6} parent=0 // loop_pre_header
    _
  $region3: #{_lambda_.6} parent=0 // loop_header
    %s11 = sphi 0, %s15
    %p12 = scmp.ge.s32.totalorder %s11, 4
    %s21 = sphi 0, %s23
    %s24 = sphi 0, %s21
    %s25 = sphi 0, %s24
    %s41 = sphi 0, %s25
    %s45 = sphi 0, %s45
    %s47 = sphi 0, %s45
    %s48 = sphi 0, %s47
    %s62 = sphi 0, %s48
    %s66 = sphi 0, %s66
    %s68 = sphi 0, %s66
    %s69 = sphi 0, %s68
    %s83 = sphi 0, %s69
    %s87 = sphi 0, %s87
    %s89 = sphi 0, %s87
    %s90 = sphi 0, %s89
    %s104 = sphi 0, %s90
    %s108 = sphi 0, %s108
    %s110 = sphi 0, %s108
    %s111 = sphi 0, %s110
    %s125 = sphi 0, %s111
    %s131 = sphi 0, %s133
    %s134 = sphi 0, %s131
    %s135 = sphi 0, %s134
    %s151 = sphi 0, %s135
  $region4: #{_lambda_.6} parent=0 // loop_header_branch
    %14 = sbr.rel (%p12) target = $region8
  $region5: #{_lambda_.6} parent=0 // loop_body
    %s16 = ssub.s32 %s11, 1
    %s17 = ssub.s32 %s11, 2
    %s18 = sadd.s32 %s11, 1
    %s19 = ssub.s32 %s11, %s18
    %p20 = scmp.eq.s32.totalorder %s19, 0
    %s22 = sadd.s32 %s21, 1
    %s23 = scalar_select %p20, %s21, %s22
    %p26 = pneg %p20
    %p27 = scmp.eq.s32.totalorder %s11, 1
    %p28 = por %p26, %p27
    %p29 = scmp.ne.s32.totalorder %s21, %s24
    %p30 = scmp.eq.s32.totalorder %s11, 0
    %p31 = por %p29, %p30
    %p32 = scmp.ne.s32.totalorder %s21, %s24
    %p33 = scmp.eq.s32.totalorder %s16, 1
    %p34 = por %p32, %p33
    %p35 = scmp.ne.s32.totalorder %s24, %s25
    %p36 = scmp.eq.s32.totalorder %s16, 0
    %p37 = por %p35, %p36
    %p38 = scmp.ne.s32.totalorder %s24, %s25
    %p39 = scmp.eq.s32.totalorder %s17, 1
    %p40 = por %p38, %p39
    %p42 = scmp.ne.s32.totalorder %s25, %s41
    %p43 = scmp.eq.s32.totalorder %s17, 0
    %p44 = por %p42, %p43
    %s46 = sadd.s32 %s45, 1
    %p49 = scmp.eq.s32.totalorder %s11, 1
    %p50 = scmp.ne.s32.totalorder %s45, %s47
    %p51 = scmp.eq.s32.totalorder %s11, 0
    %p52 = por %p50, %p51
    %p53 = scmp.ne.s32.totalorder %s45, %s47
    %p54 = scmp.eq.s32.totalorder %s16, 1
    %p55 = por %p53, %p54
    %p56 = scmp.ne.s32.totalorder %s47, %s48
    %p57 = scmp.eq.s32.totalorder %s16, 0
    %p58 = por %p56, %p57
    %p59 = scmp.ne.s32.totalorder %s47, %s48
    %p60 = scmp.eq.s32.totalorder %s17, 1
    %p61 = por %p59, %p60
    %p63 = scmp.ne.s32.totalorder %s48, %s62
    %p64 = scmp.eq.s32.totalorder %s17, 0
    %p65 = por %p63, %p64
    %s67 = sadd.s32 %s66, 1
    %p70 = scmp.eq.s32.totalorder %s11, 1
    %p71 = scmp.ne.s32.totalorder %s66, %s68
    %p72 = scmp.eq.s32.totalorder %s11, 0
    %p73 = por %p71, %p72
    %p74 = scmp.ne.s32.totalorder %s66, %s68
    %p75 = scmp.eq.s32.totalorder %s16, 1
    %p76 = por %p74, %p75
    %p77 = scmp.ne.s32.totalorder %s68, %s69
    %p78 = scmp.eq.s32.totalorder %s16, 0
    %p79 = por %p77, %p78
    %p80 = scmp.ne.s32.totalorder %s68, %s69
    %p81 = scmp.eq.s32.totalorder %s17, 1
    %p82 = por %p80, %p81
    %p84 = scmp.ne.s32.totalorder %s69, %s83
    %p85 = scmp.eq.s32.totalorder %s17, 0
    %p86 = por %p84, %p85
    %s88 = sadd.s32 %s87, 1
    %p91 = scmp.eq.s32.totalorder %s11, 1
    %p92 = scmp.ne.s32.totalorder %s87, %s89
    %p93 = scmp.eq.s32.totalorder %s11, 0
    %p94 = por %p92, %p93
    %p95 = scmp.ne.s32.totalorder %s87, %s89
    %p96 = scmp.eq.s32.totalorder %s16, 1
    %p97 = por %p95, %p96
    %p98 = scmp.ne.s32.totalorder %s89, %s90
    %p99 = scmp.eq.s32.totalorder %s16, 0
    %p100 = por %p98, %p99
    %p101 = scmp.ne.s32.totalorder %s89, %s90
    %p102 = scmp.eq.s32.totalorder %s17, 1
    %p103 = por %p101, %p102
    %p105 = scmp.ne.s32.totalorder %s90, %s104
    %p106 = scmp.eq.s32.totalorder %s17, 0
    %p107 = por %p105, %p106
    %s109 = sadd.s32 %s108, 1
    %p112 = scmp.eq.s32.totalorder %s11, 1
    %p113 = scmp.ne.s32.totalorder %s108, %s110
    %p114 = scmp.eq.s32.totalorder %s11, 0
    %p115 = por %p113, %p114
    %p116 = scmp.ne.s32.totalorder %s108, %s110
    %p117 = scmp.eq.s32.totalorder %s16, 1
    %p118 = por %p116, %p117
    %p119 = scmp.ne.s32.totalorder %s110, %s111
    %p120 = scmp.eq.s32.totalorder %s16, 0
    %p121 = por %p119, %p120
    %p122 = scmp.ne.s32.totalorder %s110, %s111
    %p123 = scmp.eq.s32.totalorder %s17, 1
    %p124 = por %p122, %p123
    %p126 = scmp.ne.s32.totalorder %s111, %s125
    %p127 = scmp.eq.s32.totalorder %s17, 0
    %p128 = por %p126, %p127
    %s129 = ssub.s32 %s11, %s18
    %p130 = scmp.eq.s32.totalorder %s129, 0
    %s132 = sadd.s32 %s131, 1
    %s133 = scalar_select %p130, %s131, %s132
    %p136 = pneg %p130
    %p137 = scmp.eq.s32.totalorder %s11, 1
    %p138 = por %p136, %p137
    %p139 = scmp.ne.s32.totalorder %s131, %s134
    %p140 = scmp.eq.s32.totalorder %s11, 0
    %p141 = por %p139, %p140
    %p142 = scmp.ne.s32.totalorder %s131, %s134
    %p143 = scmp.eq.s32.totalorder %s16, 1
    %p144 = por %p142, %p143
    %p145 = scmp.ne.s32.totalorder %s134, %s135
    %p146 = scmp.eq.s32.totalorder %s16, 0
    %p147 = por %p145, %p146
    %p148 = scmp.ne.s32.totalorder %s134, %s135
    %p149 = scmp.eq.s32.totalorder %s17, 1
    %p150 = por %p148, %p149
    %p152 = scmp.ne.s32.totalorder %s135, %s151
    %p153 = scmp.eq.s32.totalorder %s17, 0
    %p154 = por %p152, %p153
    %p155 = scmp.le.s32.totalorder 1, %s11
    %p156 = scmp.lt.s32.totalorder %s11, 3
    %p157 = pnand %p155, %p156
    %p158 = pneg %p157
    // Predicated region
    $region9: #{_lambda_.6} parent=5 // pred_check
      _
    $region10: #{_lambda_.6} parent=5 // pred_check_branch
      %160 = sbr.rel (%p157) target = $region12
    $region11: #{_lambda_.6} parent=5 // pred_region
      %s161 = ssub.s32 %s11, 1
      // Predicated region
      $region13: #{_lambda_.6} parent=11 // pred_check
        %p162 = pneg %p58
      $region14: #{_lambda_.6} parent=11 // pred_check_branch
        %164 = sbr.rel (%p162) target = $region16
      $region15: #{_lambda_.6} parent=11 // pred_region
        _
      $region16: #{_lambda_.6} parent=11 // pred_fallthru
        _
      // Predicated region
      $region17: #{_lambda_.6} parent=11 // pred_check
        %p165 = pneg %p79
      $region18: #{_lambda_.6} parent=11 // pred_check_branch
        %167 = sbr.rel (%p165) target = $region20
      $region19: #{_lambda_.6} parent=11 // pred_region
        _
      $region20: #{_lambda_.6} parent=11 // pred_fallthru
        _
      // Predicated region
      $region21: #{_lambda_.6} parent=11 // pred_check
        %p168 = pneg %p100
      $region22: #{_lambda_.6} parent=11 // pred_check_branch
        %170 = sbr.rel (%p168) target = $region24
      $region23: #{_lambda_.6} parent=11 // pred_region
        _
      $region24: #{_lambda_.6} parent=11 // pred_fallthru
        _
      // Predicated region
      $region25: #{_lambda_.6} parent=11 // pred_check
        %p171 = pneg %p121
      $region26: #{_lambda_.6} parent=11 // pred_check_branch
        %173 = sbr.rel (%p171) target = $region28
      $region27: #{_lambda_.6} parent=11 // pred_region
        _
      $region28: #{_lambda_.6} parent=11 // pred_fallthru
        _
    $region12: #{_lambda_.6} parent=5 // pred_fallthru
      _
    %p174 = scmp.lt.s32.totalorder %s11, 2
    // Predicated region
    $region29: #{_lambda_.6} parent=5 // pred_check
      %p175 = pneg %p174
    $region30: #{_lambda_.6} parent=5 // pred_check_branch
      %177 = sbr.rel (%p175) target = $region32
    $region31: #{_lambda_.6} parent=5 // pred_region
      // Predicated region
      $region33: #{_lambda_.6} parent=31 // pred_check
        %p178 = pneg %p31
      $region34: #{_lambda_.6} parent=31 // pred_check_branch
        %180 = sbr.rel (%p178) target = $region36
      $region35: #{_lambda_.6} parent=31 // pred_region
        %s181 = smul.u32 32, %s11
        %p182 = scmp.lt.s32.totalorder %s181, 63
        %s183 = scalar_select %p182, %s181, 63
        %s184 = smul.addr %s183, 8
        %s185 = scalar_lea.vmem %s0, %s184
        %s186 = smul.u32 32, %s11
      $region36: #{_lambda_.6} parent=31 // pred_fallthru
        _
    $region32: #{_lambda_.6} parent=5 // pred_fallthru
      _
    %p187 = scmp.le.s32.totalorder 1, %s11
    %p188 = scmp.lt.s32.totalorder %s11, 3
    %p189 = pnand %p187, %p188
    %p190 = pneg %p189
    // Predicated region
    $region37: #{_lambda_.6} parent=5 // pred_check
      _
    $region38: #{_lambda_.6} parent=5 // pred_check_branch
      %192 = sbr.rel (%p189) target = $region40
    $region39: #{_lambda_.6} parent=5 // pred_region
      %s193 = ssub.s32 %s11, 1
      %s194 = smul.u32 32, %s16
      %p195 = scmp.lt.s32.totalorder %s194, 63
      %s196 = scalar_select %p195, %s194, 63
      %s197 = smul.addr %s196, 8
      %s198 = scalar_lea.vmem %s0, %s197
      %p199 = pneg %p37
      %p200 = pneg %p34
      %p201 = pneg %p58
      %p202 = pneg %p55
      %p203 = pneg %p79
      %p204 = pneg %p76
      %p205 = pneg %p100
      %p206 = pneg %p97
      %p207 = pneg %p121
      %p208 = pneg %p118
      %p209 = pneg %p147
      %p210 = pneg %p144
      %s211 = smul.u32 32, %s16
      %p212 = scmp.lt.s32.totalorder %s211, 63
      %s213 = scalar_select %p212, %s211, 63
      %s214 = smul.addr %s213, 8
      %s215 = scalar_lea.vmem %s5, %s214
      %s216 = smul.u32 32, %s16
      %p217 = scmp.lt.s32.totalorder %s216, 63
      %s218 = scalar_select %p217, %s216, 63
      %s219 = smul.addr %s218, 8
      %s220 = scalar_lea.vmem %s0, %s219
      %s221 = smul.u32 32, %s16
      %s222 = smul.u32 32, %s16
      %p223 = scmp.lt.s32.totalorder %s222, 63
      %s224 = scalar_select %p223, %s222, 63
      %s225 = smul.addr %s224, 8
      %s226 = scalar_lea.vmem %s5, %s225
      %s227 = smul.u32 32, %s16
      %v229 = vld [vmem:[%s220] sm:$0xff]
      %v230 = vld [vmem:[%s220 + $0x8] sm:$0xff]
      %v231 = vld [vmem:[%s220 + $0x10] sm:$0xff]
      %v232 = vld [vmem:[%s220 + $0x18] sm:$0xff]
      %v233 = vld [vmem:[%s220 + $0x20] sm:$0xff]
      %v234 = vld [vmem:[%s220 + $0x28] sm:$0xff]
      %v235 = vld [vmem:[%s220 + $0x30] sm:$0xff]
      %v236 = vld [vmem:[%s220 + $0x38] sm:$0xff]
      %v237 = vld [vmem:[%s220 + $0x40] sm:$0xff]
      %v238 = vld [vmem:[%s220 + $0x48] sm:$0xff]
      %v239 = vld [vmem:[%s220 + $0x50] sm:$0xff]
      %v240 = vld [vmem:[%s220 + $0x58] sm:$0xff]
      %v241 = vld [vmem:[%s220 + $0x60] sm:$0xff]
      %v242 = vld [vmem:[%s220 + $0x68] sm:$0xff]
      %v243 = vld [vmem:[%s220 + $0x70] sm:$0xff]
      %v244 = vld [vmem:[%s220 + $0x78] sm:$0xff]
      %v245 = vld [vmem:[%s220 + $0x80] sm:$0xff]
      %v246 = vld [vmem:[%s220 + $0x88] sm:$0xff]
      %v247 = vld [vmem:[%s220 + $0x90] sm:$0xff]
      %v248 = vld [vmem:[%s220 + $0x98] sm:$0xff]
      %v249 = vld [vmem:[%s220 + $0xa0] sm:$0xff]
      %v250 = vld [vmem:[%s220 + $0xa8] sm:$0xff]
      %v251 = vld [vmem:[%s220 + $0xb0] sm:$0xff]
      %v252 = vld [vmem:[%s220 + $0xb8] sm:$0xff]
      %v253 = vld [vmem:[%s220 + $0xc0] sm:$0xff]
      %v254 = vld [vmem:[%s220 + $0xc8] sm:$0xff]
      %v255 = vld [vmem:[%s220 + $0xd0] sm:$0xff]
      %v256 = vld [vmem:[%s220 + $0xd8] sm:$0xff]
      %v257 = vld [vmem:[%s220 + $0xe0] sm:$0xff]
      %v258 = vld [vmem:[%s220 + $0xe8] sm:$0xff]
      %v259 = vld [vmem:[%s220 + $0xf0] sm:$0xff]
      %v260 = vld [vmem:[%s220 + $0xf8] sm:$0xff]
      %vm261 = vcmask 64512
      %v262 = vsel %vm261, %v229, 0.0
      %263 = vadd.xlane.f32.xlu0 %v262
      %v264 = vpop.xlane.xlu0 %263
      %v265 = vsel %vm261, %v230, 0.0
      %266 = vadd.xlane.f32.xlu0 %v265
      %v267 = vpop.xlane.xlu0 %266
      %v268 = vsel %vm261, %v231, 0.0
      %269 = vadd.xlane.f32.xlu0 %v268
      %v270 = vpop.xlane.xlu0 %269
      %v271 = vsel %vm261, %v232, 0.0
      %272 = vadd.xlane.f32.xlu0 %v271
      %v273 = vpop.xlane.xlu0 %272
      %v274 = vsel %vm261, %v233, 0.0
      %275 = vadd.xlane.f32.xlu0 %v274
      %v276 = vpop.xlane.xlu0 %275
      %v277 = vsel %vm261, %v234, 0.0
      %278 = vadd.xlane.f32.xlu0 %v277
      %v279 = vpop.xlane.xlu0 %278
      %v280 = vsel %vm261, %v235, 0.0
      %281 = vadd.xlane.f32.xlu0 %v280
      %v282 = vpop.xlane.xlu0 %281
      %v283 = vsel %vm261, %v236, 0.0
      %284 = vadd.xlane.f32.xlu0 %v283
      %v285 = vpop.xlane.xlu0 %284
      %v286 = vsel %vm261, %v237, 0.0
      %287 = vadd.xlane.f32.xlu0 %v286
      %v288 = vpop.xlane.xlu0 %287
      %v289 = vsel %vm261, %v238, 0.0
      %290 = vadd.xlane.f32.xlu0 %v289
      %v291 = vpop.xlane.xlu0 %290
      %v292 = vsel %vm261, %v239, 0.0
      %293 = vadd.xlane.f32.xlu0 %v292
      %v294 = vpop.xlane.xlu0 %293
      %v295 = vsel %vm261, %v240, 0.0
      %296 = vadd.xlane.f32.xlu0 %v295
      %v297 = vpop.xlane.xlu0 %296
      %v298 = vsel %vm261, %v241, 0.0
      %299 = vadd.xlane.f32.xlu0 %v298
      %v300 = vpop.xlane.xlu0 %299
      %v301 = vsel %vm261, %v242, 0.0
      %302 = vadd.xlane.f32.xlu0 %v301
      %v303 = vpop.xlane.xlu0 %302
      %v304 = vsel %vm261, %v243, 0.0
      %305 = vadd.xlane.f32.xlu0 %v304
      %v306 = vpop.xlane.xlu0 %305
      %v307 = vsel %vm261, %v244, 0.0
      %308 = vadd.xlane.f32.xlu0 %v307
      %v309 = vpop.xlane.xlu0 %308
      %v310 = vsel %vm261, %v245, 0.0
      %311 = vadd.xlane.f32.xlu0 %v310
      %v312 = vpop.xlane.xlu0 %311
      %v313 = vsel %vm261, %v246, 0.0
      %314 = vadd.xlane.f32.xlu0 %v313
      %v315 = vpop.xlane.xlu0 %314
      %v316 = vsel %vm261, %v247, 0.0
      %317 = vadd.xlane.f32.xlu0 %v316
      %v318 = vpop.xlane.xlu0 %317
      %v319 = vsel %vm261, %v248, 0.0
      %320 = vadd.xlane.f32.xlu0 %v319
      %v321 = vpop.xlane.xlu0 %320
      %v322 = vsel %vm261, %v249, 0.0
      %323 = vadd.xlane.f32.xlu0 %v322
      %v324 = vpop.xlane.xlu0 %323
      %v325 = vsel %vm261, %v250, 0.0
      %326 = vadd.xlane.f32.xlu0 %v325
      %v327 = vpop.xlane.xlu0 %326
      %v328 = vsel %vm261, %v251, 0.0
      %329 = vadd.xlane.f32.xlu0 %v328
      %v330 = vpop.xlane.xlu0 %329
      %v331 = vsel %vm261, %v252, 0.0
      %332 = vadd.xlane.f32.xlu0 %v331
      %v333 = vpop.xlane.xlu0 %332
      %v334 = vsel %vm261, %v253, 0.0
      %335 = vadd.xlane.f32.xlu0 %v334
      %v336 = vpop.xlane.xlu0 %335
      %v337 = vsel %vm261, %v254, 0.0
      %338 = vadd.xlane.f32.xlu0 %v337
      %v339 = vpop.xlane.xlu0 %338
      %v340 = vsel %vm261, %v255, 0.0
      %341 = vadd.xlane.f32.xlu0 %v340
      %v342 = vpop.xlane.xlu0 %341
      %v343 = vsel %vm261, %v256, 0.0
      %344 = vadd.xlane.f32.xlu0 %v343
      %v345 = vpop.xlane.xlu0 %344
      %v346 = vsel %vm261, %v257, 0.0
      %347 = vadd.xlane.f32.xlu0 %v346
      %v348 = vpop.xlane.xlu0 %347
      %v349 = vsel %vm261, %v258, 0.0
      %350 = vadd.xlane.f32.xlu0 %v349
      %v351 = vpop.xlane.xlu0 %350
      %v352 = vsel %vm261, %v259, 0.0
      %353 = vadd.xlane.f32.xlu0 %v352
      %v354 = vpop.xlane.xlu0 %353
      %v355 = vsel %vm261, %v260, 0.0
      %356 = vadd.xlane.f32.xlu0 %v355
      %v357 = vpop.xlane.xlu0 %356
      %v358 = vrcp.pop 8.0
      %v359 = vmul.f32 8.0, %v358
      %v360 = vsub.f32 1.0, %v359
      %v361 = vmul.f32 %v358, %v360
      %v362 = vadd.f32 %v358, %v361
      %vm363 = vweird.f32 %v358
      %v364 = vsel %vm363, %v358, %v362
      %v365 = vmul.f32 %v264, %v364
      %v366 = vmul.f32 %v267, %v364
      %v367 = vmul.f32 %v270, %v364
      %v368 = vmul.f32 %v273, %v364
      %v369 = vmul.f32 %v276, %v364
      %v370 = vmul.f32 %v279, %v364
      %v371 = vmul.f32 %v282, %v364
      %v372 = vmul.f32 %v285, %v364
      %v373 = vmul.f32 %v288, %v364
      %v374 = vmul.f32 %v291, %v364
      %v375 = vmul.f32 %v294, %v364
      %v376 = vmul.f32 %v297, %v364
      %v377 = vmul.f32 %v300, %v364
      %v378 = vmul.f32 %v303, %v364
      %v379 = vmul.f32 %v306, %v364
      %v380 = vmul.f32 %v309, %v364
      %v381 = vmul.f32 %v312, %v364
      %v382 = vmul.f32 %v315, %v364
      %v383 = vmul.f32 %v318, %v364
      %v384 = vmul.f32 %v321, %v364
      %v385 = vmul.f32 %v324, %v364
      %v386 = vmul.f32 %v327, %v364
      %v387 = vmul.f32 %v330, %v364
      %v388 = vmul.f32 %v333, %v364
      %v389 = vmul.f32 %v336, %v364
      %v390 = vmul.f32 %v339, %v364
      %v391 = vmul.f32 %v342, %v364
      %v392 = vmul.f32 %v345, %v364
      %v393 = vmul.f32 %v348, %v364
      %v394 = vmul.f32 %v351, %v364
      %v395 = vmul.f32 %v354, %v364
      %v396 = vmul.f32 %v357, %v364
      %v397 = vsub.f32 %v229, %v365
      %v398 = vsub.f32 %v230, %v366
      %v399 = vsub.f32 %v231, %v367
      %v400 = vsub.f32 %v232, %v368
      %v401 = vsub.f32 %v233, %v369
      %v402 = vsub.f32 %v234, %v370
      %v403 = vsub.f32 %v235, %v371
      %v404 = vsub.f32 %v236, %v372
      %v405 = vsub.f32 %v237, %v373
      %v406 = vsub.f32 %v238, %v374
      %v407 = vsub.f32 %v239, %v375
      %v408 = vsub.f32 %v240, %v376
      %v409 = vsub.f32 %v241, %v377
      %v410 = vsub.f32 %v242, %v378
      %v411 = vsub.f32 %v243, %v379
      %v412 = vsub.f32 %v244, %v380
      %v413 = vsub.f32 %v245, %v381
      %v414 = vsub.f32 %v246, %v382
      %v415 = vsub.f32 %v247, %v383
      %v416 = vsub.f32 %v248, %v384
      %v417 = vsub.f32 %v249, %v385
      %v418 = vsub.f32 %v250, %v386
      %v419 = vsub.f32 %v251, %v387
      %v420 = vsub.f32 %v252, %v388
      %v421 = vsub.f32 %v253, %v389
      %v422 = vsub.f32 %v254, %v390
      %v423 = vsub.f32 %v255, %v391
      %v424 = vsub.f32 %v256, %v392
      %v425 = vsub.f32 %v257, %v393
      %v426 = vsub.f32 %v258, %v394
      %v427 = vsub.f32 %v259, %v395
      %v428 = vsub.f32 %v260, %v396
      %v429 = vmul.f32 %v397, %v397
      %v430 = vmul.f32 %v398, %v398
      %v431 = vmul.f32 %v399, %v399
      %v432 = vmul.f32 %v400, %v400
      %v433 = vmul.f32 %v401, %v401
      %v434 = vmul.f32 %v402, %v402
      %v435 = vmul.f32 %v403, %v403
      %v436 = vmul.f32 %v404, %v404
      %v437 = vmul.f32 %v405, %v405
      %v438 = vmul.f32 %v406, %v406
      %v439 = vmul.f32 %v407, %v407
      %v440 = vmul.f32 %v408, %v408
      %v441 = vmul.f32 %v409, %v409
      %v442 = vmul.f32 %v410, %v410
      %v443 = vmul.f32 %v411, %v411
      %v444 = vmul.f32 %v412, %v412
      %v445 = vmul.f32 %v413, %v413
      %v446 = vmul.f32 %v414, %v414
      %v447 = vmul.f32 %v415, %v415
      %v448 = vmul.f32 %v416, %v416
      %v449 = vmul.f32 %v417, %v417
      %v450 = vmul.f32 %v418, %v418
      %v451 = vmul.f32 %v419, %v419
      %v452 = vmul.f32 %v420, %v420
      %v453 = vmul.f32 %v421, %v421
      %v454 = vmul.f32 %v422, %v422
      %v455 = vmul.f32 %v423, %v423
      %v456 = vmul.f32 %v424, %v424
      %v457 = vmul.f32 %v425, %v425
      %v458 = vmul.f32 %v426, %v426
      %v459 = vmul.f32 %v427, %v427
      %v460 = vmul.f32 %v428, %v428
      %v461 = vsel %vm261, %v429, 0.0
      %462 = vadd.xlane.f32.xlu0 %v461
      %v463 = vpop.xlane.xlu0 %462
      %v464 = vsel %vm261, %v430, 0.0
      %465 = vadd.xlane.f32.xlu0 %v464
      %v466 = vpop.xlane.xlu0 %465
      %v467 = vsel %vm261, %v431, 0.0
      %468 = vadd.xlane.f32.xlu0 %v467
      %v469 = vpop.xlane.xlu0 %468
      %v470 = vsel %vm261, %v432, 0.0
      %471 = vadd.xlane.f32.xlu0 %v470
      %v472 = vpop.xlane.xlu0 %471
      %v473 = vsel %vm261, %v433, 0.0
      %474 = vadd.xlane.f32.xlu0 %v473
      %v475 = vpop.xlane.xlu0 %474
      %v476 = vsel %vm261, %v434, 0.0
      %477 = vadd.xlane.f32.xlu0 %v476
      %v478 = vpop.xlane.xlu0 %477
      %v479 = vsel %vm261, %v435, 0.0
      %480 = vadd.xlane.f32.xlu0 %v479
      %v481 = vpop.xlane.xlu0 %480
      %v482 = vsel %vm261, %v436, 0.0
      %483 = vadd.xlane.f32.xlu0 %v482
      %v484 = vpop.xlane.xlu0 %483
      %v485 = vsel %vm261, %v437, 0.0
      %486 = vadd.xlane.f32.xlu0 %v485
      %v487 = vpop.xlane.xlu0 %486
      %v488 = vsel %vm261, %v438, 0.0
      %489 = vadd.xlane.f32.xlu0 %v488
      %v490 = vpop.xlane.xlu0 %489
      %v491 = vsel %vm261, %v439, 0.0
      %492 = vadd.xlane.f32.xlu0 %v491
      %v493 = vpop.xlane.xlu0 %492
      %v494 = vsel %vm261, %v440, 0.0
      %495 = vadd.xlane.f32.xlu0 %v494
      %v496 = vpop.xlane.xlu0 %495
      %v497 = vsel %vm261, %v441, 0.0
      %498 = vadd.xlane.f32.xlu0 %v497
      %v499 = vpop.xlane.xlu0 %498
      %v500 = vsel %vm261, %v442, 0.0
      %501 = vadd.xlane.f32.xlu0 %v500
      %v502 = vpop.xlane.xlu0 %501
      %v503 = vsel %vm261, %v443, 0.0
      %504 = vadd.xlane.f32.xlu0 %v503
      %v505 = vpop.xlane.xlu0 %504
      %v506 = vsel %vm261, %v444, 0.0
      %507 = vadd.xlane.f32.xlu0 %v506
      %v508 = vpop.xlane.xlu0 %507
      %v509 = vsel %vm261, %v445, 0.0
      %510 = vadd.xlane.f32.xlu0 %v509
      %v511 = vpop.xlane.xlu0 %510
      %v512 = vsel %vm261, %v446, 0.0
      %513 = vadd.xlane.f32.xlu0 %v512
      %v514 = vpop.xlane.xlu0 %513
      %v515 = vsel %vm261, %v447, 0.0
      %516 = vadd.xlane.f32.xlu0 %v515
      %v517 = vpop.xlane.xlu0 %516
      %v518 = vsel %vm261, %v448, 0.0
      %519 = vadd.xlane.f32.xlu0 %v518
      %v520 = vpop.xlane.xlu0 %519
      %v521 = vsel %vm261, %v449, 0.0
      %522 = vadd.xlane.f32.xlu0 %v521
      %v523 = vpop.xlane.xlu0 %522
      %v524 = vsel %vm261, %v450, 0.0
      %525 = vadd.xlane.f32.xlu0 %v524
      %v526 = vpop.xlane.xlu0 %525
      %v527 = vsel %vm261, %v451, 0.0
      %528 = vadd.xlane.f32.xlu0 %v527
      %v529 = vpop.xlane.xlu0 %528
      %v530 = vsel %vm261, %v452, 0.0
      %531 = vadd.xlane.f32.xlu0 %v530
      %v532 = vpop.xlane.xlu0 %531
      %v533 = vsel %vm261, %v453, 0.0
      %534 = vadd.xlane.f32.xlu0 %v533
      %v535 = vpop.xlane.xlu0 %534
      %v536 = vsel %vm261, %v454, 0.0
      %537 = vadd.xlane.f32.xlu0 %v536
      %v538 = vpop.xlane.xlu0 %537
      %v539 = vsel %vm261, %v455, 0.0
      %540 = vadd.xlane.f32.xlu0 %v539
      %v541 = vpop.xlane.xlu0 %540
      %v542 = vsel %vm261, %v456, 0.0
      %543 = vadd.xlane.f32.xlu0 %v542
      %v544 = vpop.xlane.xlu0 %543
      %v545 = vsel %vm261, %v457, 0.0
      %546 = vadd.xlane.f32.xlu0 %v545
      %v547 = vpop.xlane.xlu0 %546
      %v548 = vsel %vm261, %v458, 0.0
      %549 = vadd.xlane.f32.xlu0 %v548
      %v550 = vpop.xlane.xlu0 %549
      %v551 = vsel %vm261, %v459, 0.0
      %552 = vadd.xlane.f32.xlu0 %v551
      %v553 = vpop.xlane.xlu0 %552
      %v554 = vsel %vm261, %v460, 0.0
      %555 = vadd.xlane.f32.xlu0 %v554
      %v556 = vpop.xlane.xlu0 %555
      %v557 = vmul.f32 %v463, %v364
      %v558 = vmul.f32 %v466, %v364
      %v559 = vmul.f32 %v469, %v364
      %v560 = vmul.f32 %v472, %v364
      %v561 = vmul.f32 %v475, %v364
      %v562 = vmul.f32 %v478, %v364
      %v563 = vmul.f32 %v481, %v364
      %v564 = vmul.f32 %v484, %v364
      %v565 = vmul.f32 %v487, %v364
      %v566 = vmul.f32 %v490, %v364
      %v567 = vmul.f32 %v493, %v364
      %v568 = vmul.f32 %v496, %v364
      %v569 = vmul.f32 %v499, %v364
      %v570 = vmul.f32 %v502, %v364
      %v571 = vmul.f32 %v505, %v364
      %v572 = vmul.f32 %v508, %v364
      %v573 = vmul.f32 %v511, %v364
      %v574 = vmul.f32 %v514, %v364
      %v575 = vmul.f32 %v517, %v364
      %v576 = vmul.f32 %v520, %v364
      %v577 = vmul.f32 %v523, %v364
      %v578 = vmul.f32 %v526, %v364
      %v579 = vmul.f32 %v529, %v364
      %v580 = vmul.f32 %v532, %v364
      %v581 = vmul.f32 %v535, %v364
      %v582 = vmul.f32 %v538, %v364
      %v583 = vmul.f32 %v541, %v364
      %v584 = vmul.f32 %v544, %v364
      %v585 = vmul.f32 %v547, %v364
      %v586 = vmul.f32 %v550, %v364
      %v587 = vmul.f32 %v553, %v364
      %v588 = vmul.f32 %v556, %v364
      %v589 = vadd.f32 %v557, 1e-05
      %v590 = vadd.f32 %v558, 1e-05
      %v591 = vadd.f32 %v559, 1e-05
      %v592 = vadd.f32 %v560, 1e-05
      %v593 = vadd.f32 %v561, 1e-05
      %v594 = vadd.f32 %v562, 1e-05
      %v595 = vadd.f32 %v563, 1e-05
      %v596 = vadd.f32 %v564, 1e-05
      %v597 = vadd.f32 %v565, 1e-05
      %v598 = vadd.f32 %v566, 1e-05
      %v599 = vadd.f32 %v567, 1e-05
      %v600 = vadd.f32 %v568, 1e-05
      %v601 = vadd.f32 %v569, 1e-05
      %v602 = vadd.f32 %v570, 1e-05
      %v603 = vadd.f32 %v571, 1e-05
      %v604 = vadd.f32 %v572, 1e-05
      %v605 = vadd.f32 %v573, 1e-05
      %v606 = vadd.f32 %v574, 1e-05
      %v607 = vadd.f32 %v575, 1e-05
      %v608 = vadd.f32 %v576, 1e-05
      %v609 = vadd.f32 %v577, 1e-05
      %v610 = vadd.f32 %v578, 1e-05
      %v611 = vadd.f32 %v579, 1e-05
      %v612 = vadd.f32 %v580, 1e-05
      %v613 = vadd.f32 %v581, 1e-05
      %v614 = vadd.f32 %v582, 1e-05
      %v615 = vadd.f32 %v583, 1e-05
      %v616 = vadd.f32 %v584, 1e-05
      %v617 = vadd.f32 %v585, 1e-05
      %v618 = vadd.f32 %v586, 1e-05
      %v619 = vadd.f32 %v587, 1e-05
      %v620 = vadd.f32 %v588, 1e-05
      %v621 = vrsqrt.pop %v589
      %v622 = vmul.f32 %v621, %v589
      %v623 = vmul.f32 %v622, %v621
      %v624 = vmul.f32 0.5, %v623
      %v625 = vsub.f32 1.5, %v624
      %v626 = vmul.f32 %v621, %v625
      %vm627 = vweird.f32 %v589
      %vm628 = vweird.f32 %v621
      %vm629 = vmor %vm627, %vm628
      %v630 = vsel %vm629, %v621, %v626
      %v631 = vrsqrt.pop %v590
      %v632 = vmul.f32 %v631, %v590
      %v633 = vmul.f32 %v632, %v631
      %v634 = vmul.f32 0.5, %v633
      %v635 = vsub.f32 1.5, %v634
      %v636 = vmul.f32 %v631, %v635
      %vm637 = vweird.f32 %v590
      %vm638 = vweird.f32 %v631
      %vm639 = vmor %vm637, %vm638
      %v640 = vsel %vm639, %v631, %v636
      %v641 = vrsqrt.pop %v591
      %v642 = vmul.f32 %v641, %v591
      %v643 = vmul.f32 %v642, %v641
      %v644 = vmul.f32 0.5, %v643
      %v645 = vsub.f32 1.5, %v644
      %v646 = vmul.f32 %v641, %v645
      %vm647 = vweird.f32 %v591
      %vm648 = vweird.f32 %v641
      %vm649 = vmor %vm647, %vm648
      %v650 = vsel %vm649, %v641, %v646
      %v651 = vrsqrt.pop %v592
      %v652 = vmul.f32 %v651, %v592
      %v653 = vmul.f32 %v652, %v651
      %v654 = vmul.f32 0.5, %v653
      %v655 = vsub.f32 1.5, %v654
      %v656 = vmul.f32 %v651, %v655
      %vm657 = vweird.f32 %v592
      %vm658 = vweird.f32 %v651
      %vm659 = vmor %vm657, %vm658
      %v660 = vsel %vm659, %v651, %v656
      %v661 = vrsqrt.pop %v593
      %v662 = vmul.f32 %v661, %v593
      %v663 = vmul.f32 %v662, %v661
      %v664 = vmul.f32 0.5, %v663
      %v665 = vsub.f32 1.5, %v664
      %v666 = vmul.f32 %v661, %v665
      %vm667 = vweird.f32 %v593
      %vm668 = vweird.f32 %v661
      %vm669 = vmor %vm667, %vm668
      %v670 = vsel %vm669, %v661, %v666
      %v671 = vrsqrt.pop %v594
      %v672 = vmul.f32 %v671, %v594
      %v673 = vmul.f32 %v672, %v671
      %v674 = vmul.f32 0.5, %v673
      %v675 = vsub.f32 1.5, %v674
      %v676 = vmul.f32 %v671, %v675
      %vm677 = vweird.f32 %v594
      %vm678 = vweird.f32 %v671
      %vm679 = vmor %vm677, %vm678
      %v680 = vsel %vm679, %v671, %v676
      %v681 = vrsqrt.pop %v595
      %v682 = vmul.f32 %v681, %v595
      %v683 = vmul.f32 %v682, %v681
      %v684 = vmul.f32 0.5, %v683
      %v685 = vsub.f32 1.5, %v684
      %v686 = vmul.f32 %v681, %v685
      %vm687 = vweird.f32 %v595
      %vm688 = vweird.f32 %v681
      %vm689 = vmor %vm687, %vm688
      %v690 = vsel %vm689, %v681, %v686
      %v691 = vrsqrt.pop %v596
      %v692 = vmul.f32 %v691, %v596
      %v693 = vmul.f32 %v692, %v691
      %v694 = vmul.f32 0.5, %v693
      %v695 = vsub.f32 1.5, %v694
      %v696 = vmul.f32 %v691, %v695
      %vm697 = vweird.f32 %v596
      %vm698 = vweird.f32 %v691
      %vm699 = vmor %vm697, %vm698
      %v700 = vsel %vm699, %v691, %v696
      %v701 = vrsqrt.pop %v597
      %v702 = vmul.f32 %v701, %v597
      %v703 = vmul.f32 %v702, %v701
      %v704 = vmul.f32 0.5, %v703
      %v705 = vsub.f32 1.5, %v704
      %v706 = vmul.f32 %v701, %v705
      %vm707 = vweird.f32 %v597
      %vm708 = vweird.f32 %v701
      %vm709 = vmor %vm707, %vm708
      %v710 = vsel %vm709, %v701, %v706
      %v711 = vrsqrt.pop %v598
      %v712 = vmul.f32 %v711, %v598
      %v713 = vmul.f32 %v712, %v711
      %v714 = vmul.f32 0.5, %v713
      %v715 = vsub.f32 1.5, %v714
      %v716 = vmul.f32 %v711, %v715
      %vm717 = vweird.f32 %v598
      %vm718 = vweird.f32 %v711
      %vm719 = vmor %vm717, %vm718
      %v720 = vsel %vm719, %v711, %v716
      %v721 = vrsqrt.pop %v599
      %v722 = vmul.f32 %v721, %v599
      %v723 = vmul.f32 %v722, %v721
      %v724 = vmul.f32 0.5, %v723
      %v725 = vsub.f32 1.5, %v724
      %v726 = vmul.f32 %v721, %v725
      %vm727 = vweird.f32 %v599
      %vm728 = vweird.f32 %v721
      %vm729 = vmor %vm727, %vm728
      %v730 = vsel %vm729, %v721, %v726
      %v731 = vrsqrt.pop %v600
      %v732 = vmul.f32 %v731, %v600
      %v733 = vmul.f32 %v732, %v731
      %v734 = vmul.f32 0.5, %v733
      %v735 = vsub.f32 1.5, %v734
      %v736 = vmul.f32 %v731, %v735
      %vm737 = vweird.f32 %v600
      %vm738 = vweird.f32 %v731
      %vm739 = vmor %vm737, %vm738
      %v740 = vsel %vm739, %v731, %v736
      %v741 = vrsqrt.pop %v601
      %v742 = vmul.f32 %v741, %v601
      %v743 = vmul.f32 %v742, %v741
      %v744 = vmul.f32 0.5, %v743
      %v745 = vsub.f32 1.5, %v744
      %v746 = vmul.f32 %v741, %v745
      %vm747 = vweird.f32 %v601
      %vm748 = vweird.f32 %v741
      %vm749 = vmor %vm747, %vm748
      %v750 = vsel %vm749, %v741, %v746
      %v751 = vrsqrt.pop %v602
      %v752 = vmul.f32 %v751, %v602
      %v753 = vmul.f32 %v752, %v751
      %v754 = vmul.f32 0.5, %v753
      %v755 = vsub.f32 1.5, %v754
      %v756 = vmul.f32 %v751, %v755
      %vm757 = vweird.f32 %v602
      %vm758 = vweird.f32 %v751
      %vm759 = vmor %vm757, %vm758
      %v760 = vsel %vm759, %v751, %v756
      %v761 = vrsqrt.pop %v603
      %v762 = vmul.f32 %v761, %v603
      %v763 = vmul.f32 %v762, %v761
      %v764 = vmul.f32 0.5, %v763
      %v765 = vsub.f32 1.5, %v764
      %v766 = vmul.f32 %v761, %v765
      %vm767 = vweird.f32 %v603
      %vm768 = vweird.f32 %v761
      %vm769 = vmor %vm767, %vm768
      %v770 = vsel %vm769, %v761, %v766
      %v771 = vrsqrt.pop %v604
      %v772 = vmul.f32 %v771, %v604
      %v773 = vmul.f32 %v772, %v771
      %v774 = vmul.f32 0.5, %v773
      %v775 = vsub.f32 1.5, %v774
      %v776 = vmul.f32 %v771, %v775
      %vm777 = vweird.f32 %v604
      %vm778 = vweird.f32 %v771
      %vm779 = vmor %vm777, %vm778
      %v780 = vsel %vm779, %v771, %v776
      %v781 = vrsqrt.pop %v605
      %v782 = vmul.f32 %v781, %v605
      %v783 = vmul.f32 %v782, %v781
      %v784 = vmul.f32 0.5, %v783
      %v785 = vsub.f32 1.5, %v784
      %v786 = vmul.f32 %v781, %v785
      %vm787 = vweird.f32 %v605
      %vm788 = vweird.f32 %v781
      %vm789 = vmor %vm787, %vm788
      %v790 = vsel %vm789, %v781, %v786
      %v791 = vrsqrt.pop %v606
      %v792 = vmul.f32 %v791, %v606
      %v793 = vmul.f32 %v792, %v791
      %v794 = vmul.f32 0.5, %v793
      %v795 = vsub.f32 1.5, %v794
      %v796 = vmul.f32 %v791, %v795
      %vm797 = vweird.f32 %v606
      %vm798 = vweird.f32 %v791
      %vm799 = vmor %vm797, %vm798
      %v800 = vsel %vm799, %v791, %v796
      %v801 = vrsqrt.pop %v607
      %v802 = vmul.f32 %v801, %v607
      %v803 = vmul.f32 %v802, %v801
      %v804 = vmul.f32 0.5, %v803
      %v805 = vsub.f32 1.5, %v804
      %v806 = vmul.f32 %v801, %v805
      %vm807 = vweird.f32 %v607
      %vm808 = vweird.f32 %v801
      %vm809 = vmor %vm807, %vm808
      %v810 = vsel %vm809, %v801, %v806
      %v811 = vrsqrt.pop %v608
      %v812 = vmul.f32 %v811, %v608
      %v813 = vmul.f32 %v812, %v811
      %v814 = vmul.f32 0.5, %v813
      %v815 = vsub.f32 1.5, %v814
      %v816 = vmul.f32 %v811, %v815
      %vm817 = vweird.f32 %v608
      %vm818 = vweird.f32 %v811
      %vm819 = vmor %vm817, %vm818
      %v820 = vsel %vm819, %v811, %v816
      %v821 = vrsqrt.pop %v609
      %v822 = vmul.f32 %v821, %v609
      %v823 = vmul.f32 %v822, %v821
      %v824 = vmul.f32 0.5, %v823
      %v825 = vsub.f32 1.5, %v824
      %v826 = vmul.f32 %v821, %v825
      %vm827 = vweird.f32 %v609
      %vm828 = vweird.f32 %v821
      %vm829 = vmor %vm827, %vm828
      %v830 = vsel %vm829, %v821, %v826
      %v831 = vrsqrt.pop %v610
      %v832 = vmul.f32 %v831, %v610
      %v833 = vmul.f32 %v832, %v831
      %v834 = vmul.f32 0.5, %v833
      %v835 = vsub.f32 1.5, %v834
      %v836 = vmul.f32 %v831, %v835
      %vm837 = vweird.f32 %v610
      %vm838 = vweird.f32 %v831
      %vm839 = vmor %vm837, %vm838
      %v840 = vsel %vm839, %v831, %v836
      %v841 = vrsqrt.pop %v611
      %v842 = vmul.f32 %v841, %v611
      %v843 = vmul.f32 %v842, %v841
      %v844 = vmul.f32 0.5, %v843
      %v845 = vsub.f32 1.5, %v844
      %v846 = vmul.f32 %v841, %v845
      %vm847 = vweird.f32 %v611
      %vm848 = vweird.f32 %v841
      %vm849 = vmor %vm847, %vm848
      %v850 = vsel %vm849, %v841, %v846
      %v851 = vrsqrt.pop %v612
      %v852 = vmul.f32 %v851, %v612
      %v853 = vmul.f32 %v852, %v851
      %v854 = vmul.f32 0.5, %v853
      %v855 = vsub.f32 1.5, %v854
      %v856 = vmul.f32 %v851, %v855
      %vm857 = vweird.f32 %v612
      %vm858 = vweird.f32 %v851
      %vm859 = vmor %vm857, %vm858
      %v860 = vsel %vm859, %v851, %v856
      %v861 = vrsqrt.pop %v613
      %v862 = vmul.f32 %v861, %v613
      %v863 = vmul.f32 %v862, %v861
      %v864 = vmul.f32 0.5, %v863
      %v865 = vsub.f32 1.5, %v864
      %v866 = vmul.f32 %v861, %v865
      %vm867 = vweird.f32 %v613
      %vm868 = vweird.f32 %v861
      %vm869 = vmor %vm867, %vm868
      %v870 = vsel %vm869, %v861, %v866
      %v871 = vrsqrt.pop %v614
      %v872 = vmul.f32 %v871, %v614
      %v873 = vmul.f32 %v872, %v871
      %v874 = vmul.f32 0.5, %v873
      %v875 = vsub.f32 1.5, %v874
      %v876 = vmul.f32 %v871, %v875
      %vm877 = vweird.f32 %v614
      %vm878 = vweird.f32 %v871
      %vm879 = vmor %vm877, %vm878
      %v880 = vsel %vm879, %v871, %v876
      %v881 = vrsqrt.pop %v615
      %v882 = vmul.f32 %v881, %v615
      %v883 = vmul.f32 %v882, %v881
      %v884 = vmul.f32 0.5, %v883
      %v885 = vsub.f32 1.5, %v884
      %v886 = vmul.f32 %v881, %v885
      %vm887 = vweird.f32 %v615
      %vm888 = vweird.f32 %v881
      %vm889 = vmor %vm887, %vm888
      %v890 = vsel %vm889, %v881, %v886
      %v891 = vrsqrt.pop %v616
      %v892 = vmul.f32 %v891, %v616
      %v893 = vmul.f32 %v892, %v891
      %v894 = vmul.f32 0.5, %v893
      %v895 = vsub.f32 1.5, %v894
      %v896 = vmul.f32 %v891, %v895
      %vm897 = vweird.f32 %v616
      %vm898 = vweird.f32 %v891
      %vm899 = vmor %vm897, %vm898
      %v900 = vsel %vm899, %v891, %v896
      %v901 = vrsqrt.pop %v617
      %v902 = vmul.f32 %v901, %v617
      %v903 = vmul.f32 %v902, %v901
      %v904 = vmul.f32 0.5, %v903
      %v905 = vsub.f32 1.5, %v904
      %v906 = vmul.f32 %v901, %v905
      %vm907 = vweird.f32 %v617
      %vm908 = vweird.f32 %v901
      %vm909 = vmor %vm907, %vm908
      %v910 = vsel %vm909, %v901, %v906
      %v911 = vrsqrt.pop %v618
      %v912 = vmul.f32 %v911, %v618
      %v913 = vmul.f32 %v912, %v911
      %v914 = vmul.f32 0.5, %v913
      %v915 = vsub.f32 1.5, %v914
      %v916 = vmul.f32 %v911, %v915
      %vm917 = vweird.f32 %v618
      %vm918 = vweird.f32 %v911
      %vm919 = vmor %vm917, %vm918
      %v920 = vsel %vm919, %v911, %v916
      %v921 = vrsqrt.pop %v619
      %v922 = vmul.f32 %v921, %v619
      %v923 = vmul.f32 %v922, %v921
      %v924 = vmul.f32 0.5, %v923
      %v925 = vsub.f32 1.5, %v924
      %v926 = vmul.f32 %v921, %v925
      %vm927 = vweird.f32 %v619
      %vm928 = vweird.f32 %v921
      %vm929 = vmor %vm927, %vm928
      %v930 = vsel %vm929, %v921, %v926
      %v931 = vrsqrt.pop %v620
      %v932 = vmul.f32 %v931, %v620
      %v933 = vmul.f32 %v932, %v931
      %v934 = vmul.f32 0.5, %v933
      %v935 = vsub.f32 1.5, %v934
      %v936 = vmul.f32 %v931, %v935
      %vm937 = vweird.f32 %v620
      %vm938 = vweird.f32 %v931
      %vm939 = vmor %vm937, %vm938
      %v940 = vsel %vm939, %v931, %v936
      %v941 = vmul.f32 %v397, %v630
      %v942 = vmul.f32 %v398, %v640
      %v943 = vmul.f32 %v399, %v650
      %v944 = vmul.f32 %v400, %v660
      %v945 = vmul.f32 %v401, %v670
      %v946 = vmul.f32 %v402, %v680
      %v947 = vmul.f32 %v403, %v690
      %v948 = vmul.f32 %v404, %v700
      %v949 = vmul.f32 %v405, %v710
      %v950 = vmul.f32 %v406, %v720
      %v951 = vmul.f32 %v407, %v730
      %v952 = vmul.f32 %v408, %v740
      %v953 = vmul.f32 %v409, %v750
      %v954 = vmul.f32 %v410, %v760
      %v955 = vmul.f32 %v411, %v770
      %v956 = vmul.f32 %v412, %v780
      %v957 = vmul.f32 %v413, %v790
      %v958 = vmul.f32 %v414, %v800
      %v959 = vmul.f32 %v415, %v810
      %v960 = vmul.f32 %v416, %v820
      %v961 = vmul.f32 %v417, %v830
      %v962 = vmul.f32 %v418, %v840
      %v963 = vmul.f32 %v419, %v850
      %v964 = vmul.f32 %v420, %v860
      %v965 = vmul.f32 %v421, %v870
      %v966 = vmul.f32 %v422, %v880
      %v967 = vmul.f32 %v423, %v890
      %v968 = vmul.f32 %v424, %v900
      %v969 = vmul.f32 %v425, %v910
      %v970 = vmul.f32 %v426, %v920
      %v971 = vmul.f32 %v427, %v930
      %v972 = vmul.f32 %v428, %v940
      %v973 = vld [vmem:[%s1] sm:$0x1]
      %v975 = vperm.slane %v973, 0
      %v977 = vmul.f32 %v941, %v975
      %v978 = vmul.f32 %v942, %v975
      %v979 = vmul.f32 %v943, %v975
      %v980 = vmul.f32 %v944, %v975
      %v981 = vmul.f32 %v945, %v975
      %v982 = vmul.f32 %v946, %v975
      %v983 = vmul.f32 %v947, %v975
      %v984 = vmul.f32 %v948, %v975
      %v985 = vmul.f32 %v949, %v975
      %v986 = vmul.f32 %v950, %v975
      %v987 = vmul.f32 %v951, %v975
      %v988 = vmul.f32 %v952, %v975
      %v989 = vmul.f32 %v953, %v975
      %v990 = vmul.f32 %v954, %v975
      %v991 = vmul.f32 %v955, %v975
      %v992 = vmul.f32 %v956, %v975
      %v993 = vmul.f32 %v957, %v975
      %v994 = vmul.f32 %v958, %v975
      %v995 = vmul.f32 %v959, %v975
      %v996 = vmul.f32 %v960, %v975
      %v997 = vmul.f32 %v961, %v975
      %v998 = vmul.f32 %v962, %v975
      %v999 = vmul.f32 %v963, %v975
      %v1000 = vmul.f32 %v964, %v975
      %v1001 = vmul.f32 %v965, %v975
      %v1002 = vmul.f32 %v966, %v975
      %v1003 = vmul.f32 %v967, %v975
      %v1004 = vmul.f32 %v968, %v975
      %v1005 = vmul.f32 %v969, %v975
      %v1006 = vmul.f32 %v970, %v975
      %v1007 = vmul.f32 %v971, %v975
      %v1008 = vmul.f32 %v972, %v975
      %v1009 = vld [vmem:[%s2] sm:$0x1]
      %v1011 = vperm.slane %v1009, 0
      %v1013 = vadd.f32 %v977, %v1011
      %v1014 = vadd.f32 %v978, %v1011
      %v1015 = vadd.f32 %v979, %v1011
      %v1016 = vadd.f32 %v980, %v1011
      %v1017 = vadd.f32 %v981, %v1011
      %v1018 = vadd.f32 %v982, %v1011
      %v1019 = vadd.f32 %v983, %v1011
      %v1020 = vadd.f32 %v984, %v1011
      %v1021 = vadd.f32 %v985, %v1011
      %v1022 = vadd.f32 %v986, %v1011
      %v1023 = vadd.f32 %v987, %v1011
      %v1024 = vadd.f32 %v988, %v1011
      %v1025 = vadd.f32 %v989, %v1011
      %v1026 = vadd.f32 %v990, %v1011
      %v1027 = vadd.f32 %v991, %v1011
      %v1028 = vadd.f32 %v992, %v1011
      %v1029 = vadd.f32 %v993, %v1011
      %v1030 = vadd.f32 %v994, %v1011
      %v1031 = vadd.f32 %v995, %v1011
      %v1032 = vadd.f32 %v996, %v1011
      %v1033 = vadd.f32 %v997, %v1011
      %v1034 = vadd.f32 %v998, %v1011
      %v1035 = vadd.f32 %v999, %v1011
      %v1036 = vadd.f32 %v1000, %v1011
      %v1037 = vadd.f32 %v1001, %v1011
      %v1038 = vadd.f32 %v1002, %v1011
      %v1039 = vadd.f32 %v1003, %v1011
      %v1040 = vadd.f32 %v1004, %v1011
      %v1041 = vadd.f32 %v1005, %v1011
      %v1042 = vadd.f32 %v1006, %v1011
      %v1043 = vadd.f32 %v1007, %v1011
      %v1044 = vadd.f32 %v1008, %v1011
      %v1045 = vpack.c.bf16 %v1014, %v1013
      %v1046 = vpack.c.bf16 %v1016, %v1015
      %v1047 = vpack.c.bf16 %v1018, %v1017
      %v1048 = vpack.c.bf16 %v1020, %v1019
      %v1049 = vpack.c.bf16 %v1022, %v1021
      %v1050 = vpack.c.bf16 %v1024, %v1023
      %v1051 = vpack.c.bf16 %v1026, %v1025
      %v1052 = vpack.c.bf16 %v1028, %v1027
      %v1053 = vpack.c.bf16 %v1030, %v1029
      %v1054 = vpack.c.bf16 %v1032, %v1031
      %v1055 = vpack.c.bf16 %v1034, %v1033
      %v1056 = vpack.c.bf16 %v1036, %v1035
      %v1057 = vpack.c.bf16 %v1038, %v1037
      %v1058 = vpack.c.bf16 %v1040, %v1039
      %v1059 = vpack.c.bf16 %v1042, %v1041
      %v1060 = vpack.c.bf16 %v1044, %v1043
      %v1061 = vld [vmem:[%s3] sm:$0xf]
      %v1062 = vld [vmem:[%s4] sm:$0x1]
      %v1064 = vperm.slane %v1062, 0
      %v1067 = vsel %vm261, %v1045, 0
      %v1070 = vsel %vm261, %v1046, 0
      %v1073 = vsel %vm261, %v1047, 0
      %v1076 = vsel %vm261, %v1048, 0
      %v1079 = vsel %vm261, %v1049, 0
      %v1082 = vsel %vm261, %v1050, 0
      %v1085 = vsel %vm261, %v1051, 0
      %v1088 = vsel %vm261, %v1052, 0
      %v1091 = vsel %vm261, %v1053, 0
      %v1094 = vsel %vm261, %v1054, 0
      %v1097 = vsel %vm261, %v1055, 0
      %v1100 = vsel %vm261, %v1056, 0
      %v1103 = vsel %vm261, %v1057, 0
      %v1106 = vsel %vm261, %v1058, 0
      %v1109 = vsel %vm261, %v1059, 0
      %v1112 = vsel %vm261, %v1060, 0
      %vm1114 = vcmask 1043456
      %v1116 = vsel %vm1114, %v1061, 0
      %1118 = vmatpush.bf16.msra.mxu0 0
      %1119 = vmatpush.bf16.msra.mxu0 0
      %1120 = vmatpush.bf16.msra.mxu0 0
      %1121 = vmatpush.bf16.msra.mxu0 0
      %1122 = vmatpush.bf16.msra.mxu0 0
      %1123 = vmatpush.bf16.msra.mxu0 0
      %1124 = vmatpush.bf16.msra.mxu0 0
      %1125 = vmatpush.bf16.msra.mxu0 %v1116
      %1126 = vmatmul.bf16.gmra.mxu0 %v1067
      %v1127 = vpop.f32.mrf.mxu0
      %v1128 = vadd.f32 %v1064, %v1127
      %v1129 = vpop.f32.mrf.mxu0
      %v1130 = vadd.f32 %v1064, %v1129
      %1131 = vmatmul.bf16.gmra.mxu0 %v1070
      %v1132 = vpop.f32.mrf.mxu0
      %v1133 = vadd.f32 %v1064, %v1132
      %v1134 = vpop.f32.mrf.mxu0
      %v1135 = vadd.f32 %v1064, %v1134
      %1136 = vmatmul.bf16.gmra.mxu0 %v1073
      %v1137 = vpop.f32.mrf.mxu0
      %v1138 = vadd.f32 %v1064, %v1137
      %v1139 = vpop.f32.mrf.mxu0
      %v1140 = vadd.f32 %v1064, %v1139
      %1141 = vmatmul.bf16.gmra.mxu0 %v1076
      %v1142 = vpop.f32.mrf.mxu0
      %v1143 = vadd.f32 %v1064, %v1142
      %v1144 = vpop.f32.mrf.mxu0
      %v1145 = vadd.f32 %v1064, %v1144
      %1146 = vmatmul.bf16.gmra.mxu0 %v1079
      %v1147 = vpop.f32.mrf.mxu0
      %v1148 = vadd.f32 %v1064, %v1147
      %v1149 = vpop.f32.mrf.mxu0
      %v1150 = vadd.f32 %v1064, %v1149
      %1151 = vmatmul.bf16.gmra.mxu0 %v1082
      %v1152 = vpop.f32.mrf.mxu0
      %v1153 = vadd.f32 %v1064, %v1152
      %v1154 = vpop.f32.mrf.mxu0
      %v1155 = vadd.f32 %v1064, %v1154
      %1156 = vmatmul.bf16.gmra.mxu0 %v1085
      %v1157 = vpop.f32.mrf.mxu0
      %v1158 = vadd.f32 %v1064, %v1157
      %v1159 = vpop.f32.mrf.mxu0
      %v1160 = vadd.f32 %v1064, %v1159
      %1161 = vmatmul.bf16.gmra.mxu0 %v1088
      %v1162 = vpop.f32.mrf.mxu0
      %v1163 = vadd.f32 %v1064, %v1162
      %v1164 = vpop.f32.mrf.mxu0
      %v1165 = vadd.f32 %v1064, %v1164
      %1166 = vmatmul.bf16.gmra.mxu0 %v1091
      %v1167 = vpop.f32.mrf.mxu0
      %v1168 = vadd.f32 %v1064, %v1167
      %v1169 = vpop.f32.mrf.mxu0
      %v1170 = vadd.f32 %v1064, %v1169
      %1171 = vmatmul.bf16.gmra.mxu0 %v1094
      %v1172 = vpop.f32.mrf.mxu0
      %v1173 = vadd.f32 %v1064, %v1172
      %v1174 = vpop.f32.mrf.mxu0
      %v1175 = vadd.f32 %v1064, %v1174
      %1176 = vmatmul.bf16.gmra.mxu0 %v1097
      %v1177 = vpop.f32.mrf.mxu0
      %v1178 = vadd.f32 %v1064, %v1177
      %v1179 = vpop.f32.mrf.mxu0
      %v1180 = vadd.f32 %v1064, %v1179
      %1181 = vmatmul.bf16.gmra.mxu0 %v1100
      %v1182 = vpop.f32.mrf.mxu0
      %v1183 = vadd.f32 %v1064, %v1182
      %v1184 = vpop.f32.mrf.mxu0
      %v1185 = vadd.f32 %v1064, %v1184
      %1186 = vmatmul.bf16.gmra.mxu0 %v1103
      %v1187 = vpop.f32.mrf.mxu0
      %v1188 = vadd.f32 %v1064, %v1187
      %v1189 = vpop.f32.mrf.mxu0
      %v1190 = vadd.f32 %v1064, %v1189
      %1191 = vmatmul.bf16.gmra.mxu0 %v1106
      %v1192 = vpop.f32.mrf.mxu0
      %v1193 = vadd.f32 %v1064, %v1192
      %v1194 = vpop.f32.mrf.mxu0
      %v1195 = vadd.f32 %v1064, %v1194
      %1196 = vmatmul.bf16.gmra.mxu0 %v1109
      %v1197 = vpop.f32.mrf.mxu0
      %v1198 = vadd.f32 %v1064, %v1197
      %v1199 = vpop.f32.mrf.mxu0
      %v1200 = vadd.f32 %v1064, %v1199
      %1201 = vmatmul.bf16.gmra.mxu0 %v1112
      %v1202 = vpop.f32.mrf.mxu0
      %v1203 = vadd.f32 %v1064, %v1202
      %v1204 = vpop.f32.mrf.mxu0
      %v1205 = vadd.f32 %v1064, %v1204
      %1206 = vdwg.mxu0
      %vm1207 = vcmask 195584
      %1208 = vst.msk [vmem:[%s226] sm:$0xff] %vm1207, %v1128
      %1209 = vst.msk [vmem:[%s226 + $0x8] sm:$0xff] %vm1207, %v1130
      %1210 = vst.msk [vmem:[%s226 + $0x10] sm:$0xff] %vm1207, %v1133
      %1211 = vst.msk [vmem:[%s226 + $0x18] sm:$0xff] %vm1207, %v1135
      %1212 = vst.msk [vmem:[%s226 + $0x20] sm:$0xff] %vm1207, %v1138
      %1213 = vst.msk [vmem:[%s226 + $0x28] sm:$0xff] %vm1207, %v1140
      %1214 = vst.msk [vmem:[%s226 + $0x30] sm:$0xff] %vm1207, %v1143
      %1215 = vst.msk [vmem:[%s226 + $0x38] sm:$0xff] %vm1207, %v1145
      %1216 = vst.msk [vmem:[%s226 + $0x40] sm:$0xff] %vm1207, %v1148
      %1217 = vst.msk [vmem:[%s226 + $0x48] sm:$0xff] %vm1207, %v1150
      %1218 = vst.msk [vmem:[%s226 + $0x50] sm:$0xff] %vm1207, %v1153
      %1219 = vst.msk [vmem:[%s226 + $0x58] sm:$0xff] %vm1207, %v1155
      %1220 = vst.msk [vmem:[%s226 + $0x60] sm:$0xff] %vm1207, %v1158
      %1221 = vst.msk [vmem:[%s226 + $0x68] sm:$0xff] %vm1207, %v1160
      %1222 = vst.msk [vmem:[%s226 + $0x70] sm:$0xff] %vm1207, %v1163
      %1223 = vst.msk [vmem:[%s226 + $0x78] sm:$0xff] %vm1207, %v1165
      %1224 = vst.msk [vmem:[%s226 + $0x80] sm:$0xff] %vm1207, %v1168
      %1225 = vst.msk [vmem:[%s226 + $0x88] sm:$0xff] %vm1207, %v1170
      %1226 = vst.msk [vmem:[%s226 + $0x90] sm:$0xff] %vm1207, %v1173
      %1227 = vst.msk [vmem:[%s226 + $0x98] sm:$0xff] %vm1207, %v1175
      %1228 = vst.msk [vmem:[%s226 + $0xa0] sm:$0xff] %vm1207, %v1178
      %1229 = vst.msk [vmem:[%s226 + $0xa8] sm:$0xff] %vm1207, %v1180
      %1230 = vst.msk [vmem:[%s226 + $0xb0] sm:$0xff] %vm1207, %v1183
      %1231 = vst.msk [vmem:[%s226 + $0xb8] sm:$0xff] %vm1207, %v1185
      %1232 = vst.msk [vmem:[%s226 + $0xc0] sm:$0xff] %vm1207, %v1188
      %1233 = vst.msk [vmem:[%s226 + $0xc8] sm:$0xff] %vm1207, %v1190
      %1234 = vst.msk [vmem:[%s226 + $0xd0] sm:$0xff] %vm1207, %v1193
      %1235 = vst.msk [vmem:[%s226 + $0xd8] sm:$0xff] %vm1207, %v1195
      %1236 = vst.msk [vmem:[%s226 + $0xe0] sm:$0xff] %vm1207, %v1198
      %1237 = vst.msk [vmem:[%s226 + $0xe8] sm:$0xff] %vm1207, %v1200
      %1238 = vst.msk [vmem:[%s226 + $0xf0] sm:$0xff] %vm1207, %v1203
      %1239 = vst.msk [vmem:[%s226 + $0xf8] sm:$0xff] %vm1207, %v1205
      %s1240 = smul.u32 32, %s16
      %p1241 = scmp.lt.s32.totalorder %s1240, 63
      %s1242 = scalar_select %p1241, %s1240, 63
      %s1243 = smul.addr %s1242, 8
      %s1244 = scalar_lea.vmem %s5, %s1243
      // Predicated region
      $region41: #{_lambda_.6} parent=39 // pred_check
        %p1245 = pneg %p144
      $region42: #{_lambda_.6} parent=39 // pred_check_branch
        %1247 = sbr.rel (%p1245) target = $region44
      $region43: #{_lambda_.6} parent=39 // pred_region
        %s1248 = smul.u32 32, %s16
      $region44: #{_lambda_.6} parent=39 // pred_fallthru
        _
    $region40: #{_lambda_.6} parent=5 // pred_fallthru
      _
    %p1249 = scmp.le.s32.totalorder 2, %s11
    // Predicated region
    $region45: #{_lambda_.6} parent=5 // pred_check
      %p1250 = pneg %p1249
    $region46: #{_lambda_.6} parent=5 // pred_check_branch
      %1252 = sbr.rel (%p1250) target = $region48
    $region47: #{_lambda_.6} parent=5 // pred_region
      %s1253 = ssub.s32 %s11, 2
      // Predicated region
      $region49: #{_lambda_.6} parent=47 // pred_check
        %p1254 = pneg %p150
      $region50: #{_lambda_.6} parent=47 // pred_check_branch
        %1256 = sbr.rel (%p1254) target = $region52
      $region51: #{_lambda_.6} parent=47 // pred_region
        %s1257 = smul.u32 32, %s17
        %p1258 = scmp.lt.s32.totalorder %s1257, 63
        %s1259 = scalar_select %p1258, %s1257, 63
        %s1260 = smul.addr %s1259, 8
        %s1261 = scalar_lea.vmem %s5, %s1260
      $region52: #{_lambda_.6} parent=47 // pred_fallthru
        _
    $region48: #{_lambda_.6} parent=5 // pred_fallthru
      _
  $region6: #{_lambda_.6} parent=0 // loop_footer
    %s15 = sadd.s32 1, %s11
  $region7: #{_lambda_.6} parent=0 // loop_footer_branch
    %10 = sbr.rel target = $region3
  $region8: #{_lambda_.6} parent=0 // loop_exit
    _

// kernel: _lambda_.9
$region0: #{_lambda_.9}
  #allocation0 [shape = 'u32[]', space=smem, size = 0x4, offset = 0x4, fixed_abs, tag = 'smem constant byte address 0x4 - core index']
  #allocation1 [shape = 'u32[72,128]{1,0:T(1,128)}', space=vmem, size = 0x9000, scoped, tag = 'internal scratch']
  %s0 = inlined_call_operand.vmem [shape: f32[512,8], index: 0, kind: input, shape index: {}]
  %s1 = inlined_call_operand.vmem [shape: f32[1,8], index: 1, kind: input, shape index: {}]
  %s2 = inlined_call_operand.vmem [shape: f32[1,8], index: 2, kind: input, shape index: {}]
  %s3 = inlined_call_operand.vmem [shape: bf16[8,32], index: 3, kind: input, shape index: {}]
  %s4 = inlined_call_operand.vmem [shape: f32[1,32], index: 4, kind: input, shape index: {}]
  %s5 = inlined_call_operand.vmem [shape: f32[512,32], index: 5, kind: output, shape index: {}]
  %s6 = sld [smem:[#allocation0]]
  $region53: #{_lambda_.9} parent=0
    _
  %s8 = ssub.s32 1, %s6
  %s9 = scalar_select 0, %s8, %s6
  loop: start=0, step=1, limit=4
  $region2: #{_lambda_.9} parent=0 // loop_pre_header
    _
  $region3: #{_lambda_.9} parent=0 // loop_header
    %s11 = sphi 0, %s15
    %p12 = scmp.ge.s32.totalorder %s11, 4
    %s21 = sphi 0, %s23
    %s24 = sphi 0, %s21
    %s25 = sphi 0, %s24
    %s41 = sphi 0, %s25
    %s45 = sphi 0, %s45
    %s47 = sphi 0, %s45
    %s48 = sphi 0, %s47
    %s62 = sphi 0, %s48
    %s66 = sphi 0, %s66
    %s68 = sphi 0, %s66
    %s69 = sphi 0, %s68
    %s83 = sphi 0, %s69
    %s87 = sphi 0, %s87
    %s89 = sphi 0, %s87
    %s90 = sphi 0, %s89
    %s104 = sphi 0, %s90
    %s108 = sphi 0, %s108
    %s110 = sphi 0, %s108
    %s111 = sphi 0, %s110
    %s125 = sphi 0, %s111
    %s131 = sphi 0, %s133
    %s134 = sphi 0, %s131
    %s135 = sphi 0, %s134
    %s151 = sphi 0, %s135
  $region4: #{_lambda_.9} parent=0 // loop_header_branch
    %14 = sbr.rel (%p12) target = $region8
  $region5: #{_lambda_.9} parent=0 // loop_body
    %s16 = ssub.s32 %s11, 1
    %s17 = ssub.s32 %s11, 2
    %s18 = sadd.s32 %s11, 1
    %s19 = ssub.s32 %s11, %s18
    %p20 = scmp.eq.s32.totalorder %s19, 0
    %s22 = sadd.s32 %s21, 1
    %s23 = scalar_select %p20, %s21, %s22
    %p26 = pneg %p20
    %p27 = scmp.eq.s32.totalorder %s11, 1
    %p28 = por %p26, %p27
    %p29 = scmp.ne.s32.totalorder %s21, %s24
    %p30 = scmp.eq.s32.totalorder %s11, 0
    %p31 = por %p29, %p30
    %p32 = scmp.ne.s32.totalorder %s21, %s24
    %p33 = scmp.eq.s32.totalorder %s16, 1
    %p34 = por %p32, %p33
    %p35 = scmp.ne.s32.totalorder %s24, %s25
    %p36 = scmp.eq.s32.totalorder %s16, 0
    %p37 = por %p35, %p36
    %p38 = scmp.ne.s32.totalorder %s24, %s25
    %p39 = scmp.eq.s32.totalorder %s17, 1
    %p40 = por %p38, %p39
    %p42 = scmp.ne.s32.totalorder %s25, %s41
    %p43 = scmp.eq.s32.totalorder %s17, 0
    %p44 = por %p42, %p43
    %s46 = sadd.s32 %s45, 1
    %p49 = scmp.eq.s32.totalorder %s11, 1
    %p50 = scmp.ne.s32.totalorder %s45, %s47
    %p51 = scmp.eq.s32.totalorder %s11, 0
    %p52 = por %p50, %p51
    %p53 = scmp.ne.s32.totalorder %s45, %s47
    %p54 = scmp.eq.s32.totalorder %s16, 1
    %p55 = por %p53, %p54
    %p56 = scmp.ne.s32.totalorder %s47, %s48
    %p57 = scmp.eq.s32.totalorder %s16, 0
    %p58 = por %p56, %p57
    %p59 = scmp.ne.s32.totalorder %s47, %s48
    %p60 = scmp.eq.s32.totalorder %s17, 1
    %p61 = por %p59, %p60
    %p63 = scmp.ne.s32.totalorder %s48, %s62
    %p64 = scmp.eq.s32.totalorder %s17, 0
    %p65 = por %p63, %p64
    %s67 = sadd.s32 %s66, 1
    %p70 = scmp.eq.s32.totalorder %s11, 1
    %p71 = scmp.ne.s32.totalorder %s66, %s68
    %p72 = scmp.eq.s32.totalorder %s11, 0
    %p73 = por %p71, %p72
    %p74 = scmp.ne.s32.totalorder %s66, %s68
    %p75 = scmp.eq.s32.totalorder %s16, 1
    %p76 = por %p74, %p75
    %p77 = scmp.ne.s32.totalorder %s68, %s69
    %p78 = scmp.eq.s32.totalorder %s16, 0
    %p79 = por %p77, %p78
    %p80 = scmp.ne.s32.totalorder %s68, %s69
    %p81 = scmp.eq.s32.totalorder %s17, 1
    %p82 = por %p80, %p81
    %p84 = scmp.ne.s32.totalorder %s69, %s83
    %p85 = scmp.eq.s32.totalorder %s17, 0
    %p86 = por %p84, %p85
    %s88 = sadd.s32 %s87, 1
    %p91 = scmp.eq.s32.totalorder %s11, 1
    %p92 = scmp.ne.s32.totalorder %s87, %s89
    %p93 = scmp.eq.s32.totalorder %s11, 0
    %p94 = por %p92, %p93
    %p95 = scmp.ne.s32.totalorder %s87, %s89
    %p96 = scmp.eq.s32.totalorder %s16, 1
    %p97 = por %p95, %p96
    %p98 = scmp.ne.s32.totalorder %s89, %s90
    %p99 = scmp.eq.s32.totalorder %s16, 0
    %p100 = por %p98, %p99
    %p101 = scmp.ne.s32.totalorder %s89, %s90
    %p102 = scmp.eq.s32.totalorder %s17, 1
    %p103 = por %p101, %p102
    %p105 = scmp.ne.s32.totalorder %s90, %s104
    %p106 = scmp.eq.s32.totalorder %s17, 0
    %p107 = por %p105, %p106
    %s109 = sadd.s32 %s108, 1
    %p112 = scmp.eq.s32.totalorder %s11, 1
    %p113 = scmp.ne.s32.totalorder %s108, %s110
    %p114 = scmp.eq.s32.totalorder %s11, 0
    %p115 = por %p113, %p114
    %p116 = scmp.ne.s32.totalorder %s108, %s110
    %p117 = scmp.eq.s32.totalorder %s16, 1
    %p118 = por %p116, %p117
    %p119 = scmp.ne.s32.totalorder %s110, %s111
    %p120 = scmp.eq.s32.totalorder %s16, 0
    %p121 = por %p119, %p120
    %p122 = scmp.ne.s32.totalorder %s110, %s111
    %p123 = scmp.eq.s32.totalorder %s17, 1
    %p124 = por %p122, %p123
    %p126 = scmp.ne.s32.totalorder %s111, %s125
    %p127 = scmp.eq.s32.totalorder %s17, 0
    %p128 = por %p126, %p127
    %s129 = ssub.s32 %s11, %s18
    %p130 = scmp.eq.s32.totalorder %s129, 0
    %s132 = sadd.s32 %s131, 1
    %s133 = scalar_select %p130, %s131, %s132
    %p136 = pneg %p130
    %p137 = scmp.eq.s32.totalorder %s11, 1
    %p138 = por %p136, %p137
    %p139 = scmp.ne.s32.totalorder %s131, %s134
    %p140 = scmp.eq.s32.totalorder %s11, 0
    %p141 = por %p139, %p140
    %p142 = scmp.ne.s32.totalorder %s131, %s134
    %p143 = scmp.eq.s32.totalorder %s16, 1
    %p144 = por %p142, %p143
    %p145 = scmp.ne.s32.totalorder %s134, %s135
    %p146 = scmp.eq.s32.totalorder %s16, 0
    %p147 = por %p145, %p146
    %p148 = scmp.ne.s32.totalorder %s134, %s135
    %p149 = scmp.eq.s32.totalorder %s17, 1
    %p150 = por %p148, %p149
    %p152 = scmp.ne.s32.totalorder %s135, %s151
    %p153 = scmp.eq.s32.totalorder %s17, 0
    %p154 = por %p152, %p153
    %p155 = scmp.le.s32.totalorder 1, %s11
    %p156 = scmp.lt.s32.totalorder %s11, 3
    %p157 = pnand %p155, %p156
    %p158 = pneg %p157
    // Predicated region
    $region9: #{_lambda_.9} parent=5 // pred_check
      _
    $region10: #{_lambda_.9} parent=5 // pred_check_branch
      %160 = sbr.rel (%p157) target = $region12
    $region11: #{_lambda_.9} parent=5 // pred_region
      %s161 = ssub.s32 %s11, 1
      // Predicated region
      $region13: #{_lambda_.9} parent=11 // pred_check
        %p162 = pneg %p58
      $region14: #{_lambda_.9} parent=11 // pred_check_branch
        %164 = sbr.rel (%p162) target = $region16
      $region15: #{_lambda_.9} parent=11 // pred_region
        _
      $region16: #{_lambda_.9} parent=11 // pred_fallthru
        _
      // Predicated region
      $region17: #{_lambda_.9} parent=11 // pred_check
        %p165 = pneg %p79
      $region18: #{_lambda_.9} parent=11 // pred_check_branch
        %167 = sbr.rel (%p165) target = $region20
      $region19: #{_lambda_.9} parent=11 // pred_region
        _
      $region20: #{_lambda_.9} parent=11 // pred_fallthru
        _
      // Predicated region
      $region21: #{_lambda_.9} parent=11 // pred_check
        %p168 = pneg %p100
      $region22: #{_lambda_.9} parent=11 // pred_check_branch
        %170 = sbr.rel (%p168) target = $region24
      $region23: #{_lambda_.9} parent=11 // pred_region
        _
      $region24: #{_lambda_.9} parent=11 // pred_fallthru
        _
      // Predicated region
      $region25: #{_lambda_.9} parent=11 // pred_check
        %p171 = pneg %p121
      $region26: #{_lambda_.9} parent=11 // pred_check_branch
        %173 = sbr.rel (%p171) target = $region28
      $region27: #{_lambda_.9} parent=11 // pred_region
        _
      $region28: #{_lambda_.9} parent=11 // pred_fallthru
        _
    $region12: #{_lambda_.9} parent=5 // pred_fallthru
      _
    %p174 = scmp.lt.s32.totalorder %s11, 2
    // Predicated region
    $region29: #{_lambda_.9} parent=5 // pred_check
      %p175 = pneg %p174
    $region30: #{_lambda_.9} parent=5 // pred_check_branch
      %177 = sbr.rel (%p175) target = $region32
    $region31: #{_lambda_.9} parent=5 // pred_region
      // Predicated region
      $region33: #{_lambda_.9} parent=31 // pred_check
        %p178 = pneg %p31
      $region34: #{_lambda_.9} parent=31 // pred_check_branch
        %180 = sbr.rel (%p178) target = $region36
      $region35: #{_lambda_.9} parent=31 // pred_region
        %s181 = smul.u32 32, %s11
        %p182 = scmp.lt.s32.totalorder %s181, 63
        %s183 = scalar_select %p182, %s181, 63
        %s184 = smul.addr %s183, 8
        %s185 = scalar_lea.vmem %s0, %s184
        %s186 = smul.u32 32, %s11
      $region36: #{_lambda_.9} parent=31 // pred_fallthru
        _
    $region32: #{_lambda_.9} parent=5 // pred_fallthru
      _
    %p187 = scmp.le.s32.totalorder 1, %s11
    %p188 = scmp.lt.s32.totalorder %s11, 3
    %p189 = pnand %p187, %p188
    %p190 = pneg %p189
    // Predicated region
    $region37: #{_lambda_.9} parent=5 // pred_check
      _
    $region38: #{_lambda_.9} parent=5 // pred_check_branch
      %192 = sbr.rel (%p189) target = $region40
    $region39: #{_lambda_.9} parent=5 // pred_region
      %s193 = ssub.s32 %s11, 1
      %s194 = smul.u32 32, %s16
      %p195 = scmp.lt.s32.totalorder %s194, 63
      %s196 = scalar_select %p195, %s194, 63
      %s197 = smul.addr %s196, 8
      %s198 = scalar_lea.vmem %s0, %s197
      %p199 = pneg %p37
      %p200 = pneg %p34
      %p201 = pneg %p58
      %p202 = pneg %p55
      %p203 = pneg %p79
      %p204 = pneg %p76
      %p205 = pneg %p100
      %p206 = pneg %p97
      %p207 = pneg %p121
      %p208 = pneg %p118
      %p209 = pneg %p147
      %p210 = pneg %p144
      %s211 = smul.u32 32, %s16
      %p212 = scmp.lt.s32.totalorder %s211, 63
      %s213 = scalar_select %p212, %s211, 63
      %s214 = smul.addr %s213, 8
      %s215 = scalar_lea.vmem %s5, %s214
      %s216 = smul.u32 32, %s16
      %p217 = scmp.lt.s32.totalorder %s216, 63
      %s218 = scalar_select %p217, %s216, 63
      %s219 = smul.addr %s218, 8
      %s220 = scalar_lea.vmem %s0, %s219
      %s221 = smul.u32 32, %s16
      %s222 = smul.u32 32, %s16
      %p223 = scmp.lt.s32.totalorder %s222, 63
      %s224 = scalar_select %p223, %s222, 63
      %s225 = smul.addr %s224, 8
      %s226 = scalar_lea.vmem %s5, %s225
      %s227 = smul.u32 32, %s16
      %v229 = vld [vmem:[%s220] sm:$0xff]
      %v230 = vld [vmem:[%s220 + $0x8] sm:$0xff]
      %v231 = vld [vmem:[%s220 + $0x10] sm:$0xff]
      %v232 = vld [vmem:[%s220 + $0x18] sm:$0xff]
      %v233 = vld [vmem:[%s220 + $0x20] sm:$0xff]
      %v234 = vld [vmem:[%s220 + $0x28] sm:$0xff]
      %v235 = vld [vmem:[%s220 + $0x30] sm:$0xff]
      %v236 = vld [vmem:[%s220 + $0x38] sm:$0xff]
      %v237 = vld [vmem:[%s220 + $0x40] sm:$0xff]
      %v238 = vld [vmem:[%s220 + $0x48] sm:$0xff]
      %v239 = vld [vmem:[%s220 + $0x50] sm:$0xff]
      %v240 = vld [vmem:[%s220 + $0x58] sm:$0xff]
      %v241 = vld [vmem:[%s220 + $0x60] sm:$0xff]
      %v242 = vld [vmem:[%s220 + $0x68] sm:$0xff]
      %v243 = vld [vmem:[%s220 + $0x70] sm:$0xff]
      %v244 = vld [vmem:[%s220 + $0x78] sm:$0xff]
      %v245 = vld [vmem:[%s220 + $0x80] sm:$0xff]
      %v246 = vld [vmem:[%s220 + $0x88] sm:$0xff]
      %v247 = vld [vmem:[%s220 + $0x90] sm:$0xff]
      %v248 = vld [vmem:[%s220 + $0x98] sm:$0xff]
      %v249 = vld [vmem:[%s220 + $0xa0] sm:$0xff]
      %v250 = vld [vmem:[%s220 + $0xa8] sm:$0xff]
      %v251 = vld [vmem:[%s220 + $0xb0] sm:$0xff]
      %v252 = vld [vmem:[%s220 + $0xb8] sm:$0xff]
      %v253 = vld [vmem:[%s220 + $0xc0] sm:$0xff]
      %v254 = vld [vmem:[%s220 + $0xc8] sm:$0xff]
      %v255 = vld [vmem:[%s220 + $0xd0] sm:$0xff]
      %v256 = vld [vmem:[%s220 + $0xd8] sm:$0xff]
      %v257 = vld [vmem:[%s220 + $0xe0] sm:$0xff]
      %v258 = vld [vmem:[%s220 + $0xe8] sm:$0xff]
      %v259 = vld [vmem:[%s220 + $0xf0] sm:$0xff]
      %v260 = vld [vmem:[%s220 + $0xf8] sm:$0xff]
      %vm261 = vcmask 64512
      %v262 = vsel %vm261, %v229, 0.0
      %263 = vadd.xlane.f32.xlu0 %v262
      %v264 = vpop.xlane.xlu0 %263
      %v265 = vsel %vm261, %v230, 0.0
      %266 = vadd.xlane.f32.xlu0 %v265
      %v267 = vpop.xlane.xlu0 %266
      %v268 = vsel %vm261, %v231, 0.0
      %269 = vadd.xlane.f32.xlu0 %v268
      %v270 = vpop.xlane.xlu0 %269
      %v271 = vsel %vm261, %v232, 0.0
      %272 = vadd.xlane.f32.xlu0 %v271
      %v273 = vpop.xlane.xlu0 %272
      %v274 = vsel %vm261, %v233, 0.0
      %275 = vadd.xlane.f32.xlu0 %v274
      %v276 = vpop.xlane.xlu0 %275
      %v277 = vsel %vm261, %v234, 0.0
      %278 = vadd.xlane.f32.xlu0 %v277
      %v279 = vpop.xlane.xlu0 %278
      %v280 = vsel %vm261, %v235, 0.0
      %281 = vadd.xlane.f32.xlu0 %v280
      %v282 = vpop.xlane.xlu0 %281
      %v283 = vsel %vm261, %v236, 0.0
      %284 = vadd.xlane.f32.xlu0 %v283
      %v285 = vpop.xlane.xlu0 %284
      %v286 = vsel %vm261, %v237, 0.0
      %287 = vadd.xlane.f32.xlu0 %v286
      %v288 = vpop.xlane.xlu0 %287
      %v289 = vsel %vm261, %v238, 0.0
      %290 = vadd.xlane.f32.xlu0 %v289
      %v291 = vpop.xlane.xlu0 %290
      %v292 = vsel %vm261, %v239, 0.0
      %293 = vadd.xlane.f32.xlu0 %v292
      %v294 = vpop.xlane.xlu0 %293
      %v295 = vsel %vm261, %v240, 0.0
      %296 = vadd.xlane.f32.xlu0 %v295
      %v297 = vpop.xlane.xlu0 %296
      %v298 = vsel %vm261, %v241, 0.0
      %299 = vadd.xlane.f32.xlu0 %v298
      %v300 = vpop.xlane.xlu0 %299
      %v301 = vsel %vm261, %v242, 0.0
      %302 = vadd.xlane.f32.xlu0 %v301
      %v303 = vpop.xlane.xlu0 %302
      %v304 = vsel %vm261, %v243, 0.0
      %305 = vadd.xlane.f32.xlu0 %v304
      %v306 = vpop.xlane.xlu0 %305
      %v307 = vsel %vm261, %v244, 0.0
      %308 = vadd.xlane.f32.xlu0 %v307
      %v309 = vpop.xlane.xlu0 %308
      %v310 = vsel %vm261, %v245, 0.0
      %311 = vadd.xlane.f32.xlu0 %v310
      %v312 = vpop.xlane.xlu0 %311
      %v313 = vsel %vm261, %v246, 0.0
      %314 = vadd.xlane.f32.xlu0 %v313
      %v315 = vpop.xlane.xlu0 %314
      %v316 = vsel %vm261, %v247, 0.0
      %317 = vadd.xlane.f32.xlu0 %v316
      %v318 = vpop.xlane.xlu0 %317
      %v319 = vsel %vm261, %v248, 0.0
      %320 = vadd.xlane.f32.xlu0 %v319
      %v321 = vpop.xlane.xlu0 %320
      %v322 = vsel %vm261, %v249, 0.0
      %323 = vadd.xlane.f32.xlu0 %v322
      %v324 = vpop.xlane.xlu0 %323
      %v325 = vsel %vm261, %v250, 0.0
      %326 = vadd.xlane.f32.xlu0 %v325
      %v327 = vpop.xlane.xlu0 %326
      %v328 = vsel %vm261, %v251, 0.0
      %329 = vadd.xlane.f32.xlu0 %v328
      %v330 = vpop.xlane.xlu0 %329
      %v331 = vsel %vm261, %v252, 0.0
      %332 = vadd.xlane.f32.xlu0 %v331
      %v333 = vpop.xlane.xlu0 %332
      %v334 = vsel %vm261, %v253, 0.0
      %335 = vadd.xlane.f32.xlu0 %v334
      %v336 = vpop.xlane.xlu0 %335
      %v337 = vsel %vm261, %v254, 0.0
      %338 = vadd.xlane.f32.xlu0 %v337
      %v339 = vpop.xlane.xlu0 %338
      %v340 = vsel %vm261, %v255, 0.0
      %341 = vadd.xlane.f32.xlu0 %v340
      %v342 = vpop.xlane.xlu0 %341
      %v343 = vsel %vm261, %v256, 0.0
      %344 = vadd.xlane.f32.xlu0 %v343
      %v345 = vpop.xlane.xlu0 %344
      %v346 = vsel %vm261, %v257, 0.0
      %347 = vadd.xlane.f32.xlu0 %v346
      %v348 = vpop.xlane.xlu0 %347
      %v349 = vsel %vm261, %v258, 0.0
      %350 = vadd.xlane.f32.xlu0 %v349
      %v351 = vpop.xlane.xlu0 %350
      %v352 = vsel %vm261, %v259, 0.0
      %353 = vadd.xlane.f32.xlu0 %v352
      %v354 = vpop.xlane.xlu0 %353
      %v355 = vsel %vm261, %v260, 0.0
      %356 = vadd.xlane.f32.xlu0 %v355
      %v357 = vpop.xlane.xlu0 %356
      %v358 = vrcp.pop 8.0
      %v359 = vmul.f32 8.0, %v358
      %v360 = vsub.f32 1.0, %v359
      %v361 = vmul.f32 %v358, %v360
      %v362 = vadd.f32 %v358, %v361
      %vm363 = vweird.f32 %v358
      %v364 = vsel %vm363, %v358, %v362
      %v365 = vmul.f32 %v264, %v364
      %v366 = vmul.f32 %v267, %v364
      %v367 = vmul.f32 %v270, %v364
      %v368 = vmul.f32 %v273, %v364
      %v369 = vmul.f32 %v276, %v364
      %v370 = vmul.f32 %v279, %v364
      %v371 = vmul.f32 %v282, %v364
      %v372 = vmul.f32 %v285, %v364
      %v373 = vmul.f32 %v288, %v364
      %v374 = vmul.f32 %v291, %v364
      %v375 = vmul.f32 %v294, %v364
      %v376 = vmul.f32 %v297, %v364
      %v377 = vmul.f32 %v300, %v364
      %v378 = vmul.f32 %v303, %v364
      %v379 = vmul.f32 %v306, %v364
      %v380 = vmul.f32 %v309, %v364
      %v381 = vmul.f32 %v312, %v364
      %v382 = vmul.f32 %v315, %v364
      %v383 = vmul.f32 %v318, %v364
      %v384 = vmul.f32 %v321, %v364
      %v385 = vmul.f32 %v324, %v364
      %v386 = vmul.f32 %v327, %v364
      %v387 = vmul.f32 %v330, %v364
      %v388 = vmul.f32 %v333, %v364
      %v389 = vmul.f32 %v336, %v364
      %v390 = vmul.f32 %v339, %v364
      %v391 = vmul.f32 %v342, %v364
      %v392 = vmul.f32 %v345, %v364
      %v393 = vmul.f32 %v348, %v364
      %v394 = vmul.f32 %v351, %v364
      %v395 = vmul.f32 %v354, %v364
      %v396 = vmul.f32 %v357, %v364
      %v397 = vsub.f32 %v229, %v365
      %v398 = vsub.f32 %v230, %v366
      %v399 = vsub.f32 %v231, %v367
      %v400 = vsub.f32 %v232, %v368
      %v401 = vsub.f32 %v233, %v369
      %v402 = vsub.f32 %v234, %v370
      %v403 = vsub.f32 %v235, %v371
      %v404 = vsub.f32 %v236, %v372
      %v405 = vsub.f32 %v237, %v373
      %v406 = vsub.f32 %v238, %v374
      %v407 = vsub.f32 %v239, %v375
      %v408 = vsub.f32 %v240, %v376
      %v409 = vsub.f32 %v241, %v377
      %v410 = vsub.f32 %v242, %v378
      %v411 = vsub.f32 %v243, %v379
      %v412 = vsub.f32 %v244, %v380
      %v413 = vsub.f32 %v245, %v381
      %v414 = vsub.f32 %v246, %v382
      %v415 = vsub.f32 %v247, %v383
      %v416 = vsub.f32 %v248, %v384
      %v417 = vsub.f32 %v249, %v385
      %v418 = vsub.f32 %v250, %v386
      %v419 = vsub.f32 %v251, %v387
      %v420 = vsub.f32 %v252, %v388
      %v421 = vsub.f32 %v253, %v389
      %v422 = vsub.f32 %v254, %v390
      %v423 = vsub.f32 %v255, %v391
      %v424 = vsub.f32 %v256, %v392
      %v425 = vsub.f32 %v257, %v393
      %v426 = vsub.f32 %v258, %v394
      %v427 = vsub.f32 %v259, %v395
      %v428 = vsub.f32 %v260, %v396
      %v429 = vmul.f32 %v397, %v397
      %v430 = vmul.f32 %v398, %v398
      %v431 = vmul.f32 %v399, %v399
      %v432 = vmul.f32 %v400, %v400
      %v433 = vmul.f32 %v401, %v401
      %v434 = vmul.f32 %v402, %v402
      %v435 = vmul.f32 %v403, %v403
      %v436 = vmul.f32 %v404, %v404
      %v437 = vmul.f32 %v405, %v405
      %v438 = vmul.f32 %v406, %v406
      %v439 = vmul.f32 %v407, %v407
      %v440 = vmul.f32 %v408, %v408
      %v441 = vmul.f32 %v409, %v409
      %v442 = vmul.f32 %v410, %v410
      %v443 = vmul.f32 %v411, %v411
      %v444 = vmul.f32 %v412, %v412
      %v445 = vmul.f32 %v413, %v413
      %v446 = vmul.f32 %v414, %v414
      %v447 = vmul.f32 %v415, %v415
      %v448 = vmul.f32 %v416, %v416
      %v449 = vmul.f32 %v417, %v417
      %v450 = vmul.f32 %v418, %v418
      %v451 = vmul.f32 %v419, %v419
      %v452 = vmul.f32 %v420, %v420
      %v453 = vmul.f32 %v421, %v421
      %v454 = vmul.f32 %v422, %v422
      %v455 = vmul.f32 %v423, %v423
      %v456 = vmul.f32 %v424, %v424
      %v457 = vmul.f32 %v425, %v425
      %v458 = vmul.f32 %v426, %v426
      %v459 = vmul.f32 %v427, %v427
      %v460 = vmul.f32 %v428, %v428
      %v461 = vsel %vm261, %v429, 0.0
      %462 = vadd.xlane.f32.xlu0 %v461
      %v463 = vpop.xlane.xlu0 %462
      %v464 = vsel %vm261, %v430, 0.0
      %465 = vadd.xlane.f32.xlu0 %v464
      %v466 = vpop.xlane.xlu0 %465
      %v467 = vsel %vm261, %v431, 0.0
      %468 = vadd.xlane.f32.xlu0 %v467
      %v469 = vpop.xlane.xlu0 %468
      %v470 = vsel %vm261, %v432, 0.0
      %471 = vadd.xlane.f32.xlu0 %v470
      %v472 = vpop.xlane.xlu0 %471
      %v473 = vsel %vm261, %v433, 0.0
      %474 = vadd.xlane.f32.xlu0 %v473
      %v475 = vpop.xlane.xlu0 %474
      %v476 = vsel %vm261, %v434, 0.0
      %477 = vadd.xlane.f32.xlu0 %v476
      %v478 = vpop.xlane.xlu0 %477
      %v479 = vsel %vm261, %v435, 0.0
      %480 = vadd.xlane.f32.xlu0 %v479
      %v481 = vpop.xlane.xlu0 %480
      %v482 = vsel %vm261, %v436, 0.0
      %483 = vadd.xlane.f32.xlu0 %v482
      %v484 = vpop.xlane.xlu0 %483
      %v485 = vsel %vm261, %v437, 0.0
      %486 = vadd.xlane.f32.xlu0 %v485
      %v487 = vpop.xlane.xlu0 %486
      %v488 = vsel %vm261, %v438, 0.0
      %489 = vadd.xlane.f32.xlu0 %v488
      %v490 = vpop.xlane.xlu0 %489
      %v491 = vsel %vm261, %v439, 0.0
      %492 = vadd.xlane.f32.xlu0 %v491
      %v493 = vpop.xlane.xlu0 %492
      %v494 = vsel %vm261, %v440, 0.0
      %495 = vadd.xlane.f32.xlu0 %v494
      %v496 = vpop.xlane.xlu0 %495
      %v497 = vsel %vm261, %v441, 0.0
      %498 = vadd.xlane.f32.xlu0 %v497
      %v499 = vpop.xlane.xlu0 %498
      %v500 = vsel %vm261, %v442, 0.0
      %501 = vadd.xlane.f32.xlu0 %v500
      %v502 = vpop.xlane.xlu0 %501
      %v503 = vsel %vm261, %v443, 0.0
      %504 = vadd.xlane.f32.xlu0 %v503
      %v505 = vpop.xlane.xlu0 %504
      %v506 = vsel %vm261, %v444, 0.0
      %507 = vadd.xlane.f32.xlu0 %v506
      %v508 = vpop.xlane.xlu0 %507
      %v509 = vsel %vm261, %v445, 0.0
      %510 = vadd.xlane.f32.xlu0 %v509
      %v511 = vpop.xlane.xlu0 %510
      %v512 = vsel %vm261, %v446, 0.0
      %513 = vadd.xlane.f32.xlu0 %v512
      %v514 = vpop.xlane.xlu0 %513
      %v515 = vsel %vm261, %v447, 0.0
      %516 = vadd.xlane.f32.xlu0 %v515
      %v517 = vpop.xlane.xlu0 %516
      %v518 = vsel %vm261, %v448, 0.0
      %519 = vadd.xlane.f32.xlu0 %v518
      %v520 = vpop.xlane.xlu0 %519
      %v521 = vsel %vm261, %v449, 0.0
      %522 = vadd.xlane.f32.xlu0 %v521
      %v523 = vpop.xlane.xlu0 %522
      %v524 = vsel %vm261, %v450, 0.0
      %525 = vadd.xlane.f32.xlu0 %v524
      %v526 = vpop.xlane.xlu0 %525
      %v527 = vsel %vm261, %v451, 0.0
      %528 = vadd.xlane.f32.xlu0 %v527
      %v529 = vpop.xlane.xlu0 %528
      %v530 = vsel %vm261, %v452, 0.0
      %531 = vadd.xlane.f32.xlu0 %v530
      %v532 = vpop.xlane.xlu0 %531
      %v533 = vsel %vm261, %v453, 0.0
      %534 = vadd.xlane.f32.xlu0 %v533
      %v535 = vpop.xlane.xlu0 %534
      %v536 = vsel %vm261, %v454, 0.0
      %537 = vadd.xlane.f32.xlu0 %v536
      %v538 = vpop.xlane.xlu0 %537
      %v539 = vsel %vm261, %v455, 0.0
      %540 = vadd.xlane.f32.xlu0 %v539
      %v541 = vpop.xlane.xlu0 %540
      %v542 = vsel %vm261, %v456, 0.0
      %543 = vadd.xlane.f32.xlu0 %v542
      %v544 = vpop.xlane.xlu0 %543
      %v545 = vsel %vm261, %v457, 0.0
      %546 = vadd.xlane.f32.xlu0 %v545
      %v547 = vpop.xlane.xlu0 %546
      %v548 = vsel %vm261, %v458, 0.0
      %549 = vadd.xlane.f32.xlu0 %v548
      %v550 = vpop.xlane.xlu0 %549
      %v551 = vsel %vm261, %v459, 0.0
      %552 = vadd.xlane.f32.xlu0 %v551
      %v553 = vpop.xlane.xlu0 %552
      %v554 = vsel %vm261, %v460, 0.0
      %555 = vadd.xlane.f32.xlu0 %v554
      %v556 = vpop.xlane.xlu0 %555
      %v557 = vmul.f32 %v463, %v364
      %v558 = vmul.f32 %v466, %v364
      %v559 = vmul.f32 %v469, %v364
      %v560 = vmul.f32 %v472, %v364
      %v561 = vmul.f32 %v475, %v364
      %v562 = vmul.f32 %v478, %v364
      %v563 = vmul.f32 %v481, %v364
      %v564 = vmul.f32 %v484, %v364
      %v565 = vmul.f32 %v487, %v364
      %v566 = vmul.f32 %v490, %v364
      %v567 = vmul.f32 %v493, %v364
      %v568 = vmul.f32 %v496, %v364
      %v569 = vmul.f32 %v499, %v364
      %v570 = vmul.f32 %v502, %v364
      %v571 = vmul.f32 %v505, %v364
      %v572 = vmul.f32 %v508, %v364
      %v573 = vmul.f32 %v511, %v364
      %v574 = vmul.f32 %v514, %v364
      %v575 = vmul.f32 %v517, %v364
      %v576 = vmul.f32 %v520, %v364
      %v577 = vmul.f32 %v523, %v364
      %v578 = vmul.f32 %v526, %v364
      %v579 = vmul.f32 %v529, %v364
      %v580 = vmul.f32 %v532, %v364
      %v581 = vmul.f32 %v535, %v364
      %v582 = vmul.f32 %v538, %v364
      %v583 = vmul.f32 %v541, %v364
      %v584 = vmul.f32 %v544, %v364
      %v585 = vmul.f32 %v547, %v364
      %v586 = vmul.f32 %v550, %v364
      %v587 = vmul.f32 %v553, %v364
      %v588 = vmul.f32 %v556, %v364
      %v589 = vadd.f32 %v557, 1e-05
      %v590 = vadd.f32 %v558, 1e-05
      %v591 = vadd.f32 %v559, 1e-05
      %v592 = vadd.f32 %v560, 1e-05
      %v593 = vadd.f32 %v561, 1e-05
      %v594 = vadd.f32 %v562, 1e-05
      %v595 = vadd.f32 %v563, 1e-05
      %v596 = vadd.f32 %v564, 1e-05
      %v597 = vadd.f32 %v565, 1e-05
      %v598 = vadd.f32 %v566, 1e-05
      %v599 = vadd.f32 %v567, 1e-05
      %v600 = vadd.f32 %v568, 1e-05
      %v601 = vadd.f32 %v569, 1e-05
      %v602 = vadd.f32 %v570, 1e-05
      %v603 = vadd.f32 %v571, 1e-05
      %v604 = vadd.f32 %v572, 1e-05
      %v605 = vadd.f32 %v573, 1e-05
      %v606 = vadd.f32 %v574, 1e-05
      %v607 = vadd.f32 %v575, 1e-05
      %v608 = vadd.f32 %v576, 1e-05
      %v609 = vadd.f32 %v577, 1e-05
      %v610 = vadd.f32 %v578, 1e-05
      %v611 = vadd.f32 %v579, 1e-05
      %v612 = vadd.f32 %v580, 1e-05
      %v613 = vadd.f32 %v581, 1e-05
      %v614 = vadd.f32 %v582, 1e-05
      %v615 = vadd.f32 %v583, 1e-05
      %v616 = vadd.f32 %v584, 1e-05
      %v617 = vadd.f32 %v585, 1e-05
      %v618 = vadd.f32 %v586, 1e-05
      %v619 = vadd.f32 %v587, 1e-05
      %v620 = vadd.f32 %v588, 1e-05
      %v621 = vrsqrt.pop %v589
      %v622 = vmul.f32 %v621, %v589
      %v623 = vmul.f32 %v622, %v621
      %v624 = vmul.f32 0.5, %v623
      %v625 = vsub.f32 1.5, %v624
      %v626 = vmul.f32 %v621, %v625
      %vm627 = vweird.f32 %v589
      %vm628 = vweird.f32 %v621
      %vm629 = vmor %vm627, %vm628
      %v630 = vsel %vm629, %v621, %v626
      %v631 = vrsqrt.pop %v590
      %v632 = vmul.f32 %v631, %v590
      %v633 = vmul.f32 %v632, %v631
      %v634 = vmul.f32 0.5, %v633
      %v635 = vsub.f32 1.5, %v634
      %v636 = vmul.f32 %v631, %v635
      %vm637 = vweird.f32 %v590
      %vm638 = vweird.f32 %v631
      %vm639 = vmor %vm637, %vm638
      %v640 = vsel %vm639, %v631, %v636
      %v641 = vrsqrt.pop %v591
      %v642 = vmul.f32 %v641, %v591
      %v643 = vmul.f32 %v642, %v641
      %v644 = vmul.f32 0.5, %v643
      %v645 = vsub.f32 1.5, %v644
      %v646 = vmul.f32 %v641, %v645
      %vm647 = vweird.f32 %v591
      %vm648 = vweird.f32 %v641
      %vm649 = vmor %vm647, %vm648
      %v650 = vsel %vm649, %v641, %v646
      %v651 = vrsqrt.pop %v592
      %v652 = vmul.f32 %v651, %v592
      %v653 = vmul.f32 %v652, %v651
      %v654 = vmul.f32 0.5, %v653
      %v655 = vsub.f32 1.5, %v654
      %v656 = vmul.f32 %v651, %v655
      %vm657 = vweird.f32 %v592
      %vm658 = vweird.f32 %v651
      %vm659 = vmor %vm657, %vm658
      %v660 = vsel %vm659, %v651, %v656
      %v661 = vrsqrt.pop %v593
      %v662 = vmul.f32 %v661, %v593
      %v663 = vmul.f32 %v662, %v661
      %v664 = vmul.f32 0.5, %v663
      %v665 = vsub.f32 1.5, %v664
      %v666 = vmul.f32 %v661, %v665
      %vm667 = vweird.f32 %v593
      %vm668 = vweird.f32 %v661
      %vm669 = vmor %vm667, %vm668
      %v670 = vsel %vm669, %v661, %v666
      %v671 = vrsqrt.pop %v594
      %v672 = vmul.f32 %v671, %v594
      %v673 = vmul.f32 %v672, %v671
      %v674 = vmul.f32 0.5, %v673
      %v675 = vsub.f32 1.5, %v674
      %v676 = vmul.f32 %v671, %v675
      %vm677 = vweird.f32 %v594
      %vm678 = vweird.f32 %v671
      %vm679 = vmor %vm677, %vm678
      %v680 = vsel %vm679, %v671, %v676
      %v681 = vrsqrt.pop %v595
      %v682 = vmul.f32 %v681, %v595
      %v683 = vmul.f32 %v682, %v681
      %v684 = vmul.f32 0.5, %v683
      %v685 = vsub.f32 1.5, %v684
      %v686 = vmul.f32 %v681, %v685
      %vm687 = vweird.f32 %v595
      %vm688 = vweird.f32 %v681
      %vm689 = vmor %vm687, %vm688
      %v690 = vsel %vm689, %v681, %v686
      %v691 = vrsqrt.pop %v596
      %v692 = vmul.f32 %v691, %v596
      %v693 = vmul.f32 %v692, %v691
      %v694 = vmul.f32 0.5, %v693
      %v695 = vsub.f32 1.5, %v694
      %v696 = vmul.f32 %v691, %v695
      %vm697 = vweird.f32 %v596
      %vm698 = vweird.f32 %v691
      %vm699 = vmor %vm697, %vm698
      %v700 = vsel %vm699, %v691, %v696
      %v701 = vrsqrt.pop %v597
      %v702 = vmul.f32 %v701, %v597
      %v703 = vmul.f32 %v702, %v701
      %v704 = vmul.f32 0.5, %v703
      %v705 = vsub.f32 1.5, %v704
      %v706 = vmul.f32 %v701, %v705
      %vm707 = vweird.f32 %v597
      %vm708 = vweird.f32 %v701
      %vm709 = vmor %vm707, %vm708
      %v710 = vsel %vm709, %v701, %v706
      %v711 = vrsqrt.pop %v598
      %v712 = vmul.f32 %v711, %v598
      %v713 = vmul.f32 %v712, %v711
      %v714 = vmul.f32 0.5, %v713
      %v715 = vsub.f32 1.5, %v714
      %v716 = vmul.f32 %v711, %v715
      %vm717 = vweird.f32 %v598
      %vm718 = vweird.f32 %v711
      %vm719 = vmor %vm717, %vm718
      %v720 = vsel %vm719, %v711, %v716
      %v721 = vrsqrt.pop %v599
      %v722 = vmul.f32 %v721, %v599
      %v723 = vmul.f32 %v722, %v721
      %v724 = vmul.f32 0.5, %v723
      %v725 = vsub.f32 1.5, %v724
      %v726 = vmul.f32 %v721, %v725
      %vm727 = vweird.f32 %v599
      %vm728 = vweird.f32 %v721
      %vm729 = vmor %vm727, %vm728
      %v730 = vsel %vm729, %v721, %v726
      %v731 = vrsqrt.pop %v600
      %v732 = vmul.f32 %v731, %v600
      %v733 = vmul.f32 %v732, %v731
      %v734 = vmul.f32 0.5, %v733
      %v735 = vsub.f32 1.5, %v734
      %v736 = vmul.f32 %v731, %v735
      %vm737 = vweird.f32 %v600
      %vm738 = vweird.f32 %v731
      %vm739 = vmor %vm737, %vm738
      %v740 = vsel %vm739, %v731, %v736
      %v741 = vrsqrt.pop %v601
      %v742 = vmul.f32 %v741, %v601
      %v743 = vmul.f32 %v742, %v741
      %v744 = vmul.f32 0.5, %v743
      %v745 = vsub.f32 1.5, %v744
      %v746 = vmul.f32 %v741, %v745
      %vm747 = vweird.f32 %v601
      %vm748 = vweird.f32 %v741
      %vm749 = vmor %vm747, %vm748
      %v750 = vsel %vm749, %v741, %v746
      %v751 = vrsqrt.pop %v602
      %v752 = vmul.f32 %v751, %v602
      %v753 = vmul.f32 %v752, %v751
      %v754 = vmul.f32 0.5, %v753
      %v755 = vsub.f32 1.5, %v754
      %v756 = vmul.f32 %v751, %v755
      %vm757 = vweird.f32 %v602
      %vm758 = vweird.f32 %v751
      %vm759 = vmor %vm757, %vm758
      %v760 = vsel %vm759, %v751, %v756
      %v761 = vrsqrt.pop %v603
      %v762 = vmul.f32 %v761, %v603
      %v763 = vmul.f32 %v762, %v761
      %v764 = vmul.f32 0.5, %v763
      %v765 = vsub.f32 1.5, %v764
      %v766 = vmul.f32 %v761, %v765
      %vm767 = vweird.f32 %v603
      %vm768 = vweird.f32 %v761
      %vm769 = vmor %vm767, %vm768
      %v770 = vsel %vm769, %v761, %v766
      %v771 = vrsqrt.pop %v604
      %v772 = vmul.f32 %v771, %v604
      %v773 = vmul.f32 %v772, %v771
      %v774 = vmul.f32 0.5, %v773
      %v775 = vsub.f32 1.5, %v774
      %v776 = vmul.f32 %v771, %v775
      %vm777 = vweird.f32 %v604
      %vm778 = vweird.f32 %v771
      %vm779 = vmor %vm777, %vm778
      %v780 = vsel %vm779, %v771, %v776
      %v781 = vrsqrt.pop %v605
      %v782 = vmul.f32 %v781, %v605
      %v783 = vmul.f32 %v782, %v781
      %v784 = vmul.f32 0.5, %v783
      %v785 = vsub.f32 1.5, %v784
      %v786 = vmul.f32 %v781, %v785
      %vm787 = vweird.f32 %v605
      %vm788 = vweird.f32 %v781
      %vm789 = vmor %vm787, %vm788
      %v790 = vsel %vm789, %v781, %v786
      %v791 = vrsqrt.pop %v606
      %v792 = vmul.f32 %v791, %v606
      %v793 = vmul.f32 %v792, %v791
      %v794 = vmul.f32 0.5, %v793
      %v795 = vsub.f32 1.5, %v794
      %v796 = vmul.f32 %v791, %v795
      %vm797 = vweird.f32 %v606
      %vm798 = vweird.f32 %v791
      %vm799 = vmor %vm797, %vm798
      %v800 = vsel %vm799, %v791, %v796
      %v801 = vrsqrt.pop %v607
      %v802 = vmul.f32 %v801, %v607
      %v803 = vmul.f32 %v802, %v801
      %v804 = vmul.f32 0.5, %v803
      %v805 = vsub.f32 1.5, %v804
      %v806 = vmul.f32 %v801, %v805
      %vm807 = vweird.f32 %v607
      %vm808 = vweird.f32 %v801
      %vm809 = vmor %vm807, %vm808
      %v810 = vsel %vm809, %v801, %v806
      %v811 = vrsqrt.pop %v608
      %v812 = vmul.f32 %v811, %v608
      %v813 = vmul.f32 %v812, %v811
      %v814 = vmul.f32 0.5, %v813
      %v815 = vsub.f32 1.5, %v814
      %v816 = vmul.f32 %v811, %v815
      %vm817 = vweird.f32 %v608
      %vm818 = vweird.f32 %v811
      %vm819 = vmor %vm817, %vm818
      %v820 = vsel %vm819, %v811, %v816
      %v821 = vrsqrt.pop %v609
      %v822 = vmul.f32 %v821, %v609
      %v823 = vmul.f32 %v822, %v821
      %v824 = vmul.f32 0.5, %v823
      %v825 = vsub.f32 1.5, %v824
      %v826 = vmul.f32 %v821, %v825
      %vm827 = vweird.f32 %v609
      %vm828 = vweird.f32 %v821
      %vm829 = vmor %vm827, %vm828
      %v830 = vsel %vm829, %v821, %v826
      %v831 = vrsqrt.pop %v610
      %v832 = vmul.f32 %v831, %v610
      %v833 = vmul.f32 %v832, %v831
      %v834 = vmul.f32 0.5, %v833
      %v835 = vsub.f32 1.5, %v834
      %v836 = vmul.f32 %v831, %v835
      %vm837 = vweird.f32 %v610
      %vm838 = vweird.f32 %v831
      %vm839 = vmor %vm837, %vm838
      %v840 = vsel %vm839, %v831, %v836
      %v841 = vrsqrt.pop %v611
      %v842 = vmul.f32 %v841, %v611
      %v843 = vmul.f32 %v842, %v841
      %v844 = vmul.f32 0.5, %v843
      %v845 = vsub.f32 1.5, %v844
      %v846 = vmul.f32 %v841, %v845
      %vm847 = vweird.f32 %v611
      %vm848 = vweird.f32 %v841
      %vm849 = vmor %vm847, %vm848
      %v850 = vsel %vm849, %v841, %v846
      %v851 = vrsqrt.pop %v612
      %v852 = vmul.f32 %v851, %v612
      %v853 = vmul.f32 %v852, %v851
      %v854 = vmul.f32 0.5, %v853
      %v855 = vsub.f32 1.5, %v854
      %v856 = vmul.f32 %v851, %v855
      %vm857 = vweird.f32 %v612
      %vm858 = vweird.f32 %v851
      %vm859 = vmor %vm857, %vm858
      %v860 = vsel %vm859, %v851, %v856
      %v861 = vrsqrt.pop %v613
      %v862 = vmul.f32 %v861, %v613
      %v863 = vmul.f32 %v862, %v861
      %v864 = vmul.f32 0.5, %v863
      %v865 = vsub.f32 1.5, %v864
      %v866 = vmul.f32 %v861, %v865
      %vm867 = vweird.f32 %v613
      %vm868 = vweird.f32 %v861
      %vm869 = vmor %vm867, %vm868
      %v870 = vsel %vm869, %v861, %v866
      %v871 = vrsqrt.pop %v614
      %v872 = vmul.f32 %v871, %v614
      %v873 = vmul.f32 %v872, %v871
      %v874 = vmul.f32 0.5, %v873
      %v875 = vsub.f32 1.5, %v874
      %v876 = vmul.f32 %v871, %v875
      %vm877 = vweird.f32 %v614
      %vm878 = vweird.f32 %v871
      %vm879 = vmor %vm877, %vm878
      %v880 = vsel %vm879, %v871, %v876
      %v881 = vrsqrt.pop %v615
      %v882 = vmul.f32 %v881, %v615
      %v883 = vmul.f32 %v882, %v881
      %v884 = vmul.f32 0.5, %v883
      %v885 = vsub.f32 1.5, %v884
      %v886 = vmul.f32 %v881, %v885
      %vm887 = vweird.f32 %v615
      %vm888 = vweird.f32 %v881
      %vm889 = vmor %vm887, %vm888
      %v890 = vsel %vm889, %v881, %v886
      %v891 = vrsqrt.pop %v616
      %v892 = vmul.f32 %v891, %v616
      %v893 = vmul.f32 %v892, %v891
      %v894 = vmul.f32 0.5, %v893
      %v895 = vsub.f32 1.5, %v894
      %v896 = vmul.f32 %v891, %v895
      %vm897 = vweird.f32 %v616
      %vm898 = vweird.f32 %v891
      %vm899 = vmor %vm897, %vm898
      %v900 = vsel %vm899, %v891, %v896
      %v901 = vrsqrt.pop %v617
      %v902 = vmul.f32 %v901, %v617
      %v903 = vmul.f32 %v902, %v901
      %v904 = vmul.f32 0.5, %v903
      %v905 = vsub.f32 1.5, %v904
      %v906 = vmul.f32 %v901, %v905
      %vm907 = vweird.f32 %v617
      %vm908 = vweird.f32 %v901
      %vm909 = vmor %vm907, %vm908
      %v910 = vsel %vm909, %v901, %v906
      %v911 = vrsqrt.pop %v618
      %v912 = vmul.f32 %v911, %v618
      %v913 = vmul.f32 %v912, %v911
      %v914 = vmul.f32 0.5, %v913
      %v915 = vsub.f32 1.5, %v914
      %v916 = vmul.f32 %v911, %v915
      %vm917 = vweird.f32 %v618
      %vm918 = vweird.f32 %v911
      %vm919 = vmor %vm917, %vm918
      %v920 = vsel %vm919, %v911, %v916
      %v921 = vrsqrt.pop %v619
      %v922 = vmul.f32 %v921, %v619
      %v923 = vmul.f32 %v922, %v921
      %v924 = vmul.f32 0.5, %v923
      %v925 = vsub.f32 1.5, %v924
      %v926 = vmul.f32 %v921, %v925
      %vm927 = vweird.f32 %v619
      %vm928 = vweird.f32 %v921
      %vm929 = vmor %vm927, %vm928
      %v930 = vsel %vm929, %v921, %v926
      %v931 = vrsqrt.pop %v620
      %v932 = vmul.f32 %v931, %v620
      %v933 = vmul.f32 %v932, %v931
      %v934 = vmul.f32 0.5, %v933
      %v935 = vsub.f32 1.5, %v934
      %v936 = vmul.f32 %v931, %v935
      %vm937 = vweird.f32 %v620
      %vm938 = vweird.f32 %v931
      %vm939 = vmor %vm937, %vm938
      %v940 = vsel %vm939, %v931, %v936
      %v941 = vmul.f32 %v397, %v630
      %v942 = vmul.f32 %v398, %v640
      %v943 = vmul.f32 %v399, %v650
      %v944 = vmul.f32 %v400, %v660
      %v945 = vmul.f32 %v401, %v670
      %v946 = vmul.f32 %v402, %v680
      %v947 = vmul.f32 %v403, %v690
      %v948 = vmul.f32 %v404, %v700
      %v949 = vmul.f32 %v405, %v710
      %v950 = vmul.f32 %v406, %v720
      %v951 = vmul.f32 %v407, %v730
      %v952 = vmul.f32 %v408, %v740
      %v953 = vmul.f32 %v409, %v750
      %v954 = vmul.f32 %v410, %v760
      %v955 = vmul.f32 %v411, %v770
      %v956 = vmul.f32 %v412, %v780
      %v957 = vmul.f32 %v413, %v790
      %v958 = vmul.f32 %v414, %v800
      %v959 = vmul.f32 %v415, %v810
      %v960 = vmul.f32 %v416, %v820
      %v961 = vmul.f32 %v417, %v830
      %v962 = vmul.f32 %v418, %v840
      %v963 = vmul.f32 %v419, %v850
      %v964 = vmul.f32 %v420, %v860
      %v965 = vmul.f32 %v421, %v870
      %v966 = vmul.f32 %v422, %v880
      %v967 = vmul.f32 %v423, %v890
      %v968 = vmul.f32 %v424, %v900
      %v969 = vmul.f32 %v425, %v910
      %v970 = vmul.f32 %v426, %v920
      %v971 = vmul.f32 %v427, %v930
      %v972 = vmul.f32 %v428, %v940
      %v973 = vld [vmem:[%s1] sm:$0x1]
      %v975 = vperm.slane %v973, 0
      %v977 = vmul.f32 %v941, %v975
      %v978 = vmul.f32 %v942, %v975
      %v979 = vmul.f32 %v943, %v975
      %v980 = vmul.f32 %v944, %v975
      %v981 = vmul.f32 %v945, %v975
      %v982 = vmul.f32 %v946, %v975
      %v983 = vmul.f32 %v947, %v975
      %v984 = vmul.f32 %v948, %v975
      %v985 = vmul.f32 %v949, %v975
      %v986 = vmul.f32 %v950, %v975
      %v987 = vmul.f32 %v951, %v975
      %v988 = vmul.f32 %v952, %v975
      %v989 = vmul.f32 %v953, %v975
      %v990 = vmul.f32 %v954, %v975
      %v991 = vmul.f32 %v955, %v975
      %v992 = vmul.f32 %v956, %v975
      %v993 = vmul.f32 %v957, %v975
      %v994 = vmul.f32 %v958, %v975
      %v995 = vmul.f32 %v959, %v975
      %v996 = vmul.f32 %v960, %v975
      %v997 = vmul.f32 %v961, %v975
      %v998 = vmul.f32 %v962, %v975
      %v999 = vmul.f32 %v963, %v975
      %v1000 = vmul.f32 %v964, %v975
      %v1001 = vmul.f32 %v965, %v975
      %v1002 = vmul.f32 %v966, %v975
      %v1003 = vmul.f32 %v967, %v975
      %v1004 = vmul.f32 %v968, %v975
      %v1005 = vmul.f32 %v969, %v975
      %v1006 = vmul.f32 %v970, %v975
      %v1007 = vmul.f32 %v971, %v975
      %v1008 = vmul.f32 %v972, %v975
      %v1009 = vld [vmem:[%s2] sm:$0x1]
      %v1011 = vperm.slane %v1009, 0
      %v1013 = vadd.f32 %v977, %v1011
      %v1014 = vadd.f32 %v978, %v1011
      %v1015 = vadd.f32 %v979, %v1011
      %v1016 = vadd.f32 %v980, %v1011
      %v1017 = vadd.f32 %v981, %v1011
      %v1018 = vadd.f32 %v982, %v1011
      %v1019 = vadd.f32 %v983, %v1011
      %v1020 = vadd.f32 %v984, %v1011
      %v1021 = vadd.f32 %v985, %v1011
      %v1022 = vadd.f32 %v986, %v1011
      %v1023 = vadd.f32 %v987, %v1011
      %v1024 = vadd.f32 %v988, %v1011
      %v1025 = vadd.f32 %v989, %v1011
      %v1026 = vadd.f32 %v990, %v1011
      %v1027 = vadd.f32 %v991, %v1011
      %v1028 = vadd.f32 %v992, %v1011
      %v1029 = vadd.f32 %v993, %v1011
      %v1030 = vadd.f32 %v994, %v1011
      %v1031 = vadd.f32 %v995, %v1011
      %v1032 = vadd.f32 %v996, %v1011
      %v1033 = vadd.f32 %v997, %v1011
      %v1034 = vadd.f32 %v998, %v1011
      %v1035 = vadd.f32 %v999, %v1011
      %v1036 = vadd.f32 %v1000, %v1011
      %v1037 = vadd.f32 %v1001, %v1011
      %v1038 = vadd.f32 %v1002, %v1011
      %v1039 = vadd.f32 %v1003, %v1011
      %v1040 = vadd.f32 %v1004, %v1011
      %v1041 = vadd.f32 %v1005, %v1011
      %v1042 = vadd.f32 %v1006, %v1011
      %v1043 = vadd.f32 %v1007, %v1011
      %v1044 = vadd.f32 %v1008, %v1011
      %v1045 = vpack.c.bf16 %v1014, %v1013
      %v1046 = vpack.c.bf16 %v1016, %v1015
      %v1047 = vpack.c.bf16 %v1018, %v1017
      %v1048 = vpack.c.bf16 %v1020, %v1019
      %v1049 = vpack.c.bf16 %v1022, %v1021
      %v1050 = vpack.c.bf16 %v1024, %v1023
      %v1051 = vpack.c.bf16 %v1026, %v1025
      %v1052 = vpack.c.bf16 %v1028, %v1027
      %v1053 = vpack.c.bf16 %v1030, %v1029
      %v1054 = vpack.c.bf16 %v1032, %v1031
      %v1055 = vpack.c.bf16 %v1034, %v1033
      %v1056 = vpack.c.bf16 %v1036, %v1035
      %v1057 = vpack.c.bf16 %v1038, %v1037
      %v1058 = vpack.c.bf16 %v1040, %v1039
      %v1059 = vpack.c.bf16 %v1042, %v1041
      %v1060 = vpack.c.bf16 %v1044, %v1043
      %v1061 = vld [vmem:[%s3] sm:$0xf]
      %v1062 = vld [vmem:[%s4] sm:$0x1]
      %v1064 = vperm.slane %v1062, 0
      %v1067 = vsel %vm261, %v1045, 0
      %v1070 = vsel %vm261, %v1046, 0
      %v1073 = vsel %vm261, %v1047, 0
      %v1076 = vsel %vm261, %v1048, 0
      %v1079 = vsel %vm261, %v1049, 0
      %v1082 = vsel %vm261, %v1050, 0
      %v1085 = vsel %vm261, %v1051, 0
      %v1088 = vsel %vm261, %v1052, 0
      %v1091 = vsel %vm261, %v1053, 0
      %v1094 = vsel %vm261, %v1054, 0
      %v1097 = vsel %vm261, %v1055, 0
      %v1100 = vsel %vm261, %v1056, 0
      %v1103 = vsel %vm261, %v1057, 0
      %v1106 = vsel %vm261, %v1058, 0
      %v1109 = vsel %vm261, %v1059, 0
      %v1112 = vsel %vm261, %v1060, 0
      %vm1114 = vcmask 1043456
      %v1116 = vsel %vm1114, %v1061, 0
      %1118 = vmatpush.bf16.msra.mxu0 0
      %1119 = vmatpush.bf16.msra.mxu0 0
      %1120 = vmatpush.bf16.msra.mxu0 0
      %1121 = vmatpush.bf16.msra.mxu0 0
      %1122 = vmatpush.bf16.msra.mxu0 0
      %1123 = vmatpush.bf16.msra.mxu0 0
      %1124 = vmatpush.bf16.msra.mxu0 0
      %1125 = vmatpush.bf16.msra.mxu0 %v1116
      %1126 = vmatmul.bf16.gmra.mxu0 %v1067
      %v1127 = vpop.f32.mrf.mxu0
      %v1128 = vadd.f32 %v1064, %v1127
      %v1129 = vpop.f32.mrf.mxu0
      %v1130 = vadd.f32 %v1064, %v1129
      %1131 = vmatmul.bf16.gmra.mxu0 %v1070
      %v1132 = vpop.f32.mrf.mxu0
      %v1133 = vadd.f32 %v1064, %v1132
      %v1134 = vpop.f32.mrf.mxu0
      %v1135 = vadd.f32 %v1064, %v1134
      %1136 = vmatmul.bf16.gmra.mxu0 %v1073
      %v1137 = vpop.f32.mrf.mxu0
      %v1138 = vadd.f32 %v1064, %v1137
      %v1139 = vpop.f32.mrf.mxu0
      %v1140 = vadd.f32 %v1064, %v1139
      %1141 = vmatmul.bf16.gmra.mxu0 %v1076
      %v1142 = vpop.f32.mrf.mxu0
      %v1143 = vadd.f32 %v1064, %v1142
      %v1144 = vpop.f32.mrf.mxu0
      %v1145 = vadd.f32 %v1064, %v1144
      %1146 = vmatmul.bf16.gmra.mxu0 %v1079
      %v1147 = vpop.f32.mrf.mxu0
      %v1148 = vadd.f32 %v1064, %v1147
      %v1149 = vpop.f32.mrf.mxu0
      %v1150 = vadd.f32 %v1064, %v1149
      %1151 = vmatmul.bf16.gmra.mxu0 %v1082
      %v1152 = vpop.f32.mrf.mxu0
      %v1153 = vadd.f32 %v1064, %v1152
      %v1154 = vpop.f32.mrf.mxu0
      %v1155 = vadd.f32 %v1064, %v1154
      %1156 = vmatmul.bf16.gmra.mxu0 %v1085
      %v1157 = vpop.f32.mrf.mxu0
      %v1158 = vadd.f32 %v1064, %v1157
      %v1159 = vpop.f32.mrf.mxu0
      %v1160 = vadd.f32 %v1064, %v1159
      %1161 = vmatmul.bf16.gmra.mxu0 %v1088
      %v1162 = vpop.f32.mrf.mxu0
      %v1163 = vadd.f32 %v1064, %v1162
      %v1164 = vpop.f32.mrf.mxu0
      %v1165 = vadd.f32 %v1064, %v1164
      %1166 = vmatmul.bf16.gmra.mxu0 %v1091
      %v1167 = vpop.f32.mrf.mxu0
      %v1168 = vadd.f32 %v1064, %v1167
      %v1169 = vpop.f32.mrf.mxu0
      %v1170 = vadd.f32 %v1064, %v1169
      %1171 = vmatmul.bf16.gmra.mxu0 %v1094
      %v1172 = vpop.f32.mrf.mxu0
      %v1173 = vadd.f32 %v1064, %v1172
      %v1174 = vpop.f32.mrf.mxu0
      %v1175 = vadd.f32 %v1064, %v1174
      %1176 = vmatmul.bf16.gmra.mxu0 %v1097
      %v1177 = vpop.f32.mrf.mxu0
      %v1178 = vadd.f32 %v1064, %v1177
      %v1179 = vpop.f32.mrf.mxu0
      %v1180 = vadd.f32 %v1064, %v1179
      %1181 = vmatmul.bf16.gmra.mxu0 %v1100
      %v1182 = vpop.f32.mrf.mxu0
      %v1183 = vadd.f32 %v1064, %v1182
      %v1184 = vpop.f32.mrf.mxu0
      %v1185 = vadd.f32 %v1064, %v1184
      %1186 = vmatmul.bf16.gmra.mxu0 %v1103
      %v1187 = vpop.f32.mrf.mxu0
      %v1188 = vadd.f32 %v1064, %v1187
      %v1189 = vpop.f32.mrf.mxu0
      %v1190 = vadd.f32 %v1064, %v1189
      %1191 = vmatmul.bf16.gmra.mxu0 %v1106
      %v1192 = vpop.f32.mrf.mxu0
      %v1193 = vadd.f32 %v1064, %v1192
      %v1194 = vpop.f32.mrf.mxu0
      %v1195 = vadd.f32 %v1064, %v1194
      %1196 = vmatmul.bf16.gmra.mxu0 %v1109
      %v1197 = vpop.f32.mrf.mxu0
      %v1198 = vadd.f32 %v1064, %v1197
      %v1199 = vpop.f32.mrf.mxu0
      %v1200 = vadd.f32 %v1064, %v1199
      %1201 = vmatmul.bf16.gmra.mxu0 %v1112
      %v1202 = vpop.f32.mrf.mxu0
      %v1203 = vadd.f32 %v1064, %v1202
      %v1204 = vpop.f32.mrf.mxu0
      %v1205 = vadd.f32 %v1064, %v1204
      %1206 = vdwg.mxu0
      %vm1207 = vcmask 261120
      %1208 = vst.msk [vmem:[%s226] sm:$0xff] %vm1207, %v1128
      %1209 = vst.msk [vmem:[%s226 + $0x8] sm:$0xff] %vm1207, %v1130
      %1210 = vst.msk [vmem:[%s226 + $0x10] sm:$0xff] %vm1207, %v1133
      %1211 = vst.msk [vmem:[%s226 + $0x18] sm:$0xff] %vm1207, %v1135
      %1212 = vst.msk [vmem:[%s226 + $0x20] sm:$0xff] %vm1207, %v1138
      %1213 = vst.msk [vmem:[%s226 + $0x28] sm:$0xff] %vm1207, %v1140
      %1214 = vst.msk [vmem:[%s226 + $0x30] sm:$0xff] %vm1207, %v1143
      %1215 = vst.msk [vmem:[%s226 + $0x38] sm:$0xff] %vm1207, %v1145
      %1216 = vst.msk [vmem:[%s226 + $0x40] sm:$0xff] %vm1207, %v1148
      %1217 = vst.msk [vmem:[%s226 + $0x48] sm:$0xff] %vm1207, %v1150
      %1218 = vst.msk [vmem:[%s226 + $0x50] sm:$0xff] %vm1207, %v1153
      %1219 = vst.msk [vmem:[%s226 + $0x58] sm:$0xff] %vm1207, %v1155
      %1220 = vst.msk [vmem:[%s226 + $0x60] sm:$0xff] %vm1207, %v1158
      %1221 = vst.msk [vmem:[%s226 + $0x68] sm:$0xff] %vm1207, %v1160
      %1222 = vst.msk [vmem:[%s226 + $0x70] sm:$0xff] %vm1207, %v1163
      %1223 = vst.msk [vmem:[%s226 + $0x78] sm:$0xff] %vm1207, %v1165
      %1224 = vst.msk [vmem:[%s226 + $0x80] sm:$0xff] %vm1207, %v1168
      %1225 = vst.msk [vmem:[%s226 + $0x88] sm:$0xff] %vm1207, %v1170
      %1226 = vst.msk [vmem:[%s226 + $0x90] sm:$0xff] %vm1207, %v1173
      %1227 = vst.msk [vmem:[%s226 + $0x98] sm:$0xff] %vm1207, %v1175
      %1228 = vst.msk [vmem:[%s226 + $0xa0] sm:$0xff] %vm1207, %v1178
      %1229 = vst.msk [vmem:[%s226 + $0xa8] sm:$0xff] %vm1207, %v1180
      %1230 = vst.msk [vmem:[%s226 + $0xb0] sm:$0xff] %vm1207, %v1183
      %1231 = vst.msk [vmem:[%s226 + $0xb8] sm:$0xff] %vm1207, %v1185
      %1232 = vst.msk [vmem:[%s226 + $0xc0] sm:$0xff] %vm1207, %v1188
      %1233 = vst.msk [vmem:[%s226 + $0xc8] sm:$0xff] %vm1207, %v1190
      %1234 = vst.msk [vmem:[%s226 + $0xd0] sm:$0xff] %vm1207, %v1193
      %1235 = vst.msk [vmem:[%s226 + $0xd8] sm:$0xff] %vm1207, %v1195
      %1236 = vst.msk [vmem:[%s226 + $0xe0] sm:$0xff] %vm1207, %v1198
      %1237 = vst.msk [vmem:[%s226 + $0xe8] sm:$0xff] %vm1207, %v1200
      %1238 = vst.msk [vmem:[%s226 + $0xf0] sm:$0xff] %vm1207, %v1203
      %1239 = vst.msk [vmem:[%s226 + $0xf8] sm:$0xff] %vm1207, %v1205
      %s1240 = smul.u32 32, %s16
      %p1241 = scmp.lt.s32.totalorder %s1240, 63
      %s1242 = scalar_select %p1241, %s1240, 63
      %s1243 = smul.addr %s1242, 8
      %s1244 = scalar_lea.vmem %s5, %s1243
      // Predicated region
      $region41: #{_lambda_.9} parent=39 // pred_check
        %p1245 = pneg %p144
      $region42: #{_lambda_.9} parent=39 // pred_check_branch
        %1247 = sbr.rel (%p1245) target = $region44
      $region43: #{_lambda_.9} parent=39 // pred_region
        %s1248 = smul.u32 32, %s16
      $region44: #{_lambda_.9} parent=39 // pred_fallthru
        _
    $region40: #{_lambda_.9} parent=5 // pred_fallthru
      _
    %p1249 = scmp.le.s32.totalorder 2, %s11
    // Predicated region
    $region45: #{_lambda_.9} parent=5 // pred_check
      %p1250 = pneg %p1249
    $region46: #{_lambda_.9} parent=5 // pred_check_branch
      %1252 = sbr.rel (%p1250) target = $region48
    $region47: #{_lambda_.9} parent=5 // pred_region
      %s1253 = ssub.s32 %s11, 2
      // Predicated region
      $region49: #{_lambda_.9} parent=47 // pred_check
        %p1254 = pneg %p150
      $region50: #{_lambda_.9} parent=47 // pred_check_branch
        %1256 = sbr.rel (%p1254) target = $region52
      $region51: #{_lambda_.9} parent=47 // pred_region
        %s1257 = smul.u32 32, %s17
        %p1258 = scmp.lt.s32.totalorder %s1257, 63
        %s1259 = scalar_select %p1258, %s1257, 63
        %s1260 = smul.addr %s1259, 8
        %s1261 = scalar_lea.vmem %s5, %s1260
      $region52: #{_lambda_.9} parent=47 // pred_fallthru
        _
    $region48: #{_lambda_.9} parent=5 // pred_fallthru
      _
  $region6: #{_lambda_.9} parent=0 // loop_footer
    %s15 = sadd.s32 1, %s11
  $region7: #{_lambda_.9} parent=0 // loop_footer_branch
    %10 = sbr.rel target = $region3
  $region8: #{_lambda_.9} parent=0 // loop_exit
    _

// kernel: _lambda_.7
$region0: #{_lambda_.7}
  #allocation0 [shape = 'u32[]', space=smem, size = 0x4, offset = 0x4, fixed_abs, tag = 'smem constant byte address 0x4 - core index']
  #allocation1 [shape = 'u32[72,128]{1,0:T(1,128)}', space=vmem, size = 0x9000, scoped, tag = 'internal scratch']
  %s0 = inlined_call_operand.vmem [shape: f32[2,18,18,24], index: 0, kind: input, shape index: {}]
  %s1 = inlined_call_operand.vmem [shape: f32[3,3,1,24], index: 1, kind: input, shape index: {}]
  %s2 = inlined_call_operand.vmem [shape: f32[1,24], index: 2, kind: input, shape index: {}]
  %s3 = inlined_call_operand.vmem [shape: f32[2,16,16,24], index: 3, kind: output, shape index: {}]
  %s4 = sld [smem:[#allocation0]]
  $region45: #{_lambda_.7} parent=0
    _
  %s6 = ssub.s32 1, %s4
  %s7 = scalar_select 0, %s6, %s4
  loop: start=0, step=1, limit=4
  $region2: #{_lambda_.7} parent=0 // loop_pre_header
    _
  $region3: #{_lambda_.7} parent=0 // loop_header
    %s9 = sphi 0, %s13
    %p10 = scmp.ge.s32.totalorder %s9, 4
    %s19 = sphi 0, %s21
    %s22 = sphi 0, %s19
    %s23 = sphi 0, %s22
    %s39 = sphi 0, %s23
    %s43 = sphi 0, %s43
    %s45 = sphi 0, %s43
    %s46 = sphi 0, %s45
    %s60 = sphi 0, %s46
    %s64 = sphi 0, %s64
    %s66 = sphi 0, %s64
    %s67 = sphi 0, %s66
    %s81 = sphi 0, %s67
    %s87 = sphi 0, %s89
    %s90 = sphi 0, %s87
    %s91 = sphi 0, %s90
    %s107 = sphi 0, %s91
  $region4: #{_lambda_.7} parent=0 // loop_header_branch
    %12 = sbr.rel (%p10) target = $region8
  $region5: #{_lambda_.7} parent=0 // loop_body
    %s14 = ssub.s32 %s9, 1
    %s15 = ssub.s32 %s9, 2
    %s16 = sadd.s32 %s9, 1
    %s17 = ssub.s32 %s9, %s16
    %p18 = scmp.eq.s32.totalorder %s17, 0
    %s20 = sadd.s32 %s19, 1
    %s21 = scalar_select %p18, %s19, %s20
    %p24 = pneg %p18
    %p25 = scmp.eq.s32.totalorder %s9, 1
    %p26 = por %p24, %p25
    %p27 = scmp.ne.s32.totalorder %s19, %s22
    %p28 = scmp.eq.s32.totalorder %s9, 0
    %p29 = por %p27, %p28
    %p30 = scmp.ne.s32.totalorder %s19, %s22
    %p31 = scmp.eq.s32.totalorder %s14, 1
    %p32 = por %p30, %p31
    %p33 = scmp.ne.s32.totalorder %s22, %s23
    %p34 = scmp.eq.s32.totalorder %s14, 0
    %p35 = por %p33, %p34
    %p36 = scmp.ne.s32.totalorder %s22, %s23
    %p37 = scmp.eq.s32.totalorder %s15, 1
    %p38 = por %p36, %p37
    %p40 = scmp.ne.s32.totalorder %s23, %s39
    %p41 = scmp.eq.s32.totalorder %s15, 0
    %p42 = por %p40, %p41
    %s44 = sadd.s32 %s43, 1
    %p47 = scmp.eq.s32.totalorder %s9, 1
    %p48 = scmp.ne.s32.totalorder %s43, %s45
    %p49 = scmp.eq.s32.totalorder %s9, 0
    %p50 = por %p48, %p49
    %p51 = scmp.ne.s32.totalorder %s43, %s45
    %p52 = scmp.eq.s32.totalorder %s14, 1
    %p53 = por %p51, %p52
    %p54 = scmp.ne.s32.totalorder %s45, %s46
    %p55 = scmp.eq.s32.totalorder %s14, 0
    %p56 = por %p54, %p55
    %p57 = scmp.ne.s32.totalorder %s45, %s46
    %p58 = scmp.eq.s32.totalorder %s15, 1
    %p59 = por %p57, %p58
    %p61 = scmp.ne.s32.totalorder %s46, %s60
    %p62 = scmp.eq.s32.totalorder %s15, 0
    %p63 = por %p61, %p62
    %s65 = sadd.s32 %s64, 1
    %p68 = scmp.eq.s32.totalorder %s9, 1
    %p69 = scmp.ne.s32.totalorder %s64, %s66
    %p70 = scmp.eq.s32.totalorder %s9, 0
    %p71 = por %p69, %p70
    %p72 = scmp.ne.s32.totalorder %s64, %s66
    %p73 = scmp.eq.s32.totalorder %s14, 1
    %p74 = por %p72, %p73
    %p75 = scmp.ne.s32.totalorder %s66, %s67
    %p76 = scmp.eq.s32.totalorder %s14, 0
    %p77 = por %p75, %p76
    %p78 = scmp.ne.s32.totalorder %s66, %s67
    %p79 = scmp.eq.s32.totalorder %s15, 1
    %p80 = por %p78, %p79
    %p82 = scmp.ne.s32.totalorder %s67, %s81
    %p83 = scmp.eq.s32.totalorder %s15, 0
    %p84 = por %p82, %p83
    %s85 = ssub.s32 %s9, %s16
    %p86 = scmp.eq.s32.totalorder %s85, 0
    %s88 = sadd.s32 %s87, 1
    %s89 = scalar_select %p86, %s87, %s88
    %p92 = pneg %p86
    %p93 = scmp.eq.s32.totalorder %s9, 1
    %p94 = por %p92, %p93
    %p95 = scmp.ne.s32.totalorder %s87, %s90
    %p96 = scmp.eq.s32.totalorder %s9, 0
    %p97 = por %p95, %p96
    %p98 = scmp.ne.s32.totalorder %s87, %s90
    %p99 = scmp.eq.s32.totalorder %s14, 1
    %p100 = por %p98, %p99
    %p101 = scmp.ne.s32.totalorder %s90, %s91
    %p102 = scmp.eq.s32.totalorder %s14, 0
    %p103 = por %p101, %p102
    %p104 = scmp.ne.s32.totalorder %s90, %s91
    %p105 = scmp.eq.s32.totalorder %s15, 1
    %p106 = por %p104, %p105
    %p108 = scmp.ne.s32.totalorder %s91, %s107
    %p109 = scmp.eq.s32.totalorder %s15, 0
    %p110 = por %p108, %p109
    %p111 = scmp.le.s32.totalorder 1, %s9
    %p112 = scmp.lt.s32.totalorder %s9, 3
    %p113 = pnand %p111, %p112
    %p114 = pneg %p113
    // Predicated region
    $region9: #{_lambda_.7} parent=5 // pred_check
      _
    $region10: #{_lambda_.7} parent=5 // pred_check_branch
      %116 = sbr.rel (%p113) target = $region12
    $region11: #{_lambda_.7} parent=5 // pred_region
      %s117 = ssub.s32 %s9, 1
      // Predicated region
      $region13: #{_lambda_.7} parent=11 // pred_check
        %p118 = pneg %p56
      $region14: #{_lambda_.7} parent=11 // pred_check_branch
        %120 = sbr.rel (%p118) target = $region16
      $region15: #{_lambda_.7} parent=11 // pred_region
        _
      $region16: #{_lambda_.7} parent=11 // pred_fallthru
        _
      // Predicated region
      $region17: #{_lambda_.7} parent=11 // pred_check
        %p121 = pneg %p77
      $region18: #{_lambda_.7} parent=11 // pred_check_branch
        %123 = sbr.rel (%p121) target = $region20
      $region19: #{_lambda_.7} parent=11 // pred_region
        _
      $region20: #{_lambda_.7} parent=11 // pred_fallthru
        _
    $region12: #{_lambda_.7} parent=5 // pred_fallthru
      _
    %p124 = scmp.lt.s32.totalorder %s9, 2
    // Predicated region
    $region21: #{_lambda_.7} parent=5 // pred_check
      %p125 = pneg %p124
    $region22: #{_lambda_.7} parent=5 // pred_check_branch
      %127 = sbr.rel (%p125) target = $region24
    $region23: #{_lambda_.7} parent=5 // pred_region
      // Predicated region
      $region25: #{_lambda_.7} parent=23 // pred_check
        %p128 = pneg %p29
      $region26: #{_lambda_.7} parent=23 // pred_check_branch
        %130 = sbr.rel (%p128) target = $region28
      $region27: #{_lambda_.7} parent=23 // pred_region
        %p131 = scmp.lt.s32.totalorder %s9, 1
        %s132 = scalar_select %p131, %s9, 1
        %s133 = smul.addr %s132, 54
        %s134 = smul.addr %s133, 8
        %s135 = scalar_lea.vmem %s0, %s134
      $region28: #{_lambda_.7} parent=23 // pred_fallthru
        _
    $region24: #{_lambda_.7} parent=5 // pred_fallthru
      _
    %p136 = scmp.le.s32.totalorder 1, %s9
    %p137 = scmp.lt.s32.totalorder %s9, 3
    %p138 = pnand %p136, %p137
    %p139 = pneg %p138
    // Predicated region
    $region29: #{_lambda_.7} parent=5 // pred_check
      _
    $region30: #{_lambda_.7} parent=5 // pred_check_branch
      %141 = sbr.rel (%p138) target = $region32
    $region31: #{_lambda_.7} parent=5 // pred_region
      %s142 = ssub.s32 %s9, 1
      %p143 = scmp.lt.s32.totalorder %s14, 1
      %s144 = scalar_select %p143, %s14, 1
      %s145 = smul.addr %s144, 54
      %s146 = smul.addr %s145, 8
      %s147 = scalar_lea.vmem %s0, %s146
      %p148 = pneg %p35
      %p149 = pneg %p32
      %p150 = pneg %p56
      %p151 = pneg %p53
      %p152 = pneg %p77
      %p153 = pneg %p74
      %p154 = pneg %p103
      %p155 = pneg %p100
      %p156 = scmp.lt.s32.totalorder %s14, 1
      %s157 = scalar_select %p156, %s14, 1
      %s158 = smul.addr %s157, 32
      %s159 = smul.addr %s158, 8
      %s160 = scalar_lea.vmem %s3, %s159
      %p161 = scmp.lt.s32.totalorder %s14, 1
      %s162 = scalar_select %p161, %s14, 1
      %s163 = smul.addr %s162, 54
      %s164 = smul.addr %s163, 8
      %s165 = scalar_lea.vmem %s0, %s164
      %p166 = scmp.lt.s32.totalorder %s14, 1
      %s167 = scalar_select %p166, %s14, 1
      %s168 = smul.addr %s167, 32
      %s169 = smul.addr %s168, 8
      %s170 = scalar_lea.vmem %s3, %s169
      %v171 = vld [vmem:[%s165] sm:$0xff]
      %v172 = vld [vmem:[%s165 + $0x8] sm:$0xff]
      %v173 = vld [vmem:[%s165 + $0x18] sm:$0xff]
      %v174 = vld [vmem:[%s165 + $0x20] sm:$0xff]
      %v175 = vld [vmem:[%s165 + $0x30] sm:$0xff]
      %v176 = vld [vmem:[%s165 + $0x38] sm:$0xff]
      %v177 = vld [vmem:[%s165 + $0x48] sm:$0xff]
      %v178 = vld [vmem:[%s165 + $0x50] sm:$0xff]
      %v179 = vld [vmem:[%s165 + $0x60] sm:$0xff]
      %v180 = vld [vmem:[%s165 + $0x68] sm:$0xff]
      %v181 = vld [vmem:[%s165 + $0x78] sm:$0xff]
      %v182 = vld [vmem:[%s165 + $0x80] sm:$0xff]
      %v183 = vld [vmem:[%s165 + $0x90] sm:$0xff]
      %v184 = vld [vmem:[%s165 + $0x98] sm:$0xff]
      %v185 = vld [vmem:[%s165 + $0xa8] sm:$0xff]
      %v186 = vld [vmem:[%s165 + $0xb0] sm:$0xff]
      %v187 = vld [vmem:[%s165 + $0xc0] sm:$0xff]
      %v188 = vld [vmem:[%s165 + $0xc8] sm:$0xff]
      %v189 = vld [vmem:[%s165 + $0xd8] sm:$0xff]
      %v190 = vld [vmem:[%s165 + $0xe0] sm:$0xff]
      %v191 = vld [vmem:[%s165 + $0xf0] sm:$0xff]
      %v192 = vld [vmem:[%s165 + $0xf8] sm:$0xff]
      %v193 = vld [vmem:[%s165 + $0x108] sm:$0xff]
      %v194 = vld [vmem:[%s165 + $0x110] sm:$0xff]
      %v195 = vld [vmem:[%s165 + $0x120] sm:$0xff]
      %v196 = vld [vmem:[%s165 + $0x128] sm:$0xff]
      %v197 = vld [vmem:[%s165 + $0x138] sm:$0xff]
      %v198 = vld [vmem:[%s165 + $0x140] sm:$0xff]
      %v199 = vld [vmem:[%s165 + $0x150] sm:$0xff]
      %v200 = vld [vmem:[%s165 + $0x158] sm:$0xff]
      %v201 = vld [vmem:[%s165 + $0x168] sm:$0xff]
      %v202 = vld [vmem:[%s165 + $0x170] sm:$0xff]
      %v203 = vld [vmem:[%s1] sm:$0x1]
      %v205 = vperm.slane %v203, 0
      %v207 = vmul.f32 %v171, %v205
      %v208 = vmul.f32 %v172, %v205
      %v209 = vmul.f32 %v173, %v205
      %v210 = vmul.f32 %v174, %v205
      %v211 = vmul.f32 %v175, %v205
      %v212 = vmul.f32 %v176, %v205
      %v213 = vmul.f32 %v177, %v205
      %v214 = vmul.f32 %v178, %v205
      %v215 = vmul.f32 %v179, %v205
      %v216 = vmul.f32 %v180, %v205
      %v217 = vmul.f32 %v181, %v205
      %v218 = vmul.f32 %v182, %v205
      %v219 = vmul.f32 %v183, %v205
      %v220 = vmul.f32 %v184, %v205
      %v221 = vmul.f32 %v185, %v205
      %v222 = vmul.f32 %v186, %v205
      %v223 = vmul.f32 %v187, %v205
      %v224 = vmul.f32 %v188, %v205
      %v225 = vmul.f32 %v189, %v205
      %v226 = vmul.f32 %v190, %v205
      %v227 = vmul.f32 %v191, %v205
      %v228 = vmul.f32 %v192, %v205
      %v229 = vmul.f32 %v193, %v205
      %v230 = vmul.f32 %v194, %v205
      %v231 = vmul.f32 %v195, %v205
      %v232 = vmul.f32 %v196, %v205
      %v233 = vmul.f32 %v197, %v205
      %v234 = vmul.f32 %v198, %v205
      %v235 = vmul.f32 %v199, %v205
      %v236 = vmul.f32 %v200, %v205
      %v237 = vmul.f32 %v201, %v205
      %v238 = vmul.f32 %v202, %v205
      %v239 = vadd.f32 %v207, 0.0
      %v240 = vadd.f32 %v208, 0.0
      %v241 = vadd.f32 %v209, 0.0
      %v242 = vadd.f32 %v210, 0.0
      %v243 = vadd.f32 %v211, 0.0
      %v244 = vadd.f32 %v212, 0.0
      %v245 = vadd.f32 %v213, 0.0
      %v246 = vadd.f32 %v214, 0.0
      %v247 = vadd.f32 %v215, 0.0
      %v248 = vadd.f32 %v216, 0.0
      %v249 = vadd.f32 %v217, 0.0
      %v250 = vadd.f32 %v218, 0.0
      %v251 = vadd.f32 %v219, 0.0
      %v252 = vadd.f32 %v220, 0.0
      %v253 = vadd.f32 %v221, 0.0
      %v254 = vadd.f32 %v222, 0.0
      %v255 = vadd.f32 %v223, 0.0
      %v256 = vadd.f32 %v224, 0.0
      %v257 = vadd.f32 %v225, 0.0
      %v258 = vadd.f32 %v226, 0.0
      %v259 = vadd.f32 %v227, 0.0
      %v260 = vadd.f32 %v228, 0.0
      %v261 = vadd.f32 %v229, 0.0
      %v262 = vadd.f32 %v230, 0.0
      %v263 = vadd.f32 %v231, 0.0
      %v264 = vadd.f32 %v232, 0.0
      %v265 = vadd.f32 %v233, 0.0
      %v266 = vadd.f32 %v234, 0.0
      %v267 = vadd.f32 %v235, 0.0
      %v268 = vadd.f32 %v236, 0.0
      %v269 = vadd.f32 %v237, 0.0
      %v270 = vadd.f32 %v238, 0.0
      %v271 = vld [vmem:[%s165 + $0x1] sm:$0xff]
      %v272 = vld [vmem:[%s165 + $0x9] sm:$0xff]
      %v273 = vld [vmem:[%s165 + $0x19] sm:$0xff]
      %v274 = vld [vmem:[%s165 + $0x21] sm:$0xff]
      %v275 = vld [vmem:[%s165 + $0x31] sm:$0xff]
      %v276 = vld [vmem:[%s165 + $0x39] sm:$0xff]
      %v277 = vld [vmem:[%s165 + $0x49] sm:$0xff]
      %v278 = vld [vmem:[%s165 + $0x51] sm:$0xff]
      %v279 = vld [vmem:[%s165 + $0x61] sm:$0xff]
      %v280 = vld [vmem:[%s165 + $0x69] sm:$0xff]
      %v281 = vld [vmem:[%s165 + $0x79] sm:$0xff]
      %v282 = vld [vmem:[%s165 + $0x81] sm:$0xff]
      %v283 = vld [vmem:[%s165 + $0x91] sm:$0xff]
      %v284 = vld [vmem:[%s165 + $0x99] sm:$0xff]
      %v285 = vld [vmem:[%s165 + $0xa9] sm:$0xff]
      %v286 = vld [vmem:[%s165 + $0xb1] sm:$0xff]
      %v287 = vld [vmem:[%s165 + $0xc1] sm:$0xff]
      %v288 = vld [vmem:[%s165 + $0xc9] sm:$0xff]
      %v289 = vld [vmem:[%s165 + $0xd9] sm:$0xff]
      %v290 = vld [vmem:[%s165 + $0xe1] sm:$0xff]
      %v291 = vld [vmem:[%s165 + $0xf1] sm:$0xff]
      %v292 = vld [vmem:[%s165 + $0xf9] sm:$0xff]
      %v293 = vld [vmem:[%s165 + $0x109] sm:$0xff]
      %v294 = vld [vmem:[%s165 + $0x111] sm:$0xff]
      %v295 = vld [vmem:[%s165 + $0x121] sm:$0xff]
      %v296 = vld [vmem:[%s165 + $0x129] sm:$0xff]
      %v297 = vld [vmem:[%s165 + $0x139] sm:$0xff]
      %v298 = vld [vmem:[%s165 + $0x141] sm:$0xff]
      %v299 = vld [vmem:[%s165 + $0x151] sm:$0xff]
      %v300 = vld [vmem:[%s165 + $0x159] sm:$0xff]
      %v301 = vld [vmem:[%s165 + $0x169] sm:$0xff]
      %v302 = vld [vmem:[%s165 + $0x171] sm:$0xff]
      %s303 = scalar_lea.vmem %s1, 1
      %v304 = vld [vmem:[%s303] sm:$0x1]
      %v306 = vperm.slane %v304, 0
      %v308 = vmul.f32 %v271, %v306
      %v309 = vmul.f32 %v272, %v306
      %v310 = vmul.f32 %v273, %v306
      %v311 = vmul.f32 %v274, %v306
      %v312 = vmul.f32 %v275, %v306
      %v313 = vmul.f32 %v276, %v306
      %v314 = vmul.f32 %v277, %v306
      %v315 = vmul.f32 %v278, %v306
      %v316 = vmul.f32 %v279, %v306
      %v317 = vmul.f32 %v280, %v306
      %v318 = vmul.f32 %v281, %v306
      %v319 = vmul.f32 %v282, %v306
      %v320 = vmul.f32 %v283, %v306
      %v321 = vmul.f32 %v284, %v306
      %v322 = vmul.f32 %v285, %v306
      %v323 = vmul.f32 %v286, %v306
      %v324 = vmul.f32 %v287, %v306
      %v325 = vmul.f32 %v288, %v306
      %v326 = vmul.f32 %v289, %v306
      %v327 = vmul.f32 %v290, %v306
      %v328 = vmul.f32 %v291, %v306
      %v329 = vmul.f32 %v292, %v306
      %v330 = vmul.f32 %v293, %v306
      %v331 = vmul.f32 %v294, %v306
      %v332 = vmul.f32 %v295, %v306
      %v333 = vmul.f32 %v296, %v306
      %v334 = vmul.f32 %v297, %v306
      %v335 = vmul.f32 %v298, %v306
      %v336 = vmul.f32 %v299, %v306
      %v337 = vmul.f32 %v300, %v306
      %v338 = vmul.f32 %v301, %v306
      %v339 = vmul.f32 %v302, %v306
      %v340 = vadd.f32 %v239, %v308
      %v341 = vadd.f32 %v240, %v309
      %v342 = vadd.f32 %v241, %v310
      %v343 = vadd.f32 %v242, %v311
      %v344 = vadd.f32 %v243, %v312
      %v345 = vadd.f32 %v244, %v313
      %v346 = vadd.f32 %v245, %v314
      %v347 = vadd.f32 %v246, %v315
      %v348 = vadd.f32 %v247, %v316
      %v349 = vadd.f32 %v248, %v317
      %v350 = vadd.f32 %v249, %v318
      %v351 = vadd.f32 %v250, %v319
      %v352 = vadd.f32 %v251, %v320
      %v353 = vadd.f32 %v252, %v321
      %v354 = vadd.f32 %v253, %v322
      %v355 = vadd.f32 %v254, %v323
      %v356 = vadd.f32 %v255, %v324
      %v357 = vadd.f32 %v256, %v325
      %v358 = vadd.f32 %v257, %v326
      %v359 = vadd.f32 %v258, %v327
      %v360 = vadd.f32 %v259, %v328
      %v361 = vadd.f32 %v260, %v329
      %v362 = vadd.f32 %v261, %v330
      %v363 = vadd.f32 %v262, %v331
      %v364 = vadd.f32 %v263, %v332
      %v365 = vadd.f32 %v264, %v333
      %v366 = vadd.f32 %v265, %v334
      %v367 = vadd.f32 %v266, %v335
      %v368 = vadd.f32 %v267, %v336
      %v369 = vadd.f32 %v268, %v337
      %v370 = vadd.f32 %v269, %v338
      %v371 = vadd.f32 %v270, %v339
      %v372 = vld [vmem:[%s165 + $0x2] sm:$0xff]
      %v373 = vld [vmem:[%s165 + $0xa] sm:$0xff]
      %v374 = vld [vmem:[%s165 + $0x1a] sm:$0xff]
      %v375 = vld [vmem:[%s165 + $0x22] sm:$0xff]
      %v376 = vld [vmem:[%s165 + $0x32] sm:$0xff]
      %v377 = vld [vmem:[%s165 + $0x3a] sm:$0xff]
      %v378 = vld [vmem:[%s165 + $0x4a] sm:$0xff]
      %v379 = vld [vmem:[%s165 + $0x52] sm:$0xff]
      %v380 = vld [vmem:[%s165 + $0x62] sm:$0xff]
      %v381 = vld [vmem:[%s165 + $0x6a] sm:$0xff]
      %v382 = vld [vmem:[%s165 + $0x7a] sm:$0xff]
      %v383 = vld [vmem:[%s165 + $0x82] sm:$0xff]
      %v384 = vld [vmem:[%s165 + $0x92] sm:$0xff]
      %v385 = vld [vmem:[%s165 + $0x9a] sm:$0xff]
      %v386 = vld [vmem:[%s165 + $0xaa] sm:$0xff]
      %v387 = vld [vmem:[%s165 + $0xb2] sm:$0xff]
      %v388 = vld [vmem:[%s165 + $0xc2] sm:$0xff]
      %v389 = vld [vmem:[%s165 + $0xca] sm:$0xff]
      %v390 = vld [vmem:[%s165 + $0xda] sm:$0xff]
      %v391 = vld [vmem:[%s165 + $0xe2] sm:$0xff]
      %v392 = vld [vmem:[%s165 + $0xf2] sm:$0xff]
      %v393 = vld [vmem:[%s165 + $0xfa] sm:$0xff]
      %v394 = vld [vmem:[%s165 + $0x10a] sm:$0xff]
      %v395 = vld [vmem:[%s165 + $0x112] sm:$0xff]
      %v396 = vld [vmem:[%s165 + $0x122] sm:$0xff]
      %v397 = vld [vmem:[%s165 + $0x12a] sm:$0xff]
      %v398 = vld [vmem:[%s165 + $0x13a] sm:$0xff]
      %v399 = vld [vmem:[%s165 + $0x142] sm:$0xff]
      %v400 = vld [vmem:[%s165 + $0x152] sm:$0xff]
      %v401 = vld [vmem:[%s165 + $0x15a] sm:$0xff]
      %v402 = vld [vmem:[%s165 + $0x16a] sm:$0xff]
      %v403 = vld [vmem:[%s165 + $0x172] sm:$0xff]
      %s404 = scalar_lea.vmem %s1, 2
      %v405 = vld [vmem:[%s404] sm:$0x1]
      %v407 = vperm.slane %v405, 0
      %v409 = vmul.f32 %v372, %v407
      %v410 = vmul.f32 %v373, %v407
      %v411 = vmul.f32 %v374, %v407
      %v412 = vmul.f32 %v375, %v407
      %v413 = vmul.f32 %v376, %v407
      %v414 = vmul.f32 %v377, %v407
      %v415 = vmul.f32 %v378, %v407
      %v416 = vmul.f32 %v379, %v407
      %v417 = vmul.f32 %v380, %v407
      %v418 = vmul.f32 %v381, %v407
      %v419 = vmul.f32 %v382, %v407
      %v420 = vmul.f32 %v383, %v407
      %v421 = vmul.f32 %v384, %v407
      %v422 = vmul.f32 %v385, %v407
      %v423 = vmul.f32 %v386, %v407
      %v424 = vmul.f32 %v387, %v407
      %v425 = vmul.f32 %v388, %v407
      %v426 = vmul.f32 %v389, %v407
      %v427 = vmul.f32 %v390, %v407
      %v428 = vmul.f32 %v391, %v407
      %v429 = vmul.f32 %v392, %v407
      %v430 = vmul.f32 %v393, %v407
      %v431 = vmul.f32 %v394, %v407
      %v432 = vmul.f32 %v395, %v407
      %v433 = vmul.f32 %v396, %v407
      %v434 = vmul.f32 %v397, %v407
      %v435 = vmul.f32 %v398, %v407
      %v436 = vmul.f32 %v399, %v407
      %v437 = vmul.f32 %v400, %v407
      %v438 = vmul.f32 %v401, %v407
      %v439 = vmul.f32 %v402, %v407
      %v440 = vmul.f32 %v403, %v407
      %v441 = vadd.f32 %v340, %v409
      %v442 = vadd.f32 %v341, %v410
      %v443 = vadd.f32 %v342, %v411
      %v444 = vadd.f32 %v343, %v412
      %v445 = vadd.f32 %v344, %v413
      %v446 = vadd.f32 %v345, %v414
      %v447 = vadd.f32 %v346, %v415
      %v448 = vadd.f32 %v347, %v416
      %v449 = vadd.f32 %v348, %v417
      %v450 = vadd.f32 %v349, %v418
      %v451 = vadd.f32 %v350, %v419
      %v452 = vadd.f32 %v351, %v420
      %v453 = vadd.f32 %v352, %v421
      %v454 = vadd.f32 %v353, %v422
      %v455 = vadd.f32 %v354, %v423
      %v456 = vadd.f32 %v355, %v424
      %v457 = vadd.f32 %v356, %v425
      %v458 = vadd.f32 %v357, %v426
      %v459 = vadd.f32 %v358, %v427
      %v460 = vadd.f32 %v359, %v428
      %v461 = vadd.f32 %v360, %v429
      %v462 = vadd.f32 %v361, %v430
      %v463 = vadd.f32 %v362, %v431
      %v464 = vadd.f32 %v363, %v432
      %v465 = vadd.f32 %v364, %v433
      %v466 = vadd.f32 %v365, %v434
      %v467 = vadd.f32 %v366, %v435
      %v468 = vadd.f32 %v367, %v436
      %v469 = vadd.f32 %v368, %v437
      %v470 = vadd.f32 %v369, %v438
      %v471 = vadd.f32 %v370, %v439
      %v472 = vadd.f32 %v371, %v440
      %s473 = scalar_lea.vmem %s165, 24
      %v474 = vld [vmem:[%s473] sm:$0xff]
      %v475 = vld [vmem:[%s473 + $0x8] sm:$0xff]
      %v476 = vld [vmem:[%s473 + $0x18] sm:$0xff]
      %v477 = vld [vmem:[%s473 + $0x20] sm:$0xff]
      %v478 = vld [vmem:[%s473 + $0x30] sm:$0xff]
      %v479 = vld [vmem:[%s473 + $0x38] sm:$0xff]
      %v480 = vld [vmem:[%s473 + $0x48] sm:$0xff]
      %v481 = vld [vmem:[%s473 + $0x50] sm:$0xff]
      %v482 = vld [vmem:[%s473 + $0x60] sm:$0xff]
      %v483 = vld [vmem:[%s473 + $0x68] sm:$0xff]
      %v484 = vld [vmem:[%s473 + $0x78] sm:$0xff]
      %v485 = vld [vmem:[%s473 + $0x80] sm:$0xff]
      %v486 = vld [vmem:[%s473 + $0x90] sm:$0xff]
      %v487 = vld [vmem:[%s473 + $0x98] sm:$0xff]
      %v488 = vld [vmem:[%s473 + $0xa8] sm:$0xff]
      %v489 = vld [vmem:[%s473 + $0xb0] sm:$0xff]
      %v490 = vld [vmem:[%s473 + $0xc0] sm:$0xff]
      %v491 = vld [vmem:[%s473 + $0xc8] sm:$0xff]
      %v492 = vld [vmem:[%s473 + $0xd8] sm:$0xff]
      %v493 = vld [vmem:[%s473 + $0xe0] sm:$0xff]
      %v494 = vld [vmem:[%s473 + $0xf0] sm:$0xff]
      %v495 = vld [vmem:[%s473 + $0xf8] sm:$0xff]
      %v496 = vld [vmem:[%s473 + $0x108] sm:$0xff]
      %v497 = vld [vmem:[%s473 + $0x110] sm:$0xff]
      %v498 = vld [vmem:[%s473 + $0x120] sm:$0xff]
      %v499 = vld [vmem:[%s473 + $0x128] sm:$0xff]
      %v500 = vld [vmem:[%s473 + $0x138] sm:$0xff]
      %v501 = vld [vmem:[%s473 + $0x140] sm:$0xff]
      %v502 = vld [vmem:[%s473 + $0x150] sm:$0xff]
      %v503 = vld [vmem:[%s473 + $0x158] sm:$0xff]
      %v504 = vld [vmem:[%s473 + $0x168] sm:$0xff]
      %v505 = vld [vmem:[%s473 + $0x170] sm:$0xff]
      %s506 = scalar_lea.vmem %s1, 3
      %v507 = vld [vmem:[%s506] sm:$0x1]
      %v509 = vperm.slane %v507, 0
      %v511 = vmul.f32 %v474, %v509
      %v512 = vmul.f32 %v475, %v509
      %v513 = vmul.f32 %v476, %v509
      %v514 = vmul.f32 %v477, %v509
      %v515 = vmul.f32 %v478, %v509
      %v516 = vmul.f32 %v479, %v509
      %v517 = vmul.f32 %v480, %v509
      %v518 = vmul.f32 %v481, %v509
      %v519 = vmul.f32 %v482, %v509
      %v520 = vmul.f32 %v483, %v509
      %v521 = vmul.f32 %v484, %v509
      %v522 = vmul.f32 %v485, %v509
      %v523 = vmul.f32 %v486, %v509
      %v524 = vmul.f32 %v487, %v509
      %v525 = vmul.f32 %v488, %v509
      %v526 = vmul.f32 %v489, %v509
      %v527 = vmul.f32 %v490, %v509
      %v528 = vmul.f32 %v491, %v509
      %v529 = vmul.f32 %v492, %v509
      %v530 = vmul.f32 %v493, %v509
      %v531 = vmul.f32 %v494, %v509
      %v532 = vmul.f32 %v495, %v509
      %v533 = vmul.f32 %v496, %v509
      %v534 = vmul.f32 %v497, %v509
      %v535 = vmul.f32 %v498, %v509
      %v536 = vmul.f32 %v499, %v509
      %v537 = vmul.f32 %v500, %v509
      %v538 = vmul.f32 %v501, %v509
      %v539 = vmul.f32 %v502, %v509
      %v540 = vmul.f32 %v503, %v509
      %v541 = vmul.f32 %v504, %v509
      %v542 = vmul.f32 %v505, %v509
      %v543 = vadd.f32 %v441, %v511
      %v544 = vadd.f32 %v442, %v512
      %v545 = vadd.f32 %v443, %v513
      %v546 = vadd.f32 %v444, %v514
      %v547 = vadd.f32 %v445, %v515
      %v548 = vadd.f32 %v446, %v516
      %v549 = vadd.f32 %v447, %v517
      %v550 = vadd.f32 %v448, %v518
      %v551 = vadd.f32 %v449, %v519
      %v552 = vadd.f32 %v450, %v520
      %v553 = vadd.f32 %v451, %v521
      %v554 = vadd.f32 %v452, %v522
      %v555 = vadd.f32 %v453, %v523
      %v556 = vadd.f32 %v454, %v524
      %v557 = vadd.f32 %v455, %v525
      %v558 = vadd.f32 %v456, %v526
      %v559 = vadd.f32 %v457, %v527
      %v560 = vadd.f32 %v458, %v528
      %v561 = vadd.f32 %v459, %v529
      %v562 = vadd.f32 %v460, %v530
      %v563 = vadd.f32 %v461, %v531
      %v564 = vadd.f32 %v462, %v532
      %v565 = vadd.f32 %v463, %v533
      %v566 = vadd.f32 %v464, %v534
      %v567 = vadd.f32 %v465, %v535
      %v568 = vadd.f32 %v466, %v536
      %v569 = vadd.f32 %v467, %v537
      %v570 = vadd.f32 %v468, %v538
      %v571 = vadd.f32 %v469, %v539
      %v572 = vadd.f32 %v470, %v540
      %v573 = vadd.f32 %v471, %v541
      %v574 = vadd.f32 %v472, %v542
      %v575 = vld [vmem:[%s473 + $0x1] sm:$0xff]
      %v576 = vld [vmem:[%s473 + $0x9] sm:$0xff]
      %v577 = vld [vmem:[%s473 + $0x19] sm:$0xff]
      %v578 = vld [vmem:[%s473 + $0x21] sm:$0xff]
      %v579 = vld [vmem:[%s473 + $0x31] sm:$0xff]
      %v580 = vld [vmem:[%s473 + $0x39] sm:$0xff]
      %v581 = vld [vmem:[%s473 + $0x49] sm:$0xff]
      %v582 = vld [vmem:[%s473 + $0x51] sm:$0xff]
      %v583 = vld [vmem:[%s473 + $0x61] sm:$0xff]
      %v584 = vld [vmem:[%s473 + $0x69] sm:$0xff]
      %v585 = vld [vmem:[%s473 + $0x79] sm:$0xff]
      %v586 = vld [vmem:[%s473 + $0x81] sm:$0xff]
      %v587 = vld [vmem:[%s473 + $0x91] sm:$0xff]
      %v588 = vld [vmem:[%s473 + $0x99] sm:$0xff]
      %v589 = vld [vmem:[%s473 + $0xa9] sm:$0xff]
      %v590 = vld [vmem:[%s473 + $0xb1] sm:$0xff]
      %v591 = vld [vmem:[%s473 + $0xc1] sm:$0xff]
      %v592 = vld [vmem:[%s473 + $0xc9] sm:$0xff]
      %v593 = vld [vmem:[%s473 + $0xd9] sm:$0xff]
      %v594 = vld [vmem:[%s473 + $0xe1] sm:$0xff]
      %v595 = vld [vmem:[%s473 + $0xf1] sm:$0xff]
      %v596 = vld [vmem:[%s473 + $0xf9] sm:$0xff]
      %v597 = vld [vmem:[%s473 + $0x109] sm:$0xff]
      %v598 = vld [vmem:[%s473 + $0x111] sm:$0xff]
      %v599 = vld [vmem:[%s473 + $0x121] sm:$0xff]
      %v600 = vld [vmem:[%s473 + $0x129] sm:$0xff]
      %v601 = vld [vmem:[%s473 + $0x139] sm:$0xff]
      %v602 = vld [vmem:[%s473 + $0x141] sm:$0xff]
      %v603 = vld [vmem:[%s473 + $0x151] sm:$0xff]
      %v604 = vld [vmem:[%s473 + $0x159] sm:$0xff]
      %v605 = vld [vmem:[%s473 + $0x169] sm:$0xff]
      %v606 = vld [vmem:[%s473 + $0x171] sm:$0xff]
      %s607 = scalar_lea.vmem %s1, 4
      %v608 = vld [vmem:[%s607] sm:$0x1]
      %v610 = vperm.slane %v608, 0
      %v612 = vmul.f32 %v575, %v610
      %v613 = vmul.f32 %v576, %v610
      %v614 = vmul.f32 %v577, %v610
      %v615 = vmul.f32 %v578, %v610
      %v616 = vmul.f32 %v579, %v610
      %v617 = vmul.f32 %v580, %v610
      %v618 = vmul.f32 %v581, %v610
      %v619 = vmul.f32 %v582, %v610
      %v620 = vmul.f32 %v583, %v610
      %v621 = vmul.f32 %v584, %v610
      %v622 = vmul.f32 %v585, %v610
      %v623 = vmul.f32 %v586, %v610
      %v624 = vmul.f32 %v587, %v610
      %v625 = vmul.f32 %v588, %v610
      %v626 = vmul.f32 %v589, %v610
      %v627 = vmul.f32 %v590, %v610
      %v628 = vmul.f32 %v591, %v610
      %v629 = vmul.f32 %v592, %v610
      %v630 = vmul.f32 %v593, %v610
      %v631 = vmul.f32 %v594, %v610
      %v632 = vmul.f32 %v595, %v610
      %v633 = vmul.f32 %v596, %v610
      %v634 = vmul.f32 %v597, %v610
      %v635 = vmul.f32 %v598, %v610
      %v636 = vmul.f32 %v599, %v610
      %v637 = vmul.f32 %v600, %v610
      %v638 = vmul.f32 %v601, %v610
      %v639 = vmul.f32 %v602, %v610
      %v640 = vmul.f32 %v603, %v610
      %v641 = vmul.f32 %v604, %v610
      %v642 = vmul.f32 %v605, %v610
      %v643 = vmul.f32 %v606, %v610
      %v644 = vadd.f32 %v543, %v612
      %v645 = vadd.f32 %v544, %v613
      %v646 = vadd.f32 %v545, %v614
      %v647 = vadd.f32 %v546, %v615
      %v648 = vadd.f32 %v547, %v616
      %v649 = vadd.f32 %v548, %v617
      %v650 = vadd.f32 %v549, %v618
      %v651 = vadd.f32 %v550, %v619
      %v652 = vadd.f32 %v551, %v620
      %v653 = vadd.f32 %v552, %v621
      %v654 = vadd.f32 %v553, %v622
      %v655 = vadd.f32 %v554, %v623
      %v656 = vadd.f32 %v555, %v624
      %v657 = vadd.f32 %v556, %v625
      %v658 = vadd.f32 %v557, %v626
      %v659 = vadd.f32 %v558, %v627
      %v660 = vadd.f32 %v559, %v628
      %v661 = vadd.f32 %v560, %v629
      %v662 = vadd.f32 %v561, %v630
      %v663 = vadd.f32 %v562, %v631
      %v664 = vadd.f32 %v563, %v632
      %v665 = vadd.f32 %v564, %v633
      %v666 = vadd.f32 %v565, %v634
      %v667 = vadd.f32 %v566, %v635
      %v668 = vadd.f32 %v567, %v636
      %v669 = vadd.f32 %v568, %v637
      %v670 = vadd.f32 %v569, %v638
      %v671 = vadd.f32 %v570, %v639
      %v672 = vadd.f32 %v571, %v640
      %v673 = vadd.f32 %v572, %v641
      %v674 = vadd.f32 %v573, %v642
      %v675 = vadd.f32 %v574, %v643
      %v676 = vld [vmem:[%s473 + $0x2] sm:$0xff]
      %v677 = vld [vmem:[%s473 + $0xa] sm:$0xff]
      %v678 = vld [vmem:[%s473 + $0x1a] sm:$0xff]
      %v679 = vld [vmem:[%s473 + $0x22] sm:$0xff]
      %v680 = vld [vmem:[%s473 + $0x32] sm:$0xff]
      %v681 = vld [vmem:[%s473 + $0x3a] sm:$0xff]
      %v682 = vld [vmem:[%s473 + $0x4a] sm:$0xff]
      %v683 = vld [vmem:[%s473 + $0x52] sm:$0xff]
      %v684 = vld [vmem:[%s473 + $0x62] sm:$0xff]
      %v685 = vld [vmem:[%s473 + $0x6a] sm:$0xff]
      %v686 = vld [vmem:[%s473 + $0x7a] sm:$0xff]
      %v687 = vld [vmem:[%s473 + $0x82] sm:$0xff]
      %v688 = vld [vmem:[%s473 + $0x92] sm:$0xff]
      %v689 = vld [vmem:[%s473 + $0x9a] sm:$0xff]
      %v690 = vld [vmem:[%s473 + $0xaa] sm:$0xff]
      %v691 = vld [vmem:[%s473 + $0xb2] sm:$0xff]
      %v692 = vld [vmem:[%s473 + $0xc2] sm:$0xff]
      %v693 = vld [vmem:[%s473 + $0xca] sm:$0xff]
      %v694 = vld [vmem:[%s473 + $0xda] sm:$0xff]
      %v695 = vld [vmem:[%s473 + $0xe2] sm:$0xff]
      %v696 = vld [vmem:[%s473 + $0xf2] sm:$0xff]
      %v697 = vld [vmem:[%s473 + $0xfa] sm:$0xff]
      %v698 = vld [vmem:[%s473 + $0x10a] sm:$0xff]
      %v699 = vld [vmem:[%s473 + $0x112] sm:$0xff]
      %v700 = vld [vmem:[%s473 + $0x122] sm:$0xff]
      %v701 = vld [vmem:[%s473 + $0x12a] sm:$0xff]
      %v702 = vld [vmem:[%s473 + $0x13a] sm:$0xff]
      %v703 = vld [vmem:[%s473 + $0x142] sm:$0xff]
      %v704 = vld [vmem:[%s473 + $0x152] sm:$0xff]
      %v705 = vld [vmem:[%s473 + $0x15a] sm:$0xff]
      %v706 = vld [vmem:[%s473 + $0x16a] sm:$0xff]
      %v707 = vld [vmem:[%s473 + $0x172] sm:$0xff]
      %s708 = scalar_lea.vmem %s1, 5
      %v709 = vld [vmem:[%s708] sm:$0x1]
      %v711 = vperm.slane %v709, 0
      %v713 = vmul.f32 %v676, %v711
      %v714 = vmul.f32 %v677, %v711
      %v715 = vmul.f32 %v678, %v711
      %v716 = vmul.f32 %v679, %v711
      %v717 = vmul.f32 %v680, %v711
      %v718 = vmul.f32 %v681, %v711
      %v719 = vmul.f32 %v682, %v711
      %v720 = vmul.f32 %v683, %v711
      %v721 = vmul.f32 %v684, %v711
      %v722 = vmul.f32 %v685, %v711
      %v723 = vmul.f32 %v686, %v711
      %v724 = vmul.f32 %v687, %v711
      %v725 = vmul.f32 %v688, %v711
      %v726 = vmul.f32 %v689, %v711
      %v727 = vmul.f32 %v690, %v711
      %v728 = vmul.f32 %v691, %v711
      %v729 = vmul.f32 %v692, %v711
      %v730 = vmul.f32 %v693, %v711
      %v731 = vmul.f32 %v694, %v711
      %v732 = vmul.f32 %v695, %v711
      %v733 = vmul.f32 %v696, %v711
      %v734 = vmul.f32 %v697, %v711
      %v735 = vmul.f32 %v698, %v711
      %v736 = vmul.f32 %v699, %v711
      %v737 = vmul.f32 %v700, %v711
      %v738 = vmul.f32 %v701, %v711
      %v739 = vmul.f32 %v702, %v711
      %v740 = vmul.f32 %v703, %v711
      %v741 = vmul.f32 %v704, %v711
      %v742 = vmul.f32 %v705, %v711
      %v743 = vmul.f32 %v706, %v711
      %v744 = vmul.f32 %v707, %v711
      %v745 = vadd.f32 %v644, %v713
      %v746 = vadd.f32 %v645, %v714
      %v747 = vadd.f32 %v646, %v715
      %v748 = vadd.f32 %v647, %v716
      %v749 = vadd.f32 %v648, %v717
      %v750 = vadd.f32 %v649, %v718
      %v751 = vadd.f32 %v650, %v719
      %v752 = vadd.f32 %v651, %v720
      %v753 = vadd.f32 %v652, %v721
      %v754 = vadd.f32 %v653, %v722
      %v755 = vadd.f32 %v654, %v723
      %v756 = vadd.f32 %v655, %v724
      %v757 = vadd.f32 %v656, %v725
      %v758 = vadd.f32 %v657, %v726
      %v759 = vadd.f32 %v658, %v727
      %v760 = vadd.f32 %v659, %v728
      %v761 = vadd.f32 %v660, %v729
      %v762 = vadd.f32 %v661, %v730
      %v763 = vadd.f32 %v662, %v731
      %v764 = vadd.f32 %v663, %v732
      %v765 = vadd.f32 %v664, %v733
      %v766 = vadd.f32 %v665, %v734
      %v767 = vadd.f32 %v666, %v735
      %v768 = vadd.f32 %v667, %v736
      %v769 = vadd.f32 %v668, %v737
      %v770 = vadd.f32 %v669, %v738
      %v771 = vadd.f32 %v670, %v739
      %v772 = vadd.f32 %v671, %v740
      %v773 = vadd.f32 %v672, %v741
      %v774 = vadd.f32 %v673, %v742
      %v775 = vadd.f32 %v674, %v743
      %v776 = vadd.f32 %v675, %v744
      %s777 = scalar_lea.vmem %s165, 48
      %v778 = vld [vmem:[%s777] sm:$0xff]
      %v779 = vld [vmem:[%s777 + $0x8] sm:$0xff]
      %v780 = vld [vmem:[%s777 + $0x18] sm:$0xff]
      %v781 = vld [vmem:[%s777 + $0x20] sm:$0xff]
      %v782 = vld [vmem:[%s777 + $0x30] sm:$0xff]
      %v783 = vld [vmem:[%s777 + $0x38] sm:$0xff]
      %v784 = vld [vmem:[%s777 + $0x48] sm:$0xff]
      %v785 = vld [vmem:[%s777 + $0x50] sm:$0xff]
      %v786 = vld [vmem:[%s777 + $0x60] sm:$0xff]
      %v787 = vld [vmem:[%s777 + $0x68] sm:$0xff]
      %v788 = vld [vmem:[%s777 + $0x78] sm:$0xff]
      %v789 = vld [vmem:[%s777 + $0x80] sm:$0xff]
      %v790 = vld [vmem:[%s777 + $0x90] sm:$0xff]
      %v791 = vld [vmem:[%s777 + $0x98] sm:$0xff]
      %v792 = vld [vmem:[%s777 + $0xa8] sm:$0xff]
      %v793 = vld [vmem:[%s777 + $0xb0] sm:$0xff]
      %v794 = vld [vmem:[%s777 + $0xc0] sm:$0xff]
      %v795 = vld [vmem:[%s777 + $0xc8] sm:$0xff]
      %v796 = vld [vmem:[%s777 + $0xd8] sm:$0xff]
      %v797 = vld [vmem:[%s777 + $0xe0] sm:$0xff]
      %v798 = vld [vmem:[%s777 + $0xf0] sm:$0xff]
      %v799 = vld [vmem:[%s777 + $0xf8] sm:$0xff]
      %v800 = vld [vmem:[%s777 + $0x108] sm:$0xff]
      %v801 = vld [vmem:[%s777 + $0x110] sm:$0xff]
      %v802 = vld [vmem:[%s777 + $0x120] sm:$0xff]
      %v803 = vld [vmem:[%s777 + $0x128] sm:$0xff]
      %v804 = vld [vmem:[%s777 + $0x138] sm:$0xff]
      %v805 = vld [vmem:[%s777 + $0x140] sm:$0xff]
      %v806 = vld [vmem:[%s777 + $0x150] sm:$0xff]
      %v807 = vld [vmem:[%s777 + $0x158] sm:$0xff]
      %v808 = vld [vmem:[%s777 + $0x168] sm:$0xff]
      %v809 = vld [vmem:[%s777 + $0x170] sm:$0xff]
      %s810 = scalar_lea.vmem %s1, 6
      %v811 = vld [vmem:[%s810] sm:$0x1]
      %v813 = vperm.slane %v811, 0
      %v815 = vmul.f32 %v778, %v813
      %v816 = vmul.f32 %v779, %v813
      %v817 = vmul.f32 %v780, %v813
      %v818 = vmul.f32 %v781, %v813
      %v819 = vmul.f32 %v782, %v813
      %v820 = vmul.f32 %v783, %v813
      %v821 = vmul.f32 %v784, %v813
      %v822 = vmul.f32 %v785, %v813
      %v823 = vmul.f32 %v786, %v813
      %v824 = vmul.f32 %v787, %v813
      %v825 = vmul.f32 %v788, %v813
      %v826 = vmul.f32 %v789, %v813
      %v827 = vmul.f32 %v790, %v813
      %v828 = vmul.f32 %v791, %v813
      %v829 = vmul.f32 %v792, %v813
      %v830 = vmul.f32 %v793, %v813
      %v831 = vmul.f32 %v794, %v813
      %v832 = vmul.f32 %v795, %v813
      %v833 = vmul.f32 %v796, %v813
      %v834 = vmul.f32 %v797, %v813
      %v835 = vmul.f32 %v798, %v813
      %v836 = vmul.f32 %v799, %v813
      %v837 = vmul.f32 %v800, %v813
      %v838 = vmul.f32 %v801, %v813
      %v839 = vmul.f32 %v802, %v813
      %v840 = vmul.f32 %v803, %v813
      %v841 = vmul.f32 %v804, %v813
      %v842 = vmul.f32 %v805, %v813
      %v843 = vmul.f32 %v806, %v813
      %v844 = vmul.f32 %v807, %v813
      %v845 = vmul.f32 %v808, %v813
      %v846 = vmul.f32 %v809, %v813
      %v847 = vadd.f32 %v745, %v815
      %v848 = vadd.f32 %v746, %v816
      %v849 = vadd.f32 %v747, %v817
      %v850 = vadd.f32 %v748, %v818
      %v851 = vadd.f32 %v749, %v819
      %v852 = vadd.f32 %v750, %v820
      %v853 = vadd.f32 %v751, %v821
      %v854 = vadd.f32 %v752, %v822
      %v855 = vadd.f32 %v753, %v823
      %v856 = vadd.f32 %v754, %v824
      %v857 = vadd.f32 %v755, %v825
      %v858 = vadd.f32 %v756, %v826
      %v859 = vadd.f32 %v757, %v827
      %v860 = vadd.f32 %v758, %v828
      %v861 = vadd.f32 %v759, %v829
      %v862 = vadd.f32 %v760, %v830
      %v863 = vadd.f32 %v761, %v831
      %v864 = vadd.f32 %v762, %v832
      %v865 = vadd.f32 %v763, %v833
      %v866 = vadd.f32 %v764, %v834
      %v867 = vadd.f32 %v765, %v835
      %v868 = vadd.f32 %v766, %v836
      %v869 = vadd.f32 %v767, %v837
      %v870 = vadd.f32 %v768, %v838
      %v871 = vadd.f32 %v769, %v839
      %v872 = vadd.f32 %v770, %v840
      %v873 = vadd.f32 %v771, %v841
      %v874 = vadd.f32 %v772, %v842
      %v875 = vadd.f32 %v773, %v843
      %v876 = vadd.f32 %v774, %v844
      %v877 = vadd.f32 %v775, %v845
      %v878 = vadd.f32 %v776, %v846
      %v879 = vld [vmem:[%s777 + $0x1] sm:$0xff]
      %v880 = vld [vmem:[%s777 + $0x9] sm:$0xff]
      %v881 = vld [vmem:[%s777 + $0x19] sm:$0xff]
      %v882 = vld [vmem:[%s777 + $0x21] sm:$0xff]
      %v883 = vld [vmem:[%s777 + $0x31] sm:$0xff]
      %v884 = vld [vmem:[%s777 + $0x39] sm:$0xff]
      %v885 = vld [vmem:[%s777 + $0x49] sm:$0xff]
      %v886 = vld [vmem:[%s777 + $0x51] sm:$0xff]
      %v887 = vld [vmem:[%s777 + $0x61] sm:$0xff]
      %v888 = vld [vmem:[%s777 + $0x69] sm:$0xff]
      %v889 = vld [vmem:[%s777 + $0x79] sm:$0xff]
      %v890 = vld [vmem:[%s777 + $0x81] sm:$0xff]
      %v891 = vld [vmem:[%s777 + $0x91] sm:$0xff]
      %v892 = vld [vmem:[%s777 + $0x99] sm:$0xff]
      %v893 = vld [vmem:[%s777 + $0xa9] sm:$0xff]
      %v894 = vld [vmem:[%s777 + $0xb1] sm:$0xff]
      %v895 = vld [vmem:[%s777 + $0xc1] sm:$0xff]
      %v896 = vld [vmem:[%s777 + $0xc9] sm:$0xff]
      %v897 = vld [vmem:[%s777 + $0xd9] sm:$0xff]
      %v898 = vld [vmem:[%s777 + $0xe1] sm:$0xff]
      %v899 = vld [vmem:[%s777 + $0xf1] sm:$0xff]
      %v900 = vld [vmem:[%s777 + $0xf9] sm:$0xff]
      %v901 = vld [vmem:[%s777 + $0x109] sm:$0xff]
      %v902 = vld [vmem:[%s777 + $0x111] sm:$0xff]
      %v903 = vld [vmem:[%s777 + $0x121] sm:$0xff]
      %v904 = vld [vmem:[%s777 + $0x129] sm:$0xff]
      %v905 = vld [vmem:[%s777 + $0x139] sm:$0xff]
      %v906 = vld [vmem:[%s777 + $0x141] sm:$0xff]
      %v907 = vld [vmem:[%s777 + $0x151] sm:$0xff]
      %v908 = vld [vmem:[%s777 + $0x159] sm:$0xff]
      %v909 = vld [vmem:[%s777 + $0x169] sm:$0xff]
      %v910 = vld [vmem:[%s777 + $0x171] sm:$0xff]
      %s911 = scalar_lea.vmem %s1, 7
      %v912 = vld [vmem:[%s911] sm:$0x1]
      %v914 = vperm.slane %v912, 0
      %v916 = vmul.f32 %v879, %v914
      %v917 = vmul.f32 %v880, %v914
      %v918 = vmul.f32 %v881, %v914
      %v919 = vmul.f32 %v882, %v914
      %v920 = vmul.f32 %v883, %v914
      %v921 = vmul.f32 %v884, %v914
      %v922 = vmul.f32 %v885, %v914
      %v923 = vmul.f32 %v886, %v914
      %v924 = vmul.f32 %v887, %v914
      %v925 = vmul.f32 %v888, %v914
      %v926 = vmul.f32 %v889, %v914
      %v927 = vmul.f32 %v890, %v914
      %v928 = vmul.f32 %v891, %v914
      %v929 = vmul.f32 %v892, %v914
      %v930 = vmul.f32 %v893, %v914
      %v931 = vmul.f32 %v894, %v914
      %v932 = vmul.f32 %v895, %v914
      %v933 = vmul.f32 %v896, %v914
      %v934 = vmul.f32 %v897, %v914
      %v935 = vmul.f32 %v898, %v914
      %v936 = vmul.f32 %v899, %v914
      %v937 = vmul.f32 %v900, %v914
      %v938 = vmul.f32 %v901, %v914
      %v939 = vmul.f32 %v902, %v914
      %v940 = vmul.f32 %v903, %v914
      %v941 = vmul.f32 %v904, %v914
      %v942 = vmul.f32 %v905, %v914
      %v943 = vmul.f32 %v906, %v914
      %v944 = vmul.f32 %v907, %v914
      %v945 = vmul.f32 %v908, %v914
      %v946 = vmul.f32 %v909, %v914
      %v947 = vmul.f32 %v910, %v914
      %v948 = vadd.f32 %v847, %v916
      %v949 = vadd.f32 %v848, %v917
      %v950 = vadd.f32 %v849, %v918
      %v951 = vadd.f32 %v850, %v919
      %v952 = vadd.f32 %v851, %v920
      %v953 = vadd.f32 %v852, %v921
      %v954 = vadd.f32 %v853, %v922
      %v955 = vadd.f32 %v854, %v923
      %v956 = vadd.f32 %v855, %v924
      %v957 = vadd.f32 %v856, %v925
      %v958 = vadd.f32 %v857, %v926
      %v959 = vadd.f32 %v858, %v927
      %v960 = vadd.f32 %v859, %v928
      %v961 = vadd.f32 %v860, %v929
      %v962 = vadd.f32 %v861, %v930
      %v963 = vadd.f32 %v862, %v931
      %v964 = vadd.f32 %v863, %v932
      %v965 = vadd.f32 %v864, %v933
      %v966 = vadd.f32 %v865, %v934
      %v967 = vadd.f32 %v866, %v935
      %v968 = vadd.f32 %v867, %v936
      %v969 = vadd.f32 %v868, %v937
      %v970 = vadd.f32 %v869, %v938
      %v971 = vadd.f32 %v870, %v939
      %v972 = vadd.f32 %v871, %v940
      %v973 = vadd.f32 %v872, %v941
      %v974 = vadd.f32 %v873, %v942
      %v975 = vadd.f32 %v874, %v943
      %v976 = vadd.f32 %v875, %v944
      %v977 = vadd.f32 %v876, %v945
      %v978 = vadd.f32 %v877, %v946
      %v979 = vadd.f32 %v878, %v947
      %v980 = vld [vmem:[%s777 + $0x2] sm:$0xff]
      %v981 = vld [vmem:[%s777 + $0xa] sm:$0xff]
      %v982 = vld [vmem:[%s777 + $0x1a] sm:$0xff]
      %v983 = vld [vmem:[%s777 + $0x22] sm:$0xff]
      %v984 = vld [vmem:[%s777 + $0x32] sm:$0xff]
      %v985 = vld [vmem:[%s777 + $0x3a] sm:$0xff]
      %v986 = vld [vmem:[%s777 + $0x4a] sm:$0xff]
      %v987 = vld [vmem:[%s777 + $0x52] sm:$0xff]
      %v988 = vld [vmem:[%s777 + $0x62] sm:$0xff]
      %v989 = vld [vmem:[%s777 + $0x6a] sm:$0xff]
      %v990 = vld [vmem:[%s777 + $0x7a] sm:$0xff]
      %v991 = vld [vmem:[%s777 + $0x82] sm:$0xff]
      %v992 = vld [vmem:[%s777 + $0x92] sm:$0xff]
      %v993 = vld [vmem:[%s777 + $0x9a] sm:$0xff]
      %v994 = vld [vmem:[%s777 + $0xaa] sm:$0xff]
      %v995 = vld [vmem:[%s777 + $0xb2] sm:$0xff]
      %v996 = vld [vmem:[%s777 + $0xc2] sm:$0xff]
      %v997 = vld [vmem:[%s777 + $0xca] sm:$0xff]
      %v998 = vld [vmem:[%s777 + $0xda] sm:$0xff]
      %v999 = vld [vmem:[%s777 + $0xe2] sm:$0xff]
      %v1000 = vld [vmem:[%s777 + $0xf2] sm:$0xff]
      %v1001 = vld [vmem:[%s777 + $0xfa] sm:$0xff]
      %v1002 = vld [vmem:[%s777 + $0x10a] sm:$0xff]
      %v1003 = vld [vmem:[%s777 + $0x112] sm:$0xff]
      %v1004 = vld [vmem:[%s777 + $0x122] sm:$0xff]
      %v1005 = vld [vmem:[%s777 + $0x12a] sm:$0xff]
      %v1006 = vld [vmem:[%s777 + $0x13a] sm:$0xff]
      %v1007 = vld [vmem:[%s777 + $0x142] sm:$0xff]
      %v1008 = vld [vmem:[%s777 + $0x152] sm:$0xff]
      %v1009 = vld [vmem:[%s777 + $0x15a] sm:$0xff]
      %v1010 = vld [vmem:[%s777 + $0x16a] sm:$0xff]
      %v1011 = vld [vmem:[%s777 + $0x172] sm:$0xff]
      %s1012 = scalar_lea.vmem %s1, 8
      %v1013 = vld [vmem:[%s1012] sm:$0x1]
      %v1015 = vperm.slane %v1013, 0
      %v1017 = vmul.f32 %v980, %v1015
      %v1018 = vmul.f32 %v981, %v1015
      %v1019 = vmul.f32 %v982, %v1015
      %v1020 = vmul.f32 %v983, %v1015
      %v1021 = vmul.f32 %v984, %v1015
      %v1022 = vmul.f32 %v985, %v1015
      %v1023 = vmul.f32 %v986, %v1015
      %v1024 = vmul.f32 %v987, %v1015
      %v1025 = vmul.f32 %v988, %v1015
      %v1026 = vmul.f32 %v989, %v1015
      %v1027 = vmul.f32 %v990, %v1015
      %v1028 = vmul.f32 %v991, %v1015
      %v1029 = vmul.f32 %v992, %v1015
      %v1030 = vmul.f32 %v993, %v1015
      %v1031 = vmul.f32 %v994, %v1015
      %v1032 = vmul.f32 %v995, %v1015
      %v1033 = vmul.f32 %v996, %v1015
      %v1034 = vmul.f32 %v997, %v1015
      %v1035 = vmul.f32 %v998, %v1015
      %v1036 = vmul.f32 %v999, %v1015
      %v1037 = vmul.f32 %v1000, %v1015
      %v1038 = vmul.f32 %v1001, %v1015
      %v1039 = vmul.f32 %v1002, %v1015
      %v1040 = vmul.f32 %v1003, %v1015
      %v1041 = vmul.f32 %v1004, %v1015
      %v1042 = vmul.f32 %v1005, %v1015
      %v1043 = vmul.f32 %v1006, %v1015
      %v1044 = vmul.f32 %v1007, %v1015
      %v1045 = vmul.f32 %v1008, %v1015
      %v1046 = vmul.f32 %v1009, %v1015
      %v1047 = vmul.f32 %v1010, %v1015
      %v1048 = vmul.f32 %v1011, %v1015
      %v1049 = vadd.f32 %v948, %v1017
      %v1050 = vadd.f32 %v949, %v1018
      %v1051 = vadd.f32 %v950, %v1019
      %v1052 = vadd.f32 %v951, %v1020
      %v1053 = vadd.f32 %v952, %v1021
      %v1054 = vadd.f32 %v953, %v1022
      %v1055 = vadd.f32 %v954, %v1023
      %v1056 = vadd.f32 %v955, %v1024
      %v1057 = vadd.f32 %v956, %v1025
      %v1058 = vadd.f32 %v957, %v1026
      %v1059 = vadd.f32 %v958, %v1027
      %v1060 = vadd.f32 %v959, %v1028
      %v1061 = vadd.f32 %v960, %v1029
      %v1062 = vadd.f32 %v961, %v1030
      %v1063 = vadd.f32 %v962, %v1031
      %v1064 = vadd.f32 %v963, %v1032
      %v1065 = vadd.f32 %v964, %v1033
      %v1066 = vadd.f32 %v965, %v1034
      %v1067 = vadd.f32 %v966, %v1035
      %v1068 = vadd.f32 %v967, %v1036
      %v1069 = vadd.f32 %v968, %v1037
      %v1070 = vadd.f32 %v969, %v1038
      %v1071 = vadd.f32 %v970, %v1039
      %v1072 = vadd.f32 %v971, %v1040
      %v1073 = vadd.f32 %v972, %v1041
      %v1074 = vadd.f32 %v973, %v1042
      %v1075 = vadd.f32 %v974, %v1043
      %v1076 = vadd.f32 %v975, %v1044
      %v1077 = vadd.f32 %v976, %v1045
      %v1078 = vadd.f32 %v977, %v1046
      %v1079 = vadd.f32 %v978, %v1047
      %v1080 = vadd.f32 %v979, %v1048
      %v1081 = vld [vmem:[%s2] sm:$0x1]
      %v1083 = vperm.slane %v1081, 0
      %v1085 = vadd.f32 %v1049, %v1083
      %v1086 = vadd.f32 %v1050, %v1083
      %v1087 = vadd.f32 %v1051, %v1083
      %v1088 = vadd.f32 %v1052, %v1083
      %v1089 = vadd.f32 %v1053, %v1083
      %v1090 = vadd.f32 %v1054, %v1083
      %v1091 = vadd.f32 %v1055, %v1083
      %v1092 = vadd.f32 %v1056, %v1083
      %v1093 = vadd.f32 %v1057, %v1083
      %v1094 = vadd.f32 %v1058, %v1083
      %v1095 = vadd.f32 %v1059, %v1083
      %v1096 = vadd.f32 %v1060, %v1083
      %v1097 = vadd.f32 %v1061, %v1083
      %v1098 = vadd.f32 %v1062, %v1083
      %v1099 = vadd.f32 %v1063, %v1083
      %v1100 = vadd.f32 %v1064, %v1083
      %v1101 = vadd.f32 %v1065, %v1083
      %v1102 = vadd.f32 %v1066, %v1083
      %v1103 = vadd.f32 %v1067, %v1083
      %v1104 = vadd.f32 %v1068, %v1083
      %v1105 = vadd.f32 %v1069, %v1083
      %v1106 = vadd.f32 %v1070, %v1083
      %v1107 = vadd.f32 %v1071, %v1083
      %v1108 = vadd.f32 %v1072, %v1083
      %v1109 = vadd.f32 %v1073, %v1083
      %v1110 = vadd.f32 %v1074, %v1083
      %v1111 = vadd.f32 %v1075, %v1083
      %v1112 = vadd.f32 %v1076, %v1083
      %v1113 = vadd.f32 %v1077, %v1083
      %v1114 = vadd.f32 %v1078, %v1083
      %v1115 = vadd.f32 %v1079, %v1083
      %v1116 = vadd.f32 %v1080, %v1083
      %vm1117 = vcmask 195584
      %1118 = vst.msk [vmem:[%s170] sm:$0xff] %vm1117, %v1085
      %1119 = vst.msk [vmem:[%s170 + $0x8] sm:$0xff] %vm1117, %v1086
      %1120 = vst.msk [vmem:[%s170 + $0x10] sm:$0xff] %vm1117, %v1087
      %1121 = vst.msk [vmem:[%s170 + $0x18] sm:$0xff] %vm1117, %v1088
      %1122 = vst.msk [vmem:[%s170 + $0x20] sm:$0xff] %vm1117, %v1089
      %1123 = vst.msk [vmem:[%s170 + $0x28] sm:$0xff] %vm1117, %v1090
      %1124 = vst.msk [vmem:[%s170 + $0x30] sm:$0xff] %vm1117, %v1091
      %1125 = vst.msk [vmem:[%s170 + $0x38] sm:$0xff] %vm1117, %v1092
      %1126 = vst.msk [vmem:[%s170 + $0x40] sm:$0xff] %vm1117, %v1093
      %1127 = vst.msk [vmem:[%s170 + $0x48] sm:$0xff] %vm1117, %v1094
      %1128 = vst.msk [vmem:[%s170 + $0x50] sm:$0xff] %vm1117, %v1095
      %1129 = vst.msk [vmem:[%s170 + $0x58] sm:$0xff] %vm1117, %v1096
      %1130 = vst.msk [vmem:[%s170 + $0x60] sm:$0xff] %vm1117, %v1097
      %1131 = vst.msk [vmem:[%s170 + $0x68] sm:$0xff] %vm1117, %v1098
      %1132 = vst.msk [vmem:[%s170 + $0x70] sm:$0xff] %vm1117, %v1099
      %1133 = vst.msk [vmem:[%s170 + $0x78] sm:$0xff] %vm1117, %v1100
      %1134 = vst.msk [vmem:[%s170 + $0x80] sm:$0xff] %vm1117, %v1101
      %1135 = vst.msk [vmem:[%s170 + $0x88] sm:$0xff] %vm1117, %v1102
      %1136 = vst.msk [vmem:[%s170 + $0x90] sm:$0xff] %vm1117, %v1103
      %1137 = vst.msk [vmem:[%s170 + $0x98] sm:$0xff] %vm1117, %v1104
      %1138 = vst.msk [vmem:[%s170 + $0xa0] sm:$0xff] %vm1117, %v1105
      %1139 = vst.msk [vmem:[%s170 + $0xa8] sm:$0xff] %vm1117, %v1106
      %1140 = vst.msk [vmem:[%s170 + $0xb0] sm:$0xff] %vm1117, %v1107
      %1141 = vst.msk [vmem:[%s170 + $0xb8] sm:$0xff] %vm1117, %v1108
      %1142 = vst.msk [vmem:[%s170 + $0xc0] sm:$0xff] %vm1117, %v1109
      %1143 = vst.msk [vmem:[%s170 + $0xc8] sm:$0xff] %vm1117, %v1110
      %1144 = vst.msk [vmem:[%s170 + $0xd0] sm:$0xff] %vm1117, %v1111
      %1145 = vst.msk [vmem:[%s170 + $0xd8] sm:$0xff] %vm1117, %v1112
      %1146 = vst.msk [vmem:[%s170 + $0xe0] sm:$0xff] %vm1117, %v1113
      %1147 = vst.msk [vmem:[%s170 + $0xe8] sm:$0xff] %vm1117, %v1114
      %1148 = vst.msk [vmem:[%s170 + $0xf0] sm:$0xff] %vm1117, %v1115
      %1149 = vst.msk [vmem:[%s170 + $0xf8] sm:$0xff] %vm1117, %v1116
      %p1150 = scmp.lt.s32.totalorder %s14, 1
      %s1151 = scalar_select %p1150, %s14, 1
      %s1152 = smul.addr %s1151, 32
      %s1153 = smul.addr %s1152, 8
      %s1154 = scalar_lea.vmem %s3, %s1153
      // Predicated region
      $region33: #{_lambda_.7} parent=31 // pred_check
        %p1155 = pneg %p100
      $region34: #{_lambda_.7} parent=31 // pred_check_branch
        %1157 = sbr.rel (%p1155) target = $region36
      $region35: #{_lambda_.7} parent=31 // pred_region
        _
      $region36: #{_lambda_.7} parent=31 // pred_fallthru
        _
    $region32: #{_lambda_.7} parent=5 // pred_fallthru
      _
    %p1158 = scmp.le.s32.totalorder 2, %s9
    // Predicated region
    $region37: #{_lambda_.7} parent=5 // pred_check
      %p1159 = pneg %p1158
    $region38: #{_lambda_.7} parent=5 // pred_check_branch
      %1161 = sbr.rel (%p1159) target = $region40
    $region39: #{_lambda_.7} parent=5 // pred_region
      %s1162 = ssub.s32 %s9, 2
      // Predicated region
      $region41: #{_lambda_.7} parent=39 // pred_check
        %p1163 = pneg %p106
      $region42: #{_lambda_.7} parent=39 // pred_check_branch
        %1165 = sbr.rel (%p1163) target = $region44
      $region43: #{_lambda_.7} parent=39 // pred_region
        %p1166 = scmp.lt.s32.totalorder %s15, 1
        %s1167 = scalar_select %p1166, %s15, 1
        %s1168 = smul.addr %s1167, 32
        %s1169 = smul.addr %s1168, 8
        %s1170 = scalar_lea.vmem %s3, %s1169
      $region44: #{_lambda_.7} parent=39 // pred_fallthru
        _
    $region40: #{_lambda_.7} parent=5 // pred_fallthru
      _
  $region6: #{_lambda_.7} parent=0 // loop_footer
    %s13 = sadd.s32 1, %s9
  $region7: #{_lambda_.7} parent=0 // loop_footer_branch
    %8 = sbr.rel target = $region3
  $region8: #{_lambda_.7} parent=0 // loop_exit
    _

// kernel: _lambda_.8
$region0: #{_lambda_.8}
  #allocation0 [shape = 'u32[]', space=smem, size = 0x4, offset = 0x4, fixed_abs, tag = 'smem constant byte address 0x4 - core index']
  #allocation1 [shape = 'u32[72,128]{1,0:T(1,128)}', space=vmem, size = 0x9000, scoped, tag = 'internal scratch']
  %s0 = inlined_call_operand.vmem [shape: f32[2,256,24], index: 0, kind: input, shape index: {}]
  %s1 = inlined_call_operand.vmem [shape: f32[2,256,8], index: 1, kind: input, shape index: {}]
  %s2 = inlined_call_operand.vmem [shape: bf16[8,8], index: 2, kind: input, shape index: {}]
  %s3 = inlined_call_operand.vmem [shape: f32[1,8], index: 3, kind: input, shape index: {}]
  %s4 = inlined_call_operand.vmem [shape: f32[2], index: 4, kind: input, shape index: {}]
  %s5 = inlined_call_operand.vmem [shape: f32[2,256,8], index: 5, kind: output, shape index: {}]
  %s6 = sld [smem:[#allocation0]]
  $region57: #{_lambda_.8} parent=0
    _
  %s8 = ssub.s32 1, %s6
  %s9 = scalar_select 0, %s8, %s6
  $region1: #{_lambda_.8} parent=0
    #allocation2 [shape = 'u8[512]{0}', space=smem, size = 0x200, scoped, tag = 'input window, operand 4, single buffered']
    #allocation3 [shape = 's32[2]{0}', space=sflag, size = 0x8, scoped, tag = 'scoped memory for _lambda_.8']
    %10 = vsyncpa [#allocation3], 0
    loop: start=0, step=1, limit=4
    $region2: #{_lambda_.8} parent=1 // loop_pre_header
      _
    $region3: #{_lambda_.8} parent=1 // loop_header
      %s12 = sphi 0, %s16
      %p13 = scmp.ge.s32.totalorder %s12, 4
      %s22 = sphi 0, %s24
      %s25 = sphi 0, %s22
      %s26 = sphi 0, %s25
      %s42 = sphi 0, %s26
      %s48 = sphi 0, %s50
      %s51 = sphi 0, %s48
      %s52 = sphi 0, %s51
      %s68 = sphi 0, %s52
      %s72 = sphi 0, %s72
      %s74 = sphi 0, %s72
      %s75 = sphi 0, %s74
      %s89 = sphi 0, %s75
      %s93 = sphi 0, %s93
      %s95 = sphi 0, %s93
      %s96 = sphi 0, %s95
      %s110 = sphi 0, %s96
      %s114 = sphi 0, %s114
      %s116 = sphi 0, %s114
      %s117 = sphi 0, %s116
      %s131 = sphi 0, %s117
      %s137 = sphi 0, %s139
      %s140 = sphi 0, %s137
      %s141 = sphi 0, %s140
      %s157 = sphi 0, %s141
    $region4: #{_lambda_.8} parent=1 // loop_header_branch
      %15 = sbr.rel (%p13) target = $region8
    $region5: #{_lambda_.8} parent=1 // loop_body
      %s17 = ssub.s32 %s12, 1
      %s18 = ssub.s32 %s12, 2
      %s19 = sadd.s32 %s12, 1
      %s20 = ssub.s32 %s12, %s19
      %p21 = scmp.eq.s32.totalorder %s20, 0
      %s23 = sadd.s32 %s22, 1
      %s24 = scalar_select %p21, %s22, %s23
      %p27 = pneg %p21
      %p28 = scmp.eq.s32.totalorder %s12, 1
      %p29 = por %p27, %p28
      %p30 = scmp.ne.s32.totalorder %s22, %s25
      %p31 = scmp.eq.s32.totalorder %s12, 0
      %p32 = por %p30, %p31
      %p33 = scmp.ne.s32.totalorder %s22, %s25
      %p34 = scmp.eq.s32.totalorder %s17, 1
      %p35 = por %p33, %p34
      %p36 = scmp.ne.s32.totalorder %s25, %s26
      %p37 = scmp.eq.s32.totalorder %s17, 0
      %p38 = por %p36, %p37
      %p39 = scmp.ne.s32.totalorder %s25, %s26
      %p40 = scmp.eq.s32.totalorder %s18, 1
      %p41 = por %p39, %p40
      %p43 = scmp.ne.s32.totalorder %s26, %s42
      %p44 = scmp.eq.s32.totalorder %s18, 0
      %p45 = por %p43, %p44
      %s46 = ssub.s32 %s12, %s19
      %p47 = scmp.eq.s32.totalorder %s46, 0
      %s49 = sadd.s32 %s48, 1
      %s50 = scalar_select %p47, %s48, %s49
      %p53 = pneg %p47
      %p54 = scmp.eq.s32.totalorder %s12, 1
      %p55 = por %p53, %p54
      %p56 = scmp.ne.s32.totalorder %s48, %s51
      %p57 = scmp.eq.s32.totalorder %s12, 0
      %p58 = por %p56, %p57
      %p59 = scmp.ne.s32.totalorder %s48, %s51
      %p60 = scmp.eq.s32.totalorder %s17, 1
      %p61 = por %p59, %p60
      %p62 = scmp.ne.s32.totalorder %s51, %s52
      %p63 = scmp.eq.s32.totalorder %s17, 0
      %p64 = por %p62, %p63
      %p65 = scmp.ne.s32.totalorder %s51, %s52
      %p66 = scmp.eq.s32.totalorder %s18, 1
      %p67 = por %p65, %p66
      %p69 = scmp.ne.s32.totalorder %s52, %s68
      %p70 = scmp.eq.s32.totalorder %s18, 0
      %p71 = por %p69, %p70
      %s73 = sadd.s32 %s72, 1
      %p76 = scmp.eq.s32.totalorder %s12, 1
      %p77 = scmp.ne.s32.totalorder %s72, %s74
      %p78 = scmp.eq.s32.totalorder %s12, 0
      %p79 = por %p77, %p78
      %p80 = scmp.ne.s32.totalorder %s72, %s74
      %p81 = scmp.eq.s32.totalorder %s17, 1
      %p82 = por %p80, %p81
      %p83 = scmp.ne.s32.totalorder %s74, %s75
      %p84 = scmp.eq.s32.totalorder %s17, 0
      %p85 = por %p83, %p84
      %p86 = scmp.ne.s32.totalorder %s74, %s75
      %p87 = scmp.eq.s32.totalorder %s18, 1
      %p88 = por %p86, %p87
      %p90 = scmp.ne.s32.totalorder %s75, %s89
      %p91 = scmp.eq.s32.totalorder %s18, 0
      %p92 = por %p90, %p91
      %s94 = sadd.s32 %s93, 1
      %p97 = scmp.eq.s32.totalorder %s12, 1
      %p98 = scmp.ne.s32.totalorder %s93, %s95
      %p99 = scmp.eq.s32.totalorder %s12, 0
      %p100 = por %p98, %p99
      %p101 = scmp.ne.s32.totalorder %s93, %s95
      %p102 = scmp.eq.s32.totalorder %s17, 1
      %p103 = por %p101, %p102
      %p104 = scmp.ne.s32.totalorder %s95, %s96
      %p105 = scmp.eq.s32.totalorder %s17, 0
      %p106 = por %p104, %p105
      %p107 = scmp.ne.s32.totalorder %s95, %s96
      %p108 = scmp.eq.s32.totalorder %s18, 1
      %p109 = por %p107, %p108
      %p111 = scmp.ne.s32.totalorder %s96, %s110
      %p112 = scmp.eq.s32.totalorder %s18, 0
      %p113 = por %p111, %p112
      %s115 = sadd.s32 %s114, 1
      %p118 = scmp.eq.s32.totalorder %s12, 1
      %p119 = scmp.ne.s32.totalorder %s114, %s116
      %p120 = scmp.eq.s32.totalorder %s12, 0
      %p121 = por %p119, %p120
      %p122 = scmp.ne.s32.totalorder %s114, %s116
      %p123 = scmp.eq.s32.totalorder %s17, 1
      %p124 = por %p122, %p123
      %p125 = scmp.ne.s32.totalorder %s116, %s117
      %p126 = scmp.eq.s32.totalorder %s17, 0
      %p127 = por %p125, %p126
      %p128 = scmp.ne.s32.totalorder %s116, %s117
      %p129 = scmp.eq.s32.totalorder %s18, 1
      %p130 = por %p128, %p129
      %p132 = scmp.ne.s32.totalorder %s117, %s131
      %p133 = scmp.eq.s32.totalorder %s18, 0
      %p134 = por %p132, %p133
      %s135 = ssub.s32 %s12, %s19
      %p136 = scmp.eq.s32.totalorder %s135, 0
      %s138 = sadd.s32 %s137, 1
      %s139 = scalar_select %p136, %s137, %s138
      %p142 = pneg %p136
      %p143 = scmp.eq.s32.totalorder %s12, 1
      %p144 = por %p142, %p143
      %p145 = scmp.ne.s32.totalorder %s137, %s140
      %p146 = scmp.eq.s32.totalorder %s12, 0
      %p147 = por %p145, %p146
      %p148 = scmp.ne.s32.totalorder %s137, %s140
      %p149 = scmp.eq.s32.totalorder %s17, 1
      %p150 = por %p148, %p149
      %p151 = scmp.ne.s32.totalorder %s140, %s141
      %p152 = scmp.eq.s32.totalorder %s17, 0
      %p153 = por %p151, %p152
      %p154 = scmp.ne.s32.totalorder %s140, %s141
      %p155 = scmp.eq.s32.totalorder %s18, 1
      %p156 = por %p154, %p155
      %p158 = scmp.ne.s32.totalorder %s141, %s157
      %p159 = scmp.eq.s32.totalorder %s18, 0
      %p160 = por %p158, %p159
      %p161 = scmp.le.s32.totalorder 1, %s12
      %p162 = scmp.lt.s32.totalorder %s12, 3
      %p163 = pnand %p161, %p162
      %p164 = pneg %p163
      // Predicated region
      $region9: #{_lambda_.8} parent=5 // pred_check
        _
      $region10: #{_lambda_.8} parent=5 // pred_check_branch
        %166 = sbr.rel (%p163) target = $region12
      $region11: #{_lambda_.8} parent=5 // pred_region
        %s167 = ssub.s32 %s12, 1
        // Predicated region
        $region13: #{_lambda_.8} parent=11 // pred_check
          %p168 = pneg %p85
        $region14: #{_lambda_.8} parent=11 // pred_check_branch
          %170 = sbr.rel (%p168) target = $region16
        $region15: #{_lambda_.8} parent=11 // pred_region
          _
        $region16: #{_lambda_.8} parent=11 // pred_fallthru
          _
        // Predicated region
        $region17: #{_lambda_.8} parent=11 // pred_check
          %p171 = pneg %p106
        $region18: #{_lambda_.8} parent=11 // pred_check_branch
          %173 = sbr.rel (%p171) target = $region20
        $region19: #{_lambda_.8} parent=11 // pred_region
          _
        $region20: #{_lambda_.8} parent=11 // pred_fallthru
          _
        // Predicated region
        $region21: #{_lambda_.8} parent=11 // pred_check
          %p174 = pneg %p127
        $region22: #{_lambda_.8} parent=11 // pred_check_branch
          %176 = sbr.rel (%p174) target = $region24
        $region23: #{_lambda_.8} parent=11 // pred_region
          %178 = vsyncadd [#allocation3], 0
          %s180 = sshll.u32 %s4, 4
          %s181 = int_to_ptr.vmem [resolvable:$true] %s180
          %183 = dma.vmem_to_smem %s181, 16, [#allocation2], [#allocation3]
        $region24: #{_lambda_.8} parent=11 // pred_fallthru
          _
      $region12: #{_lambda_.8} parent=5 // pred_fallthru
        _
      %p184 = scmp.lt.s32.totalorder %s12, 2
      // Predicated region
      $region25: #{_lambda_.8} parent=5 // pred_check
        %p185 = pneg %p184
      $region26: #{_lambda_.8} parent=5 // pred_check_branch
        %187 = sbr.rel (%p185) target = $region28
      $region27: #{_lambda_.8} parent=5 // pred_region
        // Predicated region
        $region29: #{_lambda_.8} parent=27 // pred_check
          %p188 = pneg %p32
        $region30: #{_lambda_.8} parent=27 // pred_check_branch
          %190 = sbr.rel (%p188) target = $region32
        $region31: #{_lambda_.8} parent=27 // pred_region
          %p191 = scmp.lt.s32.totalorder %s12, 1
          %s192 = scalar_select %p191, %s12, 1
          %s193 = smul.addr %s192, 32
          %s194 = smul.addr %s193, 8
          %s195 = scalar_lea.vmem %s0, %s194
        $region32: #{_lambda_.8} parent=27 // pred_fallthru
          _
        // Predicated region
        $region33: #{_lambda_.8} parent=27 // pred_check
          %p196 = pneg %p58
        $region34: #{_lambda_.8} parent=27 // pred_check_branch
          %198 = sbr.rel (%p196) target = $region36
        $region35: #{_lambda_.8} parent=27 // pred_region
          %p199 = scmp.lt.s32.totalorder %s12, 1
          %s200 = scalar_select %p199, %s12, 1
          %s201 = smul.addr %s200, 32
          %s202 = smul.addr %s201, 8
          %s203 = scalar_lea.vmem %s1, %s202
        $region36: #{_lambda_.8} parent=27 // pred_fallthru
          _
      $region28: #{_lambda_.8} parent=5 // pred_fallthru
        _
      %p204 = scmp.le.s32.totalorder 1, %s12
      %p205 = scmp.lt.s32.totalorder %s12, 3
      %p206 = pnand %p204, %p205
      %p207 = pneg %p206
      // Predicated region
      $region37: #{_lambda_.8} parent=5 // pred_check
        _
      $region38: #{_lambda_.8} parent=5 // pred_check_branch
        %209 = sbr.rel (%p206) target = $region40
      $region39: #{_lambda_.8} parent=5 // pred_region
        %s210 = ssub.s32 %s12, 1
        // Predicated region
        $region41: #{_lambda_.8} parent=39 // pred_check
          %p211 = pneg %p127
        $region42: #{_lambda_.8} parent=39 // pred_check_branch
          %213 = sbr.rel (%p211) target = $region44
        $region43: #{_lambda_.8} parent=39 // pred_region
          %215 = dma.done [#allocation3], 16
        $region44: #{_lambda_.8} parent=39 // pred_fallthru
          _
        %216 = sfence
        %p217 = scmp.lt.s32.totalorder %s17, 1
        %s218 = scalar_select %p217, %s17, 1
        %s219 = smul.addr %s218, 32
        %s220 = smul.addr %s219, 8
        %s221 = scalar_lea.vmem %s0, %s220
        %p222 = pneg %p38
        %p223 = pneg %p35
        %p224 = scmp.lt.s32.totalorder %s17, 1
        %s225 = scalar_select %p224, %s17, 1
        %s226 = smul.addr %s225, 32
        %s227 = smul.addr %s226, 8
        %s228 = scalar_lea.vmem %s1, %s227
        %p229 = pneg %p64
        %p230 = pneg %p61
        %p231 = pneg %p85
        %p232 = pneg %p82
        %p233 = pneg %p106
        %p234 = pneg %p103
        %p235 = pneg %p127
        %p236 = pneg %p124
        %p237 = pneg %p153
        %p238 = pneg %p150
        %p239 = scmp.lt.s32.totalorder %s17, 1
        %s240 = scalar_select %p239, %s17, 1
        %s241 = smul.addr %s240, 32
        %s242 = smul.addr %s241, 8
        %s243 = scalar_lea.vmem %s5, %s242
        %p244 = scmp.lt.s32.totalorder %s17, 1
        %s245 = scalar_select %p244, %s17, 1
        %s246 = smul.addr %s245, 32
        %s247 = smul.addr %s246, 8
        %s248 = scalar_lea.vmem %s0, %s247
        %p249 = scmp.lt.s32.totalorder %s17, 1
        %s250 = scalar_select %p249, %s17, 1
        %s251 = smul.addr %s250, 32
        %s252 = smul.addr %s251, 8
        %s253 = scalar_lea.vmem %s1, %s252
        %p254 = scmp.lt.s32.totalorder %s17, 1
        %s255 = scalar_select %p254, %s17, 1
        %s256 = smul.addr %s255, 32
        %s257 = smul.addr %s256, 8
        %s258 = scalar_lea.vmem %s5, %s257
        %v260 = vld [vmem:[%s248] sm:$0xff]
        %v261 = vld [vmem:[%s248 + $0x8] sm:$0xff]
        %v262 = vld [vmem:[%s248 + $0x10] sm:$0xff]
        %v263 = vld [vmem:[%s248 + $0x18] sm:$0xff]
        %v264 = vld [vmem:[%s248 + $0x20] sm:$0xff]
        %v265 = vld [vmem:[%s248 + $0x28] sm:$0xff]
        %v266 = vld [vmem:[%s248 + $0x30] sm:$0xff]
        %v267 = vld [vmem:[%s248 + $0x38] sm:$0xff]
        %v268 = vld [vmem:[%s248 + $0x40] sm:$0xff]
        %v269 = vld [vmem:[%s248 + $0x48] sm:$0xff]
        %v270 = vld [vmem:[%s248 + $0x50] sm:$0xff]
        %v271 = vld [vmem:[%s248 + $0x58] sm:$0xff]
        %v272 = vld [vmem:[%s248 + $0x60] sm:$0xff]
        %v273 = vld [vmem:[%s248 + $0x68] sm:$0xff]
        %v274 = vld [vmem:[%s248 + $0x70] sm:$0xff]
        %v275 = vld [vmem:[%s248 + $0x78] sm:$0xff]
        %v276 = vld [vmem:[%s248 + $0x80] sm:$0xff]
        %v277 = vld [vmem:[%s248 + $0x88] sm:$0xff]
        %v278 = vld [vmem:[%s248 + $0x90] sm:$0xff]
        %v279 = vld [vmem:[%s248 + $0x98] sm:$0xff]
        %v280 = vld [vmem:[%s248 + $0xa0] sm:$0xff]
        %v281 = vld [vmem:[%s248 + $0xa8] sm:$0xff]
        %v282 = vld [vmem:[%s248 + $0xb0] sm:$0xff]
        %v283 = vld [vmem:[%s248 + $0xb8] sm:$0xff]
        %v284 = vld [vmem:[%s248 + $0xc0] sm:$0xff]
        %v285 = vld [vmem:[%s248 + $0xc8] sm:$0xff]
        %v286 = vld [vmem:[%s248 + $0xd0] sm:$0xff]
        %v287 = vld [vmem:[%s248 + $0xd8] sm:$0xff]
        %v288 = vld [vmem:[%s248 + $0xe0] sm:$0xff]
        %v289 = vld [vmem:[%s248 + $0xe8] sm:$0xff]
        %v290 = vld [vmem:[%s248 + $0xf0] sm:$0xff]
        %v291 = vld [vmem:[%s248 + $0xf8] sm:$0xff]
        %v292 = vmul.f32 %v260, %v260
        %v293 = vmul.f32 %v261, %v261
        %v294 = vmul.f32 %v262, %v262
        %v295 = vmul.f32 %v263, %v263
        %v296 = vmul.f32 %v264, %v264
        %v297 = vmul.f32 %v265, %v265
        %v298 = vmul.f32 %v266, %v266
        %v299 = vmul.f32 %v267, %v267
        %v300 = vmul.f32 %v268, %v268
        %v301 = vmul.f32 %v269, %v269
        %v302 = vmul.f32 %v270, %v270
        %v303 = vmul.f32 %v271, %v271
        %v304 = vmul.f32 %v272, %v272
        %v305 = vmul.f32 %v273, %v273
        %v306 = vmul.f32 %v274, %v274
        %v307 = vmul.f32 %v275, %v275
        %v308 = vmul.f32 %v276, %v276
        %v309 = vmul.f32 %v277, %v277
        %v310 = vmul.f32 %v278, %v278
        %v311 = vmul.f32 %v279, %v279
        %v312 = vmul.f32 %v280, %v280
        %v313 = vmul.f32 %v281, %v281
        %v314 = vmul.f32 %v282, %v282
        %v315 = vmul.f32 %v283, %v283
        %v316 = vmul.f32 %v284, %v284
        %v317 = vmul.f32 %v285, %v285
        %v318 = vmul.f32 %v286, %v286
        %v319 = vmul.f32 %v287, %v287
        %v320 = vmul.f32 %v288, %v288
        %v321 = vmul.f32 %v289, %v289
        %v322 = vmul.f32 %v290, %v290
        %v323 = vmul.f32 %v291, %v291
        %vm324 = vcmask 31744
        %v325 = vsel %vm324, %v292, 0.0
        %v326 = vsel %vm324, %v293, 0.0
        %v327 = vadd.f32 %v325, %v326
        %v328 = vsel %vm324, %v294, 0.0
        %v329 = vadd.f32 %v327, %v328
        %v330 = vsel %vm324, %v295, 0.0
        %v331 = vadd.f32 %v329, %v330
        %v332 = vsel %vm324, %v296, 0.0
        %v333 = vadd.f32 %v331, %v332
        %v334 = vsel %vm324, %v297, 0.0
        %v335 = vadd.f32 %v333, %v334
        %v336 = vsel %vm324, %v298, 0.0
        %v337 = vadd.f32 %v335, %v336
        %v338 = vsel %vm324, %v299, 0.0
        %v339 = vadd.f32 %v337, %v338
        %v340 = vsel %vm324, %v300, 0.0
        %v341 = vadd.f32 %v339, %v340
        %v342 = vsel %vm324, %v301, 0.0
        %v343 = vadd.f32 %v341, %v342
        %v344 = vsel %vm324, %v302, 0.0
        %v345 = vadd.f32 %v343, %v344
        %v346 = vsel %vm324, %v303, 0.0
        %v347 = vadd.f32 %v345, %v346
        %v348 = vsel %vm324, %v304, 0.0
        %v349 = vadd.f32 %v347, %v348
        %v350 = vsel %vm324, %v305, 0.0
        %v351 = vadd.f32 %v349, %v350
        %v352 = vsel %vm324, %v306, 0.0
        %v353 = vadd.f32 %v351, %v352
        %v354 = vsel %vm324, %v307, 0.0
        %v355 = vadd.f32 %v353, %v354
        %v356 = vsel %vm324, %v308, 0.0
        %v357 = vadd.f32 %v355, %v356
        %v358 = vsel %vm324, %v309, 0.0
        %v359 = vadd.f32 %v357, %v358
        %v360 = vsel %vm324, %v310, 0.0
        %v361 = vadd.f32 %v359, %v360
        %v362 = vsel %vm324, %v311, 0.0
        %v363 = vadd.f32 %v361, %v362
        %v364 = vsel %vm324, %v312, 0.0
        %v365 = vadd.f32 %v363, %v364
        %v366 = vsel %vm324, %v313, 0.0
        %v367 = vadd.f32 %v365, %v366
        %v368 = vsel %vm324, %v314, 0.0
        %v369 = vadd.f32 %v367, %v368
        %v370 = vsel %vm324, %v315, 0.0
        %v371 = vadd.f32 %v369, %v370
        %v372 = vsel %vm324, %v316, 0.0
        %v373 = vadd.f32 %v371, %v372
        %v374 = vsel %vm324, %v317, 0.0
        %v375 = vadd.f32 %v373, %v374
        %v376 = vsel %vm324, %v318, 0.0
        %v377 = vadd.f32 %v375, %v376
        %v378 = vsel %vm324, %v319, 0.0
        %v379 = vadd.f32 %v377, %v378
        %v380 = vsel %vm324, %v320, 0.0
        %v381 = vadd.f32 %v379, %v380
        %v382 = vsel %vm324, %v321, 0.0
        %v383 = vadd.f32 %v381, %v382
        %v384 = vsel %vm324, %v322, 0.0
        %v385 = vadd.f32 %v383, %v384
        %v386 = vsel %vm324, %v323, 0.0
        %v387 = vadd.f32 %v385, %v386
        %v388 = vrot.slane %v387, 4
        %v389 = vadd.f32 %v387, %v388
        %v390 = vrot.slane %v389, 2
        %v391 = vadd.f32 %v389, %v390
        %v392 = vrot.slane %v391, 1
        %v393 = vadd.f32 %v391, %v392
        %v394 = vmax.f32 %v393, 1e-24
        %v395 = vrsqrt.pop %v394
        %v396 = vmul.f32 %v395, %v394
        %v397 = vmul.f32 %v396, %v395
        %v398 = vmul.f32 0.5, %v397
        %v399 = vsub.f32 1.5, %v398
        %v400 = vmul.f32 %v395, %v399
        %vm401 = vweird.f32 %v394
        %vm402 = vweird.f32 %v395
        %vm403 = vmor %vm401, %vm402
        %v404 = vsel %vm403, %v395, %v400
        %v405 = vmul.f32 %v260, %v404
        %v406 = vmul.f32 %v261, %v404
        %v407 = vmul.f32 %v262, %v404
        %v408 = vmul.f32 %v263, %v404
        %v409 = vmul.f32 %v264, %v404
        %v410 = vmul.f32 %v265, %v404
        %v411 = vmul.f32 %v266, %v404
        %v412 = vmul.f32 %v267, %v404
        %v413 = vmul.f32 %v268, %v404
        %v414 = vmul.f32 %v269, %v404
        %v415 = vmul.f32 %v270, %v404
        %v416 = vmul.f32 %v271, %v404
        %v417 = vmul.f32 %v272, %v404
        %v418 = vmul.f32 %v273, %v404
        %v419 = vmul.f32 %v274, %v404
        %v420 = vmul.f32 %v275, %v404
        %v421 = vmul.f32 %v276, %v404
        %v422 = vmul.f32 %v277, %v404
        %v423 = vmul.f32 %v278, %v404
        %v424 = vmul.f32 %v279, %v404
        %v425 = vmul.f32 %v280, %v404
        %v426 = vmul.f32 %v281, %v404
        %v427 = vmul.f32 %v282, %v404
        %v428 = vmul.f32 %v283, %v404
        %v429 = vmul.f32 %v284, %v404
        %v430 = vmul.f32 %v285, %v404
        %v431 = vmul.f32 %v286, %v404
        %v432 = vmul.f32 %v287, %v404
        %v433 = vmul.f32 %v288, %v404
        %v434 = vmul.f32 %v289, %v404
        %v435 = vmul.f32 %v290, %v404
        %v436 = vmul.f32 %v291, %v404
        %vm437 = vcmask 97344
        %v438 = vsel %vm437, %v292, 0.0
        %v439 = vsel %vm437, %v293, 0.0
        %v440 = vadd.f32 %v438, %v439
        %v441 = vsel %vm437, %v294, 0.0
        %v442 = vadd.f32 %v440, %v441
        %v443 = vsel %vm437, %v295, 0.0
        %v444 = vadd.f32 %v442, %v443
        %v445 = vsel %vm437, %v296, 0.0
        %v446 = vadd.f32 %v444, %v445
        %v447 = vsel %vm437, %v297, 0.0
        %v448 = vadd.f32 %v446, %v447
        %v449 = vsel %vm437, %v298, 0.0
        %v450 = vadd.f32 %v448, %v449
        %v451 = vsel %vm437, %v299, 0.0
        %v452 = vadd.f32 %v450, %v451
        %v453 = vsel %vm437, %v300, 0.0
        %v454 = vadd.f32 %v452, %v453
        %v455 = vsel %vm437, %v301, 0.0
        %v456 = vadd.f32 %v454, %v455
        %v457 = vsel %vm437, %v302, 0.0
        %v458 = vadd.f32 %v456, %v457
        %v459 = vsel %vm437, %v303, 0.0
        %v460 = vadd.f32 %v458, %v459
        %v461 = vsel %vm437, %v304, 0.0
        %v462 = vadd.f32 %v460, %v461
        %v463 = vsel %vm437, %v305, 0.0
        %v464 = vadd.f32 %v462, %v463
        %v465 = vsel %vm437, %v306, 0.0
        %v466 = vadd.f32 %v464, %v465
        %v467 = vsel %vm437, %v307, 0.0
        %v468 = vadd.f32 %v466, %v467
        %v469 = vsel %vm437, %v308, 0.0
        %v470 = vadd.f32 %v468, %v469
        %v471 = vsel %vm437, %v309, 0.0
        %v472 = vadd.f32 %v470, %v471
        %v473 = vsel %vm437, %v310, 0.0
        %v474 = vadd.f32 %v472, %v473
        %v475 = vsel %vm437, %v311, 0.0
        %v476 = vadd.f32 %v474, %v475
        %v477 = vsel %vm437, %v312, 0.0
        %v478 = vadd.f32 %v476, %v477
        %v479 = vsel %vm437, %v313, 0.0
        %v480 = vadd.f32 %v478, %v479
        %v481 = vsel %vm437, %v314, 0.0
        %v482 = vadd.f32 %v480, %v481
        %v483 = vsel %vm437, %v315, 0.0
        %v484 = vadd.f32 %v482, %v483
        %v485 = vsel %vm437, %v316, 0.0
        %v486 = vadd.f32 %v484, %v485
        %v487 = vsel %vm437, %v317, 0.0
        %v488 = vadd.f32 %v486, %v487
        %v489 = vsel %vm437, %v318, 0.0
        %v490 = vadd.f32 %v488, %v489
        %v491 = vsel %vm437, %v319, 0.0
        %v492 = vadd.f32 %v490, %v491
        %v493 = vsel %vm437, %v320, 0.0
        %v494 = vadd.f32 %v492, %v493
        %v495 = vsel %vm437, %v321, 0.0
        %v496 = vadd.f32 %v494, %v495
        %v497 = vsel %vm437, %v322, 0.0
        %v498 = vadd.f32 %v496, %v497
        %v499 = vsel %vm437, %v323, 0.0
        %v500 = vadd.f32 %v498, %v499
        %v501 = vrot.slane %v500, 4
        %v502 = vadd.f32 %v500, %v501
        %v503 = vrot.slane %v502, 2
        %v504 = vadd.f32 %v502, %v503
        %v505 = vrot.slane %v504, 1
        %v506 = vadd.f32 %v504, %v505
        %v507 = vmax.f32 %v506, 1e-24
        %v508 = vrsqrt.pop %v507
        %v509 = vmul.f32 %v508, %v507
        %v510 = vmul.f32 %v509, %v508
        %v511 = vmul.f32 0.5, %v510
        %v512 = vsub.f32 1.5, %v511
        %v513 = vmul.f32 %v508, %v512
        %vm514 = vweird.f32 %v507
        %vm515 = vweird.f32 %v508
        %vm516 = vmor %vm514, %vm515
        %v517 = vsel %vm516, %v508, %v513
        %v518 = vmul.f32 %v260, %v517
        %v519 = vmul.f32 %v261, %v517
        %v520 = vmul.f32 %v262, %v517
        %v521 = vmul.f32 %v263, %v517
        %v522 = vmul.f32 %v264, %v517
        %v523 = vmul.f32 %v265, %v517
        %v524 = vmul.f32 %v266, %v517
        %v525 = vmul.f32 %v267, %v517
        %v526 = vmul.f32 %v268, %v517
        %v527 = vmul.f32 %v269, %v517
        %v528 = vmul.f32 %v270, %v517
        %v529 = vmul.f32 %v271, %v517
        %v530 = vmul.f32 %v272, %v517
        %v531 = vmul.f32 %v273, %v517
        %v532 = vmul.f32 %v274, %v517
        %v533 = vmul.f32 %v275, %v517
        %v534 = vmul.f32 %v276, %v517
        %v535 = vmul.f32 %v277, %v517
        %v536 = vmul.f32 %v278, %v517
        %v537 = vmul.f32 %v279, %v517
        %v538 = vmul.f32 %v280, %v517
        %v539 = vmul.f32 %v281, %v517
        %v540 = vmul.f32 %v282, %v517
        %v541 = vmul.f32 %v283, %v517
        %v542 = vmul.f32 %v284, %v517
        %v543 = vmul.f32 %v285, %v517
        %v544 = vmul.f32 %v286, %v517
        %v545 = vmul.f32 %v287, %v517
        %v546 = vmul.f32 %v288, %v517
        %v547 = vmul.f32 %v289, %v517
        %v548 = vmul.f32 %v290, %v517
        %v549 = vmul.f32 %v291, %v517
        %v550 = vpack.c.bf16 %v406, %v405
        %v551 = vpack.c.bf16 %v408, %v407
        %v552 = vpack.c.bf16 %v410, %v409
        %v553 = vpack.c.bf16 %v412, %v411
        %v554 = vpack.c.bf16 %v414, %v413
        %v555 = vpack.c.bf16 %v416, %v415
        %v556 = vpack.c.bf16 %v418, %v417
        %v557 = vpack.c.bf16 %v420, %v419
        %v558 = vpack.c.bf16 %v422, %v421
        %v559 = vpack.c.bf16 %v424, %v423
        %v560 = vpack.c.bf16 %v426, %v425
        %v561 = vpack.c.bf16 %v428, %v427
        %v562 = vpack.c.bf16 %v430, %v429
        %v563 = vpack.c.bf16 %v432, %v431
        %v564 = vpack.c.bf16 %v434, %v433
        %v565 = vpack.c.bf16 %v436, %v435
        %v566 = vpack.c.bf16 %v519, %v518
        %v567 = vpack.c.bf16 %v521, %v520
        %v568 = vpack.c.bf16 %v523, %v522
        %v569 = vpack.c.bf16 %v525, %v524
        %v570 = vpack.c.bf16 %v527, %v526
        %v571 = vpack.c.bf16 %v529, %v528
        %v572 = vpack.c.bf16 %v531, %v530
        %v573 = vpack.c.bf16 %v533, %v532
        %v574 = vpack.c.bf16 %v535, %v534
        %v575 = vpack.c.bf16 %v537, %v536
        %v576 = vpack.c.bf16 %v539, %v538
        %v577 = vpack.c.bf16 %v541, %v540
        %v578 = vpack.c.bf16 %v543, %v542
        %v579 = vpack.c.bf16 %v545, %v544
        %v580 = vpack.c.bf16 %v547, %v546
        %v581 = vpack.c.bf16 %v549, %v548
        %582 = vxpose.xlu0.c.b16.start [1/8] %v550, 128
        %583 = vxpose.xlu0.c.b16.cont [2/8] %v551, 128
        %584 = vxpose.xlu0.c.b16.cont [3/8] %v552, 128
        %585 = vxpose.xlu0.c.b16.cont [4/8] %v553, 128
        %586 = vxpose.xlu0.c.b16.cont [5/8] %v554, 128
        %587 = vxpose.xlu0.c.b16.cont [6/8] %v555, 128
        %588 = vxpose.xlu0.c.b16.cont [7/8] %v556, 128
        %589 = vxpose.xlu0.c.b16.end [8/8] %v557, 128
        %v590 = vpop.trf.xlu0
        %v591 = vpop.trf.xlu0
        %v592 = vpop.trf.xlu0
        %v593 = vpop.trf.xlu0
        %v594 = vpop.trf.xlu0
        %v595 = vpop.trf.xlu0
        %v596 = vpop.trf.xlu0
        %v597 = vpop.trf.xlu0
        %598 = vxpose.xlu0.c.b16.start [1/8] %v558, 128
        %599 = vxpose.xlu0.c.b16.cont [2/8] %v559, 128
        %600 = vxpose.xlu0.c.b16.cont [3/8] %v560, 128
        %601 = vxpose.xlu0.c.b16.cont [4/8] %v561, 128
        %602 = vxpose.xlu0.c.b16.cont [5/8] %v562, 128
        %603 = vxpose.xlu0.c.b16.cont [6/8] %v563, 128
        %604 = vxpose.xlu0.c.b16.cont [7/8] %v564, 128
        %605 = vxpose.xlu0.c.b16.end [8/8] %v565, 128
        %v606 = vpop.trf.xlu0
        %v607 = vpop.trf.xlu0
        %v608 = vpop.trf.xlu0
        %v609 = vpop.trf.xlu0
        %v610 = vpop.trf.xlu0
        %v611 = vpop.trf.xlu0
        %v612 = vpop.trf.xlu0
        %v613 = vpop.trf.xlu0
        %630 = vrot.lane.b32.xlu0 %v566, 120
        %v631 = vpop.permute.xlu0 %630
        %632 = vrot.lane.b32.xlu0 %v567, 120
        %v633 = vpop.permute.xlu0 %632
        %634 = vrot.lane.b32.xlu0 %v568, 120
        %v635 = vpop.permute.xlu0 %634
        %636 = vrot.lane.b32.xlu0 %v569, 120
        %v637 = vpop.permute.xlu0 %636
        %638 = vrot.lane.b32.xlu0 %v570, 120
        %v639 = vpop.permute.xlu0 %638
        %640 = vrot.lane.b32.xlu0 %v571, 120
        %v641 = vpop.permute.xlu0 %640
        %642 = vrot.lane.b32.xlu0 %v572, 120
        %v643 = vpop.permute.xlu0 %642
        %644 = vrot.lane.b32.xlu0 %v573, 120
        %v645 = vpop.permute.xlu0 %644
        %646 = vrot.lane.b32.xlu0 %v574, 120
        %v647 = vpop.permute.xlu0 %646
        %648 = vrot.lane.b32.xlu0 %v575, 120
        %v649 = vpop.permute.xlu0 %648
        %650 = vrot.lane.b32.xlu0 %v576, 120
        %v651 = vpop.permute.xlu0 %650
        %652 = vrot.lane.b32.xlu0 %v577, 120
        %v653 = vpop.permute.xlu0 %652
        %654 = vrot.lane.b32.xlu0 %v578, 120
        %v655 = vpop.permute.xlu0 %654
        %656 = vrot.lane.b32.xlu0 %v579, 120
        %v657 = vpop.permute.xlu0 %656
        %658 = vrot.lane.b32.xlu0 %v580, 120
        %v659 = vpop.permute.xlu0 %658
        %660 = vrot.lane.b32.xlu0 %v581, 120
        %v661 = vpop.permute.xlu0 %660
        %678 = vmatpush.bf16.msra.mxu0 %v645
        %679 = vmatpush.bf16.msra.mxu0 %v643
        %680 = vmatpush.bf16.msra.mxu0 %v641
        %681 = vmatpush.bf16.msra.mxu0 %v639
        %682 = vmatpush.bf16.msra.mxu0 %v637
        %683 = vmatpush.bf16.msra.mxu0 %v635
        %684 = vmatpush.bf16.msra.mxu0 %v633
        %685 = vmatpush.bf16.msra.mxu0 %v631
        %686 = vmatmul.bf16.gmra.mxu0 %v590
        %v687 = vpop.f32.mrf.mxu0
        %v688 = vadd.f32 0.0, %v687
        %v689 = vpop.f32.mrf.mxu0
        %690 = vdwg.mxu0
        %691 = vmatpush.bf16.msra.mxu0 %v661
        %692 = vmatpush.bf16.msra.mxu0 %v659
        %693 = vmatpush.bf16.msra.mxu0 %v657
        %694 = vmatpush.bf16.msra.mxu0 %v655
        %695 = vmatpush.bf16.msra.mxu0 %v653
        %696 = vmatpush.bf16.msra.mxu0 %v651
        %697 = vmatpush.bf16.msra.mxu0 %v649
        %698 = vmatpush.bf16.msra.mxu0 %v647
        %699 = vmatmul.bf16.gmra.mxu0 %v606
        %v700 = vpop.f32.mrf.mxu0
        %v701 = vadd.f32 %v688, %v700
        %v702 = vpop.f32.mrf.mxu0
        %703 = vdwg.mxu0
        %s704 = sld [smem:[#allocation2]]
        %v705 = vstv %s704
        %v706 = vmul.f32 %v701, %v705
        %vm707 = vcmask 27648
        %v708 = vsel %vm707, %v706, -inf
        %709 = vmax.xlane.f32.xlu0 %v708
        %v710 = vpop.xlane.xlu0 %709
        %v711 = vsub.f32 %v706, %v710
        %v712 = vmul.f32 %v711, 1.442695
        %v713 = vpow.pop %v712
        %v714 = vsel %vm707, %v713, 0.0
        %715 = vadd.xlane.f32.xlu0 %v714
        %v716 = vpop.xlane.xlu0 %715
        %v717 = vrcp.pop %v716
        %v718 = vmul.f32 %v713, %v717
        %v719 = vpack.c.bf16 %v261, %v260
        %v720 = vpack.c.bf16 %v263, %v262
        %v721 = vpack.c.bf16 %v265, %v264
        %v722 = vpack.c.bf16 %v267, %v266
        %v723 = vpack.c.bf16 %v269, %v268
        %v724 = vpack.c.bf16 %v271, %v270
        %v725 = vpack.c.bf16 %v273, %v272
        %v726 = vpack.c.bf16 %v275, %v274
        %v727 = vpack.c.bf16 %v277, %v276
        %v728 = vpack.c.bf16 %v279, %v278
        %v729 = vpack.c.bf16 %v281, %v280
        %v730 = vpack.c.bf16 %v283, %v282
        %v731 = vpack.c.bf16 %v285, %v284
        %v732 = vpack.c.bf16 %v287, %v286
        %v733 = vpack.c.bf16 %v289, %v288
        %v734 = vpack.c.bf16 %v291, %v290
        %v735 = vpack.c.bf16 %v718, %v718
        %752 = vrot.lane.b32.xlu0 %v719, 112
        %v753 = vpop.permute.xlu0 %752
        %754 = vrot.lane.b32.xlu0 %v720, 112
        %v755 = vpop.permute.xlu0 %754
        %756 = vrot.lane.b32.xlu0 %v721, 112
        %v757 = vpop.permute.xlu0 %756
        %758 = vrot.lane.b32.xlu0 %v722, 112
        %v759 = vpop.permute.xlu0 %758
        %760 = vrot.lane.b32.xlu0 %v723, 112
        %v761 = vpop.permute.xlu0 %760
        %762 = vrot.lane.b32.xlu0 %v724, 112
        %v763 = vpop.permute.xlu0 %762
        %764 = vrot.lane.b32.xlu0 %v725, 112
        %v765 = vpop.permute.xlu0 %764
        %766 = vrot.lane.b32.xlu0 %v726, 112
        %v767 = vpop.permute.xlu0 %766
        %768 = vrot.lane.b32.xlu0 %v727, 112
        %v769 = vpop.permute.xlu0 %768
        %770 = vrot.lane.b32.xlu0 %v728, 112
        %v771 = vpop.permute.xlu0 %770
        %772 = vrot.lane.b32.xlu0 %v729, 112
        %v773 = vpop.permute.xlu0 %772
        %774 = vrot.lane.b32.xlu0 %v730, 112
        %v775 = vpop.permute.xlu0 %774
        %776 = vrot.lane.b32.xlu0 %v731, 112
        %v777 = vpop.permute.xlu0 %776
        %778 = vrot.lane.b32.xlu0 %v732, 112
        %v779 = vpop.permute.xlu0 %778
        %780 = vrot.lane.b32.xlu0 %v733, 112
        %v781 = vpop.permute.xlu0 %780
        %782 = vrot.lane.b32.xlu0 %v734, 112
        %v783 = vpop.permute.xlu0 %782
        %v785 = vsel %vm324, %v753, 0
        %v788 = vsel %vm324, %v755, 0
        %v791 = vsel %vm324, %v757, 0
        %v794 = vsel %vm324, %v759, 0
        %v797 = vsel %vm324, %v761, 0
        %v800 = vsel %vm324, %v763, 0
        %v803 = vsel %vm324, %v765, 0
        %v806 = vsel %vm324, %v767, 0
        %v809 = vsel %vm324, %v769, 0
        %v812 = vsel %vm324, %v771, 0
        %v815 = vsel %vm324, %v773, 0
        %v818 = vsel %vm324, %v775, 0
        %v821 = vsel %vm324, %v777, 0
        %v824 = vsel %vm324, %v779, 0
        %v827 = vsel %vm324, %v781, 0
        %v830 = vsel %vm324, %v783, 0
        %v833 = vsel %vm324, %v735, 0
        %835 = vmatpush.bf16.xpose.msra.mxu0 0
        %836 = vmatpush.bf16.xpose.msra.mxu0 0
        %837 = vmatpush.bf16.xpose.msra.mxu0 0
        %838 = vmatpush.bf16.xpose.msra.mxu0 0
        %839 = vmatpush.bf16.xpose.msra.mxu0 0
        %840 = vmatpush.bf16.xpose.msra.mxu0 0
        %841 = vmatpush.bf16.xpose.msra.mxu0 0
        %842 = vmatpush.bf16.xpose.msra.mxu0 %v833
        %843 = vmatmul.bf16.gmra.mxu0 %v785
        %v844 = vpop.f32.mrf.mxu0
        %v845 = vadd.f32 0.0, %v844
        %v846 = vpop.f32.mrf.mxu0
        %v847 = vadd.f32 0.0, %v846
        %848 = vmatmul.bf16.gmra.mxu0 %v788
        %v849 = vpop.f32.mrf.mxu0
        %v850 = vadd.f32 0.0, %v849
        %v851 = vpop.f32.mrf.mxu0
        %v852 = vadd.f32 0.0, %v851
        %853 = vmatmul.bf16.gmra.mxu0 %v791
        %v854 = vpop.f32.mrf.mxu0
        %v855 = vadd.f32 0.0, %v854
        %v856 = vpop.f32.mrf.mxu0
        %v857 = vadd.f32 0.0, %v856
        %858 = vmatmul.bf16.gmra.mxu0 %v794
        %v859 = vpop.f32.mrf.mxu0
        %v860 = vadd.f32 0.0, %v859
        %v861 = vpop.f32.mrf.mxu0
        %v862 = vadd.f32 0.0, %v861
        %863 = vmatmul.bf16.gmra.mxu0 %v797
        %v864 = vpop.f32.mrf.mxu0
        %v865 = vadd.f32 0.0, %v864
        %v866 = vpop.f32.mrf.mxu0
        %v867 = vadd.f32 0.0, %v866
        %868 = vmatmul.bf16.gmra.mxu0 %v800
        %v869 = vpop.f32.mrf.mxu0
        %v870 = vadd.f32 0.0, %v869
        %v871 = vpop.f32.mrf.mxu0
        %v872 = vadd.f32 0.0, %v871
        %873 = vmatmul.bf16.gmra.mxu0 %v803
        %v874 = vpop.f32.mrf.mxu0
        %v875 = vadd.f32 0.0, %v874
        %v876 = vpop.f32.mrf.mxu0
        %v877 = vadd.f32 0.0, %v876
        %878 = vmatmul.bf16.gmra.mxu0 %v806
        %v879 = vpop.f32.mrf.mxu0
        %v880 = vadd.f32 0.0, %v879
        %v881 = vpop.f32.mrf.mxu0
        %v882 = vadd.f32 0.0, %v881
        %883 = vmatmul.bf16.gmra.mxu0 %v809
        %v884 = vpop.f32.mrf.mxu0
        %v885 = vadd.f32 0.0, %v884
        %v886 = vpop.f32.mrf.mxu0
        %v887 = vadd.f32 0.0, %v886
        %888 = vmatmul.bf16.gmra.mxu0 %v812
        %v889 = vpop.f32.mrf.mxu0
        %v890 = vadd.f32 0.0, %v889
        %v891 = vpop.f32.mrf.mxu0
        %v892 = vadd.f32 0.0, %v891
        %893 = vmatmul.bf16.gmra.mxu0 %v815
        %v894 = vpop.f32.mrf.mxu0
        %v895 = vadd.f32 0.0, %v894
        %v896 = vpop.f32.mrf.mxu0
        %v897 = vadd.f32 0.0, %v896
        %898 = vmatmul.bf16.gmra.mxu0 %v818
        %v899 = vpop.f32.mrf.mxu0
        %v900 = vadd.f32 0.0, %v899
        %v901 = vpop.f32.mrf.mxu0
        %v902 = vadd.f32 0.0, %v901
        %903 = vmatmul.bf16.gmra.mxu0 %v821
        %v904 = vpop.f32.mrf.mxu0
        %v905 = vadd.f32 0.0, %v904
        %v906 = vpop.f32.mrf.mxu0
        %v907 = vadd.f32 0.0, %v906
        %908 = vmatmul.bf16.gmra.mxu0 %v824
        %v909 = vpop.f32.mrf.mxu0
        %v910 = vadd.f32 0.0, %v909
        %v911 = vpop.f32.mrf.mxu0
        %v912 = vadd.f32 0.0, %v911
        %913 = vmatmul.bf16.gmra.mxu0 %v827
        %v914 = vpop.f32.mrf.mxu0
        %v915 = vadd.f32 0.0, %v914
        %v916 = vpop.f32.mrf.mxu0
        %v917 = vadd.f32 0.0, %v916
        %918 = vmatmul.bf16.gmra.mxu0 %v830
        %v919 = vpop.f32.mrf.mxu0
        %v920 = vadd.f32 0.0, %v919
        %v921 = vpop.f32.mrf.mxu0
        %v922 = vadd.f32 0.0, %v921
        %923 = vdwg.mxu0
        %v924 = vpack.c.bf16 %v847, %v845
        %v925 = vpack.c.bf16 %v852, %v850
        %v926 = vpack.c.bf16 %v857, %v855
        %v927 = vpack.c.bf16 %v862, %v860
        %v928 = vpack.c.bf16 %v867, %v865
        %v929 = vpack.c.bf16 %v872, %v870
        %v930 = vpack.c.bf16 %v877, %v875
        %v931 = vpack.c.bf16 %v882, %v880
        %v932 = vpack.c.bf16 %v887, %v885
        %v933 = vpack.c.bf16 %v892, %v890
        %v934 = vpack.c.bf16 %v897, %v895
        %v935 = vpack.c.bf16 %v902, %v900
        %v936 = vpack.c.bf16 %v907, %v905
        %v937 = vpack.c.bf16 %v912, %v910
        %v938 = vpack.c.bf16 %v917, %v915
        %v939 = vpack.c.bf16 %v922, %v920
        %v940 = vld [vmem:[%s2] sm:$0x3]
        %vm941 = vcmask 64544
        %v942 = vsel %vm941, %v292, 0.0
        %v943 = vsel %vm941, %v293, 0.0
        %v944 = vadd.f32 %v942, %v943
        %v945 = vsel %vm941, %v294, 0.0
        %v946 = vadd.f32 %v944, %v945
        %v947 = vsel %vm941, %v295, 0.0
        %v948 = vadd.f32 %v946, %v947
        %v949 = vsel %vm941, %v296, 0.0
        %v950 = vadd.f32 %v948, %v949
        %v951 = vsel %vm941, %v297, 0.0
        %v952 = vadd.f32 %v950, %v951
        %v953 = vsel %vm941, %v298, 0.0
        %v954 = vadd.f32 %v952, %v953
        %v955 = vsel %vm941, %v299, 0.0
        %v956 = vadd.f32 %v954, %v955
        %v957 = vsel %vm941, %v300, 0.0
        %v958 = vadd.f32 %v956, %v957
        %v959 = vsel %vm941, %v301, 0.0
        %v960 = vadd.f32 %v958, %v959
        %v961 = vsel %vm941, %v302, 0.0
        %v962 = vadd.f32 %v960, %v961
        %v963 = vsel %vm941, %v303, 0.0
        %v964 = vadd.f32 %v962, %v963
        %v965 = vsel %vm941, %v304, 0.0
        %v966 = vadd.f32 %v964, %v965
        %v967 = vsel %vm941, %v305, 0.0
        %v968 = vadd.f32 %v966, %v967
        %v969 = vsel %vm941, %v306, 0.0
        %v970 = vadd.f32 %v968, %v969
        %v971 = vsel %vm941, %v307, 0.0
        %v972 = vadd.f32 %v970, %v971
        %v973 = vsel %vm941, %v308, 0.0
        %v974 = vadd.f32 %v972, %v973
        %v975 = vsel %vm941, %v309, 0.0
        %v976 = vadd.f32 %v974, %v975
        %v977 = vsel %vm941, %v310, 0.0
        %v978 = vadd.f32 %v976, %v977
        %v979 = vsel %vm941, %v311, 0.0
        %v980 = vadd.f32 %v978, %v979
        %v981 = vsel %vm941, %v312, 0.0
        %v982 = vadd.f32 %v980, %v981
        %v983 = vsel %vm941, %v313, 0.0
        %v984 = vadd.f32 %v982, %v983
        %v985 = vsel %vm941, %v314, 0.0
        %v986 = vadd.f32 %v984, %v985
        %v987 = vsel %vm941, %v315, 0.0
        %v988 = vadd.f32 %v986, %v987
        %v989 = vsel %vm941, %v316, 0.0
        %v990 = vadd.f32 %v988, %v989
        %v991 = vsel %vm941, %v317, 0.0
        %v992 = vadd.f32 %v990, %v991
        %v993 = vsel %vm941, %v318, 0.0
        %v994 = vadd.f32 %v992, %v993
        %v995 = vsel %vm941, %v319, 0.0
        %v996 = vadd.f32 %v994, %v995
        %v997 = vsel %vm941, %v320, 0.0
        %v998 = vadd.f32 %v996, %v997
        %v999 = vsel %vm941, %v321, 0.0
        %v1000 = vadd.f32 %v998, %v999
        %v1001 = vsel %vm941, %v322, 0.0
        %v1002 = vadd.f32 %v1000, %v1001
        %v1003 = vsel %vm941, %v323, 0.0
        %v1004 = vadd.f32 %v1002, %v1003
        %v1005 = vrot.slane %v1004, 4
        %v1006 = vadd.f32 %v1004, %v1005
        %v1007 = vrot.slane %v1006, 2
        %v1008 = vadd.f32 %v1006, %v1007
        %v1009 = vrot.slane %v1008, 1
        %v1010 = vadd.f32 %v1008, %v1009
        %v1011 = vmax.f32 %v1010, 1e-24
        %v1012 = vrsqrt.pop %v1011
        %v1013 = vmul.f32 %v1012, %v1011
        %v1014 = vmul.f32 %v1013, %v1012
        %v1015 = vmul.f32 0.5, %v1014
        %v1016 = vsub.f32 1.5, %v1015
        %v1017 = vmul.f32 %v1012, %v1016
        %vm1018 = vweird.f32 %v1011
        %vm1019 = vweird.f32 %v1012
        %vm1020 = vmor %vm1018, %vm1019
        %v1021 = vsel %vm1020, %v1012, %v1017
        %v1022 = vmul.f32 %v260, %v1021
        %v1023 = vmul.f32 %v261, %v1021
        %v1024 = vmul.f32 %v262, %v1021
        %v1025 = vmul.f32 %v263, %v1021
        %v1026 = vmul.f32 %v264, %v1021
        %v1027 = vmul.f32 %v265, %v1021
        %v1028 = vmul.f32 %v266, %v1021
        %v1029 = vmul.f32 %v267, %v1021
        %v1030 = vmul.f32 %v268, %v1021
        %v1031 = vmul.f32 %v269, %v1021
        %v1032 = vmul.f32 %v270, %v1021
        %v1033 = vmul.f32 %v271, %v1021
        %v1034 = vmul.f32 %v272, %v1021
        %v1035 = vmul.f32 %v273, %v1021
        %v1036 = vmul.f32 %v274, %v1021
        %v1037 = vmul.f32 %v275, %v1021
        %v1038 = vmul.f32 %v276, %v1021
        %v1039 = vmul.f32 %v277, %v1021
        %v1040 = vmul.f32 %v278, %v1021
        %v1041 = vmul.f32 %v279, %v1021
        %v1042 = vmul.f32 %v280, %v1021
        %v1043 = vmul.f32 %v281, %v1021
        %v1044 = vmul.f32 %v282, %v1021
        %v1045 = vmul.f32 %v283, %v1021
        %v1046 = vmul.f32 %v284, %v1021
        %v1047 = vmul.f32 %v285, %v1021
        %v1048 = vmul.f32 %v286, %v1021
        %v1049 = vmul.f32 %v287, %v1021
        %v1050 = vmul.f32 %v288, %v1021
        %v1051 = vmul.f32 %v289, %v1021
        %v1052 = vmul.f32 %v290, %v1021
        %v1053 = vmul.f32 %v291, %v1021
        %vm1054 = vcmask 130144
        %v1055 = vsel %vm1054, %v292, 0.0
        %v1056 = vsel %vm1054, %v293, 0.0
        %v1057 = vadd.f32 %v1055, %v1056
        %v1058 = vsel %vm1054, %v294, 0.0
        %v1059 = vadd.f32 %v1057, %v1058
        %v1060 = vsel %vm1054, %v295, 0.0
        %v1061 = vadd.f32 %v1059, %v1060
        %v1062 = vsel %vm1054, %v296, 0.0
        %v1063 = vadd.f32 %v1061, %v1062
        %v1064 = vsel %vm1054, %v297, 0.0
        %v1065 = vadd.f32 %v1063, %v1064
        %v1066 = vsel %vm1054, %v298, 0.0
        %v1067 = vadd.f32 %v1065, %v1066
        %v1068 = vsel %vm1054, %v299, 0.0
        %v1069 = vadd.f32 %v1067, %v1068
        %v1070 = vsel %vm1054, %v300, 0.0
        %v1071 = vadd.f32 %v1069, %v1070
        %v1072 = vsel %vm1054, %v301, 0.0
        %v1073 = vadd.f32 %v1071, %v1072
        %v1074 = vsel %vm1054, %v302, 0.0
        %v1075 = vadd.f32 %v1073, %v1074
        %v1076 = vsel %vm1054, %v303, 0.0
        %v1077 = vadd.f32 %v1075, %v1076
        %v1078 = vsel %vm1054, %v304, 0.0
        %v1079 = vadd.f32 %v1077, %v1078
        %v1080 = vsel %vm1054, %v305, 0.0
        %v1081 = vadd.f32 %v1079, %v1080
        %v1082 = vsel %vm1054, %v306, 0.0
        %v1083 = vadd.f32 %v1081, %v1082
        %v1084 = vsel %vm1054, %v307, 0.0
        %v1085 = vadd.f32 %v1083, %v1084
        %v1086 = vsel %vm1054, %v308, 0.0
        %v1087 = vadd.f32 %v1085, %v1086
        %v1088 = vsel %vm1054, %v309, 0.0
        %v1089 = vadd.f32 %v1087, %v1088
        %v1090 = vsel %vm1054, %v310, 0.0
        %v1091 = vadd.f32 %v1089, %v1090
        %v1092 = vsel %vm1054, %v311, 0.0
        %v1093 = vadd.f32 %v1091, %v1092
        %v1094 = vsel %vm1054, %v312, 0.0
        %v1095 = vadd.f32 %v1093, %v1094
        %v1096 = vsel %vm1054, %v313, 0.0
        %v1097 = vadd.f32 %v1095, %v1096
        %v1098 = vsel %vm1054, %v314, 0.0
        %v1099 = vadd.f32 %v1097, %v1098
        %v1100 = vsel %vm1054, %v315, 0.0
        %v1101 = vadd.f32 %v1099, %v1100
        %v1102 = vsel %vm1054, %v316, 0.0
        %v1103 = vadd.f32 %v1101, %v1102
        %v1104 = vsel %vm1054, %v317, 0.0
        %v1105 = vadd.f32 %v1103, %v1104
        %v1106 = vsel %vm1054, %v318, 0.0
        %v1107 = vadd.f32 %v1105, %v1106
        %v1108 = vsel %vm1054, %v319, 0.0
        %v1109 = vadd.f32 %v1107, %v1108
        %v1110 = vsel %vm1054, %v320, 0.0
        %v1111 = vadd.f32 %v1109, %v1110
        %v1112 = vsel %vm1054, %v321, 0.0
        %v1113 = vadd.f32 %v1111, %v1112
        %v1114 = vsel %vm1054, %v322, 0.0
        %v1115 = vadd.f32 %v1113, %v1114
        %v1116 = vsel %vm1054, %v323, 0.0
        %v1117 = vadd.f32 %v1115, %v1116
        %v1118 = vrot.slane %v1117, 4
        %v1119 = vadd.f32 %v1117, %v1118
        %v1120 = vrot.slane %v1119, 2
        %v1121 = vadd.f32 %v1119, %v1120
        %v1122 = vrot.slane %v1121, 1
        %v1123 = vadd.f32 %v1121, %v1122
        %v1124 = vmax.f32 %v1123, 1e-24
        %v1125 = vrsqrt.pop %v1124
        %v1126 = vmul.f32 %v1125, %v1124
        %v1127 = vmul.f32 %v1126, %v1125
        %v1128 = vmul.f32 0.5, %v1127
        %v1129 = vsub.f32 1.5, %v1128
        %v1130 = vmul.f32 %v1125, %v1129
        %vm1131 = vweird.f32 %v1124
        %vm1132 = vweird.f32 %v1125
        %vm1133 = vmor %vm1131, %vm1132
        %v1134 = vsel %vm1133, %v1125, %v1130
        %v1135 = vmul.f32 %v260, %v1134
        %v1136 = vmul.f32 %v261, %v1134
        %v1137 = vmul.f32 %v262, %v1134
        %v1138 = vmul.f32 %v263, %v1134
        %v1139 = vmul.f32 %v264, %v1134
        %v1140 = vmul.f32 %v265, %v1134
        %v1141 = vmul.f32 %v266, %v1134
        %v1142 = vmul.f32 %v267, %v1134
        %v1143 = vmul.f32 %v268, %v1134
        %v1144 = vmul.f32 %v269, %v1134
        %v1145 = vmul.f32 %v270, %v1134
        %v1146 = vmul.f32 %v271, %v1134
        %v1147 = vmul.f32 %v272, %v1134
        %v1148 = vmul.f32 %v273, %v1134
        %v1149 = vmul.f32 %v274, %v1134
        %v1150 = vmul.f32 %v275, %v1134
        %v1151 = vmul.f32 %v276, %v1134
        %v1152 = vmul.f32 %v277, %v1134
        %v1153 = vmul.f32 %v278, %v1134
        %v1154 = vmul.f32 %v279, %v1134
        %v1155 = vmul.f32 %v280, %v1134
        %v1156 = vmul.f32 %v281, %v1134
        %v1157 = vmul.f32 %v282, %v1134
        %v1158 = vmul.f32 %v283, %v1134
        %v1159 = vmul.f32 %v284, %v1134
        %v1160 = vmul.f32 %v285, %v1134
        %v1161 = vmul.f32 %v286, %v1134
        %v1162 = vmul.f32 %v287, %v1134
        %v1163 = vmul.f32 %v288, %v1134
        %v1164 = vmul.f32 %v289, %v1134
        %v1165 = vmul.f32 %v290, %v1134
        %v1166 = vmul.f32 %v291, %v1134
        %v1167 = vpack.c.bf16 %v1023, %v1022
        %v1168 = vpack.c.bf16 %v1025, %v1024
        %v1169 = vpack.c.bf16 %v1027, %v1026
        %v1170 = vpack.c.bf16 %v1029, %v1028
        %v1171 = vpack.c.bf16 %v1031, %v1030
        %v1172 = vpack.c.bf16 %v1033, %v1032
        %v1173 = vpack.c.bf16 %v1035, %v1034
        %v1174 = vpack.c.bf16 %v1037, %v1036
        %v1175 = vpack.c.bf16 %v1039, %v1038
        %v1176 = vpack.c.bf16 %v1041, %v1040
        %v1177 = vpack.c.bf16 %v1043, %v1042
        %v1178 = vpack.c.bf16 %v1045, %v1044
        %v1179 = vpack.c.bf16 %v1047, %v1046
        %v1180 = vpack.c.bf16 %v1049, %v1048
        %v1181 = vpack.c.bf16 %v1051, %v1050
        %v1182 = vpack.c.bf16 %v1053, %v1052
        %v1183 = vpack.c.bf16 %v1136, %v1135
        %v1184 = vpack.c.bf16 %v1138, %v1137
        %v1185 = vpack.c.bf16 %v1140, %v1139
        %v1186 = vpack.c.bf16 %v1142, %v1141
        %v1187 = vpack.c.bf16 %v1144, %v1143
        %v1188 = vpack.c.bf16 %v1146, %v1145
        %v1189 = vpack.c.bf16 %v1148, %v1147
        %v1190 = vpack.c.bf16 %v1150, %v1149
        %v1191 = vpack.c.bf16 %v1152, %v1151
        %v1192 = vpack.c.bf16 %v1154, %v1153
        %v1193 = vpack.c.bf16 %v1156, %v1155
        %v1194 = vpack.c.bf16 %v1158, %v1157
        %v1195 = vpack.c.bf16 %v1160, %v1159
        %v1196 = vpack.c.bf16 %v1162, %v1161
        %v1197 = vpack.c.bf16 %v1164, %v1163
        %v1198 = vpack.c.bf16 %v1166, %v1165
        %1215 = vrot.lane.b32.xlu0 %v1167, 124
        %v1216 = vpop.permute.xlu0 %1215
        %1217 = vrot.lane.b32.xlu0 %v1168, 124
        %v1218 = vpop.permute.xlu0 %1217
        %1219 = vrot.lane.b32.xlu0 %v1169, 124
        %v1220 = vpop.permute.xlu0 %1219
        %1221 = vrot.lane.b32.xlu0 %v1170, 124
        %v1222 = vpop.permute.xlu0 %1221
        %1223 = vrot.lane.b32.xlu0 %v1171, 124
        %v1224 = vpop.permute.xlu0 %1223
        %1225 = vrot.lane.b32.xlu0 %v1172, 124
        %v1226 = vpop.permute.xlu0 %1225
        %1227 = vrot.lane.b32.xlu0 %v1173, 124
        %v1228 = vpop.permute.xlu0 %1227
        %1229 = vrot.lane.b32.xlu0 %v1174, 124
        %v1230 = vpop.permute.xlu0 %1229
        %1231 = vrot.lane.b32.xlu0 %v1175, 124
        %v1232 = vpop.permute.xlu0 %1231
        %1233 = vrot.lane.b32.xlu0 %v1176, 124
        %v1234 = vpop.permute.xlu0 %1233
        %1235 = vrot.lane.b32.xlu0 %v1177, 124
        %v1236 = vpop.permute.xlu0 %1235
        %1237 = vrot.lane.b32.xlu0 %v1178, 124
        %v1238 = vpop.permute.xlu0 %1237
        %1239 = vrot.lane.b32.xlu0 %v1179, 124
        %v1240 = vpop.permute.xlu0 %1239
        %1241 = vrot.lane.b32.xlu0 %v1180, 124
        %v1242 = vpop.permute.xlu0 %1241
        %1243 = vrot.lane.b32.xlu0 %v1181, 124
        %v1244 = vpop.permute.xlu0 %1243
        %1245 = vrot.lane.b32.xlu0 %v1182, 124
        %v1246 = vpop.permute.xlu0 %1245
        %1263 = vxpose.xlu0.c.b16.start [1/8] %v1216, 128
        %1264 = vxpose.xlu0.c.b16.cont [2/8] %v1218, 128
        %1265 = vxpose.xlu0.c.b16.cont [3/8] %v1220, 128
        %1266 = vxpose.xlu0.c.b16.cont [4/8] %v1222, 128
        %1267 = vxpose.xlu0.c.b16.cont [5/8] %v1224, 128
        %1268 = vxpose.xlu0.c.b16.cont [6/8] %v1226, 128
        %1269 = vxpose.xlu0.c.b16.cont [7/8] %v1228, 128
        %1270 = vxpose.xlu0.c.b16.end [8/8] %v1230, 128
        %v1271 = vpop.trf.xlu0
        %v1272 = vpop.trf.xlu0
        %v1273 = vpop.trf.xlu0
        %v1274 = vpop.trf.xlu0
        %v1275 = vpop.trf.xlu0
        %v1276 = vpop.trf.xlu0
        %v1277 = vpop.trf.xlu0
        %v1278 = vpop.trf.xlu0
        %1279 = vxpose.xlu0.c.b16.start [1/8] %v1232, 128
        %1280 = vxpose.xlu0.c.b16.cont [2/8] %v1234, 128
        %1281 = vxpose.xlu0.c.b16.cont [3/8] %v1236, 128
        %1282 = vxpose.xlu0.c.b16.cont [4/8] %v1238, 128
        %1283 = vxpose.xlu0.c.b16.cont [5/8] %v1240, 128
        %1284 = vxpose.xlu0.c.b16.cont [6/8] %v1242, 128
        %1285 = vxpose.xlu0.c.b16.cont [7/8] %v1244, 128
        %1286 = vxpose.xlu0.c.b16.end [8/8] %v1246, 128
        %v1287 = vpop.trf.xlu0
        %v1288 = vpop.trf.xlu0
        %v1289 = vpop.trf.xlu0
        %v1290 = vpop.trf.xlu0
        %v1291 = vpop.trf.xlu0
        %v1292 = vpop.trf.xlu0
        %v1293 = vpop.trf.xlu0
        %v1294 = vpop.trf.xlu0
        %1311 = vrot.lane.b32.xlu0 %v1183, 116
        %v1312 = vpop.permute.xlu0 %1311
        %1313 = vrot.lane.b32.xlu0 %v1184, 116
        %v1314 = vpop.permute.xlu0 %1313
        %1315 = vrot.lane.b32.xlu0 %v1185, 116
        %v1316 = vpop.permute.xlu0 %1315
        %1317 = vrot.lane.b32.xlu0 %v1186, 116
        %v1318 = vpop.permute.xlu0 %1317
        %1319 = vrot.lane.b32.xlu0 %v1187, 116
        %v1320 = vpop.permute.xlu0 %1319
        %1321 = vrot.lane.b32.xlu0 %v1188, 116
        %v1322 = vpop.permute.xlu0 %1321
        %1323 = vrot.lane.b32.xlu0 %v1189, 116
        %v1324 = vpop.permute.xlu0 %1323
        %1325 = vrot.lane.b32.xlu0 %v1190, 116
        %v1326 = vpop.permute.xlu0 %1325
        %1327 = vrot.lane.b32.xlu0 %v1191, 116
        %v1328 = vpop.permute.xlu0 %1327
        %1329 = vrot.lane.b32.xlu0 %v1192, 116
        %v1330 = vpop.permute.xlu0 %1329
        %1331 = vrot.lane.b32.xlu0 %v1193, 116
        %v1332 = vpop.permute.xlu0 %1331
        %1333 = vrot.lane.b32.xlu0 %v1194, 116
        %v1334 = vpop.permute.xlu0 %1333
        %1335 = vrot.lane.b32.xlu0 %v1195, 116
        %v1336 = vpop.permute.xlu0 %1335
        %1337 = vrot.lane.b32.xlu0 %v1196, 116
        %v1338 = vpop.permute.xlu0 %1337
        %1339 = vrot.lane.b32.xlu0 %v1197, 116
        %v1340 = vpop.permute.xlu0 %1339
        %1341 = vrot.lane.b32.xlu0 %v1198, 116
        %v1342 = vpop.permute.xlu0 %1341
        %1359 = vmatpush.bf16.msra.mxu0 %v1326
        %1360 = vmatpush.bf16.msra.mxu0 %v1324
        %1361 = vmatpush.bf16.msra.mxu0 %v1322
        %1362 = vmatpush.bf16.msra.mxu0 %v1320
        %1363 = vmatpush.bf16.msra.mxu0 %v1318
        %1364 = vmatpush.bf16.msra.mxu0 %v1316
        %1365 = vmatpush.bf16.msra.mxu0 %v1314
        %1366 = vmatpush.bf16.msra.mxu0 %v1312
        %1367 = vmatmul.bf16.gmra.mxu0 %v1271
        %v1368 = vpop.f32.mrf.mxu0
        %v1369 = vadd.f32 0.0, %v1368
        %v1370 = vpop.f32.mrf.mxu0
        %1371 = vdwg.mxu0
        %1372 = vmatpush.bf16.msra.mxu0 %v1342
        %1373 = vmatpush.bf16.msra.mxu0 %v1340
        %1374 = vmatpush.bf16.msra.mxu0 %v1338
        %1375 = vmatpush.bf16.msra.mxu0 %v1336
        %1376 = vmatpush.bf16.msra.mxu0 %v1334
        %1377 = vmatpush.bf16.msra.mxu0 %v1332
        %1378 = vmatpush.bf16.msra.mxu0 %v1330
        %1379 = vmatpush.bf16.msra.mxu0 %v1328
        %1380 = vmatmul.bf16.gmra.mxu0 %v1287
        %v1381 = vpop.f32.mrf.mxu0
        %v1382 = vadd.f32 %v1369, %v1381
        %v1383 = vpop.f32.mrf.mxu0
        %1384 = vdwg.mxu0
        %s1385 = sld [smem:[#allocation2 + $0x1]]
        %v1386 = vstv %s1385
        %v1387 = vmul.f32 %v1382, %v1386
        %v1388 = vsel %vm707, %v1387, -inf
        %1389 = vmax.xlane.f32.xlu0 %v1388
        %v1390 = vpop.xlane.xlu0 %1389
        %v1391 = vsub.f32 %v1387, %v1390
        %v1392 = vmul.f32 %v1391, 1.442695
        %v1393 = vpow.pop %v1392
        %v1394 = vsel %vm707, %v1393, 0.0
        %1395 = vadd.xlane.f32.xlu0 %v1394
        %v1396 = vpop.xlane.xlu0 %1395
        %v1397 = vrcp.pop %v1396
        %v1398 = vmul.f32 %v1393, %v1397
        %v1399 = vpack.c.bf16 %v1398, %v1398
        %1400 = vrot.lane.b32.xlu0 %v719, 108
        %v1401 = vpop.permute.xlu0 %1400
        %1402 = vrot.lane.b32.xlu0 %v720, 108
        %v1403 = vpop.permute.xlu0 %1402
        %1404 = vrot.lane.b32.xlu0 %v721, 108
        %v1405 = vpop.permute.xlu0 %1404
        %1406 = vrot.lane.b32.xlu0 %v722, 108
        %v1407 = vpop.permute.xlu0 %1406
        %1408 = vrot.lane.b32.xlu0 %v723, 108
        %v1409 = vpop.permute.xlu0 %1408
        %1410 = vrot.lane.b32.xlu0 %v724, 108
        %v1411 = vpop.permute.xlu0 %1410
        %1412 = vrot.lane.b32.xlu0 %v725, 108
        %v1413 = vpop.permute.xlu0 %1412
        %1414 = vrot.lane.b32.xlu0 %v726, 108
        %v1415 = vpop.permute.xlu0 %1414
        %1416 = vrot.lane.b32.xlu0 %v727, 108
        %v1417 = vpop.permute.xlu0 %1416
        %1418 = vrot.lane.b32.xlu0 %v728, 108
        %v1419 = vpop.permute.xlu0 %1418
        %1420 = vrot.lane.b32.xlu0 %v729, 108
        %v1421 = vpop.permute.xlu0 %1420
        %1422 = vrot.lane.b32.xlu0 %v730, 108
        %v1423 = vpop.permute.xlu0 %1422
        %1424 = vrot.lane.b32.xlu0 %v731, 108
        %v1425 = vpop.permute.xlu0 %1424
        %1426 = vrot.lane.b32.xlu0 %v732, 108
        %v1427 = vpop.permute.xlu0 %1426
        %1428 = vrot.lane.b32.xlu0 %v733, 108
        %v1429 = vpop.permute.xlu0 %1428
        %1430 = vrot.lane.b32.xlu0 %v734, 108
        %v1431 = vpop.permute.xlu0 %1430
        %v1433 = vsel %vm324, %v1401, 0
        %v1436 = vsel %vm324, %v1403, 0
        %v1439 = vsel %vm324, %v1405, 0
        %v1442 = vsel %vm324, %v1407, 0
        %v1445 = vsel %vm324, %v1409, 0
        %v1448 = vsel %vm324, %v1411, 0
        %v1451 = vsel %vm324, %v1413, 0
        %v1454 = vsel %vm324, %v1415, 0
        %v1457 = vsel %vm324, %v1417, 0
        %v1460 = vsel %vm324, %v1419, 0
        %v1463 = vsel %vm324, %v1421, 0
        %v1466 = vsel %vm324, %v1423, 0
        %v1469 = vsel %vm324, %v1425, 0
        %v1472 = vsel %vm324, %v1427, 0
        %v1475 = vsel %vm324, %v1429, 0
        %v1478 = vsel %vm324, %v1431, 0
        %v1481 = vsel %vm324, %v1399, 0
        %1483 = vmatpush.bf16.xpose.msra.mxu0 0
        %1484 = vmatpush.bf16.xpose.msra.mxu0 0
        %1485 = vmatpush.bf16.xpose.msra.mxu0 0
        %1486 = vmatpush.bf16.xpose.msra.mxu0 0
        %1487 = vmatpush.bf16.xpose.msra.mxu0 0
        %1488 = vmatpush.bf16.xpose.msra.mxu0 0
        %1489 = vmatpush.bf16.xpose.msra.mxu0 0
        %1490 = vmatpush.bf16.xpose.msra.mxu0 %v1481
        %1491 = vmatmul.bf16.gmra.mxu0 %v1433
        %v1492 = vpop.f32.mrf.mxu0
        %v1493 = vadd.f32 0.0, %v1492
        %v1494 = vpop.f32.mrf.mxu0
        %v1495 = vadd.f32 0.0, %v1494
        %1496 = vmatmul.bf16.gmra.mxu0 %v1436
        %v1497 = vpop.f32.mrf.mxu0
        %v1498 = vadd.f32 0.0, %v1497
        %v1499 = vpop.f32.mrf.mxu0
        %v1500 = vadd.f32 0.0, %v1499
        %1501 = vmatmul.bf16.gmra.mxu0 %v1439
        %v1502 = vpop.f32.mrf.mxu0
        %v1503 = vadd.f32 0.0, %v1502
        %v1504 = vpop.f32.mrf.mxu0
        %v1505 = vadd.f32 0.0, %v1504
        %1506 = vmatmul.bf16.gmra.mxu0 %v1442
        %v1507 = vpop.f32.mrf.mxu0
        %v1508 = vadd.f32 0.0, %v1507
        %v1509 = vpop.f32.mrf.mxu0
        %v1510 = vadd.f32 0.0, %v1509
        %1511 = vmatmul.bf16.gmra.mxu0 %v1445
        %v1512 = vpop.f32.mrf.mxu0
        %v1513 = vadd.f32 0.0, %v1512
        %v1514 = vpop.f32.mrf.mxu0
        %v1515 = vadd.f32 0.0, %v1514
        %1516 = vmatmul.bf16.gmra.mxu0 %v1448
        %v1517 = vpop.f32.mrf.mxu0
        %v1518 = vadd.f32 0.0, %v1517
        %v1519 = vpop.f32.mrf.mxu0
        %v1520 = vadd.f32 0.0, %v1519
        %1521 = vmatmul.bf16.gmra.mxu0 %v1451
        %v1522 = vpop.f32.mrf.mxu0
        %v1523 = vadd.f32 0.0, %v1522
        %v1524 = vpop.f32.mrf.mxu0
        %v1525 = vadd.f32 0.0, %v1524
        %1526 = vmatmul.bf16.gmra.mxu0 %v1454
        %v1527 = vpop.f32.mrf.mxu0
        %v1528 = vadd.f32 0.0, %v1527
        %v1529 = vpop.f32.mrf.mxu0
        %v1530 = vadd.f32 0.0, %v1529
        %1531 = vmatmul.bf16.gmra.mxu0 %v1457
        %v1532 = vpop.f32.mrf.mxu0
        %v1533 = vadd.f32 0.0, %v1532
        %v1534 = vpop.f32.mrf.mxu0
        %v1535 = vadd.f32 0.0, %v1534
        %1536 = vmatmul.bf16.gmra.mxu0 %v1460
        %v1537 = vpop.f32.mrf.mxu0
        %v1538 = vadd.f32 0.0, %v1537
        %v1539 = vpop.f32.mrf.mxu0
        %v1540 = vadd.f32 0.0, %v1539
        %1541 = vmatmul.bf16.gmra.mxu0 %v1463
        %v1542 = vpop.f32.mrf.mxu0
        %v1543 = vadd.f32 0.0, %v1542
        %v1544 = vpop.f32.mrf.mxu0
        %v1545 = vadd.f32 0.0, %v1544
        %1546 = vmatmul.bf16.gmra.mxu0 %v1466
        %v1547 = vpop.f32.mrf.mxu0
        %v1548 = vadd.f32 0.0, %v1547
        %v1549 = vpop.f32.mrf.mxu0
        %v1550 = vadd.f32 0.0, %v1549
        %1551 = vmatmul.bf16.gmra.mxu0 %v1469
        %v1552 = vpop.f32.mrf.mxu0
        %v1553 = vadd.f32 0.0, %v1552
        %v1554 = vpop.f32.mrf.mxu0
        %v1555 = vadd.f32 0.0, %v1554
        %1556 = vmatmul.bf16.gmra.mxu0 %v1472
        %v1557 = vpop.f32.mrf.mxu0
        %v1558 = vadd.f32 0.0, %v1557
        %v1559 = vpop.f32.mrf.mxu0
        %v1560 = vadd.f32 0.0, %v1559
        %1561 = vmatmul.bf16.gmra.mxu0 %v1475
        %v1562 = vpop.f32.mrf.mxu0
        %v1563 = vadd.f32 0.0, %v1562
        %v1564 = vpop.f32.mrf.mxu0
        %v1565 = vadd.f32 0.0, %v1564
        %1566 = vmatmul.bf16.gmra.mxu0 %v1478
        %v1567 = vpop.f32.mrf.mxu0
        %v1568 = vadd.f32 0.0, %v1567
        %v1569 = vpop.f32.mrf.mxu0
        %v1570 = vadd.f32 0.0, %v1569
        %1571 = vdwg.mxu0
        %v1572 = vpack.c.bf16 %v1495, %v1493
        %v1573 = vpack.c.bf16 %v1500, %v1498
        %v1574 = vpack.c.bf16 %v1505, %v1503
        %v1575 = vpack.c.bf16 %v1510, %v1508
        %v1576 = vpack.c.bf16 %v1515, %v1513
        %v1577 = vpack.c.bf16 %v1520, %v1518
        %v1578 = vpack.c.bf16 %v1525, %v1523
        %v1579 = vpack.c.bf16 %v1530, %v1528
        %v1580 = vpack.c.bf16 %v1535, %v1533
        %v1581 = vpack.c.bf16 %v1540, %v1538
        %v1582 = vpack.c.bf16 %v1545, %v1543
        %v1583 = vpack.c.bf16 %v1550, %v1548
        %v1584 = vpack.c.bf16 %v1555, %v1553
        %v1585 = vpack.c.bf16 %v1560, %v1558
        %v1586 = vpack.c.bf16 %v1565, %v1563
        %v1587 = vpack.c.bf16 %v1570, %v1568
        %v1588 = vld [vmem:[%s2] sm:$0xc]
        %v1590 = vunpack.c.l.b16 %v1588
        %v1591 = vpack.c.b16 %v1590, %v1590
        %v1592 = vrot.slane %v1591, 2
        %v1594 = vsel %vm324, %v1572, 0
        %v1597 = vsel %vm324, %v1573, 0
        %v1600 = vsel %vm324, %v1574, 0
        %v1603 = vsel %vm324, %v1575, 0
        %v1606 = vsel %vm324, %v1576, 0
        %v1609 = vsel %vm324, %v1577, 0
        %v1612 = vsel %vm324, %v1578, 0
        %v1615 = vsel %vm324, %v1579, 0
        %v1618 = vsel %vm324, %v1580, 0
        %v1621 = vsel %vm324, %v1581, 0
        %v1624 = vsel %vm324, %v1582, 0
        %v1627 = vsel %vm324, %v1583, 0
        %v1630 = vsel %vm324, %v1584, 0
        %v1633 = vsel %vm324, %v1585, 0
        %v1636 = vsel %vm324, %v1586, 0
        %v1639 = vsel %vm324, %v1587, 0
        %vm1641 = vcmask 1041408
        %v1643 = vsel %vm1641, %v1592, 0
        %1645 = vmatpush.bf16.msra.mxu0 0
        %1646 = vmatpush.bf16.msra.mxu0 0
        %1647 = vmatpush.bf16.msra.mxu0 0
        %1648 = vmatpush.bf16.msra.mxu0 0
        %1649 = vmatpush.bf16.msra.mxu0 0
        %1650 = vmatpush.bf16.msra.mxu0 0
        %1651 = vmatpush.bf16.msra.mxu0 0
        %1652 = vmatpush.bf16.msra.mxu0 %v1643
        %1653 = vmatmul.bf16.gmra.mxu0 %v1594
        %v1654 = vpop.f32.mrf.mxu0
        %v1655 = vadd.f32 0.0, %v1654
        %v1656 = vpop.f32.mrf.mxu0
        %v1657 = vadd.f32 0.0, %v1656
        %1658 = vmatmul.bf16.gmra.mxu0 %v1597
        %v1659 = vpop.f32.mrf.mxu0
        %v1660 = vadd.f32 0.0, %v1659
        %v1661 = vpop.f32.mrf.mxu0
        %v1662 = vadd.f32 0.0, %v1661
        %1663 = vmatmul.bf16.gmra.mxu0 %v1600
        %v1664 = vpop.f32.mrf.mxu0
        %v1665 = vadd.f32 0.0, %v1664
        %v1666 = vpop.f32.mrf.mxu0
        %v1667 = vadd.f32 0.0, %v1666
        %1668 = vmatmul.bf16.gmra.mxu0 %v1603
        %v1669 = vpop.f32.mrf.mxu0
        %v1670 = vadd.f32 0.0, %v1669
        %v1671 = vpop.f32.mrf.mxu0
        %v1672 = vadd.f32 0.0, %v1671
        %1673 = vmatmul.bf16.gmra.mxu0 %v1606
        %v1674 = vpop.f32.mrf.mxu0
        %v1675 = vadd.f32 0.0, %v1674
        %v1676 = vpop.f32.mrf.mxu0
        %v1677 = vadd.f32 0.0, %v1676
        %1678 = vmatmul.bf16.gmra.mxu0 %v1609
        %v1679 = vpop.f32.mrf.mxu0
        %v1680 = vadd.f32 0.0, %v1679
        %v1681 = vpop.f32.mrf.mxu0
        %v1682 = vadd.f32 0.0, %v1681
        %1683 = vmatmul.bf16.gmra.mxu0 %v1612
        %v1684 = vpop.f32.mrf.mxu0
        %v1685 = vadd.f32 0.0, %v1684
        %v1686 = vpop.f32.mrf.mxu0
        %v1687 = vadd.f32 0.0, %v1686
        %1688 = vmatmul.bf16.gmra.mxu0 %v1615
        %v1689 = vpop.f32.mrf.mxu0
        %v1690 = vadd.f32 0.0, %v1689
        %v1691 = vpop.f32.mrf.mxu0
        %v1692 = vadd.f32 0.0, %v1691
        %1693 = vmatmul.bf16.gmra.mxu0 %v1618
        %v1694 = vpop.f32.mrf.mxu0
        %v1695 = vadd.f32 0.0, %v1694
        %v1696 = vpop.f32.mrf.mxu0
        %v1697 = vadd.f32 0.0, %v1696
        %1698 = vmatmul.bf16.gmra.mxu0 %v1621
        %v1699 = vpop.f32.mrf.mxu0
        %v1700 = vadd.f32 0.0, %v1699
        %v1701 = vpop.f32.mrf.mxu0
        %v1702 = vadd.f32 0.0, %v1701
        %1703 = vmatmul.bf16.gmra.mxu0 %v1624
        %v1704 = vpop.f32.mrf.mxu0
        %v1705 = vadd.f32 0.0, %v1704
        %v1706 = vpop.f32.mrf.mxu0
        %v1707 = vadd.f32 0.0, %v1706
        %1708 = vmatmul.bf16.gmra.mxu0 %v1627
        %v1709 = vpop.f32.mrf.mxu0
        %v1710 = vadd.f32 0.0, %v1709
        %v1711 = vpop.f32.mrf.mxu0
        %v1712 = vadd.f32 0.0, %v1711
        %1713 = vmatmul.bf16.gmra.mxu0 %v1630
        %v1714 = vpop.f32.mrf.mxu0
        %v1715 = vadd.f32 0.0, %v1714
        %v1716 = vpop.f32.mrf.mxu0
        %v1717 = vadd.f32 0.0, %v1716
        %1718 = vmatmul.bf16.gmra.mxu0 %v1633
        %v1719 = vpop.f32.mrf.mxu0
        %v1720 = vadd.f32 0.0, %v1719
        %v1721 = vpop.f32.mrf.mxu0
        %v1722 = vadd.f32 0.0, %v1721
        %1723 = vmatmul.bf16.gmra.mxu0 %v1636
        %v1724 = vpop.f32.mrf.mxu0
        %v1725 = vadd.f32 0.0, %v1724
        %v1726 = vpop.f32.mrf.mxu0
        %v1727 = vadd.f32 0.0, %v1726
        %1728 = vmatmul.bf16.gmra.mxu0 %v1639
        %v1729 = vpop.f32.mrf.mxu0
        %v1730 = vadd.f32 0.0, %v1729
        %v1731 = vpop.f32.mrf.mxu0
        %v1732 = vadd.f32 0.0, %v1731
        %1733 = vdwg.mxu0
        %v1735 = vsel %vm324, %v924, 0
        %v1738 = vsel %vm324, %v925, 0
        %v1741 = vsel %vm324, %v926, 0
        %v1744 = vsel %vm324, %v927, 0
        %v1747 = vsel %vm324, %v928, 0
        %v1750 = vsel %vm324, %v929, 0
        %v1753 = vsel %vm324, %v930, 0
        %v1756 = vsel %vm324, %v931, 0
        %v1759 = vsel %vm324, %v932, 0
        %v1762 = vsel %vm324, %v933, 0
        %v1765 = vsel %vm324, %v934, 0
        %v1768 = vsel %vm324, %v935, 0
        %v1771 = vsel %vm324, %v936, 0
        %v1774 = vsel %vm324, %v937, 0
        %v1777 = vsel %vm324, %v938, 0
        %v1780 = vsel %vm324, %v939, 0
        %v1783 = vsel %vm1641, %v940, 0
        %1785 = vmatpush.bf16.msra.mxu0 0
        %1786 = vmatpush.bf16.msra.mxu0 0
        %1787 = vmatpush.bf16.msra.mxu0 0
        %1788 = vmatpush.bf16.msra.mxu0 0
        %1789 = vmatpush.bf16.msra.mxu0 0
        %1790 = vmatpush.bf16.msra.mxu0 0
        %1791 = vmatpush.bf16.msra.mxu0 0
        %1792 = vmatpush.bf16.msra.mxu0 %v1783
        %1793 = vmatmul.bf16.gmra.mxu0 %v1735
        %v1794 = vpop.f32.mrf.mxu0
        %v1795 = vadd.f32 %v1655, %v1794
        %v1796 = vpop.f32.mrf.mxu0
        %v1797 = vadd.f32 %v1657, %v1796
        %1798 = vmatmul.bf16.gmra.mxu0 %v1738
        %v1799 = vpop.f32.mrf.mxu0
        %v1800 = vadd.f32 %v1660, %v1799
        %v1801 = vpop.f32.mrf.mxu0
        %v1802 = vadd.f32 %v1662, %v1801
        %1803 = vmatmul.bf16.gmra.mxu0 %v1741
        %v1804 = vpop.f32.mrf.mxu0
        %v1805 = vadd.f32 %v1665, %v1804
        %v1806 = vpop.f32.mrf.mxu0
        %v1807 = vadd.f32 %v1667, %v1806
        %1808 = vmatmul.bf16.gmra.mxu0 %v1744
        %v1809 = vpop.f32.mrf.mxu0
        %v1810 = vadd.f32 %v1670, %v1809
        %v1811 = vpop.f32.mrf.mxu0
        %v1812 = vadd.f32 %v1672, %v1811
        %1813 = vmatmul.bf16.gmra.mxu0 %v1747
        %v1814 = vpop.f32.mrf.mxu0
        %v1815 = vadd.f32 %v1675, %v1814
        %v1816 = vpop.f32.mrf.mxu0
        %v1817 = vadd.f32 %v1677, %v1816
        %1818 = vmatmul.bf16.gmra.mxu0 %v1750
        %v1819 = vpop.f32.mrf.mxu0
        %v1820 = vadd.f32 %v1680, %v1819
        %v1821 = vpop.f32.mrf.mxu0
        %v1822 = vadd.f32 %v1682, %v1821
        %1823 = vmatmul.bf16.gmra.mxu0 %v1753
        %v1824 = vpop.f32.mrf.mxu0
        %v1825 = vadd.f32 %v1685, %v1824
        %v1826 = vpop.f32.mrf.mxu0
        %v1827 = vadd.f32 %v1687, %v1826
        %1828 = vmatmul.bf16.gmra.mxu0 %v1756
        %v1829 = vpop.f32.mrf.mxu0
        %v1830 = vadd.f32 %v1690, %v1829
        %v1831 = vpop.f32.mrf.mxu0
        %v1832 = vadd.f32 %v1692, %v1831
        %1833 = vmatmul.bf16.gmra.mxu0 %v1759
        %v1834 = vpop.f32.mrf.mxu0
        %v1835 = vadd.f32 %v1695, %v1834
        %v1836 = vpop.f32.mrf.mxu0
        %v1837 = vadd.f32 %v1697, %v1836
        %1838 = vmatmul.bf16.gmra.mxu0 %v1762
        %v1839 = vpop.f32.mrf.mxu0
        %v1840 = vadd.f32 %v1700, %v1839
        %v1841 = vpop.f32.mrf.mxu0
        %v1842 = vadd.f32 %v1702, %v1841
        %1843 = vmatmul.bf16.gmra.mxu0 %v1765
        %v1844 = vpop.f32.mrf.mxu0
        %v1845 = vadd.f32 %v1705, %v1844
        %v1846 = vpop.f32.mrf.mxu0
        %v1847 = vadd.f32 %v1707, %v1846
        %1848 = vmatmul.bf16.gmra.mxu0 %v1768
        %v1849 = vpop.f32.mrf.mxu0
        %v1850 = vadd.f32 %v1710, %v1849
        %v1851 = vpop.f32.mrf.mxu0
        %v1852 = vadd.f32 %v1712, %v1851
        %1853 = vmatmul.bf16.gmra.mxu0 %v1771
        %v1854 = vpop.f32.mrf.mxu0
        %v1855 = vadd.f32 %v1715, %v1854
        %v1856 = vpop.f32.mrf.mxu0
        %v1857 = vadd.f32 %v1717, %v1856
        %1858 = vmatmul.bf16.gmra.mxu0 %v1774
        %v1859 = vpop.f32.mrf.mxu0
        %v1860 = vadd.f32 %v1720, %v1859
        %v1861 = vpop.f32.mrf.mxu0
        %v1862 = vadd.f32 %v1722, %v1861
        %1863 = vmatmul.bf16.gmra.mxu0 %v1777
        %v1864 = vpop.f32.mrf.mxu0
        %v1865 = vadd.f32 %v1725, %v1864
        %v1866 = vpop.f32.mrf.mxu0
        %v1867 = vadd.f32 %v1727, %v1866
        %1868 = vmatmul.bf16.gmra.mxu0 %v1780
        %v1869 = vpop.f32.mrf.mxu0
        %v1870 = vadd.f32 %v1730, %v1869
        %v1871 = vpop.f32.mrf.mxu0
        %v1872 = vadd.f32 %v1732, %v1871
        %1873 = vdwg.mxu0
        %v1874 = vld [vmem:[%s3] sm:$0x1]
        %v1876 = vperm.slane %v1874, 0
        %v1878 = vadd.f32 %v1795, %v1876
        %v1879 = vadd.f32 %v1797, %v1876
        %v1880 = vadd.f32 %v1800, %v1876
        %v1881 = vadd.f32 %v1802, %v1876
        %v1882 = vadd.f32 %v1805, %v1876
        %v1883 = vadd.f32 %v1807, %v1876
        %v1884 = vadd.f32 %v1810, %v1876
        %v1885 = vadd.f32 %v1812, %v1876
        %v1886 = vadd.f32 %v1815, %v1876
        %v1887 = vadd.f32 %v1817, %v1876
        %v1888 = vadd.f32 %v1820, %v1876
        %v1889 = vadd.f32 %v1822, %v1876
        %v1890 = vadd.f32 %v1825, %v1876
        %v1891 = vadd.f32 %v1827, %v1876
        %v1892 = vadd.f32 %v1830, %v1876
        %v1893 = vadd.f32 %v1832, %v1876
        %v1894 = vadd.f32 %v1835, %v1876
        %v1895 = vadd.f32 %v1837, %v1876
        %v1896 = vadd.f32 %v1840, %v1876
        %v1897 = vadd.f32 %v1842, %v1876
        %v1898 = vadd.f32 %v1845, %v1876
        %v1899 = vadd.f32 %v1847, %v1876
        %v1900 = vadd.f32 %v1850, %v1876
        %v1901 = vadd.f32 %v1852, %v1876
        %v1902 = vadd.f32 %v1855, %v1876
        %v1903 = vadd.f32 %v1857, %v1876
        %v1904 = vadd.f32 %v1860, %v1876
        %v1905 = vadd.f32 %v1862, %v1876
        %v1906 = vadd.f32 %v1865, %v1876
        %v1907 = vadd.f32 %v1867, %v1876
        %v1908 = vadd.f32 %v1870, %v1876
        %v1909 = vadd.f32 %v1872, %v1876
        %v1910 = vld [vmem:[%s253] sm:$0xff]
        %v1911 = vld [vmem:[%s253 + $0x8] sm:$0xff]
        %v1912 = vld [vmem:[%s253 + $0x10] sm:$0xff]
        %v1913 = vld [vmem:[%s253 + $0x18] sm:$0xff]
        %v1914 = vld [vmem:[%s253 + $0x20] sm:$0xff]
        %v1915 = vld [vmem:[%s253 + $0x28] sm:$0xff]
        %v1916 = vld [vmem:[%s253 + $0x30] sm:$0xff]
        %v1917 = vld [vmem:[%s253 + $0x38] sm:$0xff]
        %v1918 = vld [vmem:[%s253 + $0x40] sm:$0xff]
        %v1919 = vld [vmem:[%s253 + $0x48] sm:$0xff]
        %v1920 = vld [vmem:[%s253 + $0x50] sm:$0xff]
        %v1921 = vld [vmem:[%s253 + $0x58] sm:$0xff]
        %v1922 = vld [vmem:[%s253 + $0x60] sm:$0xff]
        %v1923 = vld [vmem:[%s253 + $0x68] sm:$0xff]
        %v1924 = vld [vmem:[%s253 + $0x70] sm:$0xff]
        %v1925 = vld [vmem:[%s253 + $0x78] sm:$0xff]
        %v1926 = vld [vmem:[%s253 + $0x80] sm:$0xff]
        %v1927 = vld [vmem:[%s253 + $0x88] sm:$0xff]
        %v1928 = vld [vmem:[%s253 + $0x90] sm:$0xff]
        %v1929 = vld [vmem:[%s253 + $0x98] sm:$0xff]
        %v1930 = vld [vmem:[%s253 + $0xa0] sm:$0xff]
        %v1931 = vld [vmem:[%s253 + $0xa8] sm:$0xff]
        %v1932 = vld [vmem:[%s253 + $0xb0] sm:$0xff]
        %v1933 = vld [vmem:[%s253 + $0xb8] sm:$0xff]
        %v1934 = vld [vmem:[%s253 + $0xc0] sm:$0xff]
        %v1935 = vld [vmem:[%s253 + $0xc8] sm:$0xff]
        %v1936 = vld [vmem:[%s253 + $0xd0] sm:$0xff]
        %v1937 = vld [vmem:[%s253 + $0xd8] sm:$0xff]
        %v1938 = vld [vmem:[%s253 + $0xe0] sm:$0xff]
        %v1939 = vld [vmem:[%s253 + $0xe8] sm:$0xff]
        %v1940 = vld [vmem:[%s253 + $0xf0] sm:$0xff]
        %v1941 = vld [vmem:[%s253 + $0xf8] sm:$0xff]
        %v1942 = vadd.f32 %v1878, %v1910
        %v1943 = vadd.f32 %v1879, %v1911
        %v1944 = vadd.f32 %v1880, %v1912
        %v1945 = vadd.f32 %v1881, %v1913
        %v1946 = vadd.f32 %v1882, %v1914
        %v1947 = vadd.f32 %v1883, %v1915
        %v1948 = vadd.f32 %v1884, %v1916
        %v1949 = vadd.f32 %v1885, %v1917
        %v1950 = vadd.f32 %v1886, %v1918
        %v1951 = vadd.f32 %v1887, %v1919
        %v1952 = vadd.f32 %v1888, %v1920
        %v1953 = vadd.f32 %v1889, %v1921
        %v1954 = vadd.f32 %v1890, %v1922
        %v1955 = vadd.f32 %v1891, %v1923
        %v1956 = vadd.f32 %v1892, %v1924
        %v1957 = vadd.f32 %v1893, %v1925
        %v1958 = vadd.f32 %v1894, %v1926
        %v1959 = vadd.f32 %v1895, %v1927
        %v1960 = vadd.f32 %v1896, %v1928
        %v1961 = vadd.f32 %v1897, %v1929
        %v1962 = vadd.f32 %v1898, %v1930
        %v1963 = vadd.f32 %v1899, %v1931
        %v1964 = vadd.f32 %v1900, %v1932
        %v1965 = vadd.f32 %v1901, %v1933
        %v1966 = vadd.f32 %v1902, %v1934
        %v1967 = vadd.f32 %v1903, %v1935
        %v1968 = vadd.f32 %v1904, %v1936
        %v1969 = vadd.f32 %v1905, %v1937
        %v1970 = vadd.f32 %v1906, %v1938
        %v1971 = vadd.f32 %v1907, %v1939
        %v1972 = vadd.f32 %v1908, %v1940
        %v1973 = vadd.f32 %v1909, %v1941
        %vm1974 = vcmask 64512
        %1975 = vst.msk [vmem:[%s258] sm:$0xff] %vm1974, %v1942
        %1976 = vst.msk [vmem:[%s258 + $0x8] sm:$0xff] %vm1974, %v1943
        %1977 = vst.msk [vmem:[%s258 + $0x10] sm:$0xff] %vm1974, %v1944
        %1978 = vst.msk [vmem:[%s258 + $0x18] sm:$0xff] %vm1974, %v1945
        %1979 = vst.msk [vmem:[%s258 + $0x20] sm:$0xff] %vm1974, %v1946
        %1980 = vst.msk [vmem:[%s258 + $0x28] sm:$0xff] %vm1974, %v1947
        %1981 = vst.msk [vmem:[%s258 + $0x30] sm:$0xff] %vm1974, %v1948
        %1982 = vst.msk [vmem:[%s258 + $0x38] sm:$0xff] %vm1974, %v1949
        %1983 = vst.msk [vmem:[%s258 + $0x40] sm:$0xff] %vm1974, %v1950
        %1984 = vst.msk [vmem:[%s258 + $0x48] sm:$0xff] %vm1974, %v1951
        %1985 = vst.msk [vmem:[%s258 + $0x50] sm:$0xff] %vm1974, %v1952
        %1986 = vst.msk [vmem:[%s258 + $0x58] sm:$0xff] %vm1974, %v1953
        %1987 = vst.msk [vmem:[%s258 + $0x60] sm:$0xff] %vm1974, %v1954
        %1988 = vst.msk [vmem:[%s258 + $0x68] sm:$0xff] %vm1974, %v1955
        %1989 = vst.msk [vmem:[%s258 + $0x70] sm:$0xff] %vm1974, %v1956
        %1990 = vst.msk [vmem:[%s258 + $0x78] sm:$0xff] %vm1974, %v1957
        %1991 = vst.msk [vmem:[%s258 + $0x80] sm:$0xff] %vm1974, %v1958
        %1992 = vst.msk [vmem:[%s258 + $0x88] sm:$0xff] %vm1974, %v1959
        %1993 = vst.msk [vmem:[%s258 + $0x90] sm:$0xff] %vm1974, %v1960
        %1994 = vst.msk [vmem:[%s258 + $0x98] sm:$0xff] %vm1974, %v1961
        %1995 = vst.msk [vmem:[%s258 + $0xa0] sm:$0xff] %vm1974, %v1962
        %1996 = vst.msk [vmem:[%s258 + $0xa8] sm:$0xff] %vm1974, %v1963
        %1997 = vst.msk [vmem:[%s258 + $0xb0] sm:$0xff] %vm1974, %v1964
        %1998 = vst.msk [vmem:[%s258 + $0xb8] sm:$0xff] %vm1974, %v1965
        %1999 = vst.msk [vmem:[%s258 + $0xc0] sm:$0xff] %vm1974, %v1966
        %2000 = vst.msk [vmem:[%s258 + $0xc8] sm:$0xff] %vm1974, %v1967
        %2001 = vst.msk [vmem:[%s258 + $0xd0] sm:$0xff] %vm1974, %v1968
        %2002 = vst.msk [vmem:[%s258 + $0xd8] sm:$0xff] %vm1974, %v1969
        %2003 = vst.msk [vmem:[%s258 + $0xe0] sm:$0xff] %vm1974, %v1970
        %2004 = vst.msk [vmem:[%s258 + $0xe8] sm:$0xff] %vm1974, %v1971
        %2005 = vst.msk [vmem:[%s258 + $0xf0] sm:$0xff] %vm1974, %v1972
        %2006 = vst.msk [vmem:[%s258 + $0xf8] sm:$0xff] %vm1974, %v1973
        %p2007 = scmp.lt.s32.totalorder %s17, 1
        %s2008 = scalar_select %p2007, %s17, 1
        %s2009 = smul.addr %s2008, 32
        %s2010 = smul.addr %s2009, 8
        %s2011 = scalar_lea.vmem %s5, %s2010
        // Predicated region
        $region45: #{_lambda_.8} parent=39 // pred_check
          %p2012 = pneg %p150
        $region46: #{_lambda_.8} parent=39 // pred_check_branch
          %2014 = sbr.rel (%p2012) target = $region48
        $region47: #{_lambda_.8} parent=39 // pred_region
          _
        $region48: #{_lambda_.8} parent=39 // pred_fallthru
          _
      $region40: #{_lambda_.8} parent=5 // pred_fallthru
        _
      %p2015 = scmp.le.s32.totalorder 2, %s12
      // Predicated region
      $region49: #{_lambda_.8} parent=5 // pred_check
        %p2016 = pneg %p2015
      $region50: #{_lambda_.8} parent=5 // pred_check_branch
        %2018 = sbr.rel (%p2016) target = $region52
      $region51: #{_lambda_.8} parent=5 // pred_region
        %s2019 = ssub.s32 %s12, 2
        // Predicated region
        $region53: #{_lambda_.8} parent=51 // pred_check
          %p2020 = pneg %p156
        $region54: #{_lambda_.8} parent=51 // pred_check_branch
          %2022 = sbr.rel (%p2020) target = $region56
        $region55: #{_lambda_.8} parent=51 // pred_region
          %p2023 = scmp.lt.s32.totalorder %s18, 1
          %s2024 = scalar_select %p2023, %s18, 1
          %s2025 = smul.addr %s2024, 32
          %s2026 = smul.addr %s2025, 8
          %s2027 = scalar_lea.vmem %s5, %s2026
        $region56: #{_lambda_.8} parent=51 // pred_fallthru
          _
      $region52: #{_lambda_.8} parent=5 // pred_fallthru
        _
    $region6: #{_lambda_.8} parent=1 // loop_footer
      %s16 = sadd.s32 1, %s12
    $region7: #{_lambda_.8} parent=1 // loop_footer_branch
      %11 = sbr.rel target = $region3
    $region8: #{_lambda_.8} parent=1 // loop_exit
      _
    %2028 = vsyncpa [#allocation3], 1
    %s2029 = scalar_lea.sflag [#allocation3], 1
    %2030 = vsyncpa %s2029, 1

// kernel: _lambda_.11
$region0: #{_lambda_.11}
  #allocation0 [shape = 'u32[]', space=smem, size = 0x4, offset = 0x4, fixed_abs, tag = 'smem constant byte address 0x4 - core index']
  #allocation1 [shape = 'u32[72,128]{1,0:T(1,128)}', space=vmem, size = 0x9000, scoped, tag = 'internal scratch']
  %s0 = inlined_call_operand.vmem [shape: f32[512,32], index: 0, kind: input, shape index: {}]
  %s1 = inlined_call_operand.vmem [shape: f32[512,8], index: 1, kind: input, shape index: {}]
  %s2 = inlined_call_operand.vmem [shape: bf16[16,8], index: 2, kind: input, shape index: {}]
  %s3 = inlined_call_operand.vmem [shape: f32[1,8], index: 3, kind: input, shape index: {}]
  %s4 = inlined_call_operand.vmem [shape: f32[512,8], index: 4, kind: output, shape index: {}]
  %s5 = sld [smem:[#allocation0]]
  $region49: #{_lambda_.11} parent=0
    _
  %s7 = ssub.s32 1, %s5
  %s8 = scalar_select 0, %s7, %s5
  loop: start=0, step=1, limit=4
  $region2: #{_lambda_.11} parent=0 // loop_pre_header
    _
  $region3: #{_lambda_.11} parent=0 // loop_header
    %s10 = sphi 0, %s14
    %p11 = scmp.ge.s32.totalorder %s10, 4
    %s20 = sphi 0, %s22
    %s23 = sphi 0, %s20
    %s24 = sphi 0, %s23
    %s40 = sphi 0, %s24
    %s46 = sphi 0, %s48
    %s49 = sphi 0, %s46
    %s50 = sphi 0, %s49
    %s66 = sphi 0, %s50
    %s70 = sphi 0, %s70
    %s72 = sphi 0, %s70
    %s73 = sphi 0, %s72
    %s87 = sphi 0, %s73
    %s91 = sphi 0, %s91
    %s93 = sphi 0, %s91
    %s94 = sphi 0, %s93
    %s108 = sphi 0, %s94
    %s114 = sphi 0, %s116
    %s117 = sphi 0, %s114
    %s118 = sphi 0, %s117
    %s134 = sphi 0, %s118
  $region4: #{_lambda_.11} parent=0 // loop_header_branch
    %13 = sbr.rel (%p11) target = $region8
  $region5: #{_lambda_.11} parent=0 // loop_body
    %s15 = ssub.s32 %s10, 1
    %s16 = ssub.s32 %s10, 2
    %s17 = sadd.s32 %s10, 1
    %s18 = ssub.s32 %s10, %s17
    %p19 = scmp.eq.s32.totalorder %s18, 0
    %s21 = sadd.s32 %s20, 1
    %s22 = scalar_select %p19, %s20, %s21
    %p25 = pneg %p19
    %p26 = scmp.eq.s32.totalorder %s10, 1
    %p27 = por %p25, %p26
    %p28 = scmp.ne.s32.totalorder %s20, %s23
    %p29 = scmp.eq.s32.totalorder %s10, 0
    %p30 = por %p28, %p29
    %p31 = scmp.ne.s32.totalorder %s20, %s23
    %p32 = scmp.eq.s32.totalorder %s15, 1
    %p33 = por %p31, %p32
    %p34 = scmp.ne.s32.totalorder %s23, %s24
    %p35 = scmp.eq.s32.totalorder %s15, 0
    %p36 = por %p34, %p35
    %p37 = scmp.ne.s32.totalorder %s23, %s24
    %p38 = scmp.eq.s32.totalorder %s16, 1
    %p39 = por %p37, %p38
    %p41 = scmp.ne.s32.totalorder %s24, %s40
    %p42 = scmp.eq.s32.totalorder %s16, 0
    %p43 = por %p41, %p42
    %s44 = ssub.s32 %s10, %s17
    %p45 = scmp.eq.s32.totalorder %s44, 0
    %s47 = sadd.s32 %s46, 1
    %s48 = scalar_select %p45, %s46, %s47
    %p51 = pneg %p45
    %p52 = scmp.eq.s32.totalorder %s10, 1
    %p53 = por %p51, %p52
    %p54 = scmp.ne.s32.totalorder %s46, %s49
    %p55 = scmp.eq.s32.totalorder %s10, 0
    %p56 = por %p54, %p55
    %p57 = scmp.ne.s32.totalorder %s46, %s49
    %p58 = scmp.eq.s32.totalorder %s15, 1
    %p59 = por %p57, %p58
    %p60 = scmp.ne.s32.totalorder %s49, %s50
    %p61 = scmp.eq.s32.totalorder %s15, 0
    %p62 = por %p60, %p61
    %p63 = scmp.ne.s32.totalorder %s49, %s50
    %p64 = scmp.eq.s32.totalorder %s16, 1
    %p65 = por %p63, %p64
    %p67 = scmp.ne.s32.totalorder %s50, %s66
    %p68 = scmp.eq.s32.totalorder %s16, 0
    %p69 = por %p67, %p68
    %s71 = sadd.s32 %s70, 1
    %p74 = scmp.eq.s32.totalorder %s10, 1
    %p75 = scmp.ne.s32.totalorder %s70, %s72
    %p76 = scmp.eq.s32.totalorder %s10, 0
    %p77 = por %p75, %p76
    %p78 = scmp.ne.s32.totalorder %s70, %s72
    %p79 = scmp.eq.s32.totalorder %s15, 1
    %p80 = por %p78, %p79
    %p81 = scmp.ne.s32.totalorder %s72, %s73
    %p82 = scmp.eq.s32.totalorder %s15, 0
    %p83 = por %p81, %p82
    %p84 = scmp.ne.s32.totalorder %s72, %s73
    %p85 = scmp.eq.s32.totalorder %s16, 1
    %p86 = por %p84, %p85
    %p88 = scmp.ne.s32.totalorder %s73, %s87
    %p89 = scmp.eq.s32.totalorder %s16, 0
    %p90 = por %p88, %p89
    %s92 = sadd.s32 %s91, 1
    %p95 = scmp.eq.s32.totalorder %s10, 1
    %p96 = scmp.ne.s32.totalorder %s91, %s93
    %p97 = scmp.eq.s32.totalorder %s10, 0
    %p98 = por %p96, %p97
    %p99 = scmp.ne.s32.totalorder %s91, %s93
    %p100 = scmp.eq.s32.totalorder %s15, 1
    %p101 = por %p99, %p100
    %p102 = scmp.ne.s32.totalorder %s93, %s94
    %p103 = scmp.eq.s32.totalorder %s15, 0
    %p104 = por %p102, %p103
    %p105 = scmp.ne.s32.totalorder %s93, %s94
    %p106 = scmp.eq.s32.totalorder %s16, 1
    %p107 = por %p105, %p106
    %p109 = scmp.ne.s32.totalorder %s94, %s108
    %p110 = scmp.eq.s32.totalorder %s16, 0
    %p111 = por %p109, %p110
    %s112 = ssub.s32 %s10, %s17
    %p113 = scmp.eq.s32.totalorder %s112, 0
    %s115 = sadd.s32 %s114, 1
    %s116 = scalar_select %p113, %s114, %s115
    %p119 = pneg %p113
    %p120 = scmp.eq.s32.totalorder %s10, 1
    %p121 = por %p119, %p120
    %p122 = scmp.ne.s32.totalorder %s114, %s117
    %p123 = scmp.eq.s32.totalorder %s10, 0
    %p124 = por %p122, %p123
    %p125 = scmp.ne.s32.totalorder %s114, %s117
    %p126 = scmp.eq.s32.totalorder %s15, 1
    %p127 = por %p125, %p126
    %p128 = scmp.ne.s32.totalorder %s117, %s118
    %p129 = scmp.eq.s32.totalorder %s15, 0
    %p130 = por %p128, %p129
    %p131 = scmp.ne.s32.totalorder %s117, %s118
    %p132 = scmp.eq.s32.totalorder %s16, 1
    %p133 = por %p131, %p132
    %p135 = scmp.ne.s32.totalorder %s118, %s134
    %p136 = scmp.eq.s32.totalorder %s16, 0
    %p137 = por %p135, %p136
    %p138 = scmp.le.s32.totalorder 1, %s10
    %p139 = scmp.lt.s32.totalorder %s10, 3
    %p140 = pnand %p138, %p139
    %p141 = pneg %p140
    // Predicated region
    $region9: #{_lambda_.11} parent=5 // pred_check
      _
    $region10: #{_lambda_.11} parent=5 // pred_check_branch
      %143 = sbr.rel (%p140) target = $region12
    $region11: #{_lambda_.11} parent=5 // pred_region
      %s144 = ssub.s32 %s10, 1
      // Predicated region
      $region13: #{_lambda_.11} parent=11 // pred_check
        %p145 = pneg %p83
      $region14: #{_lambda_.11} parent=11 // pred_check_branch
        %147 = sbr.rel (%p145) target = $region16
      $region15: #{_lambda_.11} parent=11 // pred_region
        _
      $region16: #{_lambda_.11} parent=11 // pred_fallthru
        _
      // Predicated region
      $region17: #{_lambda_.11} parent=11 // pred_check
        %p148 = pneg %p104
      $region18: #{_lambda_.11} parent=11 // pred_check_branch
        %150 = sbr.rel (%p148) target = $region20
      $region19: #{_lambda_.11} parent=11 // pred_region
        _
      $region20: #{_lambda_.11} parent=11 // pred_fallthru
        _
    $region12: #{_lambda_.11} parent=5 // pred_fallthru
      _
    %p151 = scmp.lt.s32.totalorder %s10, 2
    // Predicated region
    $region21: #{_lambda_.11} parent=5 // pred_check
      %p152 = pneg %p151
    $region22: #{_lambda_.11} parent=5 // pred_check_branch
      %154 = sbr.rel (%p152) target = $region24
    $region23: #{_lambda_.11} parent=5 // pred_region
      // Predicated region
      $region25: #{_lambda_.11} parent=23 // pred_check
        %p155 = pneg %p30
      $region26: #{_lambda_.11} parent=23 // pred_check_branch
        %157 = sbr.rel (%p155) target = $region28
      $region27: #{_lambda_.11} parent=23 // pred_region
        %s158 = smul.u32 32, %s10
        %p159 = scmp.lt.s32.totalorder %s158, 63
        %s160 = scalar_select %p159, %s158, 63
        %s161 = smul.addr %s160, 8
        %s162 = scalar_lea.vmem %s0, %s161
        %s163 = smul.u32 32, %s10
      $region28: #{_lambda_.11} parent=23 // pred_fallthru
        _
      // Predicated region
      $region29: #{_lambda_.11} parent=23 // pred_check
        %p164 = pneg %p56
      $region30: #{_lambda_.11} parent=23 // pred_check_branch
        %166 = sbr.rel (%p164) target = $region32
      $region31: #{_lambda_.11} parent=23 // pred_region
        %s167 = smul.u32 32, %s10
        %p168 = scmp.lt.s32.totalorder %s167, 63
        %s169 = scalar_select %p168, %s167, 63
        %s170 = smul.addr %s169, 8
        %s171 = scalar_lea.vmem %s1, %s170
        %s172 = smul.u32 32, %s10
      $region32: #{_lambda_.11} parent=23 // pred_fallthru
        _
    $region24: #{_lambda_.11} parent=5 // pred_fallthru
      _
    %p173 = scmp.le.s32.totalorder 1, %s10
    %p174 = scmp.lt.s32.totalorder %s10, 3
    %p175 = pnand %p173, %p174
    %p176 = pneg %p175
    // Predicated region
    $region33: #{_lambda_.11} parent=5 // pred_check
      _
    $region34: #{_lambda_.11} parent=5 // pred_check_branch
      %178 = sbr.rel (%p175) target = $region36
    $region35: #{_lambda_.11} parent=5 // pred_region
      %s179 = ssub.s32 %s10, 1
      %s180 = smul.u32 32, %s15
      %p181 = scmp.lt.s32.totalorder %s180, 63
      %s182 = scalar_select %p181, %s180, 63
      %s183 = smul.addr %s182, 8
      %s184 = scalar_lea.vmem %s0, %s183
      %p185 = pneg %p36
      %p186 = pneg %p33
      %s187 = smul.u32 32, %s15
      %p188 = scmp.lt.s32.totalorder %s187, 63
      %s189 = scalar_select %p188, %s187, 63
      %s190 = smul.addr %s189, 8
      %s191 = scalar_lea.vmem %s1, %s190
      %p192 = pneg %p62
      %p193 = pneg %p59
      %p194 = pneg %p83
      %p195 = pneg %p80
      %p196 = pneg %p104
      %p197 = pneg %p101
      %p198 = pneg %p130
      %p199 = pneg %p127
      %s200 = smul.u32 32, %s15
      %p201 = scmp.lt.s32.totalorder %s200, 63
      %s202 = scalar_select %p201, %s200, 63
      %s203 = smul.addr %s202, 8
      %s204 = scalar_lea.vmem %s4, %s203
      %s205 = smul.u32 32, %s15
      %p206 = scmp.lt.s32.totalorder %s205, 63
      %s207 = scalar_select %p206, %s205, 63
      %s208 = smul.addr %s207, 8
      %s209 = scalar_lea.vmem %s0, %s208
      %s210 = smul.u32 32, %s15
      %s211 = smul.u32 32, %s15
      %p212 = scmp.lt.s32.totalorder %s211, 63
      %s213 = scalar_select %p212, %s211, 63
      %s214 = smul.addr %s213, 8
      %s215 = scalar_lea.vmem %s1, %s214
      %s216 = smul.u32 32, %s15
      %s217 = smul.u32 32, %s15
      %p218 = scmp.lt.s32.totalorder %s217, 63
      %s219 = scalar_select %p218, %s217, 63
      %s220 = smul.addr %s219, 8
      %s221 = scalar_lea.vmem %s4, %s220
      %s222 = smul.u32 32, %s15
      %v224 = vld [vmem:[%s209] sm:$0xff]
      %v225 = vld [vmem:[%s209 + $0x8] sm:$0xff]
      %v226 = vld [vmem:[%s209 + $0x10] sm:$0xff]
      %v227 = vld [vmem:[%s209 + $0x18] sm:$0xff]
      %v228 = vld [vmem:[%s209 + $0x20] sm:$0xff]
      %v229 = vld [vmem:[%s209 + $0x28] sm:$0xff]
      %v230 = vld [vmem:[%s209 + $0x30] sm:$0xff]
      %v231 = vld [vmem:[%s209 + $0x38] sm:$0xff]
      %v232 = vld [vmem:[%s209 + $0x40] sm:$0xff]
      %v233 = vld [vmem:[%s209 + $0x48] sm:$0xff]
      %v234 = vld [vmem:[%s209 + $0x50] sm:$0xff]
      %v235 = vld [vmem:[%s209 + $0x58] sm:$0xff]
      %v236 = vld [vmem:[%s209 + $0x60] sm:$0xff]
      %v237 = vld [vmem:[%s209 + $0x68] sm:$0xff]
      %v238 = vld [vmem:[%s209 + $0x70] sm:$0xff]
      %v239 = vld [vmem:[%s209 + $0x78] sm:$0xff]
      %v240 = vld [vmem:[%s209 + $0x80] sm:$0xff]
      %v241 = vld [vmem:[%s209 + $0x88] sm:$0xff]
      %v242 = vld [vmem:[%s209 + $0x90] sm:$0xff]
      %v243 = vld [vmem:[%s209 + $0x98] sm:$0xff]
      %v244 = vld [vmem:[%s209 + $0xa0] sm:$0xff]
      %v245 = vld [vmem:[%s209 + $0xa8] sm:$0xff]
      %v246 = vld [vmem:[%s209 + $0xb0] sm:$0xff]
      %v247 = vld [vmem:[%s209 + $0xb8] sm:$0xff]
      %v248 = vld [vmem:[%s209 + $0xc0] sm:$0xff]
      %v249 = vld [vmem:[%s209 + $0xc8] sm:$0xff]
      %v250 = vld [vmem:[%s209 + $0xd0] sm:$0xff]
      %v251 = vld [vmem:[%s209 + $0xd8] sm:$0xff]
      %v252 = vld [vmem:[%s209 + $0xe0] sm:$0xff]
      %v253 = vld [vmem:[%s209 + $0xe8] sm:$0xff]
      %v254 = vld [vmem:[%s209 + $0xf0] sm:$0xff]
      %v255 = vld [vmem:[%s209 + $0xf8] sm:$0xff]
      %v256 = vmul.f32 %v224, 0.5
      %v257 = vmul.f32 %v225, 0.5
      %v258 = vmul.f32 %v226, 0.5
      %v259 = vmul.f32 %v227, 0.5
      %v260 = vmul.f32 %v228, 0.5
      %v261 = vmul.f32 %v229, 0.5
      %v262 = vmul.f32 %v230, 0.5
      %v263 = vmul.f32 %v231, 0.5
      %v264 = vmul.f32 %v232, 0.5
      %v265 = vmul.f32 %v233, 0.5
      %v266 = vmul.f32 %v234, 0.5
      %v267 = vmul.f32 %v235, 0.5
      %v268 = vmul.f32 %v236, 0.5
      %v269 = vmul.f32 %v237, 0.5
      %v270 = vmul.f32 %v238, 0.5
      %v271 = vmul.f32 %v239, 0.5
      %v272 = vmul.f32 %v240, 0.5
      %v273 = vmul.f32 %v241, 0.5
      %v274 = vmul.f32 %v242, 0.5
      %v275 = vmul.f32 %v243, 0.5
      %v276 = vmul.f32 %v244, 0.5
      %v277 = vmul.f32 %v245, 0.5
      %v278 = vmul.f32 %v246, 0.5
      %v279 = vmul.f32 %v247, 0.5
      %v280 = vmul.f32 %v248, 0.5
      %v281 = vmul.f32 %v249, 0.5
      %v282 = vmul.f32 %v250, 0.5
      %v283 = vmul.f32 %v251, 0.5
      %v284 = vmul.f32 %v252, 0.5
      %v285 = vmul.f32 %v253, 0.5
      %v286 = vmul.f32 %v254, 0.5
      %v287 = vmul.f32 %v255, 0.5
      %v288 = vmul.f32 %v224, 0.70710677
      %v289 = vmul.f32 %v225, 0.70710677
      %v290 = vmul.f32 %v226, 0.70710677
      %v291 = vmul.f32 %v227, 0.70710677
      %v292 = vmul.f32 %v228, 0.70710677
      %v293 = vmul.f32 %v229, 0.70710677
      %v294 = vmul.f32 %v230, 0.70710677
      %v295 = vmul.f32 %v231, 0.70710677
      %v296 = vmul.f32 %v232, 0.70710677
      %v297 = vmul.f32 %v233, 0.70710677
      %v298 = vmul.f32 %v234, 0.70710677
      %v299 = vmul.f32 %v235, 0.70710677
      %v300 = vmul.f32 %v236, 0.70710677
      %v301 = vmul.f32 %v237, 0.70710677
      %v302 = vmul.f32 %v238, 0.70710677
      %v303 = vmul.f32 %v239, 0.70710677
      %v304 = vmul.f32 %v240, 0.70710677
      %v305 = vmul.f32 %v241, 0.70710677
      %v306 = vmul.f32 %v242, 0.70710677
      %v307 = vmul.f32 %v243, 0.70710677
      %v308 = vmul.f32 %v244, 0.70710677
      %v309 = vmul.f32 %v245, 0.70710677
      %v310 = vmul.f32 %v246, 0.70710677
      %v311 = vmul.f32 %v247, 0.70710677
      %v312 = vmul.f32 %v248, 0.70710677
      %v313 = vmul.f32 %v249, 0.70710677
      %v314 = vmul.f32 %v250, 0.70710677
      %v315 = vmul.f32 %v251, 0.70710677
      %v316 = vmul.f32 %v252, 0.70710677
      %v317 = vmul.f32 %v253, 0.70710677
      %v318 = vmul.f32 %v254, 0.70710677
      %v319 = vmul.f32 %v255, 0.70710677
      %v320 = vmul.f32 %v288, %v288
      %v321 = vmin.f32 16.0, %v320
      %v322 = vmul.f32 %v321, 2.1237322e-06
      %v323 = vadd.f32 %v322, 0.00028619796
      %v324 = vmul.f32 %v321, %v323
      %v325 = vadd.f32 %v324, 0.0036580483
      %v326 = vmul.f32 %v321, %v325
      %v327 = vadd.f32 %v326, 0.05243302
      %v328 = vmul.f32 %v321, %v327
      %v329 = vadd.f32 %v328, 0.18741608
      %v330 = vmul.f32 %v321, %v329
      %v331 = vadd.f32 %v330, 1.1283791
      %v332 = vmul.f32 %v288, %v331
      %v333 = vmul.f32 %v321, 3.8918573e-05
      %v334 = vadd.f32 %v333, 0.001143296
      %v335 = vmul.f32 %v321, %v334
      %v336 = vadd.f32 %v335, 0.014752088
      %v337 = vmul.f32 %v321, %v336
      %v338 = vadd.f32 %v337, 0.112945676
      %v339 = vmul.f32 %v321, %v338
      %v340 = vadd.f32 %v339, 0.4994258
      %v341 = vmul.f32 %v321, %v340
      %v342 = vadd.f32 %v341, 1.0
      %v343 = vrcp.pop %v342
      %v344 = vmul.f32 %v342, %v343
      %v345 = vsub.f32 1.0, %v344
      %v346 = vmul.f32 %v343, %v345
      %v347 = vadd.f32 %v343, %v346
      %vm348 = vweird.f32 %v342
      %vm349 = vweird.f32 %v343
      %vm350 = vmor %vm348, %vm349
      %v351 = vsel %vm350, %v343, %v347
      %v352 = vand.u32 2147483647, %v342
      %vm353 = vcmp.eq.f32.partialorder %v352, 8.507059e+37
      %v354 = vand.u32 %v342, 2147483648
      %v355 = vor.u32 1.1754944e-38, %v354
      %v356 = vsel %vm353, %v355, %v351
      %v357 = vmul.f32 %v332, %v356
      %v358 = vmin.f32 %v357, 1.0
      %v359 = vmax.f32 %v358, -1.0
      %v360 = vmul.f32 %v289, %v289
      %v361 = vmin.f32 16.0, %v360
      %v362 = vmul.f32 %v361, 2.1237322e-06
      %v363 = vadd.f32 %v362, 0.00028619796
      %v364 = vmul.f32 %v361, %v363
      %v365 = vadd.f32 %v364, 0.0036580483
      %v366 = vmul.f32 %v361, %v365
      %v367 = vadd.f32 %v366, 0.05243302
      %v368 = vmul.f32 %v361, %v367
      %v369 = vadd.f32 %v368, 0.18741608
      %v370 = vmul.f32 %v361, %v369
      %v371 = vadd.f32 %v370, 1.1283791
      %v372 = vmul.f32 %v289, %v371
      %v373 = vmul.f32 %v361, 3.8918573e-05
      %v374 = vadd.f32 %v373, 0.001143296
      %v375 = vmul.f32 %v361, %v374
      %v376 = vadd.f32 %v375, 0.014752088
      %v377 = vmul.f32 %v361, %v376
      %v378 = vadd.f32 %v377, 0.112945676
      %v379 = vmul.f32 %v361, %v378
      %v380 = vadd.f32 %v379, 0.4994258
      %v381 = vmul.f32 %v361, %v380
      %v382 = vadd.f32 %v381, 1.0
      %v383 = vrcp.pop %v382
      %v384 = vmul.f32 %v382, %v383
      %v385 = vsub.f32 1.0, %v384
      %v386 = vmul.f32 %v383, %v385
      %v387 = vadd.f32 %v383, %v386
      %vm388 = vweird.f32 %v382
      %vm389 = vweird.f32 %v383
      %vm390 = vmor %vm388, %vm389
      %v391 = vsel %vm390, %v383, %v387
      %v392 = vand.u32 2147483647, %v382
      %vm393 = vcmp.eq.f32.partialorder %v392, 8.507059e+37
      %v394 = vand.u32 %v382, 2147483648
      %v395 = vor.u32 1.1754944e-38, %v394
      %v396 = vsel %vm393, %v395, %v391
      %v397 = vmul.f32 %v372, %v396
      %v398 = vmin.f32 %v397, 1.0
      %v399 = vmax.f32 %v398, -1.0
      %v400 = vmul.f32 %v290, %v290
      %v401 = vmin.f32 16.0, %v400
      %v402 = vmul.f32 %v401, 2.1237322e-06
      %v403 = vadd.f32 %v402, 0.00028619796
      %v404 = vmul.f32 %v401, %v403
      %v405 = vadd.f32 %v404, 0.0036580483
      %v406 = vmul.f32 %v401, %v405
      %v407 = vadd.f32 %v406, 0.05243302
      %v408 = vmul.f32 %v401, %v407
      %v409 = vadd.f32 %v408, 0.18741608
      %v410 = vmul.f32 %v401, %v409
      %v411 = vadd.f32 %v410, 1.1283791
      %v412 = vmul.f32 %v290, %v411
      %v413 = vmul.f32 %v401, 3.8918573e-05
      %v414 = vadd.f32 %v413, 0.001143296
      %v415 = vmul.f32 %v401, %v414
      %v416 = vadd.f32 %v415, 0.014752088
      %v417 = vmul.f32 %v401, %v416
      %v418 = vadd.f32 %v417, 0.112945676
      %v419 = vmul.f32 %v401, %v418
      %v420 = vadd.f32 %v419, 0.4994258
      %v421 = vmul.f32 %v401, %v420
      %v422 = vadd.f32 %v421, 1.0
      %v423 = vrcp.pop %v422
      %v424 = vmul.f32 %v422, %v423
      %v425 = vsub.f32 1.0, %v424
      %v426 = vmul.f32 %v423, %v425
      %v427 = vadd.f32 %v423, %v426
      %vm428 = vweird.f32 %v422
      %vm429 = vweird.f32 %v423
      %vm430 = vmor %vm428, %vm429
      %v431 = vsel %vm430, %v423, %v427
      %v432 = vand.u32 2147483647, %v422
      %vm433 = vcmp.eq.f32.partialorder %v432, 8.507059e+37
      %v434 = vand.u32 %v422, 2147483648
      %v435 = vor.u32 1.1754944e-38, %v434
      %v436 = vsel %vm433, %v435, %v431
      %v437 = vmul.f32 %v412, %v436
      %v438 = vmin.f32 %v437, 1.0
      %v439 = vmax.f32 %v438, -1.0
      %v440 = vmul.f32 %v291, %v291
      %v441 = vmin.f32 16.0, %v440
      %v442 = vmul.f32 %v441, 2.1237322e-06
      %v443 = vadd.f32 %v442, 0.00028619796
      %v444 = vmul.f32 %v441, %v443
      %v445 = vadd.f32 %v444, 0.0036580483
      %v446 = vmul.f32 %v441, %v445
      %v447 = vadd.f32 %v446, 0.05243302
      %v448 = vmul.f32 %v441, %v447
      %v449 = vadd.f32 %v448, 0.18741608
      %v450 = vmul.f32 %v441, %v449
      %v451 = vadd.f32 %v450, 1.1283791
      %v452 = vmul.f32 %v291, %v451
      %v453 = vmul.f32 %v441, 3.8918573e-05
      %v454 = vadd.f32 %v453, 0.001143296
      %v455 = vmul.f32 %v441, %v454
      %v456 = vadd.f32 %v455, 0.014752088
      %v457 = vmul.f32 %v441, %v456
      %v458 = vadd.f32 %v457, 0.112945676
      %v459 = vmul.f32 %v441, %v458
      %v460 = vadd.f32 %v459, 0.4994258
      %v461 = vmul.f32 %v441, %v460
      %v462 = vadd.f32 %v461, 1.0
      %v463 = vrcp.pop %v462
      %v464 = vmul.f32 %v462, %v463
      %v465 = vsub.f32 1.0, %v464
      %v466 = vmul.f32 %v463, %v465
      %v467 = vadd.f32 %v463, %v466
      %vm468 = vweird.f32 %v462
      %vm469 = vweird.f32 %v463
      %vm470 = vmor %vm468, %vm469
      %v471 = vsel %vm470, %v463, %v467
      %v472 = vand.u32 2147483647, %v462
      %vm473 = vcmp.eq.f32.partialorder %v472, 8.507059e+37
      %v474 = vand.u32 %v462, 2147483648
      %v475 = vor.u32 1.1754944e-38, %v474
      %v476 = vsel %vm473, %v475, %v471
      %v477 = vmul.f32 %v452, %v476
      %v478 = vmin.f32 %v477, 1.0
      %v479 = vmax.f32 %v478, -1.0
      %v480 = vmul.f32 %v292, %v292
      %v481 = vmin.f32 16.0, %v480
      %v482 = vmul.f32 %v481, 2.1237322e-06
      %v483 = vadd.f32 %v482, 0.00028619796
      %v484 = vmul.f32 %v481, %v483
      %v485 = vadd.f32 %v484, 0.0036580483
      %v486 = vmul.f32 %v481, %v485
      %v487 = vadd.f32 %v486, 0.05243302
      %v488 = vmul.f32 %v481, %v487
      %v489 = vadd.f32 %v488, 0.18741608
      %v490 = vmul.f32 %v481, %v489
      %v491 = vadd.f32 %v490, 1.1283791
      %v492 = vmul.f32 %v292, %v491
      %v493 = vmul.f32 %v481, 3.8918573e-05
      %v494 = vadd.f32 %v493, 0.001143296
      %v495 = vmul.f32 %v481, %v494
      %v496 = vadd.f32 %v495, 0.014752088
      %v497 = vmul.f32 %v481, %v496
      %v498 = vadd.f32 %v497, 0.112945676
      %v499 = vmul.f32 %v481, %v498
      %v500 = vadd.f32 %v499, 0.4994258
      %v501 = vmul.f32 %v481, %v500
      %v502 = vadd.f32 %v501, 1.0
      %v503 = vrcp.pop %v502
      %v504 = vmul.f32 %v502, %v503
      %v505 = vsub.f32 1.0, %v504
      %v506 = vmul.f32 %v503, %v505
      %v507 = vadd.f32 %v503, %v506
      %vm508 = vweird.f32 %v502
      %vm509 = vweird.f32 %v503
      %vm510 = vmor %vm508, %vm509
      %v511 = vsel %vm510, %v503, %v507
      %v512 = vand.u32 2147483647, %v502
      %vm513 = vcmp.eq.f32.partialorder %v512, 8.507059e+37
      %v514 = vand.u32 %v502, 2147483648
      %v515 = vor.u32 1.1754944e-38, %v514
      %v516 = vsel %vm513, %v515, %v511
      %v517 = vmul.f32 %v492, %v516
      %v518 = vmin.f32 %v517, 1.0
      %v519 = vmax.f32 %v518, -1.0
      %v520 = vmul.f32 %v293, %v293
      %v521 = vmin.f32 16.0, %v520
      %v522 = vmul.f32 %v521, 2.1237322e-06
      %v523 = vadd.f32 %v522, 0.00028619796
      %v524 = vmul.f32 %v521, %v523
      %v525 = vadd.f32 %v524, 0.0036580483
      %v526 = vmul.f32 %v521, %v525
      %v527 = vadd.f32 %v526, 0.05243302
      %v528 = vmul.f32 %v521, %v527
      %v529 = vadd.f32 %v528, 0.18741608
      %v530 = vmul.f32 %v521, %v529
      %v531 = vadd.f32 %v530, 1.1283791
      %v532 = vmul.f32 %v293, %v531
      %v533 = vmul.f32 %v521, 3.8918573e-05
      %v534 = vadd.f32 %v533, 0.001143296
      %v535 = vmul.f32 %v521, %v534
      %v536 = vadd.f32 %v535, 0.014752088
      %v537 = vmul.f32 %v521, %v536
      %v538 = vadd.f32 %v537, 0.112945676
      %v539 = vmul.f32 %v521, %v538
      %v540 = vadd.f32 %v539, 0.4994258
      %v541 = vmul.f32 %v521, %v540
      %v542 = vadd.f32 %v541, 1.0
      %v543 = vrcp.pop %v542
      %v544 = vmul.f32 %v542, %v543
      %v545 = vsub.f32 1.0, %v544
      %v546 = vmul.f32 %v543, %v545
      %v547 = vadd.f32 %v543, %v546
      %vm548 = vweird.f32 %v542
      %vm549 = vweird.f32 %v543
      %vm550 = vmor %vm548, %vm549
      %v551 = vsel %vm550, %v543, %v547
      %v552 = vand.u32 2147483647, %v542
      %vm553 = vcmp.eq.f32.partialorder %v552, 8.507059e+37
      %v554 = vand.u32 %v542, 2147483648
      %v555 = vor.u32 1.1754944e-38, %v554
      %v556 = vsel %vm553, %v555, %v551
      %v557 = vmul.f32 %v532, %v556
      %v558 = vmin.f32 %v557, 1.0
      %v559 = vmax.f32 %v558, -1.0
      %v560 = vmul.f32 %v294, %v294
      %v561 = vmin.f32 16.0, %v560
      %v562 = vmul.f32 %v561, 2.1237322e-06
      %v563 = vadd.f32 %v562, 0.00028619796
      %v564 = vmul.f32 %v561, %v563
      %v565 = vadd.f32 %v564, 0.0036580483
      %v566 = vmul.f32 %v561, %v565
      %v567 = vadd.f32 %v566, 0.05243302
      %v568 = vmul.f32 %v561, %v567
      %v569 = vadd.f32 %v568, 0.18741608
      %v570 = vmul.f32 %v561, %v569
      %v571 = vadd.f32 %v570, 1.1283791
      %v572 = vmul.f32 %v294, %v571
      %v573 = vmul.f32 %v561, 3.8918573e-05
      %v574 = vadd.f32 %v573, 0.001143296
      %v575 = vmul.f32 %v561, %v574
      %v576 = vadd.f32 %v575, 0.014752088
      %v577 = vmul.f32 %v561, %v576
      %v578 = vadd.f32 %v577, 0.112945676
      %v579 = vmul.f32 %v561, %v578
      %v580 = vadd.f32 %v579, 0.4994258
      %v581 = vmul.f32 %v561, %v580
      %v582 = vadd.f32 %v581, 1.0
      %v583 = vrcp.pop %v582
      %v584 = vmul.f32 %v582, %v583
      %v585 = vsub.f32 1.0, %v584
      %v586 = vmul.f32 %v583, %v585
      %v587 = vadd.f32 %v583, %v586
      %vm588 = vweird.f32 %v582
      %vm589 = vweird.f32 %v583
      %vm590 = vmor %vm588, %vm589
      %v591 = vsel %vm590, %v583, %v587
      %v592 = vand.u32 2147483647, %v582
      %vm593 = vcmp.eq.f32.partialorder %v592, 8.507059e+37
      %v594 = vand.u32 %v582, 2147483648
      %v595 = vor.u32 1.1754944e-38, %v594
      %v596 = vsel %vm593, %v595, %v591
      %v597 = vmul.f32 %v572, %v596
      %v598 = vmin.f32 %v597, 1.0
      %v599 = vmax.f32 %v598, -1.0
      %v600 = vmul.f32 %v295, %v295
      %v601 = vmin.f32 16.0, %v600
      %v602 = vmul.f32 %v601, 2.1237322e-06
      %v603 = vadd.f32 %v602, 0.00028619796
      %v604 = vmul.f32 %v601, %v603
      %v605 = vadd.f32 %v604, 0.0036580483
      %v606 = vmul.f32 %v601, %v605
      %v607 = vadd.f32 %v606, 0.05243302
      %v608 = vmul.f32 %v601, %v607
      %v609 = vadd.f32 %v608, 0.18741608
      %v610 = vmul.f32 %v601, %v609
      %v611 = vadd.f32 %v610, 1.1283791
      %v612 = vmul.f32 %v295, %v611
      %v613 = vmul.f32 %v601, 3.8918573e-05
      %v614 = vadd.f32 %v613, 0.001143296
      %v615 = vmul.f32 %v601, %v614
      %v616 = vadd.f32 %v615, 0.014752088
      %v617 = vmul.f32 %v601, %v616
      %v618 = vadd.f32 %v617, 0.112945676
      %v619 = vmul.f32 %v601, %v618
      %v620 = vadd.f32 %v619, 0.4994258
      %v621 = vmul.f32 %v601, %v620
      %v622 = vadd.f32 %v621, 1.0
      %v623 = vrcp.pop %v622
      %v624 = vmul.f32 %v622, %v623
      %v625 = vsub.f32 1.0, %v624
      %v626 = vmul.f32 %v623, %v625
      %v627 = vadd.f32 %v623, %v626
      %vm628 = vweird.f32 %v622
      %vm629 = vweird.f32 %v623
      %vm630 = vmor %vm628, %vm629
      %v631 = vsel %vm630, %v623, %v627
      %v632 = vand.u32 2147483647, %v622
      %vm633 = vcmp.eq.f32.partialorder %v632, 8.507059e+37
      %v634 = vand.u32 %v622, 2147483648
      %v635 = vor.u32 1.1754944e-38, %v634
      %v636 = vsel %vm633, %v635, %v631
      %v637 = vmul.f32 %v612, %v636
      %v638 = vmin.f32 %v637, 1.0
      %v639 = vmax.f32 %v638, -1.0
      %v640 = vmul.f32 %v296, %v296
      %v641 = vmin.f32 16.0, %v640
      %v642 = vmul.f32 %v641, 2.1237322e-06
      %v643 = vadd.f32 %v642, 0.00028619796
      %v644 = vmul.f32 %v641, %v643
      %v645 = vadd.f32 %v644, 0.0036580483
      %v646 = vmul.f32 %v641, %v645
      %v647 = vadd.f32 %v646, 0.05243302
      %v648 = vmul.f32 %v641, %v647
      %v649 = vadd.f32 %v648, 0.18741608
      %v650 = vmul.f32 %v641, %v649
      %v651 = vadd.f32 %v650, 1.1283791
      %v652 = vmul.f32 %v296, %v651
      %v653 = vmul.f32 %v641, 3.8918573e-05
      %v654 = vadd.f32 %v653, 0.001143296
      %v655 = vmul.f32 %v641, %v654
      %v656 = vadd.f32 %v655, 0.014752088
      %v657 = vmul.f32 %v641, %v656
      %v658 = vadd.f32 %v657, 0.112945676
      %v659 = vmul.f32 %v641, %v658
      %v660 = vadd.f32 %v659, 0.4994258
      %v661 = vmul.f32 %v641, %v660
      %v662 = vadd.f32 %v661, 1.0
      %v663 = vrcp.pop %v662
      %v664 = vmul.f32 %v662, %v663
      %v665 = vsub.f32 1.0, %v664
      %v666 = vmul.f32 %v663, %v665
      %v667 = vadd.f32 %v663, %v666
      %vm668 = vweird.f32 %v662
      %vm669 = vweird.f32 %v663
      %vm670 = vmor %vm668, %vm669
      %v671 = vsel %vm670, %v663, %v667
      %v672 = vand.u32 2147483647, %v662
      %vm673 = vcmp.eq.f32.partialorder %v672, 8.507059e+37
      %v674 = vand.u32 %v662, 2147483648
      %v675 = vor.u32 1.1754944e-38, %v674
      %v676 = vsel %vm673, %v675, %v671
      %v677 = vmul.f32 %v652, %v676
      %v678 = vmin.f32 %v677, 1.0
      %v679 = vmax.f32 %v678, -1.0
      %v680 = vmul.f32 %v297, %v297
      %v681 = vmin.f32 16.0, %v680
      %v682 = vmul.f32 %v681, 2.1237322e-06
      %v683 = vadd.f32 %v682, 0.00028619796
      %v684 = vmul.f32 %v681, %v683
      %v685 = vadd.f32 %v684, 0.0036580483
      %v686 = vmul.f32 %v681, %v685
      %v687 = vadd.f32 %v686, 0.05243302
      %v688 = vmul.f32 %v681, %v687
      %v689 = vadd.f32 %v688, 0.18741608
      %v690 = vmul.f32 %v681, %v689
      %v691 = vadd.f32 %v690, 1.1283791
      %v692 = vmul.f32 %v297, %v691
      %v693 = vmul.f32 %v681, 3.8918573e-05
      %v694 = vadd.f32 %v693, 0.001143296
      %v695 = vmul.f32 %v681, %v694
      %v696 = vadd.f32 %v695, 0.014752088
      %v697 = vmul.f32 %v681, %v696
      %v698 = vadd.f32 %v697, 0.112945676
      %v699 = vmul.f32 %v681, %v698
      %v700 = vadd.f32 %v699, 0.4994258
      %v701 = vmul.f32 %v681, %v700
      %v702 = vadd.f32 %v701, 1.0
      %v703 = vrcp.pop %v702
      %v704 = vmul.f32 %v702, %v703
      %v705 = vsub.f32 1.0, %v704
      %v706 = vmul.f32 %v703, %v705
      %v707 = vadd.f32 %v703, %v706
      %vm708 = vweird.f32 %v702
      %vm709 = vweird.f32 %v703
      %vm710 = vmor %vm708, %vm709
      %v711 = vsel %vm710, %v703, %v707
      %v712 = vand.u32 2147483647, %v702
      %vm713 = vcmp.eq.f32.partialorder %v712, 8.507059e+37
      %v714 = vand.u32 %v702, 2147483648
      %v715 = vor.u32 1.1754944e-38, %v714
      %v716 = vsel %vm713, %v715, %v711
      %v717 = vmul.f32 %v692, %v716
      %v718 = vmin.f32 %v717, 1.0
      %v719 = vmax.f32 %v718, -1.0
      %v720 = vmul.f32 %v298, %v298
      %v721 = vmin.f32 16.0, %v720
      %v722 = vmul.f32 %v721, 2.1237322e-06
      %v723 = vadd.f32 %v722, 0.00028619796
      %v724 = vmul.f32 %v721, %v723
      %v725 = vadd.f32 %v724, 0.0036580483
      %v726 = vmul.f32 %v721, %v725
      %v727 = vadd.f32 %v726, 0.05243302
      %v728 = vmul.f32 %v721, %v727
      %v729 = vadd.f32 %v728, 0.18741608
      %v730 = vmul.f32 %v721, %v729
      %v731 = vadd.f32 %v730, 1.1283791
      %v732 = vmul.f32 %v298, %v731
      %v733 = vmul.f32 %v721, 3.8918573e-05
      %v734 = vadd.f32 %v733, 0.001143296
      %v735 = vmul.f32 %v721, %v734
      %v736 = vadd.f32 %v735, 0.014752088
      %v737 = vmul.f32 %v721, %v736
      %v738 = vadd.f32 %v737, 0.112945676
      %v739 = vmul.f32 %v721, %v738
      %v740 = vadd.f32 %v739, 0.4994258
      %v741 = vmul.f32 %v721, %v740
      %v742 = vadd.f32 %v741, 1.0
      %v743 = vrcp.pop %v742
      %v744 = vmul.f32 %v742, %v743
      %v745 = vsub.f32 1.0, %v744
      %v746 = vmul.f32 %v743, %v745
      %v747 = vadd.f32 %v743, %v746
      %vm748 = vweird.f32 %v742
      %vm749 = vweird.f32 %v743
      %vm750 = vmor %vm748, %vm749
      %v751 = vsel %vm750, %v743, %v747
      %v752 = vand.u32 2147483647, %v742
      %vm753 = vcmp.eq.f32.partialorder %v752, 8.507059e+37
      %v754 = vand.u32 %v742, 2147483648
      %v755 = vor.u32 1.1754944e-38, %v754
      %v756 = vsel %vm753, %v755, %v751
      %v757 = vmul.f32 %v732, %v756
      %v758 = vmin.f32 %v757, 1.0
      %v759 = vmax.f32 %v758, -1.0
      %v760 = vmul.f32 %v299, %v299
      %v761 = vmin.f32 16.0, %v760
      %v762 = vmul.f32 %v761, 2.1237322e-06
      %v763 = vadd.f32 %v762, 0.00028619796
      %v764 = vmul.f32 %v761, %v763
      %v765 = vadd.f32 %v764, 0.0036580483
      %v766 = vmul.f32 %v761, %v765
      %v767 = vadd.f32 %v766, 0.05243302
      %v768 = vmul.f32 %v761, %v767
      %v769 = vadd.f32 %v768, 0.18741608
      %v770 = vmul.f32 %v761, %v769
      %v771 = vadd.f32 %v770, 1.1283791
      %v772 = vmul.f32 %v299, %v771
      %v773 = vmul.f32 %v761, 3.8918573e-05
      %v774 = vadd.f32 %v773, 0.001143296
      %v775 = vmul.f32 %v761, %v774
      %v776 = vadd.f32 %v775, 0.014752088
      %v777 = vmul.f32 %v761, %v776
      %v778 = vadd.f32 %v777, 0.112945676
      %v779 = vmul.f32 %v761, %v778
      %v780 = vadd.f32 %v779, 0.4994258
      %v781 = vmul.f32 %v761, %v780
      %v782 = vadd.f32 %v781, 1.0
      %v783 = vrcp.pop %v782
      %v784 = vmul.f32 %v782, %v783
      %v785 = vsub.f32 1.0, %v784
      %v786 = vmul.f32 %v783, %v785
      %v787 = vadd.f32 %v783, %v786
      %vm788 = vweird.f32 %v782
      %vm789 = vweird.f32 %v783
      %vm790 = vmor %vm788, %vm789
      %v791 = vsel %vm790, %v783, %v787
      %v792 = vand.u32 2147483647, %v782
      %vm793 = vcmp.eq.f32.partialorder %v792, 8.507059e+37
      %v794 = vand.u32 %v782, 2147483648
      %v795 = vor.u32 1.1754944e-38, %v794
      %v796 = vsel %vm793, %v795, %v791
      %v797 = vmul.f32 %v772, %v796
      %v798 = vmin.f32 %v797, 1.0
      %v799 = vmax.f32 %v798, -1.0
      %v800 = vmul.f32 %v300, %v300
      %v801 = vmin.f32 16.0, %v800
      %v802 = vmul.f32 %v801, 2.1237322e-06
      %v803 = vadd.f32 %v802, 0.00028619796
      %v804 = vmul.f32 %v801, %v803
      %v805 = vadd.f32 %v804, 0.0036580483
      %v806 = vmul.f32 %v801, %v805
      %v807 = vadd.f32 %v806, 0.05243302
      %v808 = vmul.f32 %v801, %v807
      %v809 = vadd.f32 %v808, 0.18741608
      %v810 = vmul.f32 %v801, %v809
      %v811 = vadd.f32 %v810, 1.1283791
      %v812 = vmul.f32 %v300, %v811
      %v813 = vmul.f32 %v801, 3.8918573e-05
      %v814 = vadd.f32 %v813, 0.001143296
      %v815 = vmul.f32 %v801, %v814
      %v816 = vadd.f32 %v815, 0.014752088
      %v817 = vmul.f32 %v801, %v816
      %v818 = vadd.f32 %v817, 0.112945676
      %v819 = vmul.f32 %v801, %v818
      %v820 = vadd.f32 %v819, 0.4994258
      %v821 = vmul.f32 %v801, %v820
      %v822 = vadd.f32 %v821, 1.0
      %v823 = vrcp.pop %v822
      %v824 = vmul.f32 %v822, %v823
      %v825 = vsub.f32 1.0, %v824
      %v826 = vmul.f32 %v823, %v825
      %v827 = vadd.f32 %v823, %v826
      %vm828 = vweird.f32 %v822
      %vm829 = vweird.f32 %v823
      %vm830 = vmor %vm828, %vm829
      %v831 = vsel %vm830, %v823, %v827
      %v832 = vand.u32 2147483647, %v822
      %vm833 = vcmp.eq.f32.partialorder %v832, 8.507059e+37
      %v834 = vand.u32 %v822, 2147483648
      %v835 = vor.u32 1.1754944e-38, %v834
      %v836 = vsel %vm833, %v835, %v831
      %v837 = vmul.f32 %v812, %v836
      %v838 = vmin.f32 %v837, 1.0
      %v839 = vmax.f32 %v838, -1.0
      %v840 = vmul.f32 %v301, %v301
      %v841 = vmin.f32 16.0, %v840
      %v842 = vmul.f32 %v841, 2.1237322e-06
      %v843 = vadd.f32 %v842, 0.00028619796
      %v844 = vmul.f32 %v841, %v843
      %v845 = vadd.f32 %v844, 0.0036580483
      %v846 = vmul.f32 %v841, %v845
      %v847 = vadd.f32 %v846, 0.05243302
      %v848 = vmul.f32 %v841, %v847
      %v849 = vadd.f32 %v848, 0.18741608
      %v850 = vmul.f32 %v841, %v849
      %v851 = vadd.f32 %v850, 1.1283791
      %v852 = vmul.f32 %v301, %v851
      %v853 = vmul.f32 %v841, 3.8918573e-05
      %v854 = vadd.f32 %v853, 0.001143296
      %v855 = vmul.f32 %v841, %v854
      %v856 = vadd.f32 %v855, 0.014752088
      %v857 = vmul.f32 %v841, %v856
      %v858 = vadd.f32 %v857, 0.112945676
      %v859 = vmul.f32 %v841, %v858
      %v860 = vadd.f32 %v859, 0.4994258
      %v861 = vmul.f32 %v841, %v860
      %v862 = vadd.f32 %v861, 1.0
      %v863 = vrcp.pop %v862
      %v864 = vmul.f32 %v862, %v863
      %v865 = vsub.f32 1.0, %v864
      %v866 = vmul.f32 %v863, %v865
      %v867 = vadd.f32 %v863, %v866
      %vm868 = vweird.f32 %v862
      %vm869 = vweird.f32 %v863
      %vm870 = vmor %vm868, %vm869
      %v871 = vsel %vm870, %v863, %v867
      %v872 = vand.u32 2147483647, %v862
      %vm873 = vcmp.eq.f32.partialorder %v872, 8.507059e+37
      %v874 = vand.u32 %v862, 2147483648
      %v875 = vor.u32 1.1754944e-38, %v874
      %v876 = vsel %vm873, %v875, %v871
      %v877 = vmul.f32 %v852, %v876
      %v878 = vmin.f32 %v877, 1.0
      %v879 = vmax.f32 %v878, -1.0
      %v880 = vmul.f32 %v302, %v302
      %v881 = vmin.f32 16.0, %v880
      %v882 = vmul.f32 %v881, 2.1237322e-06
      %v883 = vadd.f32 %v882, 0.00028619796
      %v884 = vmul.f32 %v881, %v883
      %v885 = vadd.f32 %v884, 0.0036580483
      %v886 = vmul.f32 %v881, %v885
      %v887 = vadd.f32 %v886, 0.05243302
      %v888 = vmul.f32 %v881, %v887
      %v889 = vadd.f32 %v888, 0.18741608
      %v890 = vmul.f32 %v881, %v889
      %v891 = vadd.f32 %v890, 1.1283791
      %v892 = vmul.f32 %v302, %v891
      %v893 = vmul.f32 %v881, 3.8918573e-05
      %v894 = vadd.f32 %v893, 0.001143296
      %v895 = vmul.f32 %v881, %v894
      %v896 = vadd.f32 %v895, 0.014752088
      %v897 = vmul.f32 %v881, %v896
      %v898 = vadd.f32 %v897, 0.112945676
      %v899 = vmul.f32 %v881, %v898
      %v900 = vadd.f32 %v899, 0.4994258
      %v901 = vmul.f32 %v881, %v900
      %v902 = vadd.f32 %v901, 1.0
      %v903 = vrcp.pop %v902
      %v904 = vmul.f32 %v902, %v903
      %v905 = vsub.f32 1.0, %v904
      %v906 = vmul.f32 %v903, %v905
      %v907 = vadd.f32 %v903, %v906
      %vm908 = vweird.f32 %v902
      %vm909 = vweird.f32 %v903
      %vm910 = vmor %vm908, %vm909
      %v911 = vsel %vm910, %v903, %v907
      %v912 = vand.u32 2147483647, %v902
      %vm913 = vcmp.eq.f32.partialorder %v912, 8.507059e+37
      %v914 = vand.u32 %v902, 2147483648
      %v915 = vor.u32 1.1754944e-38, %v914
      %v916 = vsel %vm913, %v915, %v911
      %v917 = vmul.f32 %v892, %v916
      %v918 = vmin.f32 %v917, 1.0
      %v919 = vmax.f32 %v918, -1.0
      %v920 = vmul.f32 %v303, %v303
      %v921 = vmin.f32 16.0, %v920
      %v922 = vmul.f32 %v921, 2.1237322e-06
      %v923 = vadd.f32 %v922, 0.00028619796
      %v924 = vmul.f32 %v921, %v923
      %v925 = vadd.f32 %v924, 0.0036580483
      %v926 = vmul.f32 %v921, %v925
      %v927 = vadd.f32 %v926, 0.05243302
      %v928 = vmul.f32 %v921, %v927
      %v929 = vadd.f32 %v928, 0.18741608
      %v930 = vmul.f32 %v921, %v929
      %v931 = vadd.f32 %v930, 1.1283791
      %v932 = vmul.f32 %v303, %v931
      %v933 = vmul.f32 %v921, 3.8918573e-05
      %v934 = vadd.f32 %v933, 0.001143296
      %v935 = vmul.f32 %v921, %v934
      %v936 = vadd.f32 %v935, 0.014752088
      %v937 = vmul.f32 %v921, %v936
      %v938 = vadd.f32 %v937, 0.112945676
      %v939 = vmul.f32 %v921, %v938
      %v940 = vadd.f32 %v939, 0.4994258
      %v941 = vmul.f32 %v921, %v940
      %v942 = vadd.f32 %v941, 1.0
      %v943 = vrcp.pop %v942
      %v944 = vmul.f32 %v942, %v943
      %v945 = vsub.f32 1.0, %v944
      %v946 = vmul.f32 %v943, %v945
      %v947 = vadd.f32 %v943, %v946
      %vm948 = vweird.f32 %v942
      %vm949 = vweird.f32 %v943
      %vm950 = vmor %vm948, %vm949
      %v951 = vsel %vm950, %v943, %v947
      %v952 = vand.u32 2147483647, %v942
      %vm953 = vcmp.eq.f32.partialorder %v952, 8.507059e+37
      %v954 = vand.u32 %v942, 2147483648
      %v955 = vor.u32 1.1754944e-38, %v954
      %v956 = vsel %vm953, %v955, %v951
      %v957 = vmul.f32 %v932, %v956
      %v958 = vmin.f32 %v957, 1.0
      %v959 = vmax.f32 %v958, -1.0
      %v960 = vmul.f32 %v304, %v304
      %v961 = vmin.f32 16.0, %v960
      %v962 = vmul.f32 %v961, 2.1237322e-06
      %v963 = vadd.f32 %v962, 0.00028619796
      %v964 = vmul.f32 %v961, %v963
      %v965 = vadd.f32 %v964, 0.0036580483
      %v966 = vmul.f32 %v961, %v965
      %v967 = vadd.f32 %v966, 0.05243302
      %v968 = vmul.f32 %v961, %v967
      %v969 = vadd.f32 %v968, 0.18741608
      %v970 = vmul.f32 %v961, %v969
      %v971 = vadd.f32 %v970, 1.1283791
      %v972 = vmul.f32 %v304, %v971
      %v973 = vmul.f32 %v961, 3.8918573e-05
      %v974 = vadd.f32 %v973, 0.001143296
      %v975 = vmul.f32 %v961, %v974
      %v976 = vadd.f32 %v975, 0.014752088
      %v977 = vmul.f32 %v961, %v976
      %v978 = vadd.f32 %v977, 0.112945676
      %v979 = vmul.f32 %v961, %v978
      %v980 = vadd.f32 %v979, 0.4994258
      %v981 = vmul.f32 %v961, %v980
      %v982 = vadd.f32 %v981, 1.0
      %v983 = vrcp.pop %v982
      %v984 = vmul.f32 %v982, %v983
      %v985 = vsub.f32 1.0, %v984
      %v986 = vmul.f32 %v983, %v985
      %v987 = vadd.f32 %v983, %v986
      %vm988 = vweird.f32 %v982
      %vm989 = vweird.f32 %v983
      %vm990 = vmor %vm988, %vm989
      %v991 = vsel %vm990, %v983, %v987
      %v992 = vand.u32 2147483647, %v982
      %vm993 = vcmp.eq.f32.partialorder %v992, 8.507059e+37
      %v994 = vand.u32 %v982, 2147483648
      %v995 = vor.u32 1.1754944e-38, %v994
      %v996 = vsel %vm993, %v995, %v991
      %v997 = vmul.f32 %v972, %v996
      %v998 = vmin.f32 %v997, 1.0
      %v999 = vmax.f32 %v998, -1.0
      %v1000 = vmul.f32 %v305, %v305
      %v1001 = vmin.f32 16.0, %v1000
      %v1002 = vmul.f32 %v1001, 2.1237322e-06
      %v1003 = vadd.f32 %v1002, 0.00028619796
      %v1004 = vmul.f32 %v1001, %v1003
      %v1005 = vadd.f32 %v1004, 0.0036580483
      %v1006 = vmul.f32 %v1001, %v1005
      %v1007 = vadd.f32 %v1006, 0.05243302
      %v1008 = vmul.f32 %v1001, %v1007
      %v1009 = vadd.f32 %v1008, 0.18741608
      %v1010 = vmul.f32 %v1001, %v1009
      %v1011 = vadd.f32 %v1010, 1.1283791
      %v1012 = vmul.f32 %v305, %v1011
      %v1013 = vmul.f32 %v1001, 3.8918573e-05
      %v1014 = vadd.f32 %v1013, 0.001143296
      %v1015 = vmul.f32 %v1001, %v1014
      %v1016 = vadd.f32 %v1015, 0.014752088
      %v1017 = vmul.f32 %v1001, %v1016
      %v1018 = vadd.f32 %v1017, 0.112945676
      %v1019 = vmul.f32 %v1001, %v1018
      %v1020 = vadd.f32 %v1019, 0.4994258
      %v1021 = vmul.f32 %v1001, %v1020
      %v1022 = vadd.f32 %v1021, 1.0
      %v1023 = vrcp.pop %v1022
      %v1024 = vmul.f32 %v1022, %v1023
      %v1025 = vsub.f32 1.0, %v1024
      %v1026 = vmul.f32 %v1023, %v1025
      %v1027 = vadd.f32 %v1023, %v1026
      %vm1028 = vweird.f32 %v1022
      %vm1029 = vweird.f32 %v1023
      %vm1030 = vmor %vm1028, %vm1029
      %v1031 = vsel %vm1030, %v1023, %v1027
      %v1032 = vand.u32 2147483647, %v1022
      %vm1033 = vcmp.eq.f32.partialorder %v1032, 8.507059e+37
      %v1034 = vand.u32 %v1022, 2147483648
      %v1035 = vor.u32 1.1754944e-38, %v1034
      %v1036 = vsel %vm1033, %v1035, %v1031
      %v1037 = vmul.f32 %v1012, %v1036
      %v1038 = vmin.f32 %v1037, 1.0
      %v1039 = vmax.f32 %v1038, -1.0
      %v1040 = vmul.f32 %v306, %v306
      %v1041 = vmin.f32 16.0, %v1040
      %v1042 = vmul.f32 %v1041, 2.1237322e-06
      %v1043 = vadd.f32 %v1042, 0.00028619796
      %v1044 = vmul.f32 %v1041, %v1043
      %v1045 = vadd.f32 %v1044, 0.0036580483
      %v1046 = vmul.f32 %v1041, %v1045
      %v1047 = vadd.f32 %v1046, 0.05243302
      %v1048 = vmul.f32 %v1041, %v1047
      %v1049 = vadd.f32 %v1048, 0.18741608
      %v1050 = vmul.f32 %v1041, %v1049
      %v1051 = vadd.f32 %v1050, 1.1283791
      %v1052 = vmul.f32 %v306, %v1051
      %v1053 = vmul.f32 %v1041, 3.8918573e-05
      %v1054 = vadd.f32 %v1053, 0.001143296
      %v1055 = vmul.f32 %v1041, %v1054
      %v1056 = vadd.f32 %v1055, 0.014752088
      %v1057 = vmul.f32 %v1041, %v1056
      %v1058 = vadd.f32 %v1057, 0.112945676
      %v1059 = vmul.f32 %v1041, %v1058
      %v1060 = vadd.f32 %v1059, 0.4994258
      %v1061 = vmul.f32 %v1041, %v1060
      %v1062 = vadd.f32 %v1061, 1.0
      %v1063 = vrcp.pop %v1062
      %v1064 = vmul.f32 %v1062, %v1063
      %v1065 = vsub.f32 1.0, %v1064
      %v1066 = vmul.f32 %v1063, %v1065
      %v1067 = vadd.f32 %v1063, %v1066
      %vm1068 = vweird.f32 %v1062
      %vm1069 = vweird.f32 %v1063
      %vm1070 = vmor %vm1068, %vm1069
      %v1071 = vsel %vm1070, %v1063, %v1067
      %v1072 = vand.u32 2147483647, %v1062
      %vm1073 = vcmp.eq.f32.partialorder %v1072, 8.507059e+37
      %v1074 = vand.u32 %v1062, 2147483648
      %v1075 = vor.u32 1.1754944e-38, %v1074
      %v1076 = vsel %vm1073, %v1075, %v1071
      %v1077 = vmul.f32 %v1052, %v1076
      %v1078 = vmin.f32 %v1077, 1.0
      %v1079 = vmax.f32 %v1078, -1.0
      %v1080 = vmul.f32 %v307, %v307
      %v1081 = vmin.f32 16.0, %v1080
      %v1082 = vmul.f32 %v1081, 2.1237322e-06
      %v1083 = vadd.f32 %v1082, 0.00028619796
      %v1084 = vmul.f32 %v1081, %v1083
      %v1085 = vadd.f32 %v1084, 0.0036580483
      %v1086 = vmul.f32 %v1081, %v1085
      %v1087 = vadd.f32 %v1086, 0.05243302
      %v1088 = vmul.f32 %v1081, %v1087
      %v1089 = vadd.f32 %v1088, 0.18741608
      %v1090 = vmul.f32 %v1081, %v1089
      %v1091 = vadd.f32 %v1090, 1.1283791
      %v1092 = vmul.f32 %v307, %v1091
      %v1093 = vmul.f32 %v1081, 3.8918573e-05
      %v1094 = vadd.f32 %v1093, 0.001143296
      %v1095 = vmul.f32 %v1081, %v1094
      %v1096 = vadd.f32 %v1095, 0.014752088
      %v1097 = vmul.f32 %v1081, %v1096
      %v1098 = vadd.f32 %v1097, 0.112945676
      %v1099 = vmul.f32 %v1081, %v1098
      %v1100 = vadd.f32 %v1099, 0.4994258
      %v1101 = vmul.f32 %v1081, %v1100
      %v1102 = vadd.f32 %v1101, 1.0
      %v1103 = vrcp.pop %v1102
      %v1104 = vmul.f32 %v1102, %v1103
      %v1105 = vsub.f32 1.0, %v1104
      %v1106 = vmul.f32 %v1103, %v1105
      %v1107 = vadd.f32 %v1103, %v1106
      %vm1108 = vweird.f32 %v1102
      %vm1109 = vweird.f32 %v1103
      %vm1110 = vmor %vm1108, %vm1109
      %v1111 = vsel %vm1110, %v1103, %v1107
      %v1112 = vand.u32 2147483647, %v1102
      %vm1113 = vcmp.eq.f32.partialorder %v1112, 8.507059e+37
      %v1114 = vand.u32 %v1102, 2147483648
      %v1115 = vor.u32 1.1754944e-38, %v1114
      %v1116 = vsel %vm1113, %v1115, %v1111
      %v1117 = vmul.f32 %v1092, %v1116
      %v1118 = vmin.f32 %v1117, 1.0
      %v1119 = vmax.f32 %v1118, -1.0
      %v1120 = vmul.f32 %v308, %v308
      %v1121 = vmin.f32 16.0, %v1120
      %v1122 = vmul.f32 %v1121, 2.1237322e-06
      %v1123 = vadd.f32 %v1122, 0.00028619796
      %v1124 = vmul.f32 %v1121, %v1123
      %v1125 = vadd.f32 %v1124, 0.0036580483
      %v1126 = vmul.f32 %v1121, %v1125
      %v1127 = vadd.f32 %v1126, 0.05243302
      %v1128 = vmul.f32 %v1121, %v1127
      %v1129 = vadd.f32 %v1128, 0.18741608
      %v1130 = vmul.f32 %v1121, %v1129
      %v1131 = vadd.f32 %v1130, 1.1283791
      %v1132 = vmul.f32 %v308, %v1131
      %v1133 = vmul.f32 %v1121, 3.8918573e-05
      %v1134 = vadd.f32 %v1133, 0.001143296
      %v1135 = vmul.f32 %v1121, %v1134
      %v1136 = vadd.f32 %v1135, 0.014752088
      %v1137 = vmul.f32 %v1121, %v1136
      %v1138 = vadd.f32 %v1137, 0.112945676
      %v1139 = vmul.f32 %v1121, %v1138
      %v1140 = vadd.f32 %v1139, 0.4994258
      %v1141 = vmul.f32 %v1121, %v1140
      %v1142 = vadd.f32 %v1141, 1.0
      %v1143 = vrcp.pop %v1142
      %v1144 = vmul.f32 %v1142, %v1143
      %v1145 = vsub.f32 1.0, %v1144
      %v1146 = vmul.f32 %v1143, %v1145
      %v1147 = vadd.f32 %v1143, %v1146
      %vm1148 = vweird.f32 %v1142
      %vm1149 = vweird.f32 %v1143
      %vm1150 = vmor %vm1148, %vm1149
      %v1151 = vsel %vm1150, %v1143, %v1147
      %v1152 = vand.u32 2147483647, %v1142
      %vm1153 = vcmp.eq.f32.partialorder %v1152, 8.507059e+37
      %v1154 = vand.u32 %v1142, 2147483648
      %v1155 = vor.u32 1.1754944e-38, %v1154
      %v1156 = vsel %vm1153, %v1155, %v1151
      %v1157 = vmul.f32 %v1132, %v1156
      %v1158 = vmin.f32 %v1157, 1.0
      %v1159 = vmax.f32 %v1158, -1.0
      %v1160 = vmul.f32 %v309, %v309
      %v1161 = vmin.f32 16.0, %v1160
      %v1162 = vmul.f32 %v1161, 2.1237322e-06
      %v1163 = vadd.f32 %v1162, 0.00028619796
      %v1164 = vmul.f32 %v1161, %v1163
      %v1165 = vadd.f32 %v1164, 0.0036580483
      %v1166 = vmul.f32 %v1161, %v1165
      %v1167 = vadd.f32 %v1166, 0.05243302
      %v1168 = vmul.f32 %v1161, %v1167
      %v1169 = vadd.f32 %v1168, 0.18741608
      %v1170 = vmul.f32 %v1161, %v1169
      %v1171 = vadd.f32 %v1170, 1.1283791
      %v1172 = vmul.f32 %v309, %v1171
      %v1173 = vmul.f32 %v1161, 3.8918573e-05
      %v1174 = vadd.f32 %v1173, 0.001143296
      %v1175 = vmul.f32 %v1161, %v1174
      %v1176 = vadd.f32 %v1175, 0.014752088
      %v1177 = vmul.f32 %v1161, %v1176
      %v1178 = vadd.f32 %v1177, 0.112945676
      %v1179 = vmul.f32 %v1161, %v1178
      %v1180 = vadd.f32 %v1179, 0.4994258
      %v1181 = vmul.f32 %v1161, %v1180
      %v1182 = vadd.f32 %v1181, 1.0
      %v1183 = vrcp.pop %v1182
      %v1184 = vmul.f32 %v1182, %v1183
      %v1185 = vsub.f32 1.0, %v1184
      %v1186 = vmul.f32 %v1183, %v1185
      %v1187 = vadd.f32 %v1183, %v1186
      %vm1188 = vweird.f32 %v1182
      %vm1189 = vweird.f32 %v1183
      %vm1190 = vmor %vm1188, %vm1189
      %v1191 = vsel %vm1190, %v1183, %v1187
      %v1192 = vand.u32 2147483647, %v1182
      %vm1193 = vcmp.eq.f32.partialorder %v1192, 8.507059e+37
      %v1194 = vand.u32 %v1182, 2147483648
      %v1195 = vor.u32 1.1754944e-38, %v1194
      %v1196 = vsel %vm1193, %v1195, %v1191
      %v1197 = vmul.f32 %v1172, %v1196
      %v1198 = vmin.f32 %v1197, 1.0
      %v1199 = vmax.f32 %v1198, -1.0
      %v1200 = vmul.f32 %v310, %v310
      %v1201 = vmin.f32 16.0, %v1200
      %v1202 = vmul.f32 %v1201, 2.1237322e-06
      %v1203 = vadd.f32 %v1202, 0.00028619796
      %v1204 = vmul.f32 %v1201, %v1203
      %v1205 = vadd.f32 %v1204, 0.0036580483
      %v1206 = vmul.f32 %v1201, %v1205
      %v1207 = vadd.f32 %v1206, 0.05243302
      %v1208 = vmul.f32 %v1201, %v1207
      %v1209 = vadd.f32 %v1208, 0.18741608
      %v1210 = vmul.f32 %v1201, %v1209
      %v1211 = vadd.f32 %v1210, 1.1283791
      %v1212 = vmul.f32 %v310, %v1211
      %v1213 = vmul.f32 %v1201, 3.8918573e-05
      %v1214 = vadd.f32 %v1213, 0.001143296
      %v1215 = vmul.f32 %v1201, %v1214
      %v1216 = vadd.f32 %v1215, 0.014752088
      %v1217 = vmul.f32 %v1201, %v1216
      %v1218 = vadd.f32 %v1217, 0.112945676
      %v1219 = vmul.f32 %v1201, %v1218
      %v1220 = vadd.f32 %v1219, 0.4994258
      %v1221 = vmul.f32 %v1201, %v1220
      %v1222 = vadd.f32 %v1221, 1.0
      %v1223 = vrcp.pop %v1222
      %v1224 = vmul.f32 %v1222, %v1223
      %v1225 = vsub.f32 1.0, %v1224
      %v1226 = vmul.f32 %v1223, %v1225
      %v1227 = vadd.f32 %v1223, %v1226
      %vm1228 = vweird.f32 %v1222
      %vm1229 = vweird.f32 %v1223
      %vm1230 = vmor %vm1228, %vm1229
      %v1231 = vsel %vm1230, %v1223, %v1227
      %v1232 = vand.u32 2147483647, %v1222
      %vm1233 = vcmp.eq.f32.partialorder %v1232, 8.507059e+37
      %v1234 = vand.u32 %v1222, 2147483648
      %v1235 = vor.u32 1.1754944e-38, %v1234
      %v1236 = vsel %vm1233, %v1235, %v1231
      %v1237 = vmul.f32 %v1212, %v1236
      %v1238 = vmin.f32 %v1237, 1.0
      %v1239 = vmax.f32 %v1238, -1.0
      %v1240 = vmul.f32 %v311, %v311
      %v1241 = vmin.f32 16.0, %v1240
      %v1242 = vmul.f32 %v1241, 2.1237322e-06
      %v1243 = vadd.f32 %v1242, 0.00028619796
      %v1244 = vmul.f32 %v1241, %v1243
      %v1245 = vadd.f32 %v1244, 0.0036580483
      %v1246 = vmul.f32 %v1241, %v1245
      %v1247 = vadd.f32 %v1246, 0.05243302
      %v1248 = vmul.f32 %v1241, %v1247
      %v1249 = vadd.f32 %v1248, 0.18741608
      %v1250 = vmul.f32 %v1241, %v1249
      %v1251 = vadd.f32 %v1250, 1.1283791
      %v1252 = vmul.f32 %v311, %v1251
      %v1253 = vmul.f32 %v1241, 3.8918573e-05
      %v1254 = vadd.f32 %v1253, 0.001143296
      %v1255 = vmul.f32 %v1241, %v1254
      %v1256 = vadd.f32 %v1255, 0.014752088
      %v1257 = vmul.f32 %v1241, %v1256
      %v1258 = vadd.f32 %v1257, 0.112945676
      %v1259 = vmul.f32 %v1241, %v1258
      %v1260 = vadd.f32 %v1259, 0.4994258
      %v1261 = vmul.f32 %v1241, %v1260
      %v1262 = vadd.f32 %v1261, 1.0
      %v1263 = vrcp.pop %v1262
      %v1264 = vmul.f32 %v1262, %v1263
      %v1265 = vsub.f32 1.0, %v1264
      %v1266 = vmul.f32 %v1263, %v1265
      %v1267 = vadd.f32 %v1263, %v1266
      %vm1268 = vweird.f32 %v1262
      %vm1269 = vweird.f32 %v1263
      %vm1270 = vmor %vm1268, %vm1269
      %v1271 = vsel %vm1270, %v1263, %v1267
      %v1272 = vand.u32 2147483647, %v1262
      %vm1273 = vcmp.eq.f32.partialorder %v1272, 8.507059e+37
      %v1274 = vand.u32 %v1262, 2147483648
      %v1275 = vor.u32 1.1754944e-38, %v1274
      %v1276 = vsel %vm1273, %v1275, %v1271
      %v1277 = vmul.f32 %v1252, %v1276
      %v1278 = vmin.f32 %v1277, 1.0
      %v1279 = vmax.f32 %v1278, -1.0
      %v1280 = vmul.f32 %v312, %v312
      %v1281 = vmin.f32 16.0, %v1280
      %v1282 = vmul.f32 %v1281, 2.1237322e-06
      %v1283 = vadd.f32 %v1282, 0.00028619796
      %v1284 = vmul.f32 %v1281, %v1283
      %v1285 = vadd.f32 %v1284, 0.0036580483
      %v1286 = vmul.f32 %v1281, %v1285
      %v1287 = vadd.f32 %v1286, 0.05243302
      %v1288 = vmul.f32 %v1281, %v1287
      %v1289 = vadd.f32 %v1288, 0.18741608
      %v1290 = vmul.f32 %v1281, %v1289
      %v1291 = vadd.f32 %v1290, 1.1283791
      %v1292 = vmul.f32 %v312, %v1291
      %v1293 = vmul.f32 %v1281, 3.8918573e-05
      %v1294 = vadd.f32 %v1293, 0.001143296
      %v1295 = vmul.f32 %v1281, %v1294
      %v1296 = vadd.f32 %v1295, 0.014752088
      %v1297 = vmul.f32 %v1281, %v1296
      %v1298 = vadd.f32 %v1297, 0.112945676
      %v1299 = vmul.f32 %v1281, %v1298
      %v1300 = vadd.f32 %v1299, 0.4994258
      %v1301 = vmul.f32 %v1281, %v1300
      %v1302 = vadd.f32 %v1301, 1.0
      %v1303 = vrcp.pop %v1302
      %v1304 = vmul.f32 %v1302, %v1303
      %v1305 = vsub.f32 1.0, %v1304
      %v1306 = vmul.f32 %v1303, %v1305
      %v1307 = vadd.f32 %v1303, %v1306
      %vm1308 = vweird.f32 %v1302
      %vm1309 = vweird.f32 %v1303
      %vm1310 = vmor %vm1308, %vm1309
      %v1311 = vsel %vm1310, %v1303, %v1307
      %v1312 = vand.u32 2147483647, %v1302
      %vm1313 = vcmp.eq.f32.partialorder %v1312, 8.507059e+37
      %v1314 = vand.u32 %v1302, 2147483648
      %v1315 = vor.u32 1.1754944e-38, %v1314
      %v1316 = vsel %vm1313, %v1315, %v1311
      %v1317 = vmul.f32 %v1292, %v1316
      %v1318 = vmin.f32 %v1317, 1.0
      %v1319 = vmax.f32 %v1318, -1.0
      %v1320 = vmul.f32 %v313, %v313
      %v1321 = vmin.f32 16.0, %v1320
      %v1322 = vmul.f32 %v1321, 2.1237322e-06
      %v1323 = vadd.f32 %v1322, 0.00028619796
      %v1324 = vmul.f32 %v1321, %v1323
      %v1325 = vadd.f32 %v1324, 0.0036580483
      %v1326 = vmul.f32 %v1321, %v1325
      %v1327 = vadd.f32 %v1326, 0.05243302
      %v1328 = vmul.f32 %v1321, %v1327
      %v1329 = vadd.f32 %v1328, 0.18741608
      %v1330 = vmul.f32 %v1321, %v1329
      %v1331 = vadd.f32 %v1330, 1.1283791
      %v1332 = vmul.f32 %v313, %v1331
      %v1333 = vmul.f32 %v1321, 3.8918573e-05
      %v1334 = vadd.f32 %v1333, 0.001143296
      %v1335 = vmul.f32 %v1321, %v1334
      %v1336 = vadd.f32 %v1335, 0.014752088
      %v1337 = vmul.f32 %v1321, %v1336
      %v1338 = vadd.f32 %v1337, 0.112945676
      %v1339 = vmul.f32 %v1321, %v1338
      %v1340 = vadd.f32 %v1339, 0.4994258
      %v1341 = vmul.f32 %v1321, %v1340
      %v1342 = vadd.f32 %v1341, 1.0
      %v1343 = vrcp.pop %v1342
      %v1344 = vmul.f32 %v1342, %v1343
      %v1345 = vsub.f32 1.0, %v1344
      %v1346 = vmul.f32 %v1343, %v1345
      %v1347 = vadd.f32 %v1343, %v1346
      %vm1348 = vweird.f32 %v1342
      %vm1349 = vweird.f32 %v1343
      %vm1350 = vmor %vm1348, %vm1349
      %v1351 = vsel %vm1350, %v1343, %v1347
      %v1352 = vand.u32 2147483647, %v1342
      %vm1353 = vcmp.eq.f32.partialorder %v1352, 8.507059e+37
      %v1354 = vand.u32 %v1342, 2147483648
      %v1355 = vor.u32 1.1754944e-38, %v1354
      %v1356 = vsel %vm1353, %v1355, %v1351
      %v1357 = vmul.f32 %v1332, %v1356
      %v1358 = vmin.f32 %v1357, 1.0
      %v1359 = vmax.f32 %v1358, -1.0
      %v1360 = vmul.f32 %v314, %v314
      %v1361 = vmin.f32 16.0, %v1360
      %v1362 = vmul.f32 %v1361, 2.1237322e-06
      %v1363 = vadd.f32 %v1362, 0.00028619796
      %v1364 = vmul.f32 %v1361, %v1363
      %v1365 = vadd.f32 %v1364, 0.0036580483
      %v1366 = vmul.f32 %v1361, %v1365
      %v1367 = vadd.f32 %v1366, 0.05243302
      %v1368 = vmul.f32 %v1361, %v1367
      %v1369 = vadd.f32 %v1368, 0.18741608
      %v1370 = vmul.f32 %v1361, %v1369
      %v1371 = vadd.f32 %v1370, 1.1283791
      %v1372 = vmul.f32 %v314, %v1371
      %v1373 = vmul.f32 %v1361, 3.8918573e-05
      %v1374 = vadd.f32 %v1373, 0.001143296
      %v1375 = vmul.f32 %v1361, %v1374
      %v1376 = vadd.f32 %v1375, 0.014752088
      %v1377 = vmul.f32 %v1361, %v1376
      %v1378 = vadd.f32 %v1377, 0.112945676
      %v1379 = vmul.f32 %v1361, %v1378
      %v1380 = vadd.f32 %v1379, 0.4994258
      %v1381 = vmul.f32 %v1361, %v1380
      %v1382 = vadd.f32 %v1381, 1.0
      %v1383 = vrcp.pop %v1382
      %v1384 = vmul.f32 %v1382, %v1383
      %v1385 = vsub.f32 1.0, %v1384
      %v1386 = vmul.f32 %v1383, %v1385
      %v1387 = vadd.f32 %v1383, %v1386
      %vm1388 = vweird.f32 %v1382
      %vm1389 = vweird.f32 %v1383
      %vm1390 = vmor %vm1388, %vm1389
      %v1391 = vsel %vm1390, %v1383, %v1387
      %v1392 = vand.u32 2147483647, %v1382
      %vm1393 = vcmp.eq.f32.partialorder %v1392, 8.507059e+37
      %v1394 = vand.u32 %v1382, 2147483648
      %v1395 = vor.u32 1.1754944e-38, %v1394
      %v1396 = vsel %vm1393, %v1395, %v1391
      %v1397 = vmul.f32 %v1372, %v1396
      %v1398 = vmin.f32 %v1397, 1.0
      %v1399 = vmax.f32 %v1398, -1.0
      %v1400 = vmul.f32 %v315, %v315
      %v1401 = vmin.f32 16.0, %v1400
      %v1402 = vmul.f32 %v1401, 2.1237322e-06
      %v1403 = vadd.f32 %v1402, 0.00028619796
      %v1404 = vmul.f32 %v1401, %v1403
      %v1405 = vadd.f32 %v1404, 0.0036580483
      %v1406 = vmul.f32 %v1401, %v1405
      %v1407 = vadd.f32 %v1406, 0.05243302
      %v1408 = vmul.f32 %v1401, %v1407
      %v1409 = vadd.f32 %v1408, 0.18741608
      %v1410 = vmul.f32 %v1401, %v1409
      %v1411 = vadd.f32 %v1410, 1.1283791
      %v1412 = vmul.f32 %v315, %v1411
      %v1413 = vmul.f32 %v1401, 3.8918573e-05
      %v1414 = vadd.f32 %v1413, 0.001143296
      %v1415 = vmul.f32 %v1401, %v1414
      %v1416 = vadd.f32 %v1415, 0.014752088
      %v1417 = vmul.f32 %v1401, %v1416
      %v1418 = vadd.f32 %v1417, 0.112945676
      %v1419 = vmul.f32 %v1401, %v1418
      %v1420 = vadd.f32 %v1419, 0.4994258
      %v1421 = vmul.f32 %v1401, %v1420
      %v1422 = vadd.f32 %v1421, 1.0
      %v1423 = vrcp.pop %v1422
      %v1424 = vmul.f32 %v1422, %v1423
      %v1425 = vsub.f32 1.0, %v1424
      %v1426 = vmul.f32 %v1423, %v1425
      %v1427 = vadd.f32 %v1423, %v1426
      %vm1428 = vweird.f32 %v1422
      %vm1429 = vweird.f32 %v1423
      %vm1430 = vmor %vm1428, %vm1429
      %v1431 = vsel %vm1430, %v1423, %v1427
      %v1432 = vand.u32 2147483647, %v1422
      %vm1433 = vcmp.eq.f32.partialorder %v1432, 8.507059e+37
      %v1434 = vand.u32 %v1422, 2147483648
      %v1435 = vor.u32 1.1754944e-38, %v1434
      %v1436 = vsel %vm1433, %v1435, %v1431
      %v1437 = vmul.f32 %v1412, %v1436
      %v1438 = vmin.f32 %v1437, 1.0
      %v1439 = vmax.f32 %v1438, -1.0
      %v1440 = vmul.f32 %v316, %v316
      %v1441 = vmin.f32 16.0, %v1440
      %v1442 = vmul.f32 %v1441, 2.1237322e-06
      %v1443 = vadd.f32 %v1442, 0.00028619796
      %v1444 = vmul.f32 %v1441, %v1443
      %v1445 = vadd.f32 %v1444, 0.0036580483
      %v1446 = vmul.f32 %v1441, %v1445
      %v1447 = vadd.f32 %v1446, 0.05243302
      %v1448 = vmul.f32 %v1441, %v1447
      %v1449 = vadd.f32 %v1448, 0.18741608
      %v1450 = vmul.f32 %v1441, %v1449
      %v1451 = vadd.f32 %v1450, 1.1283791
      %v1452 = vmul.f32 %v316, %v1451
      %v1453 = vmul.f32 %v1441, 3.8918573e-05
      %v1454 = vadd.f32 %v1453, 0.001143296
      %v1455 = vmul.f32 %v1441, %v1454
      %v1456 = vadd.f32 %v1455, 0.014752088
      %v1457 = vmul.f32 %v1441, %v1456
      %v1458 = vadd.f32 %v1457, 0.112945676
      %v1459 = vmul.f32 %v1441, %v1458
      %v1460 = vadd.f32 %v1459, 0.4994258
      %v1461 = vmul.f32 %v1441, %v1460
      %v1462 = vadd.f32 %v1461, 1.0
      %v1463 = vrcp.pop %v1462
      %v1464 = vmul.f32 %v1462, %v1463
      %v1465 = vsub.f32 1.0, %v1464
      %v1466 = vmul.f32 %v1463, %v1465
      %v1467 = vadd.f32 %v1463, %v1466
      %vm1468 = vweird.f32 %v1462
      %vm1469 = vweird.f32 %v1463
      %vm1470 = vmor %vm1468, %vm1469
      %v1471 = vsel %vm1470, %v1463, %v1467
      %v1472 = vand.u32 2147483647, %v1462
      %vm1473 = vcmp.eq.f32.partialorder %v1472, 8.507059e+37
      %v1474 = vand.u32 %v1462, 2147483648
      %v1475 = vor.u32 1.1754944e-38, %v1474
      %v1476 = vsel %vm1473, %v1475, %v1471
      %v1477 = vmul.f32 %v1452, %v1476
      %v1478 = vmin.f32 %v1477, 1.0
      %v1479 = vmax.f32 %v1478, -1.0
      %v1480 = vmul.f32 %v317, %v317
      %v1481 = vmin.f32 16.0, %v1480
      %v1482 = vmul.f32 %v1481, 2.1237322e-06
      %v1483 = vadd.f32 %v1482, 0.00028619796
      %v1484 = vmul.f32 %v1481, %v1483
      %v1485 = vadd.f32 %v1484, 0.0036580483
      %v1486 = vmul.f32 %v1481, %v1485
      %v1487 = vadd.f32 %v1486, 0.05243302
      %v1488 = vmul.f32 %v1481, %v1487
      %v1489 = vadd.f32 %v1488, 0.18741608
      %v1490 = vmul.f32 %v1481, %v1489
      %v1491 = vadd.f32 %v1490, 1.1283791
      %v1492 = vmul.f32 %v317, %v1491
      %v1493 = vmul.f32 %v1481, 3.8918573e-05
      %v1494 = vadd.f32 %v1493, 0.001143296
      %v1495 = vmul.f32 %v1481, %v1494
      %v1496 = vadd.f32 %v1495, 0.014752088
      %v1497 = vmul.f32 %v1481, %v1496
      %v1498 = vadd.f32 %v1497, 0.112945676
      %v1499 = vmul.f32 %v1481, %v1498
      %v1500 = vadd.f32 %v1499, 0.4994258
      %v1501 = vmul.f32 %v1481, %v1500
      %v1502 = vadd.f32 %v1501, 1.0
      %v1503 = vrcp.pop %v1502
      %v1504 = vmul.f32 %v1502, %v1503
      %v1505 = vsub.f32 1.0, %v1504
      %v1506 = vmul.f32 %v1503, %v1505
      %v1507 = vadd.f32 %v1503, %v1506
      %vm1508 = vweird.f32 %v1502
      %vm1509 = vweird.f32 %v1503
      %vm1510 = vmor %vm1508, %vm1509
      %v1511 = vsel %vm1510, %v1503, %v1507
      %v1512 = vand.u32 2147483647, %v1502
      %vm1513 = vcmp.eq.f32.partialorder %v1512, 8.507059e+37
      %v1514 = vand.u32 %v1502, 2147483648
      %v1515 = vor.u32 1.1754944e-38, %v1514
      %v1516 = vsel %vm1513, %v1515, %v1511
      %v1517 = vmul.f32 %v1492, %v1516
      %v1518 = vmin.f32 %v1517, 1.0
      %v1519 = vmax.f32 %v1518, -1.0
      %v1520 = vmul.f32 %v318, %v318
      %v1521 = vmin.f32 16.0, %v1520
      %v1522 = vmul.f32 %v1521, 2.1237322e-06
      %v1523 = vadd.f32 %v1522, 0.00028619796
      %v1524 = vmul.f32 %v1521, %v1523
      %v1525 = vadd.f32 %v1524, 0.0036580483
      %v1526 = vmul.f32 %v1521, %v1525
      %v1527 = vadd.f32 %v1526, 0.05243302
      %v1528 = vmul.f32 %v1521, %v1527
      %v1529 = vadd.f32 %v1528, 0.18741608
      %v1530 = vmul.f32 %v1521, %v1529
      %v1531 = vadd.f32 %v1530, 1.1283791
      %v1532 = vmul.f32 %v318, %v1531
      %v1533 = vmul.f32 %v1521, 3.8918573e-05
      %v1534 = vadd.f32 %v1533, 0.001143296
      %v1535 = vmul.f32 %v1521, %v1534
      %v1536 = vadd.f32 %v1535, 0.014752088
      %v1537 = vmul.f32 %v1521, %v1536
      %v1538 = vadd.f32 %v1537, 0.112945676
      %v1539 = vmul.f32 %v1521, %v1538
      %v1540 = vadd.f32 %v1539, 0.4994258
      %v1541 = vmul.f32 %v1521, %v1540
      %v1542 = vadd.f32 %v1541, 1.0
      %v1543 = vrcp.pop %v1542
      %v1544 = vmul.f32 %v1542, %v1543
      %v1545 = vsub.f32 1.0, %v1544
      %v1546 = vmul.f32 %v1543, %v1545
      %v1547 = vadd.f32 %v1543, %v1546
      %vm1548 = vweird.f32 %v1542
      %vm1549 = vweird.f32 %v1543
      %vm1550 = vmor %vm1548, %vm1549
      %v1551 = vsel %vm1550, %v1543, %v1547
      %v1552 = vand.u32 2147483647, %v1542
      %vm1553 = vcmp.eq.f32.partialorder %v1552, 8.507059e+37
      %v1554 = vand.u32 %v1542, 2147483648
      %v1555 = vor.u32 1.1754944e-38, %v1554
      %v1556 = vsel %vm1553, %v1555, %v1551
      %v1557 = vmul.f32 %v1532, %v1556
      %v1558 = vmin.f32 %v1557, 1.0
      %v1559 = vmax.f32 %v1558, -1.0
      %v1560 = vmul.f32 %v319, %v319
      %v1561 = vmin.f32 16.0, %v1560
      %v1562 = vmul.f32 %v1561, 2.1237322e-06
      %v1563 = vadd.f32 %v1562, 0.00028619796
      %v1564 = vmul.f32 %v1561, %v1563
      %v1565 = vadd.f32 %v1564, 0.0036580483
      %v1566 = vmul.f32 %v1561, %v1565
      %v1567 = vadd.f32 %v1566, 0.05243302
      %v1568 = vmul.f32 %v1561, %v1567
      %v1569 = vadd.f32 %v1568, 0.18741608
      %v1570 = vmul.f32 %v1561, %v1569
      %v1571 = vadd.f32 %v1570, 1.1283791
      %v1572 = vmul.f32 %v319, %v1571
      %v1573 = vmul.f32 %v1561, 3.8918573e-05
      %v1574 = vadd.f32 %v1573, 0.001143296
      %v1575 = vmul.f32 %v1561, %v1574
      %v1576 = vadd.f32 %v1575, 0.014752088
      %v1577 = vmul.f32 %v1561, %v1576
      %v1578 = vadd.f32 %v1577, 0.112945676
      %v1579 = vmul.f32 %v1561, %v1578
      %v1580 = vadd.f32 %v1579, 0.4994258
      %v1581 = vmul.f32 %v1561, %v1580
      %v1582 = vadd.f32 %v1581, 1.0
      %v1583 = vrcp.pop %v1582
      %v1584 = vmul.f32 %v1582, %v1583
      %v1585 = vsub.f32 1.0, %v1584
      %v1586 = vmul.f32 %v1583, %v1585
      %v1587 = vadd.f32 %v1583, %v1586
      %vm1588 = vweird.f32 %v1582
      %vm1589 = vweird.f32 %v1583
      %vm1590 = vmor %vm1588, %vm1589
      %v1591 = vsel %vm1590, %v1583, %v1587
      %v1592 = vand.u32 2147483647, %v1582
      %vm1593 = vcmp.eq.f32.partialorder %v1592, 8.507059e+37
      %v1594 = vand.u32 %v1582, 2147483648
      %v1595 = vor.u32 1.1754944e-38, %v1594
      %v1596 = vsel %vm1593, %v1595, %v1591
      %v1597 = vmul.f32 %v1572, %v1596
      %v1598 = vmin.f32 %v1597, 1.0
      %v1599 = vmax.f32 %v1598, -1.0
      %v1600 = vadd.f32 %v359, 1.0
      %v1601 = vadd.f32 %v399, 1.0
      %v1602 = vadd.f32 %v439, 1.0
      %v1603 = vadd.f32 %v479, 1.0
      %v1604 = vadd.f32 %v519, 1.0
      %v1605 = vadd.f32 %v559, 1.0
      %v1606 = vadd.f32 %v599, 1.0
      %v1607 = vadd.f32 %v639, 1.0
      %v1608 = vadd.f32 %v679, 1.0
      %v1609 = vadd.f32 %v719, 1.0
      %v1610 = vadd.f32 %v759, 1.0
      %v1611 = vadd.f32 %v799, 1.0
      %v1612 = vadd.f32 %v839, 1.0
      %v1613 = vadd.f32 %v879, 1.0
      %v1614 = vadd.f32 %v919, 1.0
      %v1615 = vadd.f32 %v959, 1.0
      %v1616 = vadd.f32 %v999, 1.0
      %v1617 = vadd.f32 %v1039, 1.0
      %v1618 = vadd.f32 %v1079, 1.0
      %v1619 = vadd.f32 %v1119, 1.0
      %v1620 = vadd.f32 %v1159, 1.0
      %v1621 = vadd.f32 %v1199, 1.0
      %v1622 = vadd.f32 %v1239, 1.0
      %v1623 = vadd.f32 %v1279, 1.0
      %v1624 = vadd.f32 %v1319, 1.0
      %v1625 = vadd.f32 %v1359, 1.0
      %v1626 = vadd.f32 %v1399, 1.0
      %v1627 = vadd.f32 %v1439, 1.0
      %v1628 = vadd.f32 %v1479, 1.0
      %v1629 = vadd.f32 %v1519, 1.0
      %v1630 = vadd.f32 %v1559, 1.0
      %v1631 = vadd.f32 %v1599, 1.0
      %v1632 = vmul.f32 %v256, %v1600
      %v1633 = vmul.f32 %v257, %v1601
      %v1634 = vmul.f32 %v258, %v1602
      %v1635 = vmul.f32 %v259, %v1603
      %v1636 = vmul.f32 %v260, %v1604
      %v1637 = vmul.f32 %v261, %v1605
      %v1638 = vmul.f32 %v262, %v1606
      %v1639 = vmul.f32 %v263, %v1607
      %v1640 = vmul.f32 %v264, %v1608
      %v1641 = vmul.f32 %v265, %v1609
      %v1642 = vmul.f32 %v266, %v1610
      %v1643 = vmul.f32 %v267, %v1611
      %v1644 = vmul.f32 %v268, %v1612
      %v1645 = vmul.f32 %v269, %v1613
      %v1646 = vmul.f32 %v270, %v1614
      %v1647 = vmul.f32 %v271, %v1615
      %v1648 = vmul.f32 %v272, %v1616
      %v1649 = vmul.f32 %v273, %v1617
      %v1650 = vmul.f32 %v274, %v1618
      %v1651 = vmul.f32 %v275, %v1619
      %v1652 = vmul.f32 %v276, %v1620
      %v1653 = vmul.f32 %v277, %v1621
      %v1654 = vmul.f32 %v278, %v1622
      %v1655 = vmul.f32 %v279, %v1623
      %v1656 = vmul.f32 %v280, %v1624
      %v1657 = vmul.f32 %v281, %v1625
      %v1658 = vmul.f32 %v282, %v1626
      %v1659 = vmul.f32 %v283, %v1627
      %v1660 = vmul.f32 %v284, %v1628
      %v1661 = vmul.f32 %v285, %v1629
      %v1662 = vmul.f32 %v286, %v1630
      %v1663 = vmul.f32 %v287, %v1631
      %1696 = vrot.lane.b32.xlu0 %v224, 112
      %v1697 = vpop.permute.xlu0 %1696
      %1698 = vrot.lane.b32.xlu0 %v225, 112
      %v1699 = vpop.permute.xlu0 %1698
      %1700 = vrot.lane.b32.xlu0 %v226, 112
      %v1701 = vpop.permute.xlu0 %1700
      %1702 = vrot.lane.b32.xlu0 %v227, 112
      %v1703 = vpop.permute.xlu0 %1702
      %1704 = vrot.lane.b32.xlu0 %v228, 112
      %v1705 = vpop.permute.xlu0 %1704
      %1706 = vrot.lane.b32.xlu0 %v229, 112
      %v1707 = vpop.permute.xlu0 %1706
      %1708 = vrot.lane.b32.xlu0 %v230, 112
      %v1709 = vpop.permute.xlu0 %1708
      %1710 = vrot.lane.b32.xlu0 %v231, 112
      %v1711 = vpop.permute.xlu0 %1710
      %1712 = vrot.lane.b32.xlu0 %v232, 112
      %v1713 = vpop.permute.xlu0 %1712
      %1714 = vrot.lane.b32.xlu0 %v233, 112
      %v1715 = vpop.permute.xlu0 %1714
      %1716 = vrot.lane.b32.xlu0 %v234, 112
      %v1717 = vpop.permute.xlu0 %1716
      %1718 = vrot.lane.b32.xlu0 %v235, 112
      %v1719 = vpop.permute.xlu0 %1718
      %1720 = vrot.lane.b32.xlu0 %v236, 112
      %v1721 = vpop.permute.xlu0 %1720
      %1722 = vrot.lane.b32.xlu0 %v237, 112
      %v1723 = vpop.permute.xlu0 %1722
      %1724 = vrot.lane.b32.xlu0 %v238, 112
      %v1725 = vpop.permute.xlu0 %1724
      %1726 = vrot.lane.b32.xlu0 %v239, 112
      %v1727 = vpop.permute.xlu0 %1726
      %1728 = vrot.lane.b32.xlu0 %v240, 112
      %v1729 = vpop.permute.xlu0 %1728
      %1730 = vrot.lane.b32.xlu0 %v241, 112
      %v1731 = vpop.permute.xlu0 %1730
      %1732 = vrot.lane.b32.xlu0 %v242, 112
      %v1733 = vpop.permute.xlu0 %1732
      %1734 = vrot.lane.b32.xlu0 %v243, 112
      %v1735 = vpop.permute.xlu0 %1734
      %1736 = vrot.lane.b32.xlu0 %v244, 112
      %v1737 = vpop.permute.xlu0 %1736
      %1738 = vrot.lane.b32.xlu0 %v245, 112
      %v1739 = vpop.permute.xlu0 %1738
      %1740 = vrot.lane.b32.xlu0 %v246, 112
      %v1741 = vpop.permute.xlu0 %1740
      %1742 = vrot.lane.b32.xlu0 %v247, 112
      %v1743 = vpop.permute.xlu0 %1742
      %1744 = vrot.lane.b32.xlu0 %v248, 112
      %v1745 = vpop.permute.xlu0 %1744
      %1746 = vrot.lane.b32.xlu0 %v249, 112
      %v1747 = vpop.permute.xlu0 %1746
      %1748 = vrot.lane.b32.xlu0 %v250, 112
      %v1749 = vpop.permute.xlu0 %1748
      %1750 = vrot.lane.b32.xlu0 %v251, 112
      %v1751 = vpop.permute.xlu0 %1750
      %1752 = vrot.lane.b32.xlu0 %v252, 112
      %v1753 = vpop.permute.xlu0 %1752
      %1754 = vrot.lane.b32.xlu0 %v253, 112
      %v1755 = vpop.permute.xlu0 %1754
      %1756 = vrot.lane.b32.xlu0 %v254, 112
      %v1757 = vpop.permute.xlu0 %1756
      %1758 = vrot.lane.b32.xlu0 %v255, 112
      %v1759 = vpop.permute.xlu0 %1758
      %v1792 = vmul.f32 %v1632, %v1697
      %v1793 = vmul.f32 %v1633, %v1699
      %v1794 = vmul.f32 %v1634, %v1701
      %v1795 = vmul.f32 %v1635, %v1703
      %v1796 = vmul.f32 %v1636, %v1705
      %v1797 = vmul.f32 %v1637, %v1707
      %v1798 = vmul.f32 %v1638, %v1709
      %v1799 = vmul.f32 %v1639, %v1711
      %v1800 = vmul.f32 %v1640, %v1713
      %v1801 = vmul.f32 %v1641, %v1715
      %v1802 = vmul.f32 %v1642, %v1717
      %v1803 = vmul.f32 %v1643, %v1719
      %v1804 = vmul.f32 %v1644, %v1721
      %v1805 = vmul.f32 %v1645, %v1723
      %v1806 = vmul.f32 %v1646, %v1725
      %v1807 = vmul.f32 %v1647, %v1727
      %v1808 = vmul.f32 %v1648, %v1729
      %v1809 = vmul.f32 %v1649, %v1731
      %v1810 = vmul.f32 %v1650, %v1733
      %v1811 = vmul.f32 %v1651, %v1735
      %v1812 = vmul.f32 %v1652, %v1737
      %v1813 = vmul.f32 %v1653, %v1739
      %v1814 = vmul.f32 %v1654, %v1741
      %v1815 = vmul.f32 %v1655, %v1743
      %v1816 = vmul.f32 %v1656, %v1745
      %v1817 = vmul.f32 %v1657, %v1747
      %v1818 = vmul.f32 %v1658, %v1749
      %v1819 = vmul.f32 %v1659, %v1751
      %v1820 = vmul.f32 %v1660, %v1753
      %v1821 = vmul.f32 %v1661, %v1755
      %v1822 = vmul.f32 %v1662, %v1757
      %v1823 = vmul.f32 %v1663, %v1759
      %v1824 = vpack.c.bf16 %v1793, %v1792
      %v1825 = vpack.c.bf16 %v1795, %v1794
      %v1826 = vpack.c.bf16 %v1797, %v1796
      %v1827 = vpack.c.bf16 %v1799, %v1798
      %v1828 = vpack.c.bf16 %v1801, %v1800
      %v1829 = vpack.c.bf16 %v1803, %v1802
      %v1830 = vpack.c.bf16 %v1805, %v1804
      %v1831 = vpack.c.bf16 %v1807, %v1806
      %v1832 = vpack.c.bf16 %v1809, %v1808
      %v1833 = vpack.c.bf16 %v1811, %v1810
      %v1834 = vpack.c.bf16 %v1813, %v1812
      %v1835 = vpack.c.bf16 %v1815, %v1814
      %v1836 = vpack.c.bf16 %v1817, %v1816
      %v1837 = vpack.c.bf16 %v1819, %v1818
      %v1838 = vpack.c.bf16 %v1821, %v1820
      %v1839 = vpack.c.bf16 %v1823, %v1822
      %v1840 = vld [vmem:[%s2] sm:$0xf]
      %v1841 = vld [vmem:[%s2 + $0x4] sm:$0xf]
      %v1842 = vld [vmem:[%s3] sm:$0x1]
      %v1844 = vperm.slane %v1842, 0
      %v1848 = vunpack.c.l.b16 %v1840
      %v1849 = vunpack.c.l.b16 %v1841
      %v1850 = vpack.c.b16 %v1849, %v1848
      %vm1852 = vcmask 130048
      %v1854 = vsel %vm1852, %v1824, 0
      %v1857 = vsel %vm1852, %v1825, 0
      %v1860 = vsel %vm1852, %v1826, 0
      %v1863 = vsel %vm1852, %v1827, 0
      %v1866 = vsel %vm1852, %v1828, 0
      %v1869 = vsel %vm1852, %v1829, 0
      %v1872 = vsel %vm1852, %v1830, 0
      %v1875 = vsel %vm1852, %v1831, 0
      %v1878 = vsel %vm1852, %v1832, 0
      %v1881 = vsel %vm1852, %v1833, 0
      %v1884 = vsel %vm1852, %v1834, 0
      %v1887 = vsel %vm1852, %v1835, 0
      %v1890 = vsel %vm1852, %v1836, 0
      %v1893 = vsel %vm1852, %v1837, 0
      %v1896 = vsel %vm1852, %v1838, 0
      %v1899 = vsel %vm1852, %v1839, 0
      %1901 = vmatpush.bf16.msra.mxu0 0
      %1902 = vmatpush.bf16.msra.mxu0 0
      %1903 = vmatpush.bf16.msra.mxu0 0
      %1904 = vmatpush.bf16.msra.mxu0 0
      %1905 = vmatpush.bf16.msra.mxu0 0
      %1906 = vmatpush.bf16.msra.mxu0 0
      %1907 = vmatpush.bf16.msra.mxu0 0
      %1908 = vmatpush.bf16.msra.mxu0 %v1850
      %1909 = vmatmul.bf16.gmra.mxu0 %v1854
      %v1910 = vpop.f32.mrf.mxu0
      %v1911 = vadd.f32 %v1844, %v1910
      %v1912 = vpop.f32.mrf.mxu0
      %v1913 = vadd.f32 %v1844, %v1912
      %1914 = vmatmul.bf16.gmra.mxu0 %v1857
      %v1915 = vpop.f32.mrf.mxu0
      %v1916 = vadd.f32 %v1844, %v1915
      %v1917 = vpop.f32.mrf.mxu0
      %v1918 = vadd.f32 %v1844, %v1917
      %1919 = vmatmul.bf16.gmra.mxu0 %v1860
      %v1920 = vpop.f32.mrf.mxu0
      %v1921 = vadd.f32 %v1844, %v1920
      %v1922 = vpop.f32.mrf.mxu0
      %v1923 = vadd.f32 %v1844, %v1922
      %1924 = vmatmul.bf16.gmra.mxu0 %v1863
      %v1925 = vpop.f32.mrf.mxu0
      %v1926 = vadd.f32 %v1844, %v1925
      %v1927 = vpop.f32.mrf.mxu0
      %v1928 = vadd.f32 %v1844, %v1927
      %1929 = vmatmul.bf16.gmra.mxu0 %v1866
      %v1930 = vpop.f32.mrf.mxu0
      %v1931 = vadd.f32 %v1844, %v1930
      %v1932 = vpop.f32.mrf.mxu0
      %v1933 = vadd.f32 %v1844, %v1932
      %1934 = vmatmul.bf16.gmra.mxu0 %v1869
      %v1935 = vpop.f32.mrf.mxu0
      %v1936 = vadd.f32 %v1844, %v1935
      %v1937 = vpop.f32.mrf.mxu0
      %v1938 = vadd.f32 %v1844, %v1937
      %1939 = vmatmul.bf16.gmra.mxu0 %v1872
      %v1940 = vpop.f32.mrf.mxu0
      %v1941 = vadd.f32 %v1844, %v1940
      %v1942 = vpop.f32.mrf.mxu0
      %v1943 = vadd.f32 %v1844, %v1942
      %1944 = vmatmul.bf16.gmra.mxu0 %v1875
      %v1945 = vpop.f32.mrf.mxu0
      %v1946 = vadd.f32 %v1844, %v1945
      %v1947 = vpop.f32.mrf.mxu0
      %v1948 = vadd.f32 %v1844, %v1947
      %1949 = vmatmul.bf16.gmra.mxu0 %v1878
      %v1950 = vpop.f32.mrf.mxu0
      %v1951 = vadd.f32 %v1844, %v1950
      %v1952 = vpop.f32.mrf.mxu0
      %v1953 = vadd.f32 %v1844, %v1952
      %1954 = vmatmul.bf16.gmra.mxu0 %v1881
      %v1955 = vpop.f32.mrf.mxu0
      %v1956 = vadd.f32 %v1844, %v1955
      %v1957 = vpop.f32.mrf.mxu0
      %v1958 = vadd.f32 %v1844, %v1957
      %1959 = vmatmul.bf16.gmra.mxu0 %v1884
      %v1960 = vpop.f32.mrf.mxu0
      %v1961 = vadd.f32 %v1844, %v1960
      %v1962 = vpop.f32.mrf.mxu0
      %v1963 = vadd.f32 %v1844, %v1962
      %1964 = vmatmul.bf16.gmra.mxu0 %v1887
      %v1965 = vpop.f32.mrf.mxu0
      %v1966 = vadd.f32 %v1844, %v1965
      %v1967 = vpop.f32.mrf.mxu0
      %v1968 = vadd.f32 %v1844, %v1967
      %1969 = vmatmul.bf16.gmra.mxu0 %v1890
      %v1970 = vpop.f32.mrf.mxu0
      %v1971 = vadd.f32 %v1844, %v1970
      %v1972 = vpop.f32.mrf.mxu0
      %v1973 = vadd.f32 %v1844, %v1972
      %1974 = vmatmul.bf16.gmra.mxu0 %v1893
      %v1975 = vpop.f32.mrf.mxu0
      %v1976 = vadd.f32 %v1844, %v1975
      %v1977 = vpop.f32.mrf.mxu0
      %v1978 = vadd.f32 %v1844, %v1977
      %1979 = vmatmul.bf16.gmra.mxu0 %v1896
      %v1980 = vpop.f32.mrf.mxu0
      %v1981 = vadd.f32 %v1844, %v1980
      %v1982 = vpop.f32.mrf.mxu0
      %v1983 = vadd.f32 %v1844, %v1982
      %1984 = vmatmul.bf16.gmra.mxu0 %v1899
      %v1985 = vpop.f32.mrf.mxu0
      %v1986 = vadd.f32 %v1844, %v1985
      %v1987 = vpop.f32.mrf.mxu0
      %v1988 = vadd.f32 %v1844, %v1987
      %1989 = vdwg.mxu0
      %v1990 = vld [vmem:[%s215] sm:$0xff]
      %v1991 = vld [vmem:[%s215 + $0x8] sm:$0xff]
      %v1992 = vld [vmem:[%s215 + $0x10] sm:$0xff]
      %v1993 = vld [vmem:[%s215 + $0x18] sm:$0xff]
      %v1994 = vld [vmem:[%s215 + $0x20] sm:$0xff]
      %v1995 = vld [vmem:[%s215 + $0x28] sm:$0xff]
      %v1996 = vld [vmem:[%s215 + $0x30] sm:$0xff]
      %v1997 = vld [vmem:[%s215 + $0x38] sm:$0xff]
      %v1998 = vld [vmem:[%s215 + $0x40] sm:$0xff]
      %v1999 = vld [vmem:[%s215 + $0x48] sm:$0xff]
      %v2000 = vld [vmem:[%s215 + $0x50] sm:$0xff]
      %v2001 = vld [vmem:[%s215 + $0x58] sm:$0xff]
      %v2002 = vld [vmem:[%s215 + $0x60] sm:$0xff]
      %v2003 = vld [vmem:[%s215 + $0x68] sm:$0xff]
      %v2004 = vld [vmem:[%s215 + $0x70] sm:$0xff]
      %v2005 = vld [vmem:[%s215 + $0x78] sm:$0xff]
      %v2006 = vld [vmem:[%s215 + $0x80] sm:$0xff]
      %v2007 = vld [vmem:[%s215 + $0x88] sm:$0xff]
      %v2008 = vld [vmem:[%s215 + $0x90] sm:$0xff]
      %v2009 = vld [vmem:[%s215 + $0x98] sm:$0xff]
      %v2010 = vld [vmem:[%s215 + $0xa0] sm:$0xff]
      %v2011 = vld [vmem:[%s215 + $0xa8] sm:$0xff]
      %v2012 = vld [vmem:[%s215 + $0xb0] sm:$0xff]
      %v2013 = vld [vmem:[%s215 + $0xb8] sm:$0xff]
      %v2014 = vld [vmem:[%s215 + $0xc0] sm:$0xff]
      %v2015 = vld [vmem:[%s215 + $0xc8] sm:$0xff]
      %v2016 = vld [vmem:[%s215 + $0xd0] sm:$0xff]
      %v2017 = vld [vmem:[%s215 + $0xd8] sm:$0xff]
      %v2018 = vld [vmem:[%s215 + $0xe0] sm:$0xff]
      %v2019 = vld [vmem:[%s215 + $0xe8] sm:$0xff]
      %v2020 = vld [vmem:[%s215 + $0xf0] sm:$0xff]
      %v2021 = vld [vmem:[%s215 + $0xf8] sm:$0xff]
      %v2022 = vadd.f32 %v1911, %v1990
      %v2023 = vadd.f32 %v1913, %v1991
      %v2024 = vadd.f32 %v1916, %v1992
      %v2025 = vadd.f32 %v1918, %v1993
      %v2026 = vadd.f32 %v1921, %v1994
      %v2027 = vadd.f32 %v1923, %v1995
      %v2028 = vadd.f32 %v1926, %v1996
      %v2029 = vadd.f32 %v1928, %v1997
      %v2030 = vadd.f32 %v1931, %v1998
      %v2031 = vadd.f32 %v1933, %v1999
      %v2032 = vadd.f32 %v1936, %v2000
      %v2033 = vadd.f32 %v1938, %v2001
      %v2034 = vadd.f32 %v1941, %v2002
      %v2035 = vadd.f32 %v1943, %v2003
      %v2036 = vadd.f32 %v1946, %v2004
      %v2037 = vadd.f32 %v1948, %v2005
      %v2038 = vadd.f32 %v1951, %v2006
      %v2039 = vadd.f32 %v1953, %v2007
      %v2040 = vadd.f32 %v1956, %v2008
      %v2041 = vadd.f32 %v1958, %v2009
      %v2042 = vadd.f32 %v1961, %v2010
      %v2043 = vadd.f32 %v1963, %v2011
      %v2044 = vadd.f32 %v1966, %v2012
      %v2045 = vadd.f32 %v1968, %v2013
      %v2046 = vadd.f32 %v1971, %v2014
      %v2047 = vadd.f32 %v1973, %v2015
      %v2048 = vadd.f32 %v1976, %v2016
      %v2049 = vadd.f32 %v1978, %v2017
      %v2050 = vadd.f32 %v1981, %v2018
      %v2051 = vadd.f32 %v1983, %v2019
      %v2052 = vadd.f32 %v1986, %v2020
      %v2053 = vadd.f32 %v1988, %v2021
      %vm2054 = vcmask 64512
      %2055 = vst.msk [vmem:[%s221] sm:$0xff] %vm2054, %v2022
      %2056 = vst.msk [vmem:[%s221 + $0x8] sm:$0xff] %vm2054, %v2023
      %2057 = vst.msk [vmem:[%s221 + $0x10] sm:$0xff] %vm2054, %v2024
      %2058 = vst.msk [vmem:[%s221 + $0x18] sm:$0xff] %vm2054, %v2025
      %2059 = vst.msk [vmem:[%s221 + $0x20] sm:$0xff] %vm2054, %v2026
      %2060 = vst.msk [vmem:[%s221 + $0x28] sm:$0xff] %vm2054, %v2027
      %2061 = vst.msk [vmem:[%s221 + $0x30] sm:$0xff] %vm2054, %v2028
      %2062 = vst.msk [vmem:[%s221 + $0x38] sm:$0xff] %vm2054, %v2029
      %2063 = vst.msk [vmem:[%s221 + $0x40] sm:$0xff] %vm2054, %v2030
      %2064 = vst.msk [vmem:[%s221 + $0x48] sm:$0xff] %vm2054, %v2031
      %2065 = vst.msk [vmem:[%s221 + $0x50] sm:$0xff] %vm2054, %v2032
      %2066 = vst.msk [vmem:[%s221 + $0x58] sm:$0xff] %vm2054, %v2033
      %2067 = vst.msk [vmem:[%s221 + $0x60] sm:$0xff] %vm2054, %v2034
      %2068 = vst.msk [vmem:[%s221 + $0x68] sm:$0xff] %vm2054, %v2035
      %2069 = vst.msk [vmem:[%s221 + $0x70] sm:$0xff] %vm2054, %v2036
      %2070 = vst.msk [vmem:[%s221 + $0x78] sm:$0xff] %vm2054, %v2037
      %2071 = vst.msk [vmem:[%s221 + $0x80] sm:$0xff] %vm2054, %v2038
      %2072 = vst.msk [vmem:[%s221 + $0x88] sm:$0xff] %vm2054, %v2039
      %2073 = vst.msk [vmem:[%s221 + $0x90] sm:$0xff] %vm2054, %v2040
      %2074 = vst.msk [vmem:[%s221 + $0x98] sm:$0xff] %vm2054, %v2041
      %2075 = vst.msk [vmem:[%s221 + $0xa0] sm:$0xff] %vm2054, %v2042
      %2076 = vst.msk [vmem:[%s221 + $0xa8] sm:$0xff] %vm2054, %v2043
      %2077 = vst.msk [vmem:[%s221 + $0xb0] sm:$0xff] %vm2054, %v2044
      %2078 = vst.msk [vmem:[%s221 + $0xb8] sm:$0xff] %vm2054, %v2045
      %2079 = vst.msk [vmem:[%s221 + $0xc0] sm:$0xff] %vm2054, %v2046
      %2080 = vst.msk [vmem:[%s221 + $0xc8] sm:$0xff] %vm2054, %v2047
      %2081 = vst.msk [vmem:[%s221 + $0xd0] sm:$0xff] %vm2054, %v2048
      %2082 = vst.msk [vmem:[%s221 + $0xd8] sm:$0xff] %vm2054, %v2049
      %2083 = vst.msk [vmem:[%s221 + $0xe0] sm:$0xff] %vm2054, %v2050
      %2084 = vst.msk [vmem:[%s221 + $0xe8] sm:$0xff] %vm2054, %v2051
      %2085 = vst.msk [vmem:[%s221 + $0xf0] sm:$0xff] %vm2054, %v2052
      %2086 = vst.msk [vmem:[%s221 + $0xf8] sm:$0xff] %vm2054, %v2053
      %s2087 = smul.u32 32, %s15
      %p2088 = scmp.lt.s32.totalorder %s2087, 63
      %s2089 = scalar_select %p2088, %s2087, 63
      %s2090 = smul.addr %s2089, 8
      %s2091 = scalar_lea.vmem %s4, %s2090
      // Predicated region
      $region37: #{_lambda_.11} parent=35 // pred_check
        %p2092 = pneg %p127
      $region38: #{_lambda_.11} parent=35 // pred_check_branch
        %2094 = sbr.rel (%p2092) target = $region40
      $region39: #{_lambda_.11} parent=35 // pred_region
        %s2095 = smul.u32 32, %s15
      $region40: #{_lambda_.11} parent=35 // pred_fallthru
        _
    $region36: #{_lambda_.11} parent=5 // pred_fallthru
      _
    %p2096 = scmp.le.s32.totalorder 2, %s10
    // Predicated region
    $region41: #{_lambda_.11} parent=5 // pred_check
      %p2097 = pneg %p2096
    $region42: #{_lambda_.11} parent=5 // pred_check_branch
      %2099 = sbr.rel (%p2097) target = $region44
    $region43: #{_lambda_.11} parent=5 // pred_region
      %s2100 = ssub.s32 %s10, 2
      // Predicated region
      $region45: #{_lambda_.11} parent=43 // pred_check
        %p2101 = pneg %p133
      $region46: #{_lambda_.11} parent=43 // pred_check_branch
        %2103 = sbr.rel (%p2101) target = $region48
      $region47: #{_lambda_.11} parent=43 // pred_region
        %s2104 = smul.u32 32, %s16
        %p2105 = scmp.lt.s32.totalorder %s2104, 63
        %s2106 = scalar_select %p2105, %s2104, 63
        %s2107 = smul.addr %s2106, 8
        %s2108 = scalar_lea.vmem %s4, %s2107
      $region48: #{_lambda_.11} parent=43 // pred_fallthru
        _
    $region44: #{_lambda_.11} parent=5 // pred_fallthru
      _
  $region6: #{_lambda_.11} parent=0 // loop_footer
    %s14 = sadd.s32 1, %s10
  $region7: #{_lambda_.11} parent=0 // loop_footer_branch
    %9 = sbr.rel target = $region3
  $region8: #{_lambda_.11} parent=0 // loop_exit
    _

// kernel: _lambda_.10
$region0: #{_lambda_.10}
  #allocation0 [shape = 'u32[]', space=smem, size = 0x4, offset = 0x4, fixed_abs, tag = 'smem constant byte address 0x4 - core index']
  #allocation1 [shape = 'u32[72,128]{1,0:T(1,128)}', space=vmem, size = 0x9000, scoped, tag = 'internal scratch']
  %s0 = inlined_call_operand.vmem [shape: f32[2,18,18,32], index: 0, kind: input, shape index: {}]
  %s1 = inlined_call_operand.vmem [shape: f32[3,3,1,32], index: 1, kind: input, shape index: {}]
  %s2 = inlined_call_operand.vmem [shape: f32[1,32], index: 2, kind: input, shape index: {}]
  %s3 = inlined_call_operand.vmem [shape: f32[2,16,16,32], index: 3, kind: output, shape index: {}]
  %s4 = sld [smem:[#allocation0]]
  $region45: #{_lambda_.10} parent=0
    _
  %s6 = ssub.s32 1, %s4
  %s7 = scalar_select 0, %s6, %s4
  loop: start=0, step=1, limit=4
  $region2: #{_lambda_.10} parent=0 // loop_pre_header
    _
  $region3: #{_lambda_.10} parent=0 // loop_header
    %s9 = sphi 0, %s13
    %p10 = scmp.ge.s32.totalorder %s9, 4
    %s19 = sphi 0, %s21
    %s22 = sphi 0, %s19
    %s23 = sphi 0, %s22
    %s39 = sphi 0, %s23
    %s43 = sphi 0, %s43
    %s45 = sphi 0, %s43
    %s46 = sphi 0, %s45
    %s60 = sphi 0, %s46
    %s64 = sphi 0, %s64
    %s66 = sphi 0, %s64
    %s67 = sphi 0, %s66
    %s81 = sphi 0, %s67
    %s87 = sphi 0, %s89
    %s90 = sphi 0, %s87
    %s91 = sphi 0, %s90
    %s107 = sphi 0, %s91
  $region4: #{_lambda_.10} parent=0 // loop_header_branch
    %12 = sbr.rel (%p10) target = $region8
  $region5: #{_lambda_.10} parent=0 // loop_body
    %s14 = ssub.s32 %s9, 1
    %s15 = ssub.s32 %s9, 2
    %s16 = sadd.s32 %s9, 1
    %s17 = ssub.s32 %s9, %s16
    %p18 = scmp.eq.s32.totalorder %s17, 0
    %s20 = sadd.s32 %s19, 1
    %s21 = scalar_select %p18, %s19, %s20
    %p24 = pneg %p18
    %p25 = scmp.eq.s32.totalorder %s9, 1
    %p26 = por %p24, %p25
    %p27 = scmp.ne.s32.totalorder %s19, %s22
    %p28 = scmp.eq.s32.totalorder %s9, 0
    %p29 = por %p27, %p28
    %p30 = scmp.ne.s32.totalorder %s19, %s22
    %p31 = scmp.eq.s32.totalorder %s14, 1
    %p32 = por %p30, %p31
    %p33 = scmp.ne.s32.totalorder %s22, %s23
    %p34 = scmp.eq.s32.totalorder %s14, 0
    %p35 = por %p33, %p34
    %p36 = scmp.ne.s32.totalorder %s22, %s23
    %p37 = scmp.eq.s32.totalorder %s15, 1
    %p38 = por %p36, %p37
    %p40 = scmp.ne.s32.totalorder %s23, %s39
    %p41 = scmp.eq.s32.totalorder %s15, 0
    %p42 = por %p40, %p41
    %s44 = sadd.s32 %s43, 1
    %p47 = scmp.eq.s32.totalorder %s9, 1
    %p48 = scmp.ne.s32.totalorder %s43, %s45
    %p49 = scmp.eq.s32.totalorder %s9, 0
    %p50 = por %p48, %p49
    %p51 = scmp.ne.s32.totalorder %s43, %s45
    %p52 = scmp.eq.s32.totalorder %s14, 1
    %p53 = por %p51, %p52
    %p54 = scmp.ne.s32.totalorder %s45, %s46
    %p55 = scmp.eq.s32.totalorder %s14, 0
    %p56 = por %p54, %p55
    %p57 = scmp.ne.s32.totalorder %s45, %s46
    %p58 = scmp.eq.s32.totalorder %s15, 1
    %p59 = por %p57, %p58
    %p61 = scmp.ne.s32.totalorder %s46, %s60
    %p62 = scmp.eq.s32.totalorder %s15, 0
    %p63 = por %p61, %p62
    %s65 = sadd.s32 %s64, 1
    %p68 = scmp.eq.s32.totalorder %s9, 1
    %p69 = scmp.ne.s32.totalorder %s64, %s66
    %p70 = scmp.eq.s32.totalorder %s9, 0
    %p71 = por %p69, %p70
    %p72 = scmp.ne.s32.totalorder %s64, %s66
    %p73 = scmp.eq.s32.totalorder %s14, 1
    %p74 = por %p72, %p73
    %p75 = scmp.ne.s32.totalorder %s66, %s67
    %p76 = scmp.eq.s32.totalorder %s14, 0
    %p77 = por %p75, %p76
    %p78 = scmp.ne.s32.totalorder %s66, %s67
    %p79 = scmp.eq.s32.totalorder %s15, 1
    %p80 = por %p78, %p79
    %p82 = scmp.ne.s32.totalorder %s67, %s81
    %p83 = scmp.eq.s32.totalorder %s15, 0
    %p84 = por %p82, %p83
    %s85 = ssub.s32 %s9, %s16
    %p86 = scmp.eq.s32.totalorder %s85, 0
    %s88 = sadd.s32 %s87, 1
    %s89 = scalar_select %p86, %s87, %s88
    %p92 = pneg %p86
    %p93 = scmp.eq.s32.totalorder %s9, 1
    %p94 = por %p92, %p93
    %p95 = scmp.ne.s32.totalorder %s87, %s90
    %p96 = scmp.eq.s32.totalorder %s9, 0
    %p97 = por %p95, %p96
    %p98 = scmp.ne.s32.totalorder %s87, %s90
    %p99 = scmp.eq.s32.totalorder %s14, 1
    %p100 = por %p98, %p99
    %p101 = scmp.ne.s32.totalorder %s90, %s91
    %p102 = scmp.eq.s32.totalorder %s14, 0
    %p103 = por %p101, %p102
    %p104 = scmp.ne.s32.totalorder %s90, %s91
    %p105 = scmp.eq.s32.totalorder %s15, 1
    %p106 = por %p104, %p105
    %p108 = scmp.ne.s32.totalorder %s91, %s107
    %p109 = scmp.eq.s32.totalorder %s15, 0
    %p110 = por %p108, %p109
    %p111 = scmp.le.s32.totalorder 1, %s9
    %p112 = scmp.lt.s32.totalorder %s9, 3
    %p113 = pnand %p111, %p112
    %p114 = pneg %p113
    // Predicated region
    $region9: #{_lambda_.10} parent=5 // pred_check
      _
    $region10: #{_lambda_.10} parent=5 // pred_check_branch
      %116 = sbr.rel (%p113) target = $region12
    $region11: #{_lambda_.10} parent=5 // pred_region
      %s117 = ssub.s32 %s9, 1
      // Predicated region
      $region13: #{_lambda_.10} parent=11 // pred_check
        %p118 = pneg %p56
      $region14: #{_lambda_.10} parent=11 // pred_check_branch
        %120 = sbr.rel (%p118) target = $region16
      $region15: #{_lambda_.10} parent=11 // pred_region
        _
      $region16: #{_lambda_.10} parent=11 // pred_fallthru
        _
      // Predicated region
      $region17: #{_lambda_.10} parent=11 // pred_check
        %p121 = pneg %p77
      $region18: #{_lambda_.10} parent=11 // pred_check_branch
        %123 = sbr.rel (%p121) target = $region20
      $region19: #{_lambda_.10} parent=11 // pred_region
        _
      $region20: #{_lambda_.10} parent=11 // pred_fallthru
        _
    $region12: #{_lambda_.10} parent=5 // pred_fallthru
      _
    %p124 = scmp.lt.s32.totalorder %s9, 2
    // Predicated region
    $region21: #{_lambda_.10} parent=5 // pred_check
      %p125 = pneg %p124
    $region22: #{_lambda_.10} parent=5 // pred_check_branch
      %127 = sbr.rel (%p125) target = $region24
    $region23: #{_lambda_.10} parent=5 // pred_region
      // Predicated region
      $region25: #{_lambda_.10} parent=23 // pred_check
        %p128 = pneg %p29
      $region26: #{_lambda_.10} parent=23 // pred_check_branch
        %130 = sbr.rel (%p128) target = $region28
      $region27: #{_lambda_.10} parent=23 // pred_region
        %p131 = scmp.lt.s32.totalorder %s9, 1
        %s132 = scalar_select %p131, %s9, 1
        %s133 = smul.addr %s132, 54
        %s134 = smul.addr %s133, 8
        %s135 = scalar_lea.vmem %s0, %s134
      $region28: #{_lambda_.10} parent=23 // pred_fallthru
        _
    $region24: #{_lambda_.10} parent=5 // pred_fallthru
      _
    %p136 = scmp.le.s32.totalorder 1, %s9
    %p137 = scmp.lt.s32.totalorder %s9, 3
    %p138 = pnand %p136, %p137
    %p139 = pneg %p138
    // Predicated region
    $region29: #{_lambda_.10} parent=5 // pred_check
      _
    $region30: #{_lambda_.10} parent=5 // pred_check_branch
      %141 = sbr.rel (%p138) target = $region32
    $region31: #{_lambda_.10} parent=5 // pred_region
      %s142 = ssub.s32 %s9, 1
      %p143 = scmp.lt.s32.totalorder %s14, 1
      %s144 = scalar_select %p143, %s14, 1
      %s145 = smul.addr %s144, 54
      %s146 = smul.addr %s145, 8
      %s147 = scalar_lea.vmem %s0, %s146
      %p148 = pneg %p35
      %p149 = pneg %p32
      %p150 = pneg %p56
      %p151 = pneg %p53
      %p152 = pneg %p77
      %p153 = pneg %p74
      %p154 = pneg %p103
      %p155 = pneg %p100
      %p156 = scmp.lt.s32.totalorder %s14, 1
      %s157 = scalar_select %p156, %s14, 1
      %s158 = smul.addr %s157, 32
      %s159 = smul.addr %s158, 8
      %s160 = scalar_lea.vmem %s3, %s159
      %p161 = scmp.lt.s32.totalorder %s14, 1
      %s162 = scalar_select %p161, %s14, 1
      %s163 = smul.addr %s162, 54
      %s164 = smul.addr %s163, 8
      %s165 = scalar_lea.vmem %s0, %s164
      %p166 = scmp.lt.s32.totalorder %s14, 1
      %s167 = scalar_select %p166, %s14, 1
      %s168 = smul.addr %s167, 32
      %s169 = smul.addr %s168, 8
      %s170 = scalar_lea.vmem %s3, %s169
      %v171 = vld [vmem:[%s165] sm:$0xff]
      %v172 = vld [vmem:[%s165 + $0x8] sm:$0xff]
      %v173 = vld [vmem:[%s165 + $0x18] sm:$0xff]
      %v174 = vld [vmem:[%s165 + $0x20] sm:$0xff]
      %v175 = vld [vmem:[%s165 + $0x30] sm:$0xff]
      %v176 = vld [vmem:[%s165 + $0x38] sm:$0xff]
      %v177 = vld [vmem:[%s165 + $0x48] sm:$0xff]
      %v178 = vld [vmem:[%s165 + $0x50] sm:$0xff]
      %v179 = vld [vmem:[%s165 + $0x60] sm:$0xff]
      %v180 = vld [vmem:[%s165 + $0x68] sm:$0xff]
      %v181 = vld [vmem:[%s165 + $0x78] sm:$0xff]
      %v182 = vld [vmem:[%s165 + $0x80] sm:$0xff]
      %v183 = vld [vmem:[%s165 + $0x90] sm:$0xff]
      %v184 = vld [vmem:[%s165 + $0x98] sm:$0xff]
      %v185 = vld [vmem:[%s165 + $0xa8] sm:$0xff]
      %v186 = vld [vmem:[%s165 + $0xb0] sm:$0xff]
      %v187 = vld [vmem:[%s165 + $0xc0] sm:$0xff]
      %v188 = vld [vmem:[%s165 + $0xc8] sm:$0xff]
      %v189 = vld [vmem:[%s165 + $0xd8] sm:$0xff]
      %v190 = vld [vmem:[%s165 + $0xe0] sm:$0xff]
      %v191 = vld [vmem:[%s165 + $0xf0] sm:$0xff]
      %v192 = vld [vmem:[%s165 + $0xf8] sm:$0xff]
      %v193 = vld [vmem:[%s165 + $0x108] sm:$0xff]
      %v194 = vld [vmem:[%s165 + $0x110] sm:$0xff]
      %v195 = vld [vmem:[%s165 + $0x120] sm:$0xff]
      %v196 = vld [vmem:[%s165 + $0x128] sm:$0xff]
      %v197 = vld [vmem:[%s165 + $0x138] sm:$0xff]
      %v198 = vld [vmem:[%s165 + $0x140] sm:$0xff]
      %v199 = vld [vmem:[%s165 + $0x150] sm:$0xff]
      %v200 = vld [vmem:[%s165 + $0x158] sm:$0xff]
      %v201 = vld [vmem:[%s165 + $0x168] sm:$0xff]
      %v202 = vld [vmem:[%s165 + $0x170] sm:$0xff]
      %v203 = vld [vmem:[%s1] sm:$0x1]
      %v205 = vperm.slane %v203, 0
      %v207 = vmul.f32 %v171, %v205
      %v208 = vmul.f32 %v172, %v205
      %v209 = vmul.f32 %v173, %v205
      %v210 = vmul.f32 %v174, %v205
      %v211 = vmul.f32 %v175, %v205
      %v212 = vmul.f32 %v176, %v205
      %v213 = vmul.f32 %v177, %v205
      %v214 = vmul.f32 %v178, %v205
      %v215 = vmul.f32 %v179, %v205
      %v216 = vmul.f32 %v180, %v205
      %v217 = vmul.f32 %v181, %v205
      %v218 = vmul.f32 %v182, %v205
      %v219 = vmul.f32 %v183, %v205
      %v220 = vmul.f32 %v184, %v205
      %v221 = vmul.f32 %v185, %v205
      %v222 = vmul.f32 %v186, %v205
      %v223 = vmul.f32 %v187, %v205
      %v224 = vmul.f32 %v188, %v205
      %v225 = vmul.f32 %v189, %v205
      %v226 = vmul.f32 %v190, %v205
      %v227 = vmul.f32 %v191, %v205
      %v228 = vmul.f32 %v192, %v205
      %v229 = vmul.f32 %v193, %v205
      %v230 = vmul.f32 %v194, %v205
      %v231 = vmul.f32 %v195, %v205
      %v232 = vmul.f32 %v196, %v205
      %v233 = vmul.f32 %v197, %v205
      %v234 = vmul.f32 %v198, %v205
      %v235 = vmul.f32 %v199, %v205
      %v236 = vmul.f32 %v200, %v205
      %v237 = vmul.f32 %v201, %v205
      %v238 = vmul.f32 %v202, %v205
      %v239 = vadd.f32 %v207, 0.0
      %v240 = vadd.f32 %v208, 0.0
      %v241 = vadd.f32 %v209, 0.0
      %v242 = vadd.f32 %v210, 0.0
      %v243 = vadd.f32 %v211, 0.0
      %v244 = vadd.f32 %v212, 0.0
      %v245 = vadd.f32 %v213, 0.0
      %v246 = vadd.f32 %v214, 0.0
      %v247 = vadd.f32 %v215, 0.0
      %v248 = vadd.f32 %v216, 0.0
      %v249 = vadd.f32 %v217, 0.0
      %v250 = vadd.f32 %v218, 0.0
      %v251 = vadd.f32 %v219, 0.0
      %v252 = vadd.f32 %v220, 0.0
      %v253 = vadd.f32 %v221, 0.0
      %v254 = vadd.f32 %v222, 0.0
      %v255 = vadd.f32 %v223, 0.0
      %v256 = vadd.f32 %v224, 0.0
      %v257 = vadd.f32 %v225, 0.0
      %v258 = vadd.f32 %v226, 0.0
      %v259 = vadd.f32 %v227, 0.0
      %v260 = vadd.f32 %v228, 0.0
      %v261 = vadd.f32 %v229, 0.0
      %v262 = vadd.f32 %v230, 0.0
      %v263 = vadd.f32 %v231, 0.0
      %v264 = vadd.f32 %v232, 0.0
      %v265 = vadd.f32 %v233, 0.0
      %v266 = vadd.f32 %v234, 0.0
      %v267 = vadd.f32 %v235, 0.0
      %v268 = vadd.f32 %v236, 0.0
      %v269 = vadd.f32 %v237, 0.0
      %v270 = vadd.f32 %v238, 0.0
      %v271 = vld [vmem:[%s165 + $0x1] sm:$0xff]
      %v272 = vld [vmem:[%s165 + $0x9] sm:$0xff]
      %v273 = vld [vmem:[%s165 + $0x19] sm:$0xff]
      %v274 = vld [vmem:[%s165 + $0x21] sm:$0xff]
      %v275 = vld [vmem:[%s165 + $0x31] sm:$0xff]
      %v276 = vld [vmem:[%s165 + $0x39] sm:$0xff]
      %v277 = vld [vmem:[%s165 + $0x49] sm:$0xff]
      %v278 = vld [vmem:[%s165 + $0x51] sm:$0xff]
      %v279 = vld [vmem:[%s165 + $0x61] sm:$0xff]
      %v280 = vld [vmem:[%s165 + $0x69] sm:$0xff]
      %v281 = vld [vmem:[%s165 + $0x79] sm:$0xff]
      %v282 = vld [vmem:[%s165 + $0x81] sm:$0xff]
      %v283 = vld [vmem:[%s165 + $0x91] sm:$0xff]
      %v284 = vld [vmem:[%s165 + $0x99] sm:$0xff]
      %v285 = vld [vmem:[%s165 + $0xa9] sm:$0xff]
      %v286 = vld [vmem:[%s165 + $0xb1] sm:$0xff]
      %v287 = vld [vmem:[%s165 + $0xc1] sm:$0xff]
      %v288 = vld [vmem:[%s165 + $0xc9] sm:$0xff]
      %v289 = vld [vmem:[%s165 + $0xd9] sm:$0xff]
      %v290 = vld [vmem:[%s165 + $0xe1] sm:$0xff]
      %v291 = vld [vmem:[%s165 + $0xf1] sm:$0xff]
      %v292 = vld [vmem:[%s165 + $0xf9] sm:$0xff]
      %v293 = vld [vmem:[%s165 + $0x109] sm:$0xff]
      %v294 = vld [vmem:[%s165 + $0x111] sm:$0xff]
      %v295 = vld [vmem:[%s165 + $0x121] sm:$0xff]
      %v296 = vld [vmem:[%s165 + $0x129] sm:$0xff]
      %v297 = vld [vmem:[%s165 + $0x139] sm:$0xff]
      %v298 = vld [vmem:[%s165 + $0x141] sm:$0xff]
      %v299 = vld [vmem:[%s165 + $0x151] sm:$0xff]
      %v300 = vld [vmem:[%s165 + $0x159] sm:$0xff]
      %v301 = vld [vmem:[%s165 + $0x169] sm:$0xff]
      %v302 = vld [vmem:[%s165 + $0x171] sm:$0xff]
      %s303 = scalar_lea.vmem %s1, 1
      %v304 = vld [vmem:[%s303] sm:$0x1]
      %v306 = vperm.slane %v304, 0
      %v308 = vmul.f32 %v271, %v306
      %v309 = vmul.f32 %v272, %v306
      %v310 = vmul.f32 %v273, %v306
      %v311 = vmul.f32 %v274, %v306
      %v312 = vmul.f32 %v275, %v306
      %v313 = vmul.f32 %v276, %v306
      %v314 = vmul.f32 %v277, %v306
      %v315 = vmul.f32 %v278, %v306
      %v316 = vmul.f32 %v279, %v306
      %v317 = vmul.f32 %v280, %v306
      %v318 = vmul.f32 %v281, %v306
      %v319 = vmul.f32 %v282, %v306
      %v320 = vmul.f32 %v283, %v306
      %v321 = vmul.f32 %v284, %v306
      %v322 = vmul.f32 %v285, %v306
      %v323 = vmul.f32 %v286, %v306
      %v324 = vmul.f32 %v287, %v306
      %v325 = vmul.f32 %v288, %v306
      %v326 = vmul.f32 %v289, %v306
      %v327 = vmul.f32 %v290, %v306
      %v328 = vmul.f32 %v291, %v306
      %v329 = vmul.f32 %v292, %v306
      %v330 = vmul.f32 %v293, %v306
      %v331 = vmul.f32 %v294, %v306
      %v332 = vmul.f32 %v295, %v306
      %v333 = vmul.f32 %v296, %v306
      %v334 = vmul.f32 %v297, %v306
      %v335 = vmul.f32 %v298, %v306
      %v336 = vmul.f32 %v299, %v306
      %v337 = vmul.f32 %v300, %v306
      %v338 = vmul.f32 %v301, %v306
      %v339 = vmul.f32 %v302, %v306
      %v340 = vadd.f32 %v239, %v308
      %v341 = vadd.f32 %v240, %v309
      %v342 = vadd.f32 %v241, %v310
      %v343 = vadd.f32 %v242, %v311
      %v344 = vadd.f32 %v243, %v312
      %v345 = vadd.f32 %v244, %v313
      %v346 = vadd.f32 %v245, %v314
      %v347 = vadd.f32 %v246, %v315
      %v348 = vadd.f32 %v247, %v316
      %v349 = vadd.f32 %v248, %v317
      %v350 = vadd.f32 %v249, %v318
      %v351 = vadd.f32 %v250, %v319
      %v352 = vadd.f32 %v251, %v320
      %v353 = vadd.f32 %v252, %v321
      %v354 = vadd.f32 %v253, %v322
      %v355 = vadd.f32 %v254, %v323
      %v356 = vadd.f32 %v255, %v324
      %v357 = vadd.f32 %v256, %v325
      %v358 = vadd.f32 %v257, %v326
      %v359 = vadd.f32 %v258, %v327
      %v360 = vadd.f32 %v259, %v328
      %v361 = vadd.f32 %v260, %v329
      %v362 = vadd.f32 %v261, %v330
      %v363 = vadd.f32 %v262, %v331
      %v364 = vadd.f32 %v263, %v332
      %v365 = vadd.f32 %v264, %v333
      %v366 = vadd.f32 %v265, %v334
      %v367 = vadd.f32 %v266, %v335
      %v368 = vadd.f32 %v267, %v336
      %v369 = vadd.f32 %v268, %v337
      %v370 = vadd.f32 %v269, %v338
      %v371 = vadd.f32 %v270, %v339
      %v372 = vld [vmem:[%s165 + $0x2] sm:$0xff]
      %v373 = vld [vmem:[%s165 + $0xa] sm:$0xff]
      %v374 = vld [vmem:[%s165 + $0x1a] sm:$0xff]
      %v375 = vld [vmem:[%s165 + $0x22] sm:$0xff]
      %v376 = vld [vmem:[%s165 + $0x32] sm:$0xff]
      %v377 = vld [vmem:[%s165 + $0x3a] sm:$0xff]
      %v378 = vld [vmem:[%s165 + $0x4a] sm:$0xff]
      %v379 = vld [vmem:[%s165 + $0x52] sm:$0xff]
      %v380 = vld [vmem:[%s165 + $0x62] sm:$0xff]
      %v381 = vld [vmem:[%s165 + $0x6a] sm:$0xff]
      %v382 = vld [vmem:[%s165 + $0x7a] sm:$0xff]
      %v383 = vld [vmem:[%s165 + $0x82] sm:$0xff]
      %v384 = vld [vmem:[%s165 + $0x92] sm:$0xff]
      %v385 = vld [vmem:[%s165 + $0x9a] sm:$0xff]
      %v386 = vld [vmem:[%s165 + $0xaa] sm:$0xff]
      %v387 = vld [vmem:[%s165 + $0xb2] sm:$0xff]
      %v388 = vld [vmem:[%s165 + $0xc2] sm:$0xff]
      %v389 = vld [vmem:[%s165 + $0xca] sm:$0xff]
      %v390 = vld [vmem:[%s165 + $0xda] sm:$0xff]
      %v391 = vld [vmem:[%s165 + $0xe2] sm:$0xff]
      %v392 = vld [vmem:[%s165 + $0xf2] sm:$0xff]
      %v393 = vld [vmem:[%s165 + $0xfa] sm:$0xff]
      %v394 = vld [vmem:[%s165 + $0x10a] sm:$0xff]
      %v395 = vld [vmem:[%s165 + $0x112] sm:$0xff]
      %v396 = vld [vmem:[%s165 + $0x122] sm:$0xff]
      %v397 = vld [vmem:[%s165 + $0x12a] sm:$0xff]
      %v398 = vld [vmem:[%s165 + $0x13a] sm:$0xff]
      %v399 = vld [vmem:[%s165 + $0x142] sm:$0xff]
      %v400 = vld [vmem:[%s165 + $0x152] sm:$0xff]
      %v401 = vld [vmem:[%s165 + $0x15a] sm:$0xff]
      %v402 = vld [vmem:[%s165 + $0x16a] sm:$0xff]
      %v403 = vld [vmem:[%s165 + $0x172] sm:$0xff]
      %s404 = scalar_lea.vmem %s1, 2
      %v405 = vld [vmem:[%s404] sm:$0x1]
      %v407 = vperm.slane %v405, 0
      %v409 = vmul.f32 %v372, %v407
      %v410 = vmul.f32 %v373, %v407
      %v411 = vmul.f32 %v374, %v407
      %v412 = vmul.f32 %v375, %v407
      %v413 = vmul.f32 %v376, %v407
      %v414 = vmul.f32 %v377, %v407
      %v415 = vmul.f32 %v378, %v407
      %v416 = vmul.f32 %v379, %v407
      %v417 = vmul.f32 %v380, %v407
      %v418 = vmul.f32 %v381, %v407
      %v419 = vmul.f32 %v382, %v407
      %v420 = vmul.f32 %v383, %v407
      %v421 = vmul.f32 %v384, %v407
      %v422 = vmul.f32 %v385, %v407
      %v423 = vmul.f32 %v386, %v407
      %v424 = vmul.f32 %v387, %v407
      %v425 = vmul.f32 %v388, %v407
      %v426 = vmul.f32 %v389, %v407
      %v427 = vmul.f32 %v390, %v407
      %v428 = vmul.f32 %v391, %v407
      %v429 = vmul.f32 %v392, %v407
      %v430 = vmul.f32 %v393, %v407
      %v431 = vmul.f32 %v394, %v407
      %v432 = vmul.f32 %v395, %v407
      %v433 = vmul.f32 %v396, %v407
      %v434 = vmul.f32 %v397, %v407
      %v435 = vmul.f32 %v398, %v407
      %v436 = vmul.f32 %v399, %v407
      %v437 = vmul.f32 %v400, %v407
      %v438 = vmul.f32 %v401, %v407
      %v439 = vmul.f32 %v402, %v407
      %v440 = vmul.f32 %v403, %v407
      %v441 = vadd.f32 %v340, %v409
      %v442 = vadd.f32 %v341, %v410
      %v443 = vadd.f32 %v342, %v411
      %v444 = vadd.f32 %v343, %v412
      %v445 = vadd.f32 %v344, %v413
      %v446 = vadd.f32 %v345, %v414
      %v447 = vadd.f32 %v346, %v415
      %v448 = vadd.f32 %v347, %v416
      %v449 = vadd.f32 %v348, %v417
      %v450 = vadd.f32 %v349, %v418
      %v451 = vadd.f32 %v350, %v419
      %v452 = vadd.f32 %v351, %v420
      %v453 = vadd.f32 %v352, %v421
      %v454 = vadd.f32 %v353, %v422
      %v455 = vadd.f32 %v354, %v423
      %v456 = vadd.f32 %v355, %v424
      %v457 = vadd.f32 %v356, %v425
      %v458 = vadd.f32 %v357, %v426
      %v459 = vadd.f32 %v358, %v427
      %v460 = vadd.f32 %v359, %v428
      %v461 = vadd.f32 %v360, %v429
      %v462 = vadd.f32 %v361, %v430
      %v463 = vadd.f32 %v362, %v431
      %v464 = vadd.f32 %v363, %v432
      %v465 = vadd.f32 %v364, %v433
      %v466 = vadd.f32 %v365, %v434
      %v467 = vadd.f32 %v366, %v435
      %v468 = vadd.f32 %v367, %v436
      %v469 = vadd.f32 %v368, %v437
      %v470 = vadd.f32 %v369, %v438
      %v471 = vadd.f32 %v370, %v439
      %v472 = vadd.f32 %v371, %v440
      %s473 = scalar_lea.vmem %s165, 24
      %v474 = vld [vmem:[%s473] sm:$0xff]
      %v475 = vld [vmem:[%s473 + $0x8] sm:$0xff]
      %v476 = vld [vmem:[%s473 + $0x18] sm:$0xff]
      %v477 = vld [vmem:[%s473 + $0x20] sm:$0xff]
      %v478 = vld [vmem:[%s473 + $0x30] sm:$0xff]
      %v479 = vld [vmem:[%s473 + $0x38] sm:$0xff]
      %v480 = vld [vmem:[%s473 + $0x48] sm:$0xff]
      %v481 = vld [vmem:[%s473 + $0x50] sm:$0xff]
      %v482 = vld [vmem:[%s473 + $0x60] sm:$0xff]
      %v483 = vld [vmem:[%s473 + $0x68] sm:$0xff]
      %v484 = vld [vmem:[%s473 + $0x78] sm:$0xff]
      %v485 = vld [vmem:[%s473 + $0x80] sm:$0xff]
      %v486 = vld [vmem:[%s473 + $0x90] sm:$0xff]
      %v487 = vld [vmem:[%s473 + $0x98] sm:$0xff]
      %v488 = vld [vmem:[%s473 + $0xa8] sm:$0xff]
      %v489 = vld [vmem:[%s473 + $0xb0] sm:$0xff]
      %v490 = vld [vmem:[%s473 + $0xc0] sm:$0xff]
      %v491 = vld [vmem:[%s473 + $0xc8] sm:$0xff]
      %v492 = vld [vmem:[%s473 + $0xd8] sm:$0xff]
      %v493 = vld [vmem:[%s473 + $0xe0] sm:$0xff]
      %v494 = vld [vmem:[%s473 + $0xf0] sm:$0xff]
      %v495 = vld [vmem:[%s473 + $0xf8] sm:$0xff]
      %v496 = vld [vmem:[%s473 + $0x108] sm:$0xff]
      %v497 = vld [vmem:[%s473 + $0x110] sm:$0xff]
      %v498 = vld [vmem:[%s473 + $0x120] sm:$0xff]
      %v499 = vld [vmem:[%s473 + $0x128] sm:$0xff]
      %v500 = vld [vmem:[%s473 + $0x138] sm:$0xff]
      %v501 = vld [vmem:[%s473 + $0x140] sm:$0xff]
      %v502 = vld [vmem:[%s473 + $0x150] sm:$0xff]
      %v503 = vld [vmem:[%s473 + $0x158] sm:$0xff]
      %v504 = vld [vmem:[%s473 + $0x168] sm:$0xff]
      %v505 = vld [vmem:[%s473 + $0x170] sm:$0xff]
      %s506 = scalar_lea.vmem %s1, 3
      %v507 = vld [vmem:[%s506] sm:$0x1]
      %v509 = vperm.slane %v507, 0
      %v511 = vmul.f32 %v474, %v509
      %v512 = vmul.f32 %v475, %v509
      %v513 = vmul.f32 %v476, %v509
      %v514 = vmul.f32 %v477, %v509
      %v515 = vmul.f32 %v478, %v509
      %v516 = vmul.f32 %v479, %v509
      %v517 = vmul.f32 %v480, %v509
      %v518 = vmul.f32 %v481, %v509
      %v519 = vmul.f32 %v482, %v509
      %v520 = vmul.f32 %v483, %v509
      %v521 = vmul.f32 %v484, %v509
      %v522 = vmul.f32 %v485, %v509
      %v523 = vmul.f32 %v486, %v509
      %v524 = vmul.f32 %v487, %v509
      %v525 = vmul.f32 %v488, %v509
      %v526 = vmul.f32 %v489, %v509
      %v527 = vmul.f32 %v490, %v509
      %v528 = vmul.f32 %v491, %v509
      %v529 = vmul.f32 %v492, %v509
      %v530 = vmul.f32 %v493, %v509
      %v531 = vmul.f32 %v494, %v509
      %v532 = vmul.f32 %v495, %v509
      %v533 = vmul.f32 %v496, %v509
      %v534 = vmul.f32 %v497, %v509
      %v535 = vmul.f32 %v498, %v509
      %v536 = vmul.f32 %v499, %v509
      %v537 = vmul.f32 %v500, %v509
      %v538 = vmul.f32 %v501, %v509
      %v539 = vmul.f32 %v502, %v509
      %v540 = vmul.f32 %v503, %v509
      %v541 = vmul.f32 %v504, %v509
      %v542 = vmul.f32 %v505, %v509
      %v543 = vadd.f32 %v441, %v511
      %v544 = vadd.f32 %v442, %v512
      %v545 = vadd.f32 %v443, %v513
      %v546 = vadd.f32 %v444, %v514
      %v547 = vadd.f32 %v445, %v515
      %v548 = vadd.f32 %v446, %v516
      %v549 = vadd.f32 %v447, %v517
      %v550 = vadd.f32 %v448, %v518
      %v551 = vadd.f32 %v449, %v519
      %v552 = vadd.f32 %v450, %v520
      %v553 = vadd.f32 %v451, %v521
      %v554 = vadd.f32 %v452, %v522
      %v555 = vadd.f32 %v453, %v523
      %v556 = vadd.f32 %v454, %v524
      %v557 = vadd.f32 %v455, %v525
      %v558 = vadd.f32 %v456, %v526
      %v559 = vadd.f32 %v457, %v527
      %v560 = vadd.f32 %v458, %v528
      %v561 = vadd.f32 %v459, %v529
      %v562 = vadd.f32 %v460, %v530
      %v563 = vadd.f32 %v461, %v531
      %v564 = vadd.f32 %v462, %v532
      %v565 = vadd.f32 %v463, %v533
      %v566 = vadd.f32 %v464, %v534
      %v567 = vadd.f32 %v465, %v535
      %v568 = vadd.f32 %v466, %v536
      %v569 = vadd.f32 %v467, %v537
      %v570 = vadd.f32 %v468, %v538
      %v571 = vadd.f32 %v469, %v539
      %v572 = vadd.f32 %v470, %v540
      %v573 = vadd.f32 %v471, %v541
      %v574 = vadd.f32 %v472, %v542
      %v575 = vld [vmem:[%s473 + $0x1] sm:$0xff]
      %v576 = vld [vmem:[%s473 + $0x9] sm:$0xff]
      %v577 = vld [vmem:[%s473 + $0x19] sm:$0xff]
      %v578 = vld [vmem:[%s473 + $0x21] sm:$0xff]
      %v579 = vld [vmem:[%s473 + $0x31] sm:$0xff]
      %v580 = vld [vmem:[%s473 + $0x39] sm:$0xff]
      %v581 = vld [vmem:[%s473 + $0x49] sm:$0xff]
      %v582 = vld [vmem:[%s473 + $0x51] sm:$0xff]
      %v583 = vld [vmem:[%s473 + $0x61] sm:$0xff]
      %v584 = vld [vmem:[%s473 + $0x69] sm:$0xff]
      %v585 = vld [vmem:[%s473 + $0x79] sm:$0xff]
      %v586 = vld [vmem:[%s473 + $0x81] sm:$0xff]
      %v587 = vld [vmem:[%s473 + $0x91] sm:$0xff]
      %v588 = vld [vmem:[%s473 + $0x99] sm:$0xff]
      %v589 = vld [vmem:[%s473 + $0xa9] sm:$0xff]
      %v590 = vld [vmem:[%s473 + $0xb1] sm:$0xff]
      %v591 = vld [vmem:[%s473 + $0xc1] sm:$0xff]
      %v592 = vld [vmem:[%s473 + $0xc9] sm:$0xff]
      %v593 = vld [vmem:[%s473 + $0xd9] sm:$0xff]
      %v594 = vld [vmem:[%s473 + $0xe1] sm:$0xff]
      %v595 = vld [vmem:[%s473 + $0xf1] sm:$0xff]
      %v596 = vld [vmem:[%s473 + $0xf9] sm:$0xff]
      %v597 = vld [vmem:[%s473 + $0x109] sm:$0xff]
      %v598 = vld [vmem:[%s473 + $0x111] sm:$0xff]
      %v599 = vld [vmem:[%s473 + $0x121] sm:$0xff]
      %v600 = vld [vmem:[%s473 + $0x129] sm:$0xff]
      %v601 = vld [vmem:[%s473 + $0x139] sm:$0xff]
      %v602 = vld [vmem:[%s473 + $0x141] sm:$0xff]
      %v603 = vld [vmem:[%s473 + $0x151] sm:$0xff]
      %v604 = vld [vmem:[%s473 + $0x159] sm:$0xff]
      %v605 = vld [vmem:[%s473 + $0x169] sm:$0xff]
      %v606 = vld [vmem:[%s473 + $0x171] sm:$0xff]
      %s607 = scalar_lea.vmem %s1, 4
      %v608 = vld [vmem:[%s607] sm:$0x1]
      %v610 = vperm.slane %v608, 0
      %v612 = vmul.f32 %v575, %v610
      %v613 = vmul.f32 %v576, %v610
      %v614 = vmul.f32 %v577, %v610
      %v615 = vmul.f32 %v578, %v610
      %v616 = vmul.f32 %v579, %v610
      %v617 = vmul.f32 %v580, %v610
      %v618 = vmul.f32 %v581, %v610
      %v619 = vmul.f32 %v582, %v610
      %v620 = vmul.f32 %v583, %v610
      %v621 = vmul.f32 %v584, %v610
      %v622 = vmul.f32 %v585, %v610
      %v623 = vmul.f32 %v586, %v610
      %v624 = vmul.f32 %v587, %v610
      %v625 = vmul.f32 %v588, %v610
      %v626 = vmul.f32 %v589, %v610
      %v627 = vmul.f32 %v590, %v610
      %v628 = vmul.f32 %v591, %v610
      %v629 = vmul.f32 %v592, %v610
      %v630 = vmul.f32 %v593, %v610
      %v631 = vmul.f32 %v594, %v610
      %v632 = vmul.f32 %v595, %v610
      %v633 = vmul.f32 %v596, %v610
      %v634 = vmul.f32 %v597, %v610
      %v635 = vmul.f32 %v598, %v610
      %v636 = vmul.f32 %v599, %v610
      %v637 = vmul.f32 %v600, %v610
      %v638 = vmul.f32 %v601, %v610
      %v639 = vmul.f32 %v602, %v610
      %v640 = vmul.f32 %v603, %v610
      %v641 = vmul.f32 %v604, %v610
      %v642 = vmul.f32 %v605, %v610
      %v643 = vmul.f32 %v606, %v610
      %v644 = vadd.f32 %v543, %v612
      %v645 = vadd.f32 %v544, %v613
      %v646 = vadd.f32 %v545, %v614
      %v647 = vadd.f32 %v546, %v615
      %v648 = vadd.f32 %v547, %v616
      %v649 = vadd.f32 %v548, %v617
      %v650 = vadd.f32 %v549, %v618
      %v651 = vadd.f32 %v550, %v619
      %v652 = vadd.f32 %v551, %v620
      %v653 = vadd.f32 %v552, %v621
      %v654 = vadd.f32 %v553, %v622
      %v655 = vadd.f32 %v554, %v623
      %v656 = vadd.f32 %v555, %v624
      %v657 = vadd.f32 %v556, %v625
      %v658 = vadd.f32 %v557, %v626
      %v659 = vadd.f32 %v558, %v627
      %v660 = vadd.f32 %v559, %v628
      %v661 = vadd.f32 %v560, %v629
      %v662 = vadd.f32 %v561, %v630
      %v663 = vadd.f32 %v562, %v631
      %v664 = vadd.f32 %v563, %v632
      %v665 = vadd.f32 %v564, %v633
      %v666 = vadd.f32 %v565, %v634
      %v667 = vadd.f32 %v566, %v635
      %v668 = vadd.f32 %v567, %v636
      %v669 = vadd.f32 %v568, %v637
      %v670 = vadd.f32 %v569, %v638
      %v671 = vadd.f32 %v570, %v639
      %v672 = vadd.f32 %v571, %v640
      %v673 = vadd.f32 %v572, %v641
      %v674 = vadd.f32 %v573, %v642
      %v675 = vadd.f32 %v574, %v643
      %v676 = vld [vmem:[%s473 + $0x2] sm:$0xff]
      %v677 = vld [vmem:[%s473 + $0xa] sm:$0xff]
      %v678 = vld [vmem:[%s473 + $0x1a] sm:$0xff]
      %v679 = vld [vmem:[%s473 + $0x22] sm:$0xff]
      %v680 = vld [vmem:[%s473 + $0x32] sm:$0xff]
      %v681 = vld [vmem:[%s473 + $0x3a] sm:$0xff]
      %v682 = vld [vmem:[%s473 + $0x4a] sm:$0xff]
      %v683 = vld [vmem:[%s473 + $0x52] sm:$0xff]
      %v684 = vld [vmem:[%s473 + $0x62] sm:$0xff]
      %v685 = vld [vmem:[%s473 + $0x6a] sm:$0xff]
      %v686 = vld [vmem:[%s473 + $0x7a] sm:$0xff]
      %v687 = vld [vmem:[%s473 + $0x82] sm:$0xff]
      %v688 = vld [vmem:[%s473 + $0x92] sm:$0xff]
      %v689 = vld [vmem:[%s473 + $0x9a] sm:$0xff]
      %v690 = vld [vmem:[%s473 + $0xaa] sm:$0xff]
      %v691 = vld [vmem:[%s473 + $0xb2] sm:$0xff]
      %v692 = vld [vmem:[%s473 + $0xc2] sm:$0xff]
      %v693 = vld [vmem:[%s473 + $0xca] sm:$0xff]
      %v694 = vld [vmem:[%s473 + $0xda] sm:$0xff]
      %v695 = vld [vmem:[%s473 + $0xe2] sm:$0xff]
      %v696 = vld [vmem:[%s473 + $0xf2] sm:$0xff]
      %v697 = vld [vmem:[%s473 + $0xfa] sm:$0xff]
      %v698 = vld [vmem:[%s473 + $0x10a] sm:$0xff]
      %v699 = vld [vmem:[%s473 + $0x112] sm:$0xff]
      %v700 = vld [vmem:[%s473 + $0x122] sm:$0xff]
      %v701 = vld [vmem:[%s473 + $0x12a] sm:$0xff]
      %v702 = vld [vmem:[%s473 + $0x13a] sm:$0xff]
      %v703 = vld [vmem:[%s473 + $0x142] sm:$0xff]
      %v704 = vld [vmem:[%s473 + $0x152] sm:$0xff]
      %v705 = vld [vmem:[%s473 + $0x15a] sm:$0xff]
      %v706 = vld [vmem:[%s473 + $0x16a] sm:$0xff]
      %v707 = vld [vmem:[%s473 + $0x172] sm:$0xff]
      %s708 = scalar_lea.vmem %s1, 5
      %v709 = vld [vmem:[%s708] sm:$0x1]
      %v711 = vperm.slane %v709, 0
      %v713 = vmul.f32 %v676, %v711
      %v714 = vmul.f32 %v677, %v711
      %v715 = vmul.f32 %v678, %v711
      %v716 = vmul.f32 %v679, %v711
      %v717 = vmul.f32 %v680, %v711
      %v718 = vmul.f32 %v681, %v711
      %v719 = vmul.f32 %v682, %v711
      %v720 = vmul.f32 %v683, %v711
      %v721 = vmul.f32 %v684, %v711
      %v722 = vmul.f32 %v685, %v711
      %v723 = vmul.f32 %v686, %v711
      %v724 = vmul.f32 %v687, %v711
      %v725 = vmul.f32 %v688, %v711
      %v726 = vmul.f32 %v689, %v711
      %v727 = vmul.f32 %v690, %v711
      %v728 = vmul.f32 %v691, %v711
      %v729 = vmul.f32 %v692, %v711
      %v730 = vmul.f32 %v693, %v711
      %v731 = vmul.f32 %v694, %v711
      %v732 = vmul.f32 %v695, %v711
      %v733 = vmul.f32 %v696, %v711
      %v734 = vmul.f32 %v697, %v711
      %v735 = vmul.f32 %v698, %v711
      %v736 = vmul.f32 %v699, %v711
      %v737 = vmul.f32 %v700, %v711
      %v738 = vmul.f32 %v701, %v711
      %v739 = vmul.f32 %v702, %v711
      %v740 = vmul.f32 %v703, %v711
      %v741 = vmul.f32 %v704, %v711
      %v742 = vmul.f32 %v705, %v711
      %v743 = vmul.f32 %v706, %v711
      %v744 = vmul.f32 %v707, %v711
      %v745 = vadd.f32 %v644, %v713
      %v746 = vadd.f32 %v645, %v714
      %v747 = vadd.f32 %v646, %v715
      %v748 = vadd.f32 %v647, %v716
      %v749 = vadd.f32 %v648, %v717
      %v750 = vadd.f32 %v649, %v718
      %v751 = vadd.f32 %v650, %v719
      %v752 = vadd.f32 %v651, %v720
      %v753 = vadd.f32 %v652, %v721
      %v754 = vadd.f32 %v653, %v722
      %v755 = vadd.f32 %v654, %v723
      %v756 = vadd.f32 %v655, %v724
      %v757 = vadd.f32 %v656, %v725
      %v758 = vadd.f32 %v657, %v726
      %v759 = vadd.f32 %v658, %v727
      %v760 = vadd.f32 %v659, %v728
      %v761 = vadd.f32 %v660, %v729
      %v762 = vadd.f32 %v661, %v730
      %v763 = vadd.f32 %v662, %v731
      %v764 = vadd.f32 %v663, %v732
      %v765 = vadd.f32 %v664, %v733
      %v766 = vadd.f32 %v665, %v734
      %v767 = vadd.f32 %v666, %v735
      %v768 = vadd.f32 %v667, %v736
      %v769 = vadd.f32 %v668, %v737
      %v770 = vadd.f32 %v669, %v738
      %v771 = vadd.f32 %v670, %v739
      %v772 = vadd.f32 %v671, %v740
      %v773 = vadd.f32 %v672, %v741
      %v774 = vadd.f32 %v673, %v742
      %v775 = vadd.f32 %v674, %v743
      %v776 = vadd.f32 %v675, %v744
      %s777 = scalar_lea.vmem %s165, 48
      %v778 = vld [vmem:[%s777] sm:$0xff]
      %v779 = vld [vmem:[%s777 + $0x8] sm:$0xff]
      %v780 = vld [vmem:[%s777 + $0x18] sm:$0xff]
      %v781 = vld [vmem:[%s777 + $0x20] sm:$0xff]
      %v782 = vld [vmem:[%s777 + $0x30] sm:$0xff]
      %v783 = vld [vmem:[%s777 + $0x38] sm:$0xff]
      %v784 = vld [vmem:[%s777 + $0x48] sm:$0xff]
      %v785 = vld [vmem:[%s777 + $0x50] sm:$0xff]
      %v786 = vld [vmem:[%s777 + $0x60] sm:$0xff]
      %v787 = vld [vmem:[%s777 + $0x68] sm:$0xff]
      %v788 = vld [vmem:[%s777 + $0x78] sm:$0xff]
      %v789 = vld [vmem:[%s777 + $0x80] sm:$0xff]
      %v790 = vld [vmem:[%s777 + $0x90] sm:$0xff]
      %v791 = vld [vmem:[%s777 + $0x98] sm:$0xff]
      %v792 = vld [vmem:[%s777 + $0xa8] sm:$0xff]
      %v793 = vld [vmem:[%s777 + $0xb0] sm:$0xff]
      %v794 = vld [vmem:[%s777 + $0xc0] sm:$0xff]
      %v795 = vld [vmem:[%s777 + $0xc8] sm:$0xff]
      %v796 = vld [vmem:[%s777 + $0xd8] sm:$0xff]
      %v797 = vld [vmem:[%s777 + $0xe0] sm:$0xff]
      %v798 = vld [vmem:[%s777 + $0xf0] sm:$0xff]
      %v799 = vld [vmem:[%s777 + $0xf8] sm:$0xff]
      %v800 = vld [vmem:[%s777 + $0x108] sm:$0xff]
      %v801 = vld [vmem:[%s777 + $0x110] sm:$0xff]
      %v802 = vld [vmem:[%s777 + $0x120] sm:$0xff]
      %v803 = vld [vmem:[%s777 + $0x128] sm:$0xff]
      %v804 = vld [vmem:[%s777 + $0x138] sm:$0xff]
      %v805 = vld [vmem:[%s777 + $0x140] sm:$0xff]
      %v806 = vld [vmem:[%s777 + $0x150] sm:$0xff]
      %v807 = vld [vmem:[%s777 + $0x158] sm:$0xff]
      %v808 = vld [vmem:[%s777 + $0x168] sm:$0xff]
      %v809 = vld [vmem:[%s777 + $0x170] sm:$0xff]
      %s810 = scalar_lea.vmem %s1, 6
      %v811 = vld [vmem:[%s810] sm:$0x1]
      %v813 = vperm.slane %v811, 0
      %v815 = vmul.f32 %v778, %v813
      %v816 = vmul.f32 %v779, %v813
      %v817 = vmul.f32 %v780, %v813
      %v818 = vmul.f32 %v781, %v813
      %v819 = vmul.f32 %v782, %v813
      %v820 = vmul.f32 %v783, %v813
      %v821 = vmul.f32 %v784, %v813
      %v822 = vmul.f32 %v785, %v813
      %v823 = vmul.f32 %v786, %v813
      %v824 = vmul.f32 %v787, %v813
      %v825 = vmul.f32 %v788, %v813
      %v826 = vmul.f32 %v789, %v813
      %v827 = vmul.f32 %v790, %v813
      %v828 = vmul.f32 %v791, %v813
      %v829 = vmul.f32 %v792, %v813
      %v830 = vmul.f32 %v793, %v813
      %v831 = vmul.f32 %v794, %v813
      %v832 = vmul.f32 %v795, %v813
      %v833 = vmul.f32 %v796, %v813
      %v834 = vmul.f32 %v797, %v813
      %v835 = vmul.f32 %v798, %v813
      %v836 = vmul.f32 %v799, %v813
      %v837 = vmul.f32 %v800, %v813
      %v838 = vmul.f32 %v801, %v813
      %v839 = vmul.f32 %v802, %v813
      %v840 = vmul.f32 %v803, %v813
      %v841 = vmul.f32 %v804, %v813
      %v842 = vmul.f32 %v805, %v813
      %v843 = vmul.f32 %v806, %v813
      %v844 = vmul.f32 %v807, %v813
      %v845 = vmul.f32 %v808, %v813
      %v846 = vmul.f32 %v809, %v813
      %v847 = vadd.f32 %v745, %v815
      %v848 = vadd.f32 %v746, %v816
      %v849 = vadd.f32 %v747, %v817
      %v850 = vadd.f32 %v748, %v818
      %v851 = vadd.f32 %v749, %v819
      %v852 = vadd.f32 %v750, %v820
      %v853 = vadd.f32 %v751, %v821
      %v854 = vadd.f32 %v752, %v822
      %v855 = vadd.f32 %v753, %v823
      %v856 = vadd.f32 %v754, %v824
      %v857 = vadd.f32 %v755, %v825
      %v858 = vadd.f32 %v756, %v826
      %v859 = vadd.f32 %v757, %v827
      %v860 = vadd.f32 %v758, %v828
      %v861 = vadd.f32 %v759, %v829
      %v862 = vadd.f32 %v760, %v830
      %v863 = vadd.f32 %v761, %v831
      %v864 = vadd.f32 %v762, %v832
      %v865 = vadd.f32 %v763, %v833
      %v866 = vadd.f32 %v764, %v834
      %v867 = vadd.f32 %v765, %v835
      %v868 = vadd.f32 %v766, %v836
      %v869 = vadd.f32 %v767, %v837
      %v870 = vadd.f32 %v768, %v838
      %v871 = vadd.f32 %v769, %v839
      %v872 = vadd.f32 %v770, %v840
      %v873 = vadd.f32 %v771, %v841
      %v874 = vadd.f32 %v772, %v842
      %v875 = vadd.f32 %v773, %v843
      %v876 = vadd.f32 %v774, %v844
      %v877 = vadd.f32 %v775, %v845
      %v878 = vadd.f32 %v776, %v846
      %v879 = vld [vmem:[%s777 + $0x1] sm:$0xff]
      %v880 = vld [vmem:[%s777 + $0x9] sm:$0xff]
      %v881 = vld [vmem:[%s777 + $0x19] sm:$0xff]
      %v882 = vld [vmem:[%s777 + $0x21] sm:$0xff]
      %v883 = vld [vmem:[%s777 + $0x31] sm:$0xff]
      %v884 = vld [vmem:[%s777 + $0x39] sm:$0xff]
      %v885 = vld [vmem:[%s777 + $0x49] sm:$0xff]
      %v886 = vld [vmem:[%s777 + $0x51] sm:$0xff]
      %v887 = vld [vmem:[%s777 + $0x61] sm:$0xff]
      %v888 = vld [vmem:[%s777 + $0x69] sm:$0xff]
      %v889 = vld [vmem:[%s777 + $0x79] sm:$0xff]
      %v890 = vld [vmem:[%s777 + $0x81] sm:$0xff]
      %v891 = vld [vmem:[%s777 + $0x91] sm:$0xff]
      %v892 = vld [vmem:[%s777 + $0x99] sm:$0xff]
      %v893 = vld [vmem:[%s777 + $0xa9] sm:$0xff]
      %v894 = vld [vmem:[%s777 + $0xb1] sm:$0xff]
      %v895 = vld [vmem:[%s777 + $0xc1] sm:$0xff]
      %v896 = vld [vmem:[%s777 + $0xc9] sm:$0xff]
      %v897 = vld [vmem:[%s777 + $0xd9] sm:$0xff]
      %v898 = vld [vmem:[%s777 + $0xe1] sm:$0xff]
      %v899 = vld [vmem:[%s777 + $0xf1] sm:$0xff]
      %v900 = vld [vmem:[%s777 + $0xf9] sm:$0xff]
      %v901 = vld [vmem:[%s777 + $0x109] sm:$0xff]
      %v902 = vld [vmem:[%s777 + $0x111] sm:$0xff]
      %v903 = vld [vmem:[%s777 + $0x121] sm:$0xff]
      %v904 = vld [vmem:[%s777 + $0x129] sm:$0xff]
      %v905 = vld [vmem:[%s777 + $0x139] sm:$0xff]
      %v906 = vld [vmem:[%s777 + $0x141] sm:$0xff]
      %v907 = vld [vmem:[%s777 + $0x151] sm:$0xff]
      %v908 = vld [vmem:[%s777 + $0x159] sm:$0xff]
      %v909 = vld [vmem:[%s777 + $0x169] sm:$0xff]
      %v910 = vld [vmem:[%s777 + $0x171] sm:$0xff]
      %s911 = scalar_lea.vmem %s1, 7
      %v912 = vld [vmem:[%s911] sm:$0x1]
      %v914 = vperm.slane %v912, 0
      %v916 = vmul.f32 %v879, %v914
      %v917 = vmul.f32 %v880, %v914
      %v918 = vmul.f32 %v881, %v914
      %v919 = vmul.f32 %v882, %v914
      %v920 = vmul.f32 %v883, %v914
      %v921 = vmul.f32 %v884, %v914
      %v922 = vmul.f32 %v885, %v914
      %v923 = vmul.f32 %v886, %v914
      %v924 = vmul.f32 %v887, %v914
      %v925 = vmul.f32 %v888, %v914
      %v926 = vmul.f32 %v889, %v914
      %v927 = vmul.f32 %v890, %v914
      %v928 = vmul.f32 %v891, %v914
      %v929 = vmul.f32 %v892, %v914
      %v930 = vmul.f32 %v893, %v914
      %v931 = vmul.f32 %v894, %v914
      %v932 = vmul.f32 %v895, %v914
      %v933 = vmul.f32 %v896, %v914
      %v934 = vmul.f32 %v897, %v914
      %v935 = vmul.f32 %v898, %v914
      %v936 = vmul.f32 %v899, %v914
      %v937 = vmul.f32 %v900, %v914
      %v938 = vmul.f32 %v901, %v914
      %v939 = vmul.f32 %v902, %v914
      %v940 = vmul.f32 %v903, %v914
      %v941 = vmul.f32 %v904, %v914
      %v942 = vmul.f32 %v905, %v914
      %v943 = vmul.f32 %v906, %v914
      %v944 = vmul.f32 %v907, %v914
      %v945 = vmul.f32 %v908, %v914
      %v946 = vmul.f32 %v909, %v914
      %v947 = vmul.f32 %v910, %v914
      %v948 = vadd.f32 %v847, %v916
      %v949 = vadd.f32 %v848, %v917
      %v950 = vadd.f32 %v849, %v918
      %v951 = vadd.f32 %v850, %v919
      %v952 = vadd.f32 %v851, %v920
      %v953 = vadd.f32 %v852, %v921
      %v954 = vadd.f32 %v853, %v922
      %v955 = vadd.f32 %v854, %v923
      %v956 = vadd.f32 %v855, %v924
      %v957 = vadd.f32 %v856, %v925
      %v958 = vadd.f32 %v857, %v926
      %v959 = vadd.f32 %v858, %v927
      %v960 = vadd.f32 %v859, %v928
      %v961 = vadd.f32 %v860, %v929
      %v962 = vadd.f32 %v861, %v930
      %v963 = vadd.f32 %v862, %v931
      %v964 = vadd.f32 %v863, %v932
      %v965 = vadd.f32 %v864, %v933
      %v966 = vadd.f32 %v865, %v934
      %v967 = vadd.f32 %v866, %v935
      %v968 = vadd.f32 %v867, %v936
      %v969 = vadd.f32 %v868, %v937
      %v970 = vadd.f32 %v869, %v938
      %v971 = vadd.f32 %v870, %v939
      %v972 = vadd.f32 %v871, %v940
      %v973 = vadd.f32 %v872, %v941
      %v974 = vadd.f32 %v873, %v942
      %v975 = vadd.f32 %v874, %v943
      %v976 = vadd.f32 %v875, %v944
      %v977 = vadd.f32 %v876, %v945
      %v978 = vadd.f32 %v877, %v946
      %v979 = vadd.f32 %v878, %v947
      %v980 = vld [vmem:[%s777 + $0x2] sm:$0xff]
      %v981 = vld [vmem:[%s777 + $0xa] sm:$0xff]
      %v982 = vld [vmem:[%s777 + $0x1a] sm:$0xff]
      %v983 = vld [vmem:[%s777 + $0x22] sm:$0xff]
      %v984 = vld [vmem:[%s777 + $0x32] sm:$0xff]
      %v985 = vld [vmem:[%s777 + $0x3a] sm:$0xff]
      %v986 = vld [vmem:[%s777 + $0x4a] sm:$0xff]
      %v987 = vld [vmem:[%s777 + $0x52] sm:$0xff]
      %v988 = vld [vmem:[%s777 + $0x62] sm:$0xff]
      %v989 = vld [vmem:[%s777 + $0x6a] sm:$0xff]
      %v990 = vld [vmem:[%s777 + $0x7a] sm:$0xff]
      %v991 = vld [vmem:[%s777 + $0x82] sm:$0xff]
      %v992 = vld [vmem:[%s777 + $0x92] sm:$0xff]
      %v993 = vld [vmem:[%s777 + $0x9a] sm:$0xff]
      %v994 = vld [vmem:[%s777 + $0xaa] sm:$0xff]
      %v995 = vld [vmem:[%s777 + $0xb2] sm:$0xff]
      %v996 = vld [vmem:[%s777 + $0xc2] sm:$0xff]
      %v997 = vld [vmem:[%s777 + $0xca] sm:$0xff]
      %v998 = vld [vmem:[%s777 + $0xda] sm:$0xff]
      %v999 = vld [vmem:[%s777 + $0xe2] sm:$0xff]
      %v1000 = vld [vmem:[%s777 + $0xf2] sm:$0xff]
      %v1001 = vld [vmem:[%s777 + $0xfa] sm:$0xff]
      %v1002 = vld [vmem:[%s777 + $0x10a] sm:$0xff]
      %v1003 = vld [vmem:[%s777 + $0x112] sm:$0xff]
      %v1004 = vld [vmem:[%s777 + $0x122] sm:$0xff]
      %v1005 = vld [vmem:[%s777 + $0x12a] sm:$0xff]
      %v1006 = vld [vmem:[%s777 + $0x13a] sm:$0xff]
      %v1007 = vld [vmem:[%s777 + $0x142] sm:$0xff]
      %v1008 = vld [vmem:[%s777 + $0x152] sm:$0xff]
      %v1009 = vld [vmem:[%s777 + $0x15a] sm:$0xff]
      %v1010 = vld [vmem:[%s777 + $0x16a] sm:$0xff]
      %v1011 = vld [vmem:[%s777 + $0x172] sm:$0xff]
      %s1012 = scalar_lea.vmem %s1, 8
      %v1013 = vld [vmem:[%s1012] sm:$0x1]
      %v1015 = vperm.slane %v1013, 0
      %v1017 = vmul.f32 %v980, %v1015
      %v1018 = vmul.f32 %v981, %v1015
      %v1019 = vmul.f32 %v982, %v1015
      %v1020 = vmul.f32 %v983, %v1015
      %v1021 = vmul.f32 %v984, %v1015
      %v1022 = vmul.f32 %v985, %v1015
      %v1023 = vmul.f32 %v986, %v1015
      %v1024 = vmul.f32 %v987, %v1015
      %v1025 = vmul.f32 %v988, %v1015
      %v1026 = vmul.f32 %v989, %v1015
      %v1027 = vmul.f32 %v990, %v1015
      %v1028 = vmul.f32 %v991, %v1015
      %v1029 = vmul.f32 %v992, %v1015
      %v1030 = vmul.f32 %v993, %v1015
      %v1031 = vmul.f32 %v994, %v1015
      %v1032 = vmul.f32 %v995, %v1015
      %v1033 = vmul.f32 %v996, %v1015
      %v1034 = vmul.f32 %v997, %v1015
      %v1035 = vmul.f32 %v998, %v1015
      %v1036 = vmul.f32 %v999, %v1015
      %v1037 = vmul.f32 %v1000, %v1015
      %v1038 = vmul.f32 %v1001, %v1015
      %v1039 = vmul.f32 %v1002, %v1015
      %v1040 = vmul.f32 %v1003, %v1015
      %v1041 = vmul.f32 %v1004, %v1015
      %v1042 = vmul.f32 %v1005, %v1015
      %v1043 = vmul.f32 %v1006, %v1015
      %v1044 = vmul.f32 %v1007, %v1015
      %v1045 = vmul.f32 %v1008, %v1015
      %v1046 = vmul.f32 %v1009, %v1015
      %v1047 = vmul.f32 %v1010, %v1015
      %v1048 = vmul.f32 %v1011, %v1015
      %v1049 = vadd.f32 %v948, %v1017
      %v1050 = vadd.f32 %v949, %v1018
      %v1051 = vadd.f32 %v950, %v1019
      %v1052 = vadd.f32 %v951, %v1020
      %v1053 = vadd.f32 %v952, %v1021
      %v1054 = vadd.f32 %v953, %v1022
      %v1055 = vadd.f32 %v954, %v1023
      %v1056 = vadd.f32 %v955, %v1024
      %v1057 = vadd.f32 %v956, %v1025
      %v1058 = vadd.f32 %v957, %v1026
      %v1059 = vadd.f32 %v958, %v1027
      %v1060 = vadd.f32 %v959, %v1028
      %v1061 = vadd.f32 %v960, %v1029
      %v1062 = vadd.f32 %v961, %v1030
      %v1063 = vadd.f32 %v962, %v1031
      %v1064 = vadd.f32 %v963, %v1032
      %v1065 = vadd.f32 %v964, %v1033
      %v1066 = vadd.f32 %v965, %v1034
      %v1067 = vadd.f32 %v966, %v1035
      %v1068 = vadd.f32 %v967, %v1036
      %v1069 = vadd.f32 %v968, %v1037
      %v1070 = vadd.f32 %v969, %v1038
      %v1071 = vadd.f32 %v970, %v1039
      %v1072 = vadd.f32 %v971, %v1040
      %v1073 = vadd.f32 %v972, %v1041
      %v1074 = vadd.f32 %v973, %v1042
      %v1075 = vadd.f32 %v974, %v1043
      %v1076 = vadd.f32 %v975, %v1044
      %v1077 = vadd.f32 %v976, %v1045
      %v1078 = vadd.f32 %v977, %v1046
      %v1079 = vadd.f32 %v978, %v1047
      %v1080 = vadd.f32 %v979, %v1048
      %v1081 = vld [vmem:[%s2] sm:$0x1]
      %v1083 = vperm.slane %v1081, 0
      %v1085 = vadd.f32 %v1049, %v1083
      %v1086 = vadd.f32 %v1050, %v1083
      %v1087 = vadd.f32 %v1051, %v1083
      %v1088 = vadd.f32 %v1052, %v1083
      %v1089 = vadd.f32 %v1053, %v1083
      %v1090 = vadd.f32 %v1054, %v1083
      %v1091 = vadd.f32 %v1055, %v1083
      %v1092 = vadd.f32 %v1056, %v1083
      %v1093 = vadd.f32 %v1057, %v1083
      %v1094 = vadd.f32 %v1058, %v1083
      %v1095 = vadd.f32 %v1059, %v1083
      %v1096 = vadd.f32 %v1060, %v1083
      %v1097 = vadd.f32 %v1061, %v1083
      %v1098 = vadd.f32 %v1062, %v1083
      %v1099 = vadd.f32 %v1063, %v1083
      %v1100 = vadd.f32 %v1064, %v1083
      %v1101 = vadd.f32 %v1065, %v1083
      %v1102 = vadd.f32 %v1066, %v1083
      %v1103 = vadd.f32 %v1067, %v1083
      %v1104 = vadd.f32 %v1068, %v1083
      %v1105 = vadd.f32 %v1069, %v1083
      %v1106 = vadd.f32 %v1070, %v1083
      %v1107 = vadd.f32 %v1071, %v1083
      %v1108 = vadd.f32 %v1072, %v1083
      %v1109 = vadd.f32 %v1073, %v1083
      %v1110 = vadd.f32 %v1074, %v1083
      %v1111 = vadd.f32 %v1075, %v1083
      %v1112 = vadd.f32 %v1076, %v1083
      %v1113 = vadd.f32 %v1077, %v1083
      %v1114 = vadd.f32 %v1078, %v1083
      %v1115 = vadd.f32 %v1079, %v1083
      %v1116 = vadd.f32 %v1080, %v1083
      %vm1117 = vcmask 261120
      %1118 = vst.msk [vmem:[%s170] sm:$0xff] %vm1117, %v1085
      %1119 = vst.msk [vmem:[%s170 + $0x8] sm:$0xff] %vm1117, %v1086
      %1120 = vst.msk [vmem:[%s170 + $0x10] sm:$0xff] %vm1117, %v1087
      %1121 = vst.msk [vmem:[%s170 + $0x18] sm:$0xff] %vm1117, %v1088
      %1122 = vst.msk [vmem:[%s170 + $0x20] sm:$0xff] %vm1117, %v1089
      %1123 = vst.msk [vmem:[%s170 + $0x28] sm:$0xff] %vm1117, %v1090
      %1124 = vst.msk [vmem:[%s170 + $0x30] sm:$0xff] %vm1117, %v1091
      %1125 = vst.msk [vmem:[%s170 + $0x38] sm:$0xff] %vm1117, %v1092
      %1126 = vst.msk [vmem:[%s170 + $0x40] sm:$0xff] %vm1117, %v1093
      %1127 = vst.msk [vmem:[%s170 + $0x48] sm:$0xff] %vm1117, %v1094
      %1128 = vst.msk [vmem:[%s170 + $0x50] sm:$0xff] %vm1117, %v1095
      %1129 = vst.msk [vmem:[%s170 + $0x58] sm:$0xff] %vm1117, %v1096
      %1130 = vst.msk [vmem:[%s170 + $0x60] sm:$0xff] %vm1117, %v1097
      %1131 = vst.msk [vmem:[%s170 + $0x68] sm:$0xff] %vm1117, %v1098
      %1132 = vst.msk [vmem:[%s170 + $0x70] sm:$0xff] %vm1117, %v1099
      %1133 = vst.msk [vmem:[%s170 + $0x78] sm:$0xff] %vm1117, %v1100
      %1134 = vst.msk [vmem:[%s170 + $0x80] sm:$0xff] %vm1117, %v1101
      %1135 = vst.msk [vmem:[%s170 + $0x88] sm:$0xff] %vm1117, %v1102
      %1136 = vst.msk [vmem:[%s170 + $0x90] sm:$0xff] %vm1117, %v1103
      %1137 = vst.msk [vmem:[%s170 + $0x98] sm:$0xff] %vm1117, %v1104
      %1138 = vst.msk [vmem:[%s170 + $0xa0] sm:$0xff] %vm1117, %v1105
      %1139 = vst.msk [vmem:[%s170 + $0xa8] sm:$0xff] %vm1117, %v1106
      %1140 = vst.msk [vmem:[%s170 + $0xb0] sm:$0xff] %vm1117, %v1107
      %1141 = vst.msk [vmem:[%s170 + $0xb8] sm:$0xff] %vm1117, %v1108
      %1142 = vst.msk [vmem:[%s170 + $0xc0] sm:$0xff] %vm1117, %v1109
      %1143 = vst.msk [vmem:[%s170 + $0xc8] sm:$0xff] %vm1117, %v1110
      %1144 = vst.msk [vmem:[%s170 + $0xd0] sm:$0xff] %vm1117, %v1111
      %1145 = vst.msk [vmem:[%s170 + $0xd8] sm:$0xff] %vm1117, %v1112
      %1146 = vst.msk [vmem:[%s170 + $0xe0] sm:$0xff] %vm1117, %v1113
      %1147 = vst.msk [vmem:[%s170 + $0xe8] sm:$0xff] %vm1117, %v1114
      %1148 = vst.msk [vmem:[%s170 + $0xf0] sm:$0xff] %vm1117, %v1115
      %1149 = vst.msk [vmem:[%s170 + $0xf8] sm:$0xff] %vm1117, %v1116
      %p1150 = scmp.lt.s32.totalorder %s14, 1
      %s1151 = scalar_select %p1150, %s14, 1
      %s1152 = smul.addr %s1151, 32
      %s1153 = smul.addr %s1152, 8
      %s1154 = scalar_lea.vmem %s3, %s1153
      // Predicated region
      $region33: #{_lambda_.10} parent=31 // pred_check
        %p1155 = pneg %p100
      $region34: #{_lambda_.10} parent=31 // pred_check_branch
        %1157 = sbr.rel (%p1155) target = $region36
      $region35: #{_lambda_.10} parent=31 // pred_region
        _
      $region36: #{_lambda_.10} parent=31 // pred_fallthru
        _
    $region32: #{_lambda_.10} parent=5 // pred_fallthru
      _
    %p1158 = scmp.le.s32.totalorder 2, %s9
    // Predicated region
    $region37: #{_lambda_.10} parent=5 // pred_check
      %p1159 = pneg %p1158
    $region38: #{_lambda_.10} parent=5 // pred_check_branch
      %1161 = sbr.rel (%p1159) target = $region40
    $region39: #{_lambda_.10} parent=5 // pred_region
      %s1162 = ssub.s32 %s9, 2
      // Predicated region
      $region41: #{_lambda_.10} parent=39 // pred_check
        %p1163 = pneg %p106
      $region42: #{_lambda_.10} parent=39 // pred_check_branch
        %1165 = sbr.rel (%p1163) target = $region44
      $region43: #{_lambda_.10} parent=39 // pred_region
        %p1166 = scmp.lt.s32.totalorder %s15, 1
        %s1167 = scalar_select %p1166, %s15, 1
        %s1168 = smul.addr %s1167, 32
        %s1169 = smul.addr %s1168, 8
        %s1170 = scalar_lea.vmem %s3, %s1169
      $region44: #{_lambda_.10} parent=39 // pred_fallthru
        _
    $region40: #{_lambda_.10} parent=5 // pred_fallthru
      _
  $region6: #{_lambda_.10} parent=0 // loop_footer
    %s13 = sadd.s32 1, %s9
  $region7: #{_lambda_.10} parent=0 // loop_footer_branch
    %8 = sbr.rel target = $region3
  $region8: #{_lambda_.10} parent=0 // loop_exit
    _

</llo_original>
